<compile_context>
chip_gen: v7x
topology: tpu7x:2x2x1
jax: 0.10.0
libtpu: 0.0.40
codegen_flags: <defaults>
</compile_context>

<pallas_src>
import functools

import jax
import jax.numpy as jnp
from jax import lax
from jax.experimental import pallas as pl
from jax.experimental.pallas import tpu as pltpu

IMAGENET_MEAN = jnp.array([0.485, 0.456, 0.406], jnp.float32)
IMAGENET_STD = jnp.array([0.229, 0.224, 0.225], jnp.float32)
LAYER_WEIGHTS = {'1': 1.0, '4': 1.0}   # -> vgg19.features[:5]

COMPUTE_DTYPE = jnp.bfloat16           # bf16 activations/weights, f32 accumulation


def _pick_tile(m, target):
    """Largest multiple-of-8 tile <= target that divides m (compile-time)."""
    t = min(target, m)
    t -= t % 8
    while t >= 8:
        if m % t == 0:
            return t
        t -= 8
    return m   # full-extent block is always legal


# ----------------------------- Pallas kernels ------------------------------ #

def _conv_mm_kernel(p_ref, w_ref, b_ref, o_ref, *, apply_relu):
    # Fused im2col-matmul + bias + ReLU tile on the MXU (bf16 in, f32 acc).
    acc = jnp.dot(p_ref[...], w_ref[...], preferred_element_type=jnp.float32)
    acc = acc + b_ref[...]
    if apply_relu:
        acc = jnp.maximum(acc, 0.0)
    o_ref[...] = acc.astype(o_ref.dtype)


def _pool_kernel(a_ref, b_ref, o_ref):
    # a_ref: even image rows, b_ref: odd image rows, both (tm, Wo, 2*C) with the
    # two horizontally adjacent pixels interleaved on the lane axis.
    m = jnp.maximum(a_ref[...], b_ref[...])
    c = o_ref.shape[-1]
    o_ref[...] = jnp.maximum(m[:, :, :c], m[:, :, c:])


def _gram_kernel(x_ref, o_ref, acc_ref, *, scale):
    # Accumulate x^T x over spatial tiles; (C, C) f32 accumulator stays resident.
    @pl.when(pl.program_id(1) == 0)
    def _():
        acc_ref[...] = jnp.zeros_like(acc_ref)

    x = x_ref[...]                                        # (tp, C) bf16
    acc_ref[...] += lax.dot_general(
        x, x, (((0,), (0,)), ((), ())), preferred_element_type=jnp.float32)

    @pl.when(pl.program_id(1) == pl.num_programs(1) - 1)
    def _():
        o_ref[...] = acc_ref[...] * scale


def _l1_sum_kernel(a_ref, b_ref, o_ref, acc_ref):
    # Tiled sum of |a - b|: per-lane partial sums accumulated across grid steps;
    # the final (tiny) lane reduction + mean-divide happens in the wrapper.
    @pl.when(pl.program_id(0) == 0)
    def _():
        acc_ref[...] = jnp.zeros_like(acc_ref)

    d = a_ref[...].astype(jnp.float32) - b_ref[...].astype(jnp.float32)
    acc_ref[...] += jnp.sum(jnp.abs(d), axis=0, keepdims=True)

    @pl.when(pl.program_id(0) == pl.num_programs(0) - 1)
    def _():
        o_ref[...] = acc_ref[...]


# ------------------------------ wrappers ----------------------------------- #

def _im2col(x_nhwc, k=3, pad=1):
    n, h, w, c = x_nhwc.shape
    xp = jnp.pad(x_nhwc, ((0, 0), (pad, pad), (pad, pad), (0, 0)))
    cols = [xp[:, dy:dy + h, dx:dx + w, :] for dy in range(k) for dx in range(k)]
    return jnp.concatenate(cols, axis=-1).reshape(n * h * w, k * k * c)


def conv3x3(x_nhwc, w_oihw, b, *, apply_relu=True):
    n, h, w, c_in = x_nhwc.shape
    c_out = w_oihw.shape[0]
    # TODO(synk): im2col is still materialized in HBM (now bf16, halving the
    # traffic); an in-kernel 9-shift halo accumulation would remove the rest but
    # needs reshapes Mosaic does not reliably support at these channel widths.
    patches = _im2col(x_nhwc).astype(COMPUTE_DTYPE)             # (M, 9*Cin)
    # torch weight (Cout, Cin, kh, kw) -> ((kh*kw*Cin), Cout), matching im2col
    w_mat = jnp.transpose(w_oihw, (2, 3, 1, 0)).reshape(9 * c_in, c_out)
    w_mat = w_mat.astype(COMPUTE_DTYPE)
    b_row = b.reshape(1, c_out).astype(jnp.float32)

    m = n * h * w
    k = 9 * c_in
    tm = _pick_tile(m, 512)
    kern = functools.partial(_conv_mm_kernel, apply_relu=apply_relu)
    out = pl.pallas_call(
        kern,
        out_shape=jax.ShapeDtypeStruct((m, c_out), COMPUTE_DTYPE),
        grid=(m // tm,),
        in_specs=[pl.BlockSpec((tm, k), lambda i: (i, 0)),
                  pl.BlockSpec((k, c_out), lambda i: (0, 0)),
                  pl.BlockSpec((1, c_out), lambda i: (0, 0))],
        out_specs=pl.BlockSpec((tm, c_out), lambda i: (i, 0)),
        compiler_params=pltpu.CompilerParams(dimension_semantics=("parallel",)),
    )(patches, w_mat, b_row)
    return out.reshape(n, h, w, c_out)


def maxpool2x2(x_nhwc):
    n2, h, w, c = x_nhwc.shape
    ho, wo = h // 2, w // 2
    # Pure contiguous reshape: dim1 blocks {0,1} = even/odd image rows, lane
    # halves = even/odd image columns (channel-contiguous, so 2*C = 128 lanes).
    xr = x_nhwc.reshape(n2 * ho, 2 * wo, 2 * c)
    m = n2 * ho
    tm = _pick_tile(m, 256)
    out = pl.pallas_call(
        _pool_kernel,
        out_shape=jax.ShapeDtypeStruct((m, wo, c), x_nhwc.dtype),
        grid=(m // tm,),
        in_specs=[pl.BlockSpec((tm, wo, 2 * c), lambda i: (i, 0, 0)),
                  pl.BlockSpec((tm, wo, 2 * c), lambda i: (i, 1, 0))],
        out_specs=pl.BlockSpec((tm, wo, c), lambda i: (i, 0, 0)),
        compiler_params=pltpu.CompilerParams(dimension_semantics=("parallel",)),
    )(xr, xr)
    return out.reshape(n2, ho, wo, c)


def gram_matrix(feat_nhwc):
    n2, h, w, c = feat_nhwc.shape
    p = h * w
    x = feat_nhwc.reshape(n2, p, c)
    tp = _pick_tile(p, 512)
    kern = functools.partial(_gram_kernel, scale=1.0 / (c * h * w))
    return pl.pallas_call(
        kern,
        out_shape=jax.ShapeDtypeStruct((n2, c, c), jnp.float32),
        grid=(n2, p // tp),
        in_specs=[pl.BlockSpec((None, tp, c), lambda i, j: (i, j, 0))],
        out_specs=pl.BlockSpec((None, c, c), lambda i, j: (i, 0, 0)),
        scratch_shapes=[pltpu.VMEM((c, c), jnp.float32)],
        compiler_params=pltpu.CompilerParams(
            dimension_semantics=("parallel", "arbitrary")),
    )(x)


def l1_mean_between_halves(pair):
    """pair: (2, M, C); mean |pair[0] - pair[1]| as an f32 scalar."""
    _, m, c = pair.shape
    tm = _pick_tile(m, 1024)
    partial = pl.pallas_call(
        _l1_sum_kernel,
        out_shape=jax.ShapeDtypeStruct((1, c), jnp.float32),
        grid=(m // tm,),
        in_specs=[pl.BlockSpec((None, tm, c), lambda i: (0, i, 0)),
                  pl.BlockSpec((None, tm, c), lambda i: (1, i, 0))],
        out_specs=pl.BlockSpec((1, c), lambda i: (0, 0)),
        scratch_shapes=[pltpu.VMEM((1, c), jnp.float32)],
        compiler_params=pltpu.CompilerParams(dimension_semantics=("arbitrary",)),
    )(pair, pair)
    return jnp.sum(partial) / jnp.float32(m * c)


def fold_input_norm(w0):
    """Fold the per-input-channel 0.5/std scale of the input norm into conv1."""
    scale = (0.5 / IMAGENET_STD).reshape(1, 3, 1, 1)
    return w0 * scale


def vgg_features(x_nchw, params):
    """Truncated vgg19.features[:5]; returns features at layer names '1','4'.

    norm_img + use_input_norm are folded in:
      ((x+1)*0.5 - mean)/std == (x + (1 - 2*mean)) * (0.5/std)
    The shift is applied here (fused by XLA into the pad/im2col), the scale is
    already folded into params['w0n']; zero-padding the shifted input is exactly
    zero-padding the normalized image, so border semantics are preserved.
    """
    x = jnp.transpose(x_nchw, (0, 2, 3, 1)).astype(jnp.float32)   # NCHW -> NHWC
    x = (x + (1.0 - 2.0 * IMAGENET_MEAN)).astype(COMPUTE_DTYPE)
    feats = {}
    f1 = conv3x3(x, params['w0n'], params['b0'], apply_relu=True)   # layers 0,1
    feats['1'] = f1
    f3 = conv3x3(f1, params['w2'], params['b2'], apply_relu=True)   # layers 2,3
    feats['4'] = maxpool2x2(f3)                                     # layer 4
    return feats


def perceptual_loss(x, gt, params, layer_weights=LAYER_WEIGHTS,
                    perceptual_weight=1.0, style_weight=1.0):
    n = x.shape[0]
    batched = jnp.concatenate([x, gt], axis=0)   # single VGG pass (gt.detach() is a no-op)
    feats = vgg_features(batched, params)

    percep = jnp.float32(0.0)
    style = jnp.float32(0.0)
    for k, wk in layer_weights.items():
        f = feats[k]                               # (2n, h, w, c) bf16
        _, fh, fw, fc = f.shape
        percep = percep + l1_mean_between_halves(
            f.reshape(2, n * fh * fw, fc)) * wk
        g = gram_matrix(f)                         # (2n, c, c) f32
        style = style + l1_mean_between_halves(
            g.reshape(2, n * fc, fc)) * wk
    return percep * perceptual_weight, style * style_weight


# --------------------------- pure-JAX reference ----------------------------- #

def _ref_vgg(x_nchw, params):
    x = (x_nchw + 1.0) * 0.5
    x = (x - IMAGENET_MEAN.reshape(1, 3, 1, 1)) / IMAGENET_STD.reshape(1, 3, 1, 1)

    def conv(h, w, b):
        y = lax.conv_general_dilated(h, w, (1, 1), 'SAME',
                                     dimension_numbers=('NCHW', 'OIHW', 'NCHW'))
        return y + b.reshape(1, -1, 1, 1)

    f1 = jnp.maximum(conv(x, params['w0'], params['b0']), 0.0)
    f3 = jnp.maximum(conv(f1, params['w2'], params['b2']), 0.0)
    f4 = lax.reduce_window(f3, -jnp.inf, lax.max, (1, 1, 2, 2), (1, 1, 2, 2), 'VALID')
    return {'1': f1, '4': f4}


def _ref_gram(x):  # NCHW
    n, c, h, w = x.shape
    f = x.reshape(n, c, h * w)
    return jnp.einsum('ncp,ndp->ncd', f, f) / (c * h * w)


def _ref_loss(x, gt, params, lw, pw, sw):
    xf = _ref_vgg(x, params)
    gf = _ref_vgg(gt, params)
    p = sum(jnp.mean(jnp.abs(xf[k] - gf[k])) * lw[k] for k in lw) * pw
    s = sum(jnp.mean(jnp.abs(_ref_gram(xf[k]) - _ref_gram(gf[k]))) * lw[k]
            for k in lw) * sw
    return p, s


# --------------------------------- main ------------------------------------ #

if __name__ == "__main__":
    key = jax.random.PRNGKey(0)
    kx, kg, k0, k1, k2, k3 = jax.random.split(key, 6)

    N, C, H, W = 2, 3, 16, 16
    x = jax.random.uniform(kx, (N, C, H, W), jnp.float32, -1.0, 1.0)
    gt = jax.random.uniform(kg, (N, C, H, W), jnp.float32, -1.0, 1.0)

    C1 = 64  # vgg19 first-block width
    w0 = jax.random.normal(k0, (C1, 3, 3, 3), jnp.float32) / jnp.sqrt(27.0)
    b0 = jax.random.normal(k1, (C1,), jnp.float32) * 0.1
    w2 = jax.random.normal(k2, (C1, C1, 3, 3), jnp.float32) / jnp.sqrt(C1 * 9.0)
    b2 = jax.random.normal(k3, (C1,), jnp.float32) * 0.1

    # TODO(synk): torchvision-pretrained VGG19 weights cannot be loaded here;
    # deterministic random weights stand in for them.
    params = {
        'w0n': fold_input_norm(w0),   # input-norm scale folded into conv1
        'b0': b0,
        'w2': w2,
        'b2': b2,
    }

    percep, style = jax.block_until_ready(jax.jit(perceptual_loss)(x, gt, params))

    ref_p, ref_s = _ref_loss(x, gt, {'w0': w0, 'b0': b0, 'w2': w2, 'b2': b2},
                             LAYER_WEIGHTS, 1.0, 1.0)
    assert bool(jnp.isfinite(percep)) and bool(jnp.isfinite(style))
    assert jnp.allclose(percep, ref_p, rtol=5e-2, atol=1e-3), (percep, ref_p)
    assert jnp.allclose(style, ref_s, rtol=5e-2, atol=1e-3), (style, ref_s)

    print("KERNEL_OK")
</pallas_src>

<mosaic_0001>
module attributes {stable_mosaic.version = 11 : i64} {
  func.func @_conv_mm_kernel(%arg0: i32, %arg1: memref<512x27xbf16, #tpu.memory_space<vmem>>, %arg2: memref<27x64xbf16, #tpu.memory_space<vmem>>, %arg3: memref<1x64xf32, #tpu.memory_space<vmem>>, %arg4: memref<512x64xbf16, #tpu.memory_space<vmem>>) attributes {dimension_semantics = [#tpu.dimension_semantics<parallel>], iteration_bounds = array<i64: 2>, scalar_prefetch = 0 : i64, scratch_operands = 0 : i64, tpu.core_type = #tpu.core_type<tc>, window_params = [{transform_indices = @transform_0, window_bounds = array<i64: 512, 27>}, {pipeline_mode = #tpu.pipeline_mode<synchronous>, transform_indices = @transform_1, window_bounds = array<i64: 27, 64>}, {pipeline_mode = #tpu.pipeline_mode<synchronous>, transform_indices = @transform_2, window_bounds = array<i64: 1, 64>}, {transform_indices = @transform_3, window_bounds = array<i64: 512, 64>}]} {
    %c0 = arith.constant 0 : index
    %c0_0 = arith.constant 0 : index
    %0 = vector.load %arg1[%c0, %c0_0] : memref<512x27xbf16, #tpu.memory_space<vmem>>, vector<512x27xbf16>
    %c0_1 = arith.constant 0 : index
    %c0_2 = arith.constant 0 : index
    %1 = vector.load %arg2[%c0_1, %c0_2] : memref<27x64xbf16, #tpu.memory_space<vmem>>, vector<27x64xbf16>
    %cst = arith.constant dense<0.000000e+00> : vector<512x64xf32>
    %2 = tpu.matmul %0, %1, %cst {dimension_numbers = #tpu.dot_dimension_numbers<[1], [0], [0], [1], [0, 0, 1, 1], [], []>} : vector<512x27xbf16>, vector<27x64xbf16>, vector<512x64xf32> -> vector<512x64xf32>
    %c0_3 = arith.constant 0 : index
    %c0_4 = arith.constant 0 : index
    %3 = vector.load %arg3[%c0_3, %c0_4] : memref<1x64xf32, #tpu.memory_space<vmem>>, vector<1x64xf32>
    %4 = vector.broadcast %3 : vector<1x64xf32> to vector<512x64xf32>
    %5 = arith.addf %2, %4 : vector<512x64xf32>
    %cst_5 = arith.constant 0.000000e+00 : f32
    %6 = vector.broadcast %cst_5 : f32 to vector<512x64xf32>
    %7 = arith.maximumf %5, %6 : vector<512x64xf32>
    %8 = arith.truncf %7 : vector<512x64xf32> to vector<512x64xbf16>
    %c0_6 = arith.constant 0 : index
    %c0_7 = arith.constant 0 : index
    %9 = vector.load %arg4[%c0_6, %c0_7] : memref<512x64xbf16, #tpu.memory_space<vmem>>, vector<512x64xbf16>
    tpu.vector_store %arg4[%c0_6, %c0_7], %8 {strides = array<i32>} : memref<512x64xbf16, #tpu.memory_space<vmem>>, vector<512x64xbf16>,
    return
  }
  func.func @transform_0(%arg0: i32) -> (i32, i32) {
    %c0_i32 = arith.constant 0 : i32
    %c0_i32_0 = arith.constant 0 : i32
    return %arg0, %c0_i32 : i32, i32
  }
  func.func @transform_1(%arg0: i32) -> (i32, i32) {
    %c0_i32 = arith.constant 0 : i32
    %c0_i32_0 = arith.constant 0 : i32
    %c0_i32_1 = arith.constant 0 : i32
    return %c0_i32, %c0_i32_0 : i32, i32
  }
  func.func @transform_2(%arg0: i32) -> (i32, i32) {
    %c0_i32 = arith.constant 0 : i32
    %c0_i32_0 = arith.constant 0 : i32
    %c0_i32_1 = arith.constant 0 : i32
    return %c0_i32, %c0_i32_0 : i32, i32
  }
  func.func @transform_3(%arg0: i32) -> (i32, i32) {
    %c0_i32 = arith.constant 0 : i32
    %c0_i32_0 = arith.constant 0 : i32
    return %arg0, %c0_i32 : i32, i32
  }
}

module attributes {stable_mosaic.version = 11 : i64} {
  func.func @_conv_mm_kernel(%arg0: i32, %arg1: memref<512x576xbf16, #tpu.memory_space<vmem>>, %arg2: memref<576x64xbf16, #tpu.memory_space<vmem>>, %arg3: memref<1x64xf32, #tpu.memory_space<vmem>>, %arg4: memref<512x64xbf16, #tpu.memory_space<vmem>>) attributes {dimension_semantics = [#tpu.dimension_semantics<parallel>], iteration_bounds = array<i64: 2>, scalar_prefetch = 0 : i64, scratch_operands = 0 : i64, tpu.core_type = #tpu.core_type<tc>, window_params = [{transform_indices = @transform_0, window_bounds = array<i64: 512, 576>}, {pipeline_mode = #tpu.pipeline_mode<synchronous>, transform_indices = @transform_1, window_bounds = array<i64: 576, 64>}, {pipeline_mode = #tpu.pipeline_mode<synchronous>, transform_indices = @transform_2, window_bounds = array<i64: 1, 64>}, {transform_indices = @transform_3, window_bounds = array<i64: 512, 64>}]} {
    %c0 = arith.constant 0 : index
    %c0_0 = arith.constant 0 : index
    %0 = vector.load %arg1[%c0, %c0_0] : memref<512x576xbf16, #tpu.memory_space<vmem>>, vector<512x576xbf16>
    %c0_1 = arith.constant 0 : index
    %c0_2 = arith.constant 0 : index
    %1 = vector.load %arg2[%c0_1, %c0_2] : memref<576x64xbf16, #tpu.memory_space<vmem>>, vector<576x64xbf16>
    %cst = arith.constant dense<0.000000e+00> : vector<512x64xf32>
    %2 = tpu.matmul %0, %1, %cst {dimension_numbers = #tpu.dot_dimension_numbers<[1], [0], [0], [1], [0, 0, 1, 1], [], []>} : vector<512x576xbf16>, vector<576x64xbf16>, vector<512x64xf32> -> vector<512x64xf32>
    %c0_3 = arith.constant 0 : index
    %c0_4 = arith.constant 0 : index
    %3 = vector.load %arg3[%c0_3, %c0_4] : memref<1x64xf32, #tpu.memory_space<vmem>>, vector<1x64xf32>
    %4 = vector.broadcast %3 : vector<1x64xf32> to vector<512x64xf32>
    %5 = arith.addf %2, %4 : vector<512x64xf32>
    %cst_5 = arith.constant 0.000000e+00 : f32
    %6 = vector.broadcast %cst_5 : f32 to vector<512x64xf32>
    %7 = arith.maximumf %5, %6 : vector<512x64xf32>
    %8 = arith.truncf %7 : vector<512x64xf32> to vector<512x64xbf16>
    %c0_6 = arith.constant 0 : index
    %c0_7 = arith.constant 0 : index
    %9 = vector.load %arg4[%c0_6, %c0_7] : memref<512x64xbf16, #tpu.memory_space<vmem>>, vector<512x64xbf16>
    tpu.vector_store %arg4[%c0_6, %c0_7], %8 {strides = array<i32>} : memref<512x64xbf16, #tpu.memory_space<vmem>>, vector<512x64xbf16>,
    return
  }
  func.func @transform_0(%arg0: i32) -> (i32, i32) {
    %c0_i32 = arith.constant 0 : i32
    %c0_i32_0 = arith.constant 0 : i32
    return %arg0, %c0_i32 : i32, i32
  }
  func.func @transform_1(%arg0: i32) -> (i32, i32) {
    %c0_i32 = arith.constant 0 : i32
    %c0_i32_0 = arith.constant 0 : i32
    %c0_i32_1 = arith.constant 0 : i32
    return %c0_i32, %c0_i32_0 : i32, i32
  }
  func.func @transform_2(%arg0: i32) -> (i32, i32) {
    %c0_i32 = arith.constant 0 : i32
    %c0_i32_0 = arith.constant 0 : i32
    %c0_i32_1 = arith.constant 0 : i32
    return %c0_i32, %c0_i32_0 : i32, i32
  }
  func.func @transform_3(%arg0: i32) -> (i32, i32) {
    %c0_i32 = arith.constant 0 : i32
    %c0_i32_0 = arith.constant 0 : i32
    return %arg0, %c0_i32 : i32, i32
  }
}

module attributes {stable_mosaic.version = 11 : i64} {
  func.func @_pool_kernel(%arg0: i32, %arg1: memref<32x8x128xbf16, #tpu.memory_space<vmem>>, %arg2: memref<32x8x128xbf16, #tpu.memory_space<vmem>>, %arg3: memref<32x8x64xbf16, #tpu.memory_space<vmem>>) attributes {dimension_semantics = [#tpu.dimension_semantics<parallel>], iteration_bounds = array<i64: 1>, scalar_prefetch = 0 : i64, scratch_operands = 0 : i64, tpu.core_type = #tpu.core_type<tc>, window_params = [{transform_indices = @transform_0, window_bounds = array<i64: 32, 8, 128>}, {transform_indices = @transform_1, window_bounds = array<i64: 32, 8, 128>}, {transform_indices = @transform_2, window_bounds = array<i64: 32, 8, 64>}]} {
    %c0 = arith.constant 0 : index
    %c0_0 = arith.constant 0 : index
    %c0_1 = arith.constant 0 : index
    %0 = vector.load %arg1[%c0, %c0_0, %c0_1] : memref<32x8x128xbf16, #tpu.memory_space<vmem>>, vector<32x8x128xbf16>
    %c0_2 = arith.constant 0 : index
    %c0_3 = arith.constant 0 : index
    %c0_4 = arith.constant 0 : index
    %1 = vector.load %arg2[%c0_2, %c0_3, %c0_4] : memref<32x8x128xbf16, #tpu.memory_space<vmem>>, vector<32x8x128xbf16>
    %2 = arith.maximumf %0, %1 : vector<32x8x128xbf16>
    %3 = vector.extract_strided_slice %2 {offsets = [0, 0, 0], sizes = [32, 8, 64], strides = [1, 1, 1]} : vector<32x8x128xbf16> to vector<32x8x64xbf16>
    %4 = vector.extract_strided_slice %2 {offsets = [0, 0, 64], sizes = [32, 8, 64], strides = [1, 1, 1]} : vector<32x8x128xbf16> to vector<32x8x64xbf16>
    %5 = arith.maximumf %3, %4 : vector<32x8x64xbf16>
    %c0_5 = arith.constant 0 : index
    %c0_6 = arith.constant 0 : index
    %c0_7 = arith.constant 0 : index
    %6 = vector.load %arg3[%c0_5, %c0_6, %c0_7] : memref<32x8x64xbf16, #tpu.memory_space<vmem>>, vector<32x8x64xbf16>
    tpu.vector_store %arg3[%c0_5, %c0_6, %c0_7], %5 {strides = array<i32>} : memref<32x8x64xbf16, #tpu.memory_space<vmem>>, vector<32x8x64xbf16>,
    return
  }
  func.func @transform_0(%arg0: i32) -> (i32, i32, i32) {
    %c0_i32 = arith.constant 0 : i32
    %c0_i32_0 = arith.constant 0 : i32
    %c0_i32_1 = arith.constant 0 : i32
    return %arg0, %c0_i32, %c0_i32_0 : i32, i32, i32
  }
  func.func @transform_1(%arg0: i32) -> (i32, i32, i32) {
    %c1_i32 = arith.constant 1 : i32
    %c0_i32 = arith.constant 0 : i32
    %c0_i32_0 = arith.constant 0 : i32
    return %arg0, %c1_i32, %c0_i32 : i32, i32, i32
  }
  func.func @transform_2(%arg0: i32) -> (i32, i32, i32) {
    %c0_i32 = arith.constant 0 : i32
    %c0_i32_0 = arith.constant 0 : i32
    %c0_i32_1 = arith.constant 0 : i32
    return %arg0, %c0_i32, %c0_i32_0 : i32, i32, i32
  }
}

module attributes {stable_mosaic.version = 11 : i64} {
  func.func @_gram_kernel(%arg0: i32, %arg1: i32, %arg2: memref<1x64x64xbf16, #tpu.memory_space<vmem>>, %arg3: memref<1x64x64xf32, #tpu.memory_space<vmem>>, %arg4: memref<64x64xf32, #tpu.memory_space<vmem>>) attributes {dimension_semantics = [#tpu.dimension_semantics<parallel>, #tpu.dimension_semantics<arbitrary>], iteration_bounds = array<i64: 4, 1>, scalar_prefetch = 0 : i64, scratch_operands = 1 : i64, tpu.core_type = #tpu.core_type<tc>, window_params = [{transform_indices = @transform_0, window_bounds = array<i64: 1, 64, 64>}, {transform_indices = @transform_1, window_bounds = array<i64: 1, 64, 64>}]} {
    %c0_i32 = arith.constant 0 : i32
    %0 = arith.cmpi eq, %arg1, %c0_i32 : i32
    %1 = arith.extui %0 : i1 to i32
    %c0_i32_0 = arith.constant 0 : i32
    %2 = arith.cmpi ne, %1, %c0_i32_0 : i32
    scf.if %2 {
      %cst_9 = arith.constant 0.000000e+00 : f32
      %12 = vector.broadcast %cst_9 : f32 to vector<64x64xf32>
      %c0_10 = arith.constant 0 : index
      %c0_11 = arith.constant 0 : index
      %13 = vector.load %arg4[%c0_10, %c0_11] : memref<64x64xf32, #tpu.memory_space<vmem>>, vector<64x64xf32>
      tpu.vector_store %arg4[%c0_10, %c0_11], %12 {strides = array<i32>} : memref<64x64xf32, #tpu.memory_space<vmem>>, vector<64x64xf32>,
    } else {
    }
    %c0 = arith.constant 0 : index
    %c0_1 = arith.constant 0 : index
    %c0_2 = arith.constant 0 : index
    %3 = vector.load %arg2[%c0, %c0_1, %c0_2] : memref<1x64x64xbf16, #tpu.memory_space<vmem>>, vector<1x64x64xbf16>
    %4 = vector.shape_cast %3 : vector<1x64x64xbf16> to vector<64x64xbf16>
    %c0_3 = arith.constant 0 : index
    %c0_4 = arith.constant 0 : index
    %5 = vector.load %arg4[%c0_3, %c0_4] : memref<64x64xf32, #tpu.memory_space<vmem>>, vector<64x64xf32>
    %cst = arith.constant dense<0.000000e+00> : vector<64x64xf32>
    %6 = tpu.matmul %4, %4, %cst {dimension_numbers = #tpu.dot_dimension_numbers<[0], [0], [1], [1], [0, 1, 1, 1], [], []>} : vector<64x64xbf16>, vector<64x64xbf16>, vector<64x64xf32> -> vector<64x64xf32>
    %7 = arith.addf %5, %6 : vector<64x64xf32>
    %c0_5 = arith.constant 0 : index
    %c0_6 = arith.constant 0 : index
    %8 = vector.load %arg4[%c0_5, %c0_6] : memref<64x64xf32, #tpu.memory_space<vmem>>, vector<64x64xf32>
    tpu.vector_store %arg4[%c0_5, %c0_6], %7 {strides = array<i32>} : memref<64x64xf32, #tpu.memory_space<vmem>>, vector<64x64xf32>,
    %c0_i32_7 = arith.constant 0 : i32
    %9 = arith.cmpi eq, %arg1, %c0_i32_7 : i32
    %10 = arith.extui %9 : i1 to i32
    %c0_i32_8 = arith.constant 0 : i32
    %11 = arith.cmpi ne, %10, %c0_i32_8 : i32
    scf.if %11 {
      %c0_9 = arith.constant 0 : index
      %c0_10 = arith.constant 0 : index
      %12 = vector.load %arg4[%c0_9, %c0_10] : memref<64x64xf32, #tpu.memory_space<vmem>>, vector<64x64xf32>
      %cst_11 = arith.constant 2.44140625E-4 : f32
      %13 = vector.broadcast %cst_11 : f32 to vector<64x64xf32>
      %14 = arith.mulf %12, %13 : vector<64x64xf32>
      %c0_12 = arith.constant 0 : index
      %c0_13 = arith.constant 0 : index
      %c0_14 = arith.constant 0 : index
      %15 = vector.load %arg3[%c0_12, %c0_13, %c0_14] : memref<1x64x64xf32, #tpu.memory_space<vmem>>, vector<1x64x64xf32>
      %16 = vector.shape_cast %15 : vector<1x64x64xf32> to vector<64x64xf32>
      %17 = vector.shape_cast %14 : vector<64x64xf32> to vector<1x64x64xf32>
      tpu.vector_store %arg3[%c0_12, %c0_13, %c0_14], %17 {strides = array<i32>} : memref<1x64x64xf32, #tpu.memory_space<vmem>>, vector<1x64x64xf32>,
    } else {
    }
    return
  }
  func.func @transform_0(%arg0: i32, %arg1: i32) -> (i32, i32, i32) {
    %c0_i32 = arith.constant 0 : i32
    %c0_i32_0 = arith.constant 0 : i32
    return %arg0, %arg1, %c0_i32 : i32, i32, i32
  }
  func.func @transform_1(%arg0: i32, %arg1: i32) -> (i32, i32, i32) {
    %c0_i32 = arith.constant 0 : i32
    %c0_i32_0 = arith.constant 0 : i32
    %c0_i32_1 = arith.constant 0 : i32
    return %arg0, %c0_i32, %c0_i32_0 : i32, i32, i32
  }
}

module attributes {stable_mosaic.version = 11 : i64} {
  func.func @_l1_sum_kernel(%arg0: i32, %arg1: memref<1x128x64xf32, #tpu.memory_space<vmem>>, %arg2: memref<1x128x64xf32, #tpu.memory_space<vmem>>, %arg3: memref<1x64xf32, #tpu.memory_space<vmem>>, %arg4: memref<1x64xf32, #tpu.memory_space<vmem>>) attributes {dimension_semantics = [#tpu.dimension_semantics<arbitrary>], iteration_bounds = array<i64: 1>, scalar_prefetch = 0 : i64, scratch_operands = 1 : i64, tpu.core_type = #tpu.core_type<tc>, window_params = [{transform_indices = @transform_0, window_bounds = array<i64: 1, 128, 64>}, {transform_indices = @transform_1, window_bounds = array<i64: 1, 128, 64>}, {pipeline_mode = #tpu.pipeline_mode<synchronous>, transform_indices = @transform_2, window_bounds = array<i64: 1, 64>}]} {
    %c0_i32 = arith.constant 0 : i32
    %0 = arith.cmpi eq, %arg0, %c0_i32 : i32
    %1 = arith.extui %0 : i1 to i32
    %c0_i32_0 = arith.constant 0 : i32
    %2 = arith.cmpi ne, %1, %c0_i32_0 : i32
    scf.if %2 {
      %cst_12 = arith.constant 0.000000e+00 : f32
      %17 = vector.broadcast %cst_12 : f32 to vector<1x64xf32>
      %c0_13 = arith.constant 0 : index
      %c0_14 = arith.constant 0 : index
      %18 = vector.load %arg4[%c0_13, %c0_14] : memref<1x64xf32, #tpu.memory_space<vmem>>, vector<1x64xf32>
      tpu.vector_store %arg4[%c0_13, %c0_14], %17 {strides = array<i32>} : memref<1x64xf32, #tpu.memory_space<vmem>>, vector<1x64xf32>,
    } else {
    }
    %c0 = arith.constant 0 : index
    %c0_1 = arith.constant 0 : index
    %c0_2 = arith.constant 0 : index
    %3 = vector.load %arg1[%c0, %c0_1, %c0_2] : memref<1x128x64xf32, #tpu.memory_space<vmem>>, vector<1x128x64xf32>
    %4 = vector.shape_cast %3 : vector<1x128x64xf32> to vector<128x64xf32>
    %c0_3 = arith.constant 0 : index
    %c0_4 = arith.constant 0 : index
    %c0_5 = arith.constant 0 : index
    %5 = vector.load %arg2[%c0_3, %c0_4, %c0_5] : memref<1x128x64xf32, #tpu.memory_space<vmem>>, vector<1x128x64xf32>
    %6 = vector.shape_cast %5 : vector<1x128x64xf32> to vector<128x64xf32>
    %7 = arith.subf %4, %6 : vector<128x64xf32>
    %c0_6 = arith.constant 0 : index
    %c0_7 = arith.constant 0 : index
    %8 = vector.load %arg4[%c0_6, %c0_7] : memref<1x64xf32, #tpu.memory_space<vmem>>, vector<1x64xf32>
    %9 = math.absf %7 : vector<128x64xf32>
    %cst = arith.constant dense<0.000000e+00> : vector<64xf32>
    %10 = vector.multi_reduction <add>, %9, %cst [0] : vector<128x64xf32> to vector<64xf32>
    %11 = vector.shape_cast %10 : vector<64xf32> to vector<1x64xf32>
    %12 = arith.addf %8, %11 : vector<1x64xf32>
    %c0_8 = arith.constant 0 : index
    %c0_9 = arith.constant 0 : index
    %13 = vector.load %arg4[%c0_8, %c0_9] : memref<1x64xf32, #tpu.memory_space<vmem>>, vector<1x64xf32>
    tpu.vector_store %arg4[%c0_8, %c0_9], %12 {strides = array<i32>} : memref<1x64xf32, #tpu.memory_space<vmem>>, vector<1x64xf32>,
    %c0_i32_10 = arith.constant 0 : i32
    %14 = arith.cmpi eq, %arg0, %c0_i32_10 : i32
    %15 = arith.extui %14 : i1 to i32
    %c0_i32_11 = arith.constant 0 : i32
    %16 = arith.cmpi ne, %15, %c0_i32_11 : i32
    scf.if %16 {
      %c0_12 = arith.constant 0 : index
      %c0_13 = arith.constant 0 : index
      %17 = vector.load %arg4[%c0_12, %c0_13] : memref<1x64xf32, #tpu.memory_space<vmem>>, vector<1x64xf32>
      %c0_14 = arith.constant 0 : index
      %c0_15 = arith.constant 0 : index
      %18 = vector.load %arg3[%c0_14, %c0_15] : memref<1x64xf32, #tpu.memory_space<vmem>>, vector<1x64xf32>
      tpu.vector_store %arg3[%c0_14, %c0_15], %17 {strides = array<i32>} : memref<1x64xf32, #tpu.memory_space<vmem>>, vector<1x64xf32>,
    } else {
    }
    return
  }
  func.func @transform_0(%arg0: i32) -> (i32, i32, i32) {
    %c0_i32 = arith.constant 0 : i32
    %c0_i32_0 = arith.constant 0 : i32
    %c0_i32_1 = arith.constant 0 : i32
    return %c0_i32, %arg0, %c0_i32_0 : i32, i32, i32
  }
  func.func @transform_1(%arg0: i32) -> (i32, i32, i32) {
    %c1_i32 = arith.constant 1 : i32
    %c0_i32 = arith.constant 0 : i32
    %c0_i32_0 = arith.constant 0 : i32
    return %c1_i32, %arg0, %c0_i32 : i32, i32, i32
  }
  func.func @transform_2(%arg0: i32) -> (i32, i32) {
    %c0_i32 = arith.constant 0 : i32
    %c0_i32_0 = arith.constant 0 : i32
    %c0_i32_1 = arith.constant 0 : i32
    return %c0_i32, %c0_i32_0 : i32, i32
  }
}

module attributes {stable_mosaic.version = 11 : i64} {
  func.func @_gram_kernel(%arg0: i32, %arg1: i32, %arg2: memref<1x256x64xbf16, #tpu.memory_space<vmem>>, %arg3: memref<1x64x64xf32, #tpu.memory_space<vmem>>, %arg4: memref<64x64xf32, #tpu.memory_space<vmem>>) attributes {dimension_semantics = [#tpu.dimension_semantics<parallel>, #tpu.dimension_semantics<arbitrary>], iteration_bounds = array<i64: 4, 1>, scalar_prefetch = 0 : i64, scratch_operands = 1 : i64, tpu.core_type = #tpu.core_type<tc>, window_params = [{transform_indices = @transform_0, window_bounds = array<i64: 1, 256, 64>}, {transform_indices = @transform_1, window_bounds = array<i64: 1, 64, 64>}]} {
    %c0_i32 = arith.constant 0 : i32
    %0 = arith.cmpi eq, %arg1, %c0_i32 : i32
    %1 = arith.extui %0 : i1 to i32
    %c0_i32_0 = arith.constant 0 : i32
    %2 = arith.cmpi ne, %1, %c0_i32_0 : i32
    scf.if %2 {
      %cst_9 = arith.constant 0.000000e+00 : f32
      %12 = vector.broadcast %cst_9 : f32 to vector<64x64xf32>
      %c0_10 = arith.constant 0 : index
      %c0_11 = arith.constant 0 : index
      %13 = vector.load %arg4[%c0_10, %c0_11] : memref<64x64xf32, #tpu.memory_space<vmem>>, vector<64x64xf32>
      tpu.vector_store %arg4[%c0_10, %c0_11], %12 {strides = array<i32>} : memref<64x64xf32, #tpu.memory_space<vmem>>, vector<64x64xf32>,
    } else {
    }
    %c0 = arith.constant 0 : index
    %c0_1 = arith.constant 0 : index
    %c0_2 = arith.constant 0 : index
    %3 = vector.load %arg2[%c0, %c0_1, %c0_2] : memref<1x256x64xbf16, #tpu.memory_space<vmem>>, vector<1x256x64xbf16>
    %4 = vector.shape_cast %3 : vector<1x256x64xbf16> to vector<256x64xbf16>
    %c0_3 = arith.constant 0 : index
    %c0_4 = arith.constant 0 : index
    %5 = vector.load %arg4[%c0_3, %c0_4] : memref<64x64xf32, #tpu.memory_space<vmem>>, vector<64x64xf32>
    %cst = arith.constant dense<0.000000e+00> : vector<64x64xf32>
    %6 = tpu.matmul %4, %4, %cst {dimension_numbers = #tpu.dot_dimension_numbers<[0], [0], [1], [1], [0, 1, 1, 1], [], []>} : vector<256x64xbf16>, vector<256x64xbf16>, vector<64x64xf32> -> vector<64x64xf32>
    %7 = arith.addf %5, %6 : vector<64x64xf32>
    %c0_5 = arith.constant 0 : index
    %c0_6 = arith.constant 0 : index
    %8 = vector.load %arg4[%c0_5, %c0_6] : memref<64x64xf32, #tpu.memory_space<vmem>>, vector<64x64xf32>
    tpu.vector_store %arg4[%c0_5, %c0_6], %7 {strides = array<i32>} : memref<64x64xf32, #tpu.memory_space<vmem>>, vector<64x64xf32>,
    %c0_i32_7 = arith.constant 0 : i32
    %9 = arith.cmpi eq, %arg1, %c0_i32_7 : i32
    %10 = arith.extui %9 : i1 to i32
    %c0_i32_8 = arith.constant 0 : i32
    %11 = arith.cmpi ne, %10, %c0_i32_8 : i32
    scf.if %11 {
      %c0_9 = arith.constant 0 : index
      %c0_10 = arith.constant 0 : index
      %12 = vector.load %arg4[%c0_9, %c0_10] : memref<64x64xf32, #tpu.memory_space<vmem>>, vector<64x64xf32>
      %cst_11 = arith.constant 6.10351563E-5 : f32
      %13 = vector.broadcast %cst_11 : f32 to vector<64x64xf32>
      %14 = arith.mulf %12, %13 : vector<64x64xf32>
      %c0_12 = arith.constant 0 : index
      %c0_13 = arith.constant 0 : index
      %c0_14 = arith.constant 0 : index
      %15 = vector.load %arg3[%c0_12, %c0_13, %c0_14] : memref<1x64x64xf32, #tpu.memory_space<vmem>>, vector<1x64x64xf32>
      %16 = vector.shape_cast %15 : vector<1x64x64xf32> to vector<64x64xf32>
      %17 = vector.shape_cast %14 : vector<64x64xf32> to vector<1x64x64xf32>
      tpu.vector_store %arg3[%c0_12, %c0_13, %c0_14], %17 {strides = array<i32>} : memref<1x64x64xf32, #tpu.memory_space<vmem>>, vector<1x64x64xf32>,
    } else {
    }
    return
  }
  func.func @transform_0(%arg0: i32, %arg1: i32) -> (i32, i32, i32) {
    %c0_i32 = arith.constant 0 : i32
    %c0_i32_0 = arith.constant 0 : i32
    return %arg0, %arg1, %c0_i32 : i32, i32, i32
  }
  func.func @transform_1(%arg0: i32, %arg1: i32) -> (i32, i32, i32) {
    %c0_i32 = arith.constant 0 : i32
    %c0_i32_0 = arith.constant 0 : i32
    %c0_i32_1 = arith.constant 0 : i32
    return %arg0, %c0_i32, %c0_i32_0 : i32, i32, i32
  }
}

module attributes {stable_mosaic.version = 11 : i64} {
  func.func @_l1_sum_kernel(%arg0: i32, %arg1: memref<1x128x64xbf16, #tpu.memory_space<vmem>>, %arg2: memref<1x128x64xbf16, #tpu.memory_space<vmem>>, %arg3: memref<1x64xf32, #tpu.memory_space<vmem>>, %arg4: memref<1x64xf32, #tpu.memory_space<vmem>>) attributes {dimension_semantics = [#tpu.dimension_semantics<arbitrary>], iteration_bounds = array<i64: 1>, scalar_prefetch = 0 : i64, scratch_operands = 1 : i64, tpu.core_type = #tpu.core_type<tc>, window_params = [{transform_indices = @transform_0, window_bounds = array<i64: 1, 128, 64>}, {transform_indices = @transform_1, window_bounds = array<i64: 1, 128, 64>}, {pipeline_mode = #tpu.pipeline_mode<synchronous>, transform_indices = @transform_2, window_bounds = array<i64: 1, 64>}]} {
    %c0_i32 = arith.constant 0 : i32
    %0 = arith.cmpi eq, %arg0, %c0_i32 : i32
    %1 = arith.extui %0 : i1 to i32
    %c0_i32_0 = arith.constant 0 : i32
    %2 = arith.cmpi ne, %1, %c0_i32_0 : i32
    scf.if %2 {
      %cst_12 = arith.constant 0.000000e+00 : f32
      %19 = vector.broadcast %cst_12 : f32 to vector<1x64xf32>
      %c0_13 = arith.constant 0 : index
      %c0_14 = arith.constant 0 : index
      %20 = vector.load %arg4[%c0_13, %c0_14] : memref<1x64xf32, #tpu.memory_space<vmem>>, vector<1x64xf32>
      tpu.vector_store %arg4[%c0_13, %c0_14], %19 {strides = array<i32>} : memref<1x64xf32, #tpu.memory_space<vmem>>, vector<1x64xf32>,
    } else {
    }
    %c0 = arith.constant 0 : index
    %c0_1 = arith.constant 0 : index
    %c0_2 = arith.constant 0 : index
    %3 = vector.load %arg1[%c0, %c0_1, %c0_2] : memref<1x128x64xbf16, #tpu.memory_space<vmem>>, vector<1x128x64xbf16>
    %4 = vector.shape_cast %3 : vector<1x128x64xbf16> to vector<128x64xbf16>
    %5 = arith.extf %4 : vector<128x64xbf16> to vector<128x64xf32>
    %c0_3 = arith.constant 0 : index
    %c0_4 = arith.constant 0 : index
    %c0_5 = arith.constant 0 : index
    %6 = vector.load %arg2[%c0_3, %c0_4, %c0_5] : memref<1x128x64xbf16, #tpu.memory_space<vmem>>, vector<1x128x64xbf16>
    %7 = vector.shape_cast %6 : vector<1x128x64xbf16> to vector<128x64xbf16>
    %8 = arith.extf %7 : vector<128x64xbf16> to vector<128x64xf32>
    %9 = arith.subf %5, %8 : vector<128x64xf32>
    %c0_6 = arith.constant 0 : index
    %c0_7 = arith.constant 0 : index
    %10 = vector.load %arg4[%c0_6, %c0_7] : memref<1x64xf32, #tpu.memory_space<vmem>>, vector<1x64xf32>
    %11 = math.absf %9 : vector<128x64xf32>
    %cst = arith.constant dense<0.000000e+00> : vector<64xf32>
    %12 = vector.multi_reduction <add>, %11, %cst [0] : vector<128x64xf32> to vector<64xf32>
    %13 = vector.shape_cast %12 : vector<64xf32> to vector<1x64xf32>
    %14 = arith.addf %10, %13 : vector<1x64xf32>
    %c0_8 = arith.constant 0 : index
    %c0_9 = arith.constant 0 : index
    %15 = vector.load %arg4[%c0_8, %c0_9] : memref<1x64xf32, #tpu.memory_space<vmem>>, vector<1x64xf32>
    tpu.vector_store %arg4[%c0_8, %c0_9], %14 {strides = array<i32>} : memref<1x64xf32, #tpu.memory_space<vmem>>, vector<1x64xf32>,
    %c0_i32_10 = arith.constant 0 : i32
    %16 = arith.cmpi eq, %arg0, %c0_i32_10 : i32
    %17 = arith.extui %16 : i1 to i32
    %c0_i32_11 = arith.constant 0 : i32
    %18 = arith.cmpi ne, %17, %c0_i32_11 : i32
    scf.if %18 {
      %c0_12 = arith.constant 0 : index
      %c0_13 = arith.constant 0 : index
      %19 = vector.load %arg4[%c0_12, %c0_13] : memref<1x64xf32, #tpu.memory_space<vmem>>, vector<1x64xf32>
      %c0_14 = arith.constant 0 : index
      %c0_15 = arith.constant 0 : index
      %20 = vector.load %arg3[%c0_14, %c0_15] : memref<1x64xf32, #tpu.memory_space<vmem>>, vector<1x64xf32>
      tpu.vector_store %arg3[%c0_14, %c0_15], %19 {strides = array<i32>} : memref<1x64xf32, #tpu.memory_space<vmem>>, vector<1x64xf32>,
    } else {
    }
    return
  }
  func.func @transform_0(%arg0: i32) -> (i32, i32, i32) {
    %c0_i32 = arith.constant 0 : i32
    %c0_i32_0 = arith.constant 0 : i32
    %c0_i32_1 = arith.constant 0 : i32
    return %c0_i32, %arg0, %c0_i32_0 : i32, i32, i32
  }
  func.func @transform_1(%arg0: i32) -> (i32, i32, i32) {
    %c1_i32 = arith.constant 1 : i32
    %c0_i32 = arith.constant 0 : i32
    %c0_i32_0 = arith.constant 0 : i32
    return %c1_i32, %arg0, %c0_i32 : i32, i32, i32
  }
  func.func @transform_2(%arg0: i32) -> (i32, i32) {
    %c0_i32 = arith.constant 0 : i32
    %c0_i32_0 = arith.constant 0 : i32
    %c0_i32_1 = arith.constant 0 : i32
    return %c0_i32, %c0_i32_0 : i32, i32
  }
}

module attributes {stable_mosaic.version = 11 : i64} {
  func.func @_l1_sum_kernel(%arg0: i32, %arg1: memref<1x512x64xbf16, #tpu.memory_space<vmem>>, %arg2: memref<1x512x64xbf16, #tpu.memory_space<vmem>>, %arg3: memref<1x64xf32, #tpu.memory_space<vmem>>, %arg4: memref<1x64xf32, #tpu.memory_space<vmem>>) attributes {dimension_semantics = [#tpu.dimension_semantics<arbitrary>], iteration_bounds = array<i64: 1>, scalar_prefetch = 0 : i64, scratch_operands = 1 : i64, tpu.core_type = #tpu.core_type<tc>, window_params = [{transform_indices = @transform_0, window_bounds = array<i64: 1, 512, 64>}, {transform_indices = @transform_1, window_bounds = array<i64: 1, 512, 64>}, {pipeline_mode = #tpu.pipeline_mode<synchronous>, transform_indices = @transform_2, window_bounds = array<i64: 1, 64>}]} {
    %c0_i32 = arith.constant 0 : i32
    %0 = arith.cmpi eq, %arg0, %c0_i32 : i32
    %1 = arith.extui %0 : i1 to i32
    %c0_i32_0 = arith.constant 0 : i32
    %2 = arith.cmpi ne, %1, %c0_i32_0 : i32
    scf.if %2 {
      %cst_12 = arith.constant 0.000000e+00 : f32
      %19 = vector.broadcast %cst_12 : f32 to vector<1x64xf32>
      %c0_13 = arith.constant 0 : index
      %c0_14 = arith.constant 0 : index
      %20 = vector.load %arg4[%c0_13, %c0_14] : memref<1x64xf32, #tpu.memory_space<vmem>>, vector<1x64xf32>
      tpu.vector_store %arg4[%c0_13, %c0_14], %19 {strides = array<i32>} : memref<1x64xf32, #tpu.memory_space<vmem>>, vector<1x64xf32>,
    } else {
    }
    %c0 = arith.constant 0 : index
    %c0_1 = arith.constant 0 : index
    %c0_2 = arith.constant 0 : index
    %3 = vector.load %arg1[%c0, %c0_1, %c0_2] : memref<1x512x64xbf16, #tpu.memory_space<vmem>>, vector<1x512x64xbf16>
    %4 = vector.shape_cast %3 : vector<1x512x64xbf16> to vector<512x64xbf16>
    %5 = arith.extf %4 : vector<512x64xbf16> to vector<512x64xf32>
    %c0_3 = arith.constant 0 : index
    %c0_4 = arith.constant 0 : index
    %c0_5 = arith.constant 0 : index
    %6 = vector.load %arg2[%c0_3, %c0_4, %c0_5] : memref<1x512x64xbf16, #tpu.memory_space<vmem>>, vector<1x512x64xbf16>
    %7 = vector.shape_cast %6 : vector<1x512x64xbf16> to vector<512x64xbf16>
    %8 = arith.extf %7 : vector<512x64xbf16> to vector<512x64xf32>
    %9 = arith.subf %5, %8 : vector<512x64xf32>
    %c0_6 = arith.constant 0 : index
    %c0_7 = arith.constant 0 : index
    %10 = vector.load %arg4[%c0_6, %c0_7] : memref<1x64xf32, #tpu.memory_space<vmem>>, vector<1x64xf32>
    %11 = math.absf %9 : vector<512x64xf32>
    %cst = arith.constant dense<0.000000e+00> : vector<64xf32>
    %12 = vector.multi_reduction <add>, %11, %cst [0] : vector<512x64xf32> to vector<64xf32>
    %13 = vector.shape_cast %12 : vector<64xf32> to vector<1x64xf32>
    %14 = arith.addf %10, %13 : vector<1x64xf32>
    %c0_8 = arith.constant 0 : index
    %c0_9 = arith.constant 0 : index
    %15 = vector.load %arg4[%c0_8, %c0_9] : memref<1x64xf32, #tpu.memory_space<vmem>>, vector<1x64xf32>
    tpu.vector_store %arg4[%c0_8, %c0_9], %14 {strides = array<i32>} : memref<1x64xf32, #tpu.memory_space<vmem>>, vector<1x64xf32>,
    %c0_i32_10 = arith.constant 0 : i32
    %16 = arith.cmpi eq, %arg0, %c0_i32_10 : i32
    %17 = arith.extui %16 : i1 to i32
    %c0_i32_11 = arith.constant 0 : i32
    %18 = arith.cmpi ne, %17, %c0_i32_11 : i32
    scf.if %18 {
      %c0_12 = arith.constant 0 : index
      %c0_13 = arith.constant 0 : index
      %19 = vector.load %arg4[%c0_12, %c0_13] : memref<1x64xf32, #tpu.memory_space<vmem>>, vector<1x64xf32>
      %c0_14 = arith.constant 0 : index
      %c0_15 = arith.constant 0 : index
      %20 = vector.load %arg3[%c0_14, %c0_15] : memref<1x64xf32, #tpu.memory_space<vmem>>, vector<1x64xf32>
      tpu.vector_store %arg3[%c0_14, %c0_15], %19 {strides = array<i32>} : memref<1x64xf32, #tpu.memory_space<vmem>>, vector<1x64xf32>,
    } else {
    }
    return
  }
  func.func @transform_0(%arg0: i32) -> (i32, i32, i32) {
    %c0_i32 = arith.constant 0 : i32
    %c0_i32_0 = arith.constant 0 : i32
    %c0_i32_1 = arith.constant 0 : i32
    return %c0_i32, %arg0, %c0_i32_0 : i32, i32, i32
  }
  func.func @transform_1(%arg0: i32) -> (i32, i32, i32) {
    %c1_i32 = arith.constant 1 : i32
    %c0_i32 = arith.constant 0 : i32
    %c0_i32_0 = arith.constant 0 : i32
    return %c1_i32, %arg0, %c0_i32 : i32, i32, i32
  }
  func.func @transform_2(%arg0: i32) -> (i32, i32) {
    %c0_i32 = arith.constant 0 : i32
    %c0_i32_0 = arith.constant 0 : i32
    %c0_i32_1 = arith.constant 0 : i32
    return %c0_i32, %c0_i32_0 : i32, i32
  }
}

</mosaic_0001>

<llo_original>
// kernel: perceptual_loss.9
$region0: #{perceptual_loss.9}
  #allocation0 [shape = 'u32[]', space=smem, size = 0x4, offset = 0x4, fixed_abs, tag = 'smem constant byte address 0x4 - core index']
  #allocation1 [shape = 'u32[144,128]{1,0:T(1,128)}', space=vmem, size = 0x12000, scoped, tag = 'internal scratch']
  %s0 = inlined_call_operand.vmem [shape: bf16[1024,27], index: 0, kind: input, shape index: {}]
  %s1 = inlined_call_operand.vmem [shape: bf16[27,64], index: 1, kind: input, shape index: {}]
  %s2 = inlined_call_operand.vmem [shape: f32[1,64], index: 2, kind: input, shape index: {}]
  %s3 = inlined_call_operand.vmem [shape: bf16[1024,64], index: 3, kind: output, shape index: {}]
  %s4 = sld [smem:[#allocation0]]
  $region45: #{perceptual_loss.9} parent=0
    _
  %s6 = ssub.s32 1, %s4
  %s7 = scalar_select 0, %s6, %s4
  loop: start=0, step=1, limit=4
  $region2: #{perceptual_loss.9} parent=0 // loop_pre_header
    _
  $region3: #{perceptual_loss.9} parent=0 // loop_header
    %s9 = sphi 0, %s13
    %p10 = scmp.ge.s32.totalorder %s9, 4
    %s19 = sphi 0, %s21
    %s22 = sphi 0, %s19
    %s23 = sphi 0, %s22
    %s39 = sphi 0, %s23
    %s43 = sphi 0, %s43
    %s45 = sphi 0, %s43
    %s46 = sphi 0, %s45
    %s60 = sphi 0, %s46
    %s64 = sphi 0, %s64
    %s66 = sphi 0, %s64
    %s67 = sphi 0, %s66
    %s81 = sphi 0, %s67
    %s87 = sphi 0, %s89
    %s90 = sphi 0, %s87
    %s91 = sphi 0, %s90
    %s107 = sphi 0, %s91
  $region4: #{perceptual_loss.9} parent=0 // loop_header_branch
    %12 = sbr.rel (%p10) target = $region8
  $region5: #{perceptual_loss.9} parent=0 // loop_body
    %s14 = ssub.s32 %s9, 1
    %s15 = ssub.s32 %s9, 2
    %s16 = sadd.s32 %s9, 1
    %s17 = ssub.s32 %s9, %s16
    %p18 = scmp.eq.s32.totalorder %s17, 0
    %s20 = sadd.s32 %s19, 1
    %s21 = scalar_select %p18, %s19, %s20
    %p24 = pneg %p18
    %p25 = scmp.eq.s32.totalorder %s9, 1
    %p26 = por %p24, %p25
    %p27 = scmp.ne.s32.totalorder %s19, %s22
    %p28 = scmp.eq.s32.totalorder %s9, 0
    %p29 = por %p27, %p28
    %p30 = scmp.ne.s32.totalorder %s19, %s22
    %p31 = scmp.eq.s32.totalorder %s14, 1
    %p32 = por %p30, %p31
    %p33 = scmp.ne.s32.totalorder %s22, %s23
    %p34 = scmp.eq.s32.totalorder %s14, 0
    %p35 = por %p33, %p34
    %p36 = scmp.ne.s32.totalorder %s22, %s23
    %p37 = scmp.eq.s32.totalorder %s15, 1
    %p38 = por %p36, %p37
    %p40 = scmp.ne.s32.totalorder %s23, %s39
    %p41 = scmp.eq.s32.totalorder %s15, 0
    %p42 = por %p40, %p41
    %s44 = sadd.s32 %s43, 1
    %p47 = scmp.eq.s32.totalorder %s9, 1
    %p48 = scmp.ne.s32.totalorder %s43, %s45
    %p49 = scmp.eq.s32.totalorder %s9, 0
    %p50 = por %p48, %p49
    %p51 = scmp.ne.s32.totalorder %s43, %s45
    %p52 = scmp.eq.s32.totalorder %s14, 1
    %p53 = por %p51, %p52
    %p54 = scmp.ne.s32.totalorder %s45, %s46
    %p55 = scmp.eq.s32.totalorder %s14, 0
    %p56 = por %p54, %p55
    %p57 = scmp.ne.s32.totalorder %s45, %s46
    %p58 = scmp.eq.s32.totalorder %s15, 1
    %p59 = por %p57, %p58
    %p61 = scmp.ne.s32.totalorder %s46, %s60
    %p62 = scmp.eq.s32.totalorder %s15, 0
    %p63 = por %p61, %p62
    %s65 = sadd.s32 %s64, 1
    %p68 = scmp.eq.s32.totalorder %s9, 1
    %p69 = scmp.ne.s32.totalorder %s64, %s66
    %p70 = scmp.eq.s32.totalorder %s9, 0
    %p71 = por %p69, %p70
    %p72 = scmp.ne.s32.totalorder %s64, %s66
    %p73 = scmp.eq.s32.totalorder %s14, 1
    %p74 = por %p72, %p73
    %p75 = scmp.ne.s32.totalorder %s66, %s67
    %p76 = scmp.eq.s32.totalorder %s14, 0
    %p77 = por %p75, %p76
    %p78 = scmp.ne.s32.totalorder %s66, %s67
    %p79 = scmp.eq.s32.totalorder %s15, 1
    %p80 = por %p78, %p79
    %p82 = scmp.ne.s32.totalorder %s67, %s81
    %p83 = scmp.eq.s32.totalorder %s15, 0
    %p84 = por %p82, %p83
    %s85 = ssub.s32 %s9, %s16
    %p86 = scmp.eq.s32.totalorder %s85, 0
    %s88 = sadd.s32 %s87, 1
    %s89 = scalar_select %p86, %s87, %s88
    %p92 = pneg %p86
    %p93 = scmp.eq.s32.totalorder %s9, 1
    %p94 = por %p92, %p93
    %p95 = scmp.ne.s32.totalorder %s87, %s90
    %p96 = scmp.eq.s32.totalorder %s9, 0
    %p97 = por %p95, %p96
    %p98 = scmp.ne.s32.totalorder %s87, %s90
    %p99 = scmp.eq.s32.totalorder %s14, 1
    %p100 = por %p98, %p99
    %p101 = scmp.ne.s32.totalorder %s90, %s91
    %p102 = scmp.eq.s32.totalorder %s14, 0
    %p103 = por %p101, %p102
    %p104 = scmp.ne.s32.totalorder %s90, %s91
    %p105 = scmp.eq.s32.totalorder %s15, 1
    %p106 = por %p104, %p105
    %p108 = scmp.ne.s32.totalorder %s91, %s107
    %p109 = scmp.eq.s32.totalorder %s15, 0
    %p110 = por %p108, %p109
    %p111 = scmp.le.s32.totalorder 1, %s9
    %p112 = scmp.lt.s32.totalorder %s9, 3
    %p113 = pnand %p111, %p112
    %p114 = pneg %p113
    // Predicated region
    $region9: #{perceptual_loss.9} parent=5 // pred_check
      _
    $region10: #{perceptual_loss.9} parent=5 // pred_check_branch
      %116 = sbr.rel (%p113) target = $region12
    $region11: #{perceptual_loss.9} parent=5 // pred_region
      %s117 = ssub.s32 %s9, 1
      // Predicated region
      $region13: #{perceptual_loss.9} parent=11 // pred_check
        %p118 = pneg %p56
      $region14: #{perceptual_loss.9} parent=11 // pred_check_branch
        %120 = sbr.rel (%p118) target = $region16
      $region15: #{perceptual_loss.9} parent=11 // pred_region
        _
      $region16: #{perceptual_loss.9} parent=11 // pred_fallthru
        _
      // Predicated region
      $region17: #{perceptual_loss.9} parent=11 // pred_check
        %p121 = pneg %p77
      $region18: #{perceptual_loss.9} parent=11 // pred_check_branch
        %123 = sbr.rel (%p121) target = $region20
      $region19: #{perceptual_loss.9} parent=11 // pred_region
        _
      $region20: #{perceptual_loss.9} parent=11 // pred_fallthru
        _
    $region12: #{perceptual_loss.9} parent=5 // pred_fallthru
      _
    %p124 = scmp.lt.s32.totalorder %s9, 2
    // Predicated region
    $region21: #{perceptual_loss.9} parent=5 // pred_check
      %p125 = pneg %p124
    $region22: #{perceptual_loss.9} parent=5 // pred_check_branch
      %127 = sbr.rel (%p125) target = $region24
    $region23: #{perceptual_loss.9} parent=5 // pred_region
      // Predicated region
      $region25: #{perceptual_loss.9} parent=23 // pred_check
        %p128 = pneg %p29
      $region26: #{perceptual_loss.9} parent=23 // pred_check_branch
        %130 = sbr.rel (%p128) target = $region28
      $region27: #{perceptual_loss.9} parent=23 // pred_region
        %s131 = smul.u32 64, %s9
        %p132 = scmp.lt.s32.totalorder %s131, 127
        %s133 = scalar_select %p132, %s131, 127
        %s134 = smul.addr %s133, 4
        %s135 = scalar_lea.vmem %s0, %s134
        %s136 = smul.u32 64, %s9
      $region28: #{perceptual_loss.9} parent=23 // pred_fallthru
        _
    $region24: #{perceptual_loss.9} parent=5 // pred_fallthru
      _
    %p137 = scmp.le.s32.totalorder 1, %s9
    %p138 = scmp.lt.s32.totalorder %s9, 3
    %p139 = pnand %p137, %p138
    %p140 = pneg %p139
    // Predicated region
    $region29: #{perceptual_loss.9} parent=5 // pred_check
      _
    $region30: #{perceptual_loss.9} parent=5 // pred_check_branch
      %142 = sbr.rel (%p139) target = $region32
    $region31: #{perceptual_loss.9} parent=5 // pred_region
      %s143 = ssub.s32 %s9, 1
      %s144 = smul.u32 64, %s14
      %p145 = scmp.lt.s32.totalorder %s144, 127
      %s146 = scalar_select %p145, %s144, 127
      %s147 = smul.addr %s146, 4
      %s148 = scalar_lea.vmem %s0, %s147
      %p149 = pneg %p35
      %p150 = pneg %p32
      %p151 = pneg %p56
      %p152 = pneg %p53
      %p153 = pneg %p77
      %p154 = pneg %p74
      %p155 = pneg %p103
      %p156 = pneg %p100
      %s157 = smul.u32 64, %s14
      %p158 = scmp.lt.s32.totalorder %s157, 127
      %s159 = scalar_select %p158, %s157, 127
      %s160 = smul.addr %s159, 4
      %s161 = scalar_lea.vmem %s3, %s160
      %s162 = smul.u32 64, %s14
      %p163 = scmp.lt.s32.totalorder %s162, 127
      %s164 = scalar_select %p163, %s162, 127
      %s165 = smul.addr %s164, 4
      %s166 = scalar_lea.vmem %s0, %s165
      %s167 = smul.u32 64, %s14
      %s168 = smul.u32 64, %s14
      %p169 = scmp.lt.s32.totalorder %s168, 127
      %s170 = scalar_select %p169, %s168, 127
      %s171 = smul.addr %s170, 4
      %s172 = scalar_lea.vmem %s3, %s171
      %s173 = smul.u32 64, %s14
      %v175 = vld [vmem:[%s166] sm:$0xf]
      %v176 = vld [vmem:[%s166 + $0x4] sm:$0xf]
      %v177 = vld [vmem:[%s166 + $0x8] sm:$0xf]
      %v178 = vld [vmem:[%s166 + $0xc] sm:$0xf]
      %v179 = vld [vmem:[%s166 + $0x10] sm:$0xf]
      %v180 = vld [vmem:[%s166 + $0x14] sm:$0xf]
      %v181 = vld [vmem:[%s166 + $0x18] sm:$0xf]
      %v182 = vld [vmem:[%s166 + $0x1c] sm:$0xf]
      %v183 = vld [vmem:[%s166 + $0x20] sm:$0xf]
      %v184 = vld [vmem:[%s166 + $0x24] sm:$0xf]
      %v185 = vld [vmem:[%s166 + $0x28] sm:$0xf]
      %v186 = vld [vmem:[%s166 + $0x2c] sm:$0xf]
      %v187 = vld [vmem:[%s166 + $0x30] sm:$0xf]
      %v188 = vld [vmem:[%s166 + $0x34] sm:$0xf]
      %v189 = vld [vmem:[%s166 + $0x38] sm:$0xf]
      %v190 = vld [vmem:[%s166 + $0x3c] sm:$0xf]
      %v191 = vld [vmem:[%s166 + $0x40] sm:$0xf]
      %v192 = vld [vmem:[%s166 + $0x44] sm:$0xf]
      %v193 = vld [vmem:[%s166 + $0x48] sm:$0xf]
      %v194 = vld [vmem:[%s166 + $0x4c] sm:$0xf]
      %v195 = vld [vmem:[%s166 + $0x50] sm:$0xf]
      %v196 = vld [vmem:[%s166 + $0x54] sm:$0xf]
      %v197 = vld [vmem:[%s166 + $0x58] sm:$0xf]
      %v198 = vld [vmem:[%s166 + $0x5c] sm:$0xf]
      %v199 = vld [vmem:[%s166 + $0x60] sm:$0xf]
      %v200 = vld [vmem:[%s166 + $0x64] sm:$0xf]
      %v201 = vld [vmem:[%s166 + $0x68] sm:$0xf]
      %v202 = vld [vmem:[%s166 + $0x6c] sm:$0xf]
      %v203 = vld [vmem:[%s166 + $0x70] sm:$0xf]
      %v204 = vld [vmem:[%s166 + $0x74] sm:$0xf]
      %v205 = vld [vmem:[%s166 + $0x78] sm:$0xf]
      %v206 = vld [vmem:[%s166 + $0x7c] sm:$0xf]
      %v207 = vld [vmem:[%s166 + $0x80] sm:$0xf]
      %v208 = vld [vmem:[%s166 + $0x84] sm:$0xf]
      %v209 = vld [vmem:[%s166 + $0x88] sm:$0xf]
      %v210 = vld [vmem:[%s166 + $0x8c] sm:$0xf]
      %v211 = vld [vmem:[%s166 + $0x90] sm:$0xf]
      %v212 = vld [vmem:[%s166 + $0x94] sm:$0xf]
      %v213 = vld [vmem:[%s166 + $0x98] sm:$0xf]
      %v214 = vld [vmem:[%s166 + $0x9c] sm:$0xf]
      %v215 = vld [vmem:[%s166 + $0xa0] sm:$0xf]
      %v216 = vld [vmem:[%s166 + $0xa4] sm:$0xf]
      %v217 = vld [vmem:[%s166 + $0xa8] sm:$0xf]
      %v218 = vld [vmem:[%s166 + $0xac] sm:$0xf]
      %v219 = vld [vmem:[%s166 + $0xb0] sm:$0xf]
      %v220 = vld [vmem:[%s166 + $0xb4] sm:$0xf]
      %v221 = vld [vmem:[%s166 + $0xb8] sm:$0xf]
      %v222 = vld [vmem:[%s166 + $0xbc] sm:$0xf]
      %v223 = vld [vmem:[%s166 + $0xc0] sm:$0xf]
      %v224 = vld [vmem:[%s166 + $0xc4] sm:$0xf]
      %v225 = vld [vmem:[%s166 + $0xc8] sm:$0xf]
      %v226 = vld [vmem:[%s166 + $0xcc] sm:$0xf]
      %v227 = vld [vmem:[%s166 + $0xd0] sm:$0xf]
      %v228 = vld [vmem:[%s166 + $0xd4] sm:$0xf]
      %v229 = vld [vmem:[%s166 + $0xd8] sm:$0xf]
      %v230 = vld [vmem:[%s166 + $0xdc] sm:$0xf]
      %v231 = vld [vmem:[%s166 + $0xe0] sm:$0xf]
      %v232 = vld [vmem:[%s166 + $0xe4] sm:$0xf]
      %v233 = vld [vmem:[%s166 + $0xe8] sm:$0xf]
      %v234 = vld [vmem:[%s166 + $0xec] sm:$0xf]
      %v235 = vld [vmem:[%s166 + $0xf0] sm:$0xf]
      %v236 = vld [vmem:[%s166 + $0xf4] sm:$0xf]
      %v237 = vld [vmem:[%s166 + $0xf8] sm:$0xf]
      %v238 = vld [vmem:[%s166 + $0xfc] sm:$0xf]
      %v239 = vld [vmem:[%s1] sm:$0xf]
      %v240 = vld [vmem:[%s1 + $0x4] sm:$0xf]
      %v241 = vld [vmem:[%s1 + $0x8] sm:$0xf]
      %v242 = vld [vmem:[%s1 + $0xc] sm:$0x3]
      %v243 = vld [vmem:[%s2] sm:$0x1]
      %v245 = vlaneseq
      %v246 = vshrl.u32 %v245, 7
      %v247 = vsub.s32 0, %v246
      %v248 = vrot.slane %v243, %v247
      %v314 = vunpack.c.l.b16 %v175
      %v315 = vunpack.c.l.b16 %v176
      %v316 = vunpack.c.l.b16 %v177
      %v317 = vunpack.c.l.b16 %v178
      %v318 = vunpack.c.l.b16 %v179
      %v319 = vunpack.c.l.b16 %v180
      %v320 = vunpack.c.l.b16 %v181
      %v321 = vunpack.c.l.b16 %v182
      %v322 = vunpack.c.l.b16 %v183
      %v323 = vunpack.c.l.b16 %v184
      %v324 = vunpack.c.l.b16 %v185
      %v325 = vunpack.c.l.b16 %v186
      %v326 = vunpack.c.l.b16 %v187
      %v327 = vunpack.c.l.b16 %v188
      %v328 = vunpack.c.l.b16 %v189
      %v329 = vunpack.c.l.b16 %v190
      %v330 = vunpack.c.l.b16 %v191
      %v331 = vunpack.c.l.b16 %v192
      %v332 = vunpack.c.l.b16 %v193
      %v333 = vunpack.c.l.b16 %v194
      %v334 = vunpack.c.l.b16 %v195
      %v335 = vunpack.c.l.b16 %v196
      %v336 = vunpack.c.l.b16 %v197
      %v337 = vunpack.c.l.b16 %v198
      %v338 = vunpack.c.l.b16 %v199
      %v339 = vunpack.c.l.b16 %v200
      %v340 = vunpack.c.l.b16 %v201
      %v341 = vunpack.c.l.b16 %v202
      %v342 = vunpack.c.l.b16 %v203
      %v343 = vunpack.c.l.b16 %v204
      %v344 = vunpack.c.l.b16 %v205
      %v345 = vunpack.c.l.b16 %v206
      %v346 = vunpack.c.l.b16 %v207
      %v347 = vunpack.c.l.b16 %v208
      %v348 = vunpack.c.l.b16 %v209
      %v349 = vunpack.c.l.b16 %v210
      %v350 = vunpack.c.l.b16 %v211
      %v351 = vunpack.c.l.b16 %v212
      %v352 = vunpack.c.l.b16 %v213
      %v353 = vunpack.c.l.b16 %v214
      %v354 = vunpack.c.l.b16 %v215
      %v355 = vunpack.c.l.b16 %v216
      %v356 = vunpack.c.l.b16 %v217
      %v357 = vunpack.c.l.b16 %v218
      %v358 = vunpack.c.l.b16 %v219
      %v359 = vunpack.c.l.b16 %v220
      %v360 = vunpack.c.l.b16 %v221
      %v361 = vunpack.c.l.b16 %v222
      %v362 = vunpack.c.l.b16 %v223
      %v363 = vunpack.c.l.b16 %v224
      %v364 = vunpack.c.l.b16 %v225
      %v365 = vunpack.c.l.b16 %v226
      %v366 = vunpack.c.l.b16 %v227
      %v367 = vunpack.c.l.b16 %v228
      %v368 = vunpack.c.l.b16 %v229
      %v369 = vunpack.c.l.b16 %v230
      %v370 = vunpack.c.l.b16 %v231
      %v371 = vunpack.c.l.b16 %v232
      %v372 = vunpack.c.l.b16 %v233
      %v373 = vunpack.c.l.b16 %v234
      %v374 = vunpack.c.l.b16 %v235
      %v375 = vunpack.c.l.b16 %v236
      %v376 = vunpack.c.l.b16 %v237
      %v377 = vunpack.c.l.b16 %v238
      %v378 = vpack.c.b16 %v315, %v314
      %v379 = vpack.c.b16 %v317, %v316
      %v380 = vpack.c.b16 %v319, %v318
      %v381 = vpack.c.b16 %v321, %v320
      %v382 = vpack.c.b16 %v323, %v322
      %v383 = vpack.c.b16 %v325, %v324
      %v384 = vpack.c.b16 %v327, %v326
      %v385 = vpack.c.b16 %v329, %v328
      %v386 = vpack.c.b16 %v331, %v330
      %v387 = vpack.c.b16 %v333, %v332
      %v388 = vpack.c.b16 %v335, %v334
      %v389 = vpack.c.b16 %v337, %v336
      %v390 = vpack.c.b16 %v339, %v338
      %v391 = vpack.c.b16 %v341, %v340
      %v392 = vpack.c.b16 %v343, %v342
      %v393 = vpack.c.b16 %v345, %v344
      %v394 = vpack.c.b16 %v347, %v346
      %v395 = vpack.c.b16 %v349, %v348
      %v396 = vpack.c.b16 %v351, %v350
      %v397 = vpack.c.b16 %v353, %v352
      %v398 = vpack.c.b16 %v355, %v354
      %v399 = vpack.c.b16 %v357, %v356
      %v400 = vpack.c.b16 %v359, %v358
      %v401 = vpack.c.b16 %v361, %v360
      %v402 = vpack.c.b16 %v363, %v362
      %v403 = vpack.c.b16 %v365, %v364
      %v404 = vpack.c.b16 %v367, %v366
      %v405 = vpack.c.b16 %v369, %v368
      %v406 = vpack.c.b16 %v371, %v370
      %v407 = vpack.c.b16 %v373, %v372
      %v408 = vpack.c.b16 %v375, %v374
      %v409 = vpack.c.b16 %v377, %v376
      %v414 = vunpack.c.l.b16 %v239
      %v415 = vunpack.c.l.b16 %v240
      %v416 = vunpack.c.l.b16 %v241
      %v417 = vunpack.c.l.b16 %v242
      %v418 = vpack.c.b16 %v415, %v414
      %v419 = vpack.c.b16 %v417, %v416
      %vm421 = vcmask 220160
      %v423 = vsel %vm421, %v378, 0
      %v426 = vsel %vm421, %v379, 0
      %v429 = vsel %vm421, %v380, 0
      %v432 = vsel %vm421, %v381, 0
      %v435 = vsel %vm421, %v382, 0
      %v438 = vsel %vm421, %v383, 0
      %v441 = vsel %vm421, %v384, 0
      %v444 = vsel %vm421, %v385, 0
      %v447 = vsel %vm421, %v386, 0
      %v450 = vsel %vm421, %v387, 0
      %v453 = vsel %vm421, %v388, 0
      %v456 = vsel %vm421, %v389, 0
      %v459 = vsel %vm421, %v390, 0
      %v462 = vsel %vm421, %v391, 0
      %v465 = vsel %vm421, %v392, 0
      %v468 = vsel %vm421, %v393, 0
      %v471 = vsel %vm421, %v394, 0
      %v474 = vsel %vm421, %v395, 0
      %v477 = vsel %vm421, %v396, 0
      %v480 = vsel %vm421, %v397, 0
      %v483 = vsel %vm421, %v398, 0
      %v486 = vsel %vm421, %v399, 0
      %v489 = vsel %vm421, %v400, 0
      %v492 = vsel %vm421, %v401, 0
      %v495 = vsel %vm421, %v402, 0
      %v498 = vsel %vm421, %v403, 0
      %v501 = vsel %vm421, %v404, 0
      %v504 = vsel %vm421, %v405, 0
      %v507 = vsel %vm421, %v406, 0
      %v510 = vsel %vm421, %v407, 0
      %v513 = vsel %vm421, %v408, 0
      %v516 = vsel %vm421, %v409, 0
      %vm518 = vcmask 1044480
      %vm519 = vcmask 1045504
      %v520 = vsel %vm518, 4294967295, 65535
      %v521 = vsel %vm519, %v520, 0
      %v523 = vand.u32 %v419, %v521
      %525 = vmatprep.subr.bf16.mxu0 0
      %526 = vmatpush1.bf16.msra.mxu0 %v418
      %527 = vmatprep.subr.bf16.mxu0 0
      %528 = vmatpush1.bf16.msra.mxu0 %v523
      %529 = vmatprep.subr.bf16.mxu0 0
      %530 = vmatpush1.bf16.msra.mxu0 0
      %531 = vmatprep.subr.bf16.mxu0 0
      %532 = vmatpush1.bf16.msra.mxu0 0
      %533 = vmatprep.subr.bf16.mxu0 0
      %534 = vmatpush1.bf16.msra.mxu0 0
      %535 = vmatprep.subr.bf16.mxu0 0
      %536 = vmatpush1.bf16.msra.mxu0 0
      %537 = vmatprep.subr.bf16.mxu0 0
      %538 = vmatpush1.bf16.msra.mxu0 0
      %539 = vmatprep.subr.bf16.mxu0 0
      %540 = vmatpush1.bf16.msra.mxu0 0
      %541 = vmatprep.subr.bf16.mxu0 0
      %542 = vmatpush1.bf16.msra.mxu0 0
      %543 = vmatprep.subr.bf16.mxu0 0
      %544 = vmatpush1.bf16.msra.mxu0 0
      %545 = vmatprep.subr.bf16.mxu0 0
      %546 = vmatpush1.bf16.msra.mxu0 0
      %547 = vmatprep.subr.bf16.mxu0 0
      %548 = vmatpush1.bf16.msra.mxu0 0
      %549 = vmatprep.subr.bf16.mxu0 0
      %550 = vmatpush1.bf16.msra.mxu0 0
      %551 = vmatprep.subr.bf16.mxu0 0
      %552 = vmatpush1.bf16.msra.mxu0 0
      %553 = vmatprep.subr.bf16.mxu0 0
      %554 = vmatpush1.bf16.msra.mxu0 0
      %555 = vmatprep.subr.bf16.mxu0 0
      %556 = vmatpush1.bf16.msra.mxu0 0
      %557 = vmatprep.mubr.bf16.mxu0 0
      %558 = vmatmul.mubr.bf16.gmra.mrb[0].mxu0 %v423
      %v559 = vpop.f32.mrb[0].mxu0
      %v560 = vadd.f32 %v248, %v559
      %v561 = vpop.f32.mrb[0].mxu0
      %v562 = vpop.f32.mrb[0].mxu0
      %v563 = vadd.f32 %v248, %v562
      %v564 = vpop.f32.mrb[0].mxu0
      %565 = vmatprep.mubr.bf16.mxu0 0
      %566 = vmatmul.mubr.bf16.gmra.mrb[0].mxu0 %v426
      %v567 = vpop.f32.mrb[0].mxu0
      %v568 = vadd.f32 %v248, %v567
      %v569 = vpop.f32.mrb[0].mxu0
      %v570 = vpop.f32.mrb[0].mxu0
      %v571 = vadd.f32 %v248, %v570
      %v572 = vpop.f32.mrb[0].mxu0
      %573 = vmatprep.mubr.bf16.mxu0 0
      %574 = vmatmul.mubr.bf16.gmra.mrb[0].mxu0 %v429
      %v575 = vpop.f32.mrb[0].mxu0
      %v576 = vadd.f32 %v248, %v575
      %v577 = vpop.f32.mrb[0].mxu0
      %v578 = vpop.f32.mrb[0].mxu0
      %v579 = vadd.f32 %v248, %v578
      %v580 = vpop.f32.mrb[0].mxu0
      %581 = vmatprep.mubr.bf16.mxu0 0
      %582 = vmatmul.mubr.bf16.gmra.mrb[0].mxu0 %v432
      %v583 = vpop.f32.mrb[0].mxu0
      %v584 = vadd.f32 %v248, %v583
      %v585 = vpop.f32.mrb[0].mxu0
      %v586 = vpop.f32.mrb[0].mxu0
      %v587 = vadd.f32 %v248, %v586
      %v588 = vpop.f32.mrb[0].mxu0
      %589 = vmatprep.mubr.bf16.mxu0 0
      %590 = vmatmul.mubr.bf16.gmra.mrb[0].mxu0 %v435
      %v591 = vpop.f32.mrb[0].mxu0
      %v592 = vadd.f32 %v248, %v591
      %v593 = vpop.f32.mrb[0].mxu0
      %v594 = vpop.f32.mrb[0].mxu0
      %v595 = vadd.f32 %v248, %v594
      %v596 = vpop.f32.mrb[0].mxu0
      %597 = vmatprep.mubr.bf16.mxu0 0
      %598 = vmatmul.mubr.bf16.gmra.mrb[0].mxu0 %v438
      %v599 = vpop.f32.mrb[0].mxu0
      %v600 = vadd.f32 %v248, %v599
      %v601 = vpop.f32.mrb[0].mxu0
      %v602 = vpop.f32.mrb[0].mxu0
      %v603 = vadd.f32 %v248, %v602
      %v604 = vpop.f32.mrb[0].mxu0
      %605 = vmatprep.mubr.bf16.mxu0 0
      %606 = vmatmul.mubr.bf16.gmra.mrb[0].mxu0 %v441
      %v607 = vpop.f32.mrb[0].mxu0
      %v608 = vadd.f32 %v248, %v607
      %v609 = vpop.f32.mrb[0].mxu0
      %v610 = vpop.f32.mrb[0].mxu0
      %v611 = vadd.f32 %v248, %v610
      %v612 = vpop.f32.mrb[0].mxu0
      %613 = vmatprep.mubr.bf16.mxu0 0
      %614 = vmatmul.mubr.bf16.gmra.mrb[0].mxu0 %v444
      %v615 = vpop.f32.mrb[0].mxu0
      %v616 = vadd.f32 %v248, %v615
      %v617 = vpop.f32.mrb[0].mxu0
      %v618 = vpop.f32.mrb[0].mxu0
      %v619 = vadd.f32 %v248, %v618
      %v620 = vpop.f32.mrb[0].mxu0
      %621 = vmatprep.mubr.bf16.mxu0 0
      %622 = vmatmul.mubr.bf16.gmra.mrb[0].mxu0 %v447
      %v623 = vpop.f32.mrb[0].mxu0
      %v624 = vadd.f32 %v248, %v623
      %v625 = vpop.f32.mrb[0].mxu0
      %v626 = vpop.f32.mrb[0].mxu0
      %v627 = vadd.f32 %v248, %v626
      %v628 = vpop.f32.mrb[0].mxu0
      %629 = vmatprep.mubr.bf16.mxu0 0
      %630 = vmatmul.mubr.bf16.gmra.mrb[0].mxu0 %v450
      %v631 = vpop.f32.mrb[0].mxu0
      %v632 = vadd.f32 %v248, %v631
      %v633 = vpop.f32.mrb[0].mxu0
      %v634 = vpop.f32.mrb[0].mxu0
      %v635 = vadd.f32 %v248, %v634
      %v636 = vpop.f32.mrb[0].mxu0
      %637 = vmatprep.mubr.bf16.mxu0 0
      %638 = vmatmul.mubr.bf16.gmra.mrb[0].mxu0 %v453
      %v639 = vpop.f32.mrb[0].mxu0
      %v640 = vadd.f32 %v248, %v639
      %v641 = vpop.f32.mrb[0].mxu0
      %v642 = vpop.f32.mrb[0].mxu0
      %v643 = vadd.f32 %v248, %v642
      %v644 = vpop.f32.mrb[0].mxu0
      %645 = vmatprep.mubr.bf16.mxu0 0
      %646 = vmatmul.mubr.bf16.gmra.mrb[0].mxu0 %v456
      %v647 = vpop.f32.mrb[0].mxu0
      %v648 = vadd.f32 %v248, %v647
      %v649 = vpop.f32.mrb[0].mxu0
      %v650 = vpop.f32.mrb[0].mxu0
      %v651 = vadd.f32 %v248, %v650
      %v652 = vpop.f32.mrb[0].mxu0
      %653 = vmatprep.mubr.bf16.mxu0 0
      %654 = vmatmul.mubr.bf16.gmra.mrb[0].mxu0 %v459
      %v655 = vpop.f32.mrb[0].mxu0
      %v656 = vadd.f32 %v248, %v655
      %v657 = vpop.f32.mrb[0].mxu0
      %v658 = vpop.f32.mrb[0].mxu0
      %v659 = vadd.f32 %v248, %v658
      %v660 = vpop.f32.mrb[0].mxu0
      %661 = vmatprep.mubr.bf16.mxu0 0
      %662 = vmatmul.mubr.bf16.gmra.mrb[0].mxu0 %v462
      %v663 = vpop.f32.mrb[0].mxu0
      %v664 = vadd.f32 %v248, %v663
      %v665 = vpop.f32.mrb[0].mxu0
      %v666 = vpop.f32.mrb[0].mxu0
      %v667 = vadd.f32 %v248, %v666
      %v668 = vpop.f32.mrb[0].mxu0
      %669 = vmatprep.mubr.bf16.mxu0 0
      %670 = vmatmul.mubr.bf16.gmra.mrb[0].mxu0 %v465
      %v671 = vpop.f32.mrb[0].mxu0
      %v672 = vadd.f32 %v248, %v671
      %v673 = vpop.f32.mrb[0].mxu0
      %v674 = vpop.f32.mrb[0].mxu0
      %v675 = vadd.f32 %v248, %v674
      %v676 = vpop.f32.mrb[0].mxu0
      %677 = vmatprep.mubr.bf16.mxu0 0
      %678 = vmatmul.mubr.bf16.gmra.mrb[0].mxu0 %v468
      %v679 = vpop.f32.mrb[0].mxu0
      %v680 = vadd.f32 %v248, %v679
      %v681 = vpop.f32.mrb[0].mxu0
      %v682 = vpop.f32.mrb[0].mxu0
      %v683 = vadd.f32 %v248, %v682
      %v684 = vpop.f32.mrb[0].mxu0
      %685 = vmatprep.mubr.bf16.mxu0 0
      %686 = vmatmul.mubr.bf16.gmra.mrb[0].mxu0 %v471
      %v687 = vpop.f32.mrb[0].mxu0
      %v688 = vadd.f32 %v248, %v687
      %v689 = vpop.f32.mrb[0].mxu0
      %v690 = vpop.f32.mrb[0].mxu0
      %v691 = vadd.f32 %v248, %v690
      %v692 = vpop.f32.mrb[0].mxu0
      %693 = vmatprep.mubr.bf16.mxu0 0
      %694 = vmatmul.mubr.bf16.gmra.mrb[0].mxu0 %v474
      %v695 = vpop.f32.mrb[0].mxu0
      %v696 = vadd.f32 %v248, %v695
      %v697 = vpop.f32.mrb[0].mxu0
      %v698 = vpop.f32.mrb[0].mxu0
      %v699 = vadd.f32 %v248, %v698
      %v700 = vpop.f32.mrb[0].mxu0
      %701 = vmatprep.mubr.bf16.mxu0 0
      %702 = vmatmul.mubr.bf16.gmra.mrb[0].mxu0 %v477
      %v703 = vpop.f32.mrb[0].mxu0
      %v704 = vadd.f32 %v248, %v703
      %v705 = vpop.f32.mrb[0].mxu0
      %v706 = vpop.f32.mrb[0].mxu0
      %v707 = vadd.f32 %v248, %v706
      %v708 = vpop.f32.mrb[0].mxu0
      %709 = vmatprep.mubr.bf16.mxu0 0
      %710 = vmatmul.mubr.bf16.gmra.mrb[0].mxu0 %v480
      %v711 = vpop.f32.mrb[0].mxu0
      %v712 = vadd.f32 %v248, %v711
      %v713 = vpop.f32.mrb[0].mxu0
      %v714 = vpop.f32.mrb[0].mxu0
      %v715 = vadd.f32 %v248, %v714
      %v716 = vpop.f32.mrb[0].mxu0
      %717 = vmatprep.mubr.bf16.mxu0 0
      %718 = vmatmul.mubr.bf16.gmra.mrb[0].mxu0 %v483
      %v719 = vpop.f32.mrb[0].mxu0
      %v720 = vadd.f32 %v248, %v719
      %v721 = vpop.f32.mrb[0].mxu0
      %v722 = vpop.f32.mrb[0].mxu0
      %v723 = vadd.f32 %v248, %v722
      %v724 = vpop.f32.mrb[0].mxu0
      %725 = vmatprep.mubr.bf16.mxu0 0
      %726 = vmatmul.mubr.bf16.gmra.mrb[0].mxu0 %v486
      %v727 = vpop.f32.mrb[0].mxu0
      %v728 = vadd.f32 %v248, %v727
      %v729 = vpop.f32.mrb[0].mxu0
      %v730 = vpop.f32.mrb[0].mxu0
      %v731 = vadd.f32 %v248, %v730
      %v732 = vpop.f32.mrb[0].mxu0
      %733 = vmatprep.mubr.bf16.mxu0 0
      %734 = vmatmul.mubr.bf16.gmra.mrb[0].mxu0 %v489
      %v735 = vpop.f32.mrb[0].mxu0
      %v736 = vadd.f32 %v248, %v735
      %v737 = vpop.f32.mrb[0].mxu0
      %v738 = vpop.f32.mrb[0].mxu0
      %v739 = vadd.f32 %v248, %v738
      %v740 = vpop.f32.mrb[0].mxu0
      %741 = vmatprep.mubr.bf16.mxu0 0
      %742 = vmatmul.mubr.bf16.gmra.mrb[0].mxu0 %v492
      %v743 = vpop.f32.mrb[0].mxu0
      %v744 = vadd.f32 %v248, %v743
      %v745 = vpop.f32.mrb[0].mxu0
      %v746 = vpop.f32.mrb[0].mxu0
      %v747 = vadd.f32 %v248, %v746
      %v748 = vpop.f32.mrb[0].mxu0
      %749 = vmatprep.mubr.bf16.mxu0 0
      %750 = vmatmul.mubr.bf16.gmra.mrb[0].mxu0 %v495
      %v751 = vpop.f32.mrb[0].mxu0
      %v752 = vadd.f32 %v248, %v751
      %v753 = vpop.f32.mrb[0].mxu0
      %v754 = vpop.f32.mrb[0].mxu0
      %v755 = vadd.f32 %v248, %v754
      %v756 = vpop.f32.mrb[0].mxu0
      %757 = vmatprep.mubr.bf16.mxu0 0
      %758 = vmatmul.mubr.bf16.gmra.mrb[0].mxu0 %v498
      %v759 = vpop.f32.mrb[0].mxu0
      %v760 = vadd.f32 %v248, %v759
      %v761 = vpop.f32.mrb[0].mxu0
      %v762 = vpop.f32.mrb[0].mxu0
      %v763 = vadd.f32 %v248, %v762
      %v764 = vpop.f32.mrb[0].mxu0
      %765 = vmatprep.mubr.bf16.mxu0 0
      %766 = vmatmul.mubr.bf16.gmra.mrb[0].mxu0 %v501
      %v767 = vpop.f32.mrb[0].mxu0
      %v768 = vadd.f32 %v248, %v767
      %v769 = vpop.f32.mrb[0].mxu0
      %v770 = vpop.f32.mrb[0].mxu0
      %v771 = vadd.f32 %v248, %v770
      %v772 = vpop.f32.mrb[0].mxu0
      %773 = vmatprep.mubr.bf16.mxu0 0
      %774 = vmatmul.mubr.bf16.gmra.mrb[0].mxu0 %v504
      %v775 = vpop.f32.mrb[0].mxu0
      %v776 = vadd.f32 %v248, %v775
      %v777 = vpop.f32.mrb[0].mxu0
      %v778 = vpop.f32.mrb[0].mxu0
      %v779 = vadd.f32 %v248, %v778
      %v780 = vpop.f32.mrb[0].mxu0
      %781 = vmatprep.mubr.bf16.mxu0 0
      %782 = vmatmul.mubr.bf16.gmra.mrb[0].mxu0 %v507
      %v783 = vpop.f32.mrb[0].mxu0
      %v784 = vadd.f32 %v248, %v783
      %v785 = vpop.f32.mrb[0].mxu0
      %v786 = vpop.f32.mrb[0].mxu0
      %v787 = vadd.f32 %v248, %v786
      %v788 = vpop.f32.mrb[0].mxu0
      %789 = vmatprep.mubr.bf16.mxu0 0
      %790 = vmatmul.mubr.bf16.gmra.mrb[0].mxu0 %v510
      %v791 = vpop.f32.mrb[0].mxu0
      %v792 = vadd.f32 %v248, %v791
      %v793 = vpop.f32.mrb[0].mxu0
      %v794 = vpop.f32.mrb[0].mxu0
      %v795 = vadd.f32 %v248, %v794
      %v796 = vpop.f32.mrb[0].mxu0
      %797 = vmatprep.mubr.bf16.mxu0 0
      %798 = vmatmul.mubr.bf16.gmra.mrb[0].mxu0 %v513
      %v799 = vpop.f32.mrb[0].mxu0
      %v800 = vadd.f32 %v248, %v799
      %v801 = vpop.f32.mrb[0].mxu0
      %v802 = vpop.f32.mrb[0].mxu0
      %v803 = vadd.f32 %v248, %v802
      %v804 = vpop.f32.mrb[0].mxu0
      %805 = vmatprep.mubr.bf16.mxu0 0
      %806 = vmatmul.mubr.bf16.gmra.mrb[0].mxu0 %v516
      %v807 = vpop.f32.mrb[0].mxu0
      %v808 = vadd.f32 %v248, %v807
      %v809 = vpop.f32.mrb[0].mxu0
      %v810 = vpop.f32.mrb[0].mxu0
      %v811 = vadd.f32 %v248, %v810
      %v812 = vpop.f32.mrb[0].mxu0
      %813 = vdwg.mxu0
      %v814 = vmax.f32 %v560, 0.0
      %v815 = vmax.f32 %v563, 0.0
      %v816 = vmax.f32 %v568, 0.0
      %v817 = vmax.f32 %v571, 0.0
      %v818 = vmax.f32 %v576, 0.0
      %v819 = vmax.f32 %v579, 0.0
      %v820 = vmax.f32 %v584, 0.0
      %v821 = vmax.f32 %v587, 0.0
      %v822 = vmax.f32 %v592, 0.0
      %v823 = vmax.f32 %v595, 0.0
      %v824 = vmax.f32 %v600, 0.0
      %v825 = vmax.f32 %v603, 0.0
      %v826 = vmax.f32 %v608, 0.0
      %v827 = vmax.f32 %v611, 0.0
      %v828 = vmax.f32 %v616, 0.0
      %v829 = vmax.f32 %v619, 0.0
      %v830 = vmax.f32 %v624, 0.0
      %v831 = vmax.f32 %v627, 0.0
      %v832 = vmax.f32 %v632, 0.0
      %v833 = vmax.f32 %v635, 0.0
      %v834 = vmax.f32 %v640, 0.0
      %v835 = vmax.f32 %v643, 0.0
      %v836 = vmax.f32 %v648, 0.0
      %v837 = vmax.f32 %v651, 0.0
      %v838 = vmax.f32 %v656, 0.0
      %v839 = vmax.f32 %v659, 0.0
      %v840 = vmax.f32 %v664, 0.0
      %v841 = vmax.f32 %v667, 0.0
      %v842 = vmax.f32 %v672, 0.0
      %v843 = vmax.f32 %v675, 0.0
      %v844 = vmax.f32 %v680, 0.0
      %v845 = vmax.f32 %v683, 0.0
      %v846 = vmax.f32 %v688, 0.0
      %v847 = vmax.f32 %v691, 0.0
      %v848 = vmax.f32 %v696, 0.0
      %v849 = vmax.f32 %v699, 0.0
      %v850 = vmax.f32 %v704, 0.0
      %v851 = vmax.f32 %v707, 0.0
      %v852 = vmax.f32 %v712, 0.0
      %v853 = vmax.f32 %v715, 0.0
      %v854 = vmax.f32 %v720, 0.0
      %v855 = vmax.f32 %v723, 0.0
      %v856 = vmax.f32 %v728, 0.0
      %v857 = vmax.f32 %v731, 0.0
      %v858 = vmax.f32 %v736, 0.0
      %v859 = vmax.f32 %v739, 0.0
      %v860 = vmax.f32 %v744, 0.0
      %v861 = vmax.f32 %v747, 0.0
      %v862 = vmax.f32 %v752, 0.0
      %v863 = vmax.f32 %v755, 0.0
      %v864 = vmax.f32 %v760, 0.0
      %v865 = vmax.f32 %v763, 0.0
      %v866 = vmax.f32 %v768, 0.0
      %v867 = vmax.f32 %v771, 0.0
      %v868 = vmax.f32 %v776, 0.0
      %v869 = vmax.f32 %v779, 0.0
      %v870 = vmax.f32 %v784, 0.0
      %v871 = vmax.f32 %v787, 0.0
      %v872 = vmax.f32 %v792, 0.0
      %v873 = vmax.f32 %v795, 0.0
      %v874 = vmax.f32 %v800, 0.0
      %v875 = vmax.f32 %v803, 0.0
      %v876 = vmax.f32 %v808, 0.0
      %v877 = vmax.f32 %v811, 0.0
      %v878 = vpack.c.bf16 %v815, %v814
      %v879 = vpack.c.bf16 %v817, %v816
      %v880 = vpack.c.bf16 %v819, %v818
      %v881 = vpack.c.bf16 %v821, %v820
      %v882 = vpack.c.bf16 %v823, %v822
      %v883 = vpack.c.bf16 %v825, %v824
      %v884 = vpack.c.bf16 %v827, %v826
      %v885 = vpack.c.bf16 %v829, %v828
      %v886 = vpack.c.bf16 %v831, %v830
      %v887 = vpack.c.bf16 %v833, %v832
      %v888 = vpack.c.bf16 %v835, %v834
      %v889 = vpack.c.bf16 %v837, %v836
      %v890 = vpack.c.bf16 %v839, %v838
      %v891 = vpack.c.bf16 %v841, %v840
      %v892 = vpack.c.bf16 %v843, %v842
      %v893 = vpack.c.bf16 %v845, %v844
      %v894 = vpack.c.bf16 %v847, %v846
      %v895 = vpack.c.bf16 %v849, %v848
      %v896 = vpack.c.bf16 %v851, %v850
      %v897 = vpack.c.bf16 %v853, %v852
      %v898 = vpack.c.bf16 %v855, %v854
      %v899 = vpack.c.bf16 %v857, %v856
      %v900 = vpack.c.bf16 %v859, %v858
      %v901 = vpack.c.bf16 %v861, %v860
      %v902 = vpack.c.bf16 %v863, %v862
      %v903 = vpack.c.bf16 %v865, %v864
      %v904 = vpack.c.bf16 %v867, %v866
      %v905 = vpack.c.bf16 %v869, %v868
      %v906 = vpack.c.bf16 %v871, %v870
      %v907 = vpack.c.bf16 %v873, %v872
      %v908 = vpack.c.bf16 %v875, %v874
      %v909 = vpack.c.bf16 %v877, %v876
      %v942 = vunpack.c.l.b16 %v878
      %v943 = vunpack.c.h.b16 %v878
      %v944 = vunpack.c.l.b16 %v879
      %v945 = vunpack.c.h.b16 %v879
      %v946 = vunpack.c.l.b16 %v880
      %v947 = vunpack.c.h.b16 %v880
      %v948 = vunpack.c.l.b16 %v881
      %v949 = vunpack.c.h.b16 %v881
      %v950 = vunpack.c.l.b16 %v882
      %v951 = vunpack.c.h.b16 %v882
      %v952 = vunpack.c.l.b16 %v883
      %v953 = vunpack.c.h.b16 %v883
      %v954 = vunpack.c.l.b16 %v884
      %v955 = vunpack.c.h.b16 %v884
      %v956 = vunpack.c.l.b16 %v885
      %v957 = vunpack.c.h.b16 %v885
      %v958 = vunpack.c.l.b16 %v886
      %v959 = vunpack.c.h.b16 %v886
      %v960 = vunpack.c.l.b16 %v887
      %v961 = vunpack.c.h.b16 %v887
      %v962 = vunpack.c.l.b16 %v888
      %v963 = vunpack.c.h.b16 %v888
      %v964 = vunpack.c.l.b16 %v889
      %v965 = vunpack.c.h.b16 %v889
      %v966 = vunpack.c.l.b16 %v890
      %v967 = vunpack.c.h.b16 %v890
      %v968 = vunpack.c.l.b16 %v891
      %v969 = vunpack.c.h.b16 %v891
      %v970 = vunpack.c.l.b16 %v892
      %v971 = vunpack.c.h.b16 %v892
      %v972 = vunpack.c.l.b16 %v893
      %v973 = vunpack.c.h.b16 %v893
      %v974 = vunpack.c.l.b16 %v894
      %v975 = vunpack.c.h.b16 %v894
      %v976 = vunpack.c.l.b16 %v895
      %v977 = vunpack.c.h.b16 %v895
      %v978 = vunpack.c.l.b16 %v896
      %v979 = vunpack.c.h.b16 %v896
      %v980 = vunpack.c.l.b16 %v897
      %v981 = vunpack.c.h.b16 %v897
      %v982 = vunpack.c.l.b16 %v898
      %v983 = vunpack.c.h.b16 %v898
      %v984 = vunpack.c.l.b16 %v899
      %v985 = vunpack.c.h.b16 %v899
      %v986 = vunpack.c.l.b16 %v900
      %v987 = vunpack.c.h.b16 %v900
      %v988 = vunpack.c.l.b16 %v901
      %v989 = vunpack.c.h.b16 %v901
      %v990 = vunpack.c.l.b16 %v902
      %v991 = vunpack.c.h.b16 %v902
      %v992 = vunpack.c.l.b16 %v903
      %v993 = vunpack.c.h.b16 %v903
      %v994 = vunpack.c.l.b16 %v904
      %v995 = vunpack.c.h.b16 %v904
      %v996 = vunpack.c.l.b16 %v905
      %v997 = vunpack.c.h.b16 %v905
      %v998 = vunpack.c.l.b16 %v906
      %v999 = vunpack.c.h.b16 %v906
      %v1000 = vunpack.c.l.b16 %v907
      %v1001 = vunpack.c.h.b16 %v907
      %v1002 = vunpack.c.l.b16 %v908
      %v1003 = vunpack.c.h.b16 %v908
      %v1004 = vunpack.c.l.b16 %v909
      %v1005 = vunpack.c.h.b16 %v909
      %v1006 = vpack.c.b16 %v942, %v942
      %v1007 = vpack.c.b16 %v943, %v943
      %v1008 = vpack.c.b16 %v944, %v944
      %v1009 = vpack.c.b16 %v945, %v945
      %v1010 = vpack.c.b16 %v946, %v946
      %v1011 = vpack.c.b16 %v947, %v947
      %v1012 = vpack.c.b16 %v948, %v948
      %v1013 = vpack.c.b16 %v949, %v949
      %v1014 = vpack.c.b16 %v950, %v950
      %v1015 = vpack.c.b16 %v951, %v951
      %v1016 = vpack.c.b16 %v952, %v952
      %v1017 = vpack.c.b16 %v953, %v953
      %v1018 = vpack.c.b16 %v954, %v954
      %v1019 = vpack.c.b16 %v955, %v955
      %v1020 = vpack.c.b16 %v956, %v956
      %v1021 = vpack.c.b16 %v957, %v957
      %v1022 = vpack.c.b16 %v958, %v958
      %v1023 = vpack.c.b16 %v959, %v959
      %v1024 = vpack.c.b16 %v960, %v960
      %v1025 = vpack.c.b16 %v961, %v961
      %v1026 = vpack.c.b16 %v962, %v962
      %v1027 = vpack.c.b16 %v963, %v963
      %v1028 = vpack.c.b16 %v964, %v964
      %v1029 = vpack.c.b16 %v965, %v965
      %v1030 = vpack.c.b16 %v966, %v966
      %v1031 = vpack.c.b16 %v967, %v967
      %v1032 = vpack.c.b16 %v968, %v968
      %v1033 = vpack.c.b16 %v969, %v969
      %v1034 = vpack.c.b16 %v970, %v970
      %v1035 = vpack.c.b16 %v971, %v971
      %v1036 = vpack.c.b16 %v972, %v972
      %v1037 = vpack.c.b16 %v973, %v973
      %v1038 = vpack.c.b16 %v974, %v974
      %v1039 = vpack.c.b16 %v975, %v975
      %v1040 = vpack.c.b16 %v976, %v976
      %v1041 = vpack.c.b16 %v977, %v977
      %v1042 = vpack.c.b16 %v978, %v978
      %v1043 = vpack.c.b16 %v979, %v979
      %v1044 = vpack.c.b16 %v980, %v980
      %v1045 = vpack.c.b16 %v981, %v981
      %v1046 = vpack.c.b16 %v982, %v982
      %v1047 = vpack.c.b16 %v983, %v983
      %v1048 = vpack.c.b16 %v984, %v984
      %v1049 = vpack.c.b16 %v985, %v985
      %v1050 = vpack.c.b16 %v986, %v986
      %v1051 = vpack.c.b16 %v987, %v987
      %v1052 = vpack.c.b16 %v988, %v988
      %v1053 = vpack.c.b16 %v989, %v989
      %v1054 = vpack.c.b16 %v990, %v990
      %v1055 = vpack.c.b16 %v991, %v991
      %v1056 = vpack.c.b16 %v992, %v992
      %v1057 = vpack.c.b16 %v993, %v993
      %v1058 = vpack.c.b16 %v994, %v994
      %v1059 = vpack.c.b16 %v995, %v995
      %v1060 = vpack.c.b16 %v996, %v996
      %v1061 = vpack.c.b16 %v997, %v997
      %v1062 = vpack.c.b16 %v998, %v998
      %v1063 = vpack.c.b16 %v999, %v999
      %v1064 = vpack.c.b16 %v1000, %v1000
      %v1065 = vpack.c.b16 %v1001, %v1001
      %v1066 = vpack.c.b16 %v1002, %v1002
      %v1067 = vpack.c.b16 %v1003, %v1003
      %v1068 = vpack.c.b16 %v1004, %v1004
      %v1069 = vpack.c.b16 %v1005, %v1005
      %vm1134 = vcmask 519168
      %1135 = vst.msk [vmem:[%s172] sm:$0xf] %vm1134, %v1006
      %1136 = vst.msk [vmem:[%s172 + $0x4] sm:$0xf] %vm1134, %v1007
      %1137 = vst.msk [vmem:[%s172 + $0x8] sm:$0xf] %vm1134, %v1008
      %1138 = vst.msk [vmem:[%s172 + $0xc] sm:$0xf] %vm1134, %v1009
      %1139 = vst.msk [vmem:[%s172 + $0x10] sm:$0xf] %vm1134, %v1010
      %1140 = vst.msk [vmem:[%s172 + $0x14] sm:$0xf] %vm1134, %v1011
      %1141 = vst.msk [vmem:[%s172 + $0x18] sm:$0xf] %vm1134, %v1012
      %1142 = vst.msk [vmem:[%s172 + $0x1c] sm:$0xf] %vm1134, %v1013
      %1143 = vst.msk [vmem:[%s172 + $0x20] sm:$0xf] %vm1134, %v1014
      %1144 = vst.msk [vmem:[%s172 + $0x24] sm:$0xf] %vm1134, %v1015
      %1145 = vst.msk [vmem:[%s172 + $0x28] sm:$0xf] %vm1134, %v1016
      %1146 = vst.msk [vmem:[%s172 + $0x2c] sm:$0xf] %vm1134, %v1017
      %1147 = vst.msk [vmem:[%s172 + $0x30] sm:$0xf] %vm1134, %v1018
      %1148 = vst.msk [vmem:[%s172 + $0x34] sm:$0xf] %vm1134, %v1019
      %1149 = vst.msk [vmem:[%s172 + $0x38] sm:$0xf] %vm1134, %v1020
      %1150 = vst.msk [vmem:[%s172 + $0x3c] sm:$0xf] %vm1134, %v1021
      %1151 = vst.msk [vmem:[%s172 + $0x40] sm:$0xf] %vm1134, %v1022
      %1152 = vst.msk [vmem:[%s172 + $0x44] sm:$0xf] %vm1134, %v1023
      %1153 = vst.msk [vmem:[%s172 + $0x48] sm:$0xf] %vm1134, %v1024
      %1154 = vst.msk [vmem:[%s172 + $0x4c] sm:$0xf] %vm1134, %v1025
      %1155 = vst.msk [vmem:[%s172 + $0x50] sm:$0xf] %vm1134, %v1026
      %1156 = vst.msk [vmem:[%s172 + $0x54] sm:$0xf] %vm1134, %v1027
      %1157 = vst.msk [vmem:[%s172 + $0x58] sm:$0xf] %vm1134, %v1028
      %1158 = vst.msk [vmem:[%s172 + $0x5c] sm:$0xf] %vm1134, %v1029
      %1159 = vst.msk [vmem:[%s172 + $0x60] sm:$0xf] %vm1134, %v1030
      %1160 = vst.msk [vmem:[%s172 + $0x64] sm:$0xf] %vm1134, %v1031
      %1161 = vst.msk [vmem:[%s172 + $0x68] sm:$0xf] %vm1134, %v1032
      %1162 = vst.msk [vmem:[%s172 + $0x6c] sm:$0xf] %vm1134, %v1033
      %1163 = vst.msk [vmem:[%s172 + $0x70] sm:$0xf] %vm1134, %v1034
      %1164 = vst.msk [vmem:[%s172 + $0x74] sm:$0xf] %vm1134, %v1035
      %1165 = vst.msk [vmem:[%s172 + $0x78] sm:$0xf] %vm1134, %v1036
      %1166 = vst.msk [vmem:[%s172 + $0x7c] sm:$0xf] %vm1134, %v1037
      %1167 = vst.msk [vmem:[%s172 + $0x80] sm:$0xf] %vm1134, %v1038
      %1168 = vst.msk [vmem:[%s172 + $0x84] sm:$0xf] %vm1134, %v1039
      %1169 = vst.msk [vmem:[%s172 + $0x88] sm:$0xf] %vm1134, %v1040
      %1170 = vst.msk [vmem:[%s172 + $0x8c] sm:$0xf] %vm1134, %v1041
      %1171 = vst.msk [vmem:[%s172 + $0x90] sm:$0xf] %vm1134, %v1042
      %1172 = vst.msk [vmem:[%s172 + $0x94] sm:$0xf] %vm1134, %v1043
      %1173 = vst.msk [vmem:[%s172 + $0x98] sm:$0xf] %vm1134, %v1044
      %1174 = vst.msk [vmem:[%s172 + $0x9c] sm:$0xf] %vm1134, %v1045
      %1175 = vst.msk [vmem:[%s172 + $0xa0] sm:$0xf] %vm1134, %v1046
      %1176 = vst.msk [vmem:[%s172 + $0xa4] sm:$0xf] %vm1134, %v1047
      %1177 = vst.msk [vmem:[%s172 + $0xa8] sm:$0xf] %vm1134, %v1048
      %1178 = vst.msk [vmem:[%s172 + $0xac] sm:$0xf] %vm1134, %v1049
      %1179 = vst.msk [vmem:[%s172 + $0xb0] sm:$0xf] %vm1134, %v1050
      %1180 = vst.msk [vmem:[%s172 + $0xb4] sm:$0xf] %vm1134, %v1051
      %1181 = vst.msk [vmem:[%s172 + $0xb8] sm:$0xf] %vm1134, %v1052
      %1182 = vst.msk [vmem:[%s172 + $0xbc] sm:$0xf] %vm1134, %v1053
      %1183 = vst.msk [vmem:[%s172 + $0xc0] sm:$0xf] %vm1134, %v1054
      %1184 = vst.msk [vmem:[%s172 + $0xc4] sm:$0xf] %vm1134, %v1055
      %1185 = vst.msk [vmem:[%s172 + $0xc8] sm:$0xf] %vm1134, %v1056
      %1186 = vst.msk [vmem:[%s172 + $0xcc] sm:$0xf] %vm1134, %v1057
      %1187 = vst.msk [vmem:[%s172 + $0xd0] sm:$0xf] %vm1134, %v1058
      %1188 = vst.msk [vmem:[%s172 + $0xd4] sm:$0xf] %vm1134, %v1059
      %1189 = vst.msk [vmem:[%s172 + $0xd8] sm:$0xf] %vm1134, %v1060
      %1190 = vst.msk [vmem:[%s172 + $0xdc] sm:$0xf] %vm1134, %v1061
      %1191 = vst.msk [vmem:[%s172 + $0xe0] sm:$0xf] %vm1134, %v1062
      %1192 = vst.msk [vmem:[%s172 + $0xe4] sm:$0xf] %vm1134, %v1063
      %1193 = vst.msk [vmem:[%s172 + $0xe8] sm:$0xf] %vm1134, %v1064
      %1194 = vst.msk [vmem:[%s172 + $0xec] sm:$0xf] %vm1134, %v1065
      %1195 = vst.msk [vmem:[%s172 + $0xf0] sm:$0xf] %vm1134, %v1066
      %1196 = vst.msk [vmem:[%s172 + $0xf4] sm:$0xf] %vm1134, %v1067
      %1197 = vst.msk [vmem:[%s172 + $0xf8] sm:$0xf] %vm1134, %v1068
      %1198 = vst.msk [vmem:[%s172 + $0xfc] sm:$0xf] %vm1134, %v1069
      %s1199 = smul.u32 64, %s14
      %p1200 = scmp.lt.s32.totalorder %s1199, 127
      %s1201 = scalar_select %p1200, %s1199, 127
      %s1202 = smul.addr %s1201, 4
      %s1203 = scalar_lea.vmem %s3, %s1202
      // Predicated region
      $region33: #{perceptual_loss.9} parent=31 // pred_check
        %p1204 = pneg %p100
      $region34: #{perceptual_loss.9} parent=31 // pred_check_branch
        %1206 = sbr.rel (%p1204) target = $region36
      $region35: #{perceptual_loss.9} parent=31 // pred_region
        %s1207 = smul.u32 64, %s14
      $region36: #{perceptual_loss.9} parent=31 // pred_fallthru
        _
    $region32: #{perceptual_loss.9} parent=5 // pred_fallthru
      _
    %p1208 = scmp.le.s32.totalorder 2, %s9
    // Predicated region
    $region37: #{perceptual_loss.9} parent=5 // pred_check
      %p1209 = pneg %p1208
    $region38: #{perceptual_loss.9} parent=5 // pred_check_branch
      %1211 = sbr.rel (%p1209) target = $region40
    $region39: #{perceptual_loss.9} parent=5 // pred_region
      %s1212 = ssub.s32 %s9, 2
      // Predicated region
      $region41: #{perceptual_loss.9} parent=39 // pred_check
        %p1213 = pneg %p106
      $region42: #{perceptual_loss.9} parent=39 // pred_check_branch
        %1215 = sbr.rel (%p1213) target = $region44
      $region43: #{perceptual_loss.9} parent=39 // pred_region
        %s1216 = smul.u32 64, %s15
        %p1217 = scmp.lt.s32.totalorder %s1216, 127
        %s1218 = scalar_select %p1217, %s1216, 127
        %s1219 = smul.addr %s1218, 4
        %s1220 = scalar_lea.vmem %s3, %s1219
      $region44: #{perceptual_loss.9} parent=39 // pred_fallthru
        _
    $region40: #{perceptual_loss.9} parent=5 // pred_fallthru
      _
  $region6: #{perceptual_loss.9} parent=0 // loop_footer
    %s13 = sadd.s32 1, %s9
  $region7: #{perceptual_loss.9} parent=0 // loop_footer_branch
    %8 = sbr.rel target = $region3
  $region8: #{perceptual_loss.9} parent=0 // loop_exit
    _

// kernel: perceptual_loss.11
$region0: #{perceptual_loss.11}
  #allocation0 [shape = 'u32[]', space=smem, size = 0x4, offset = 0x4, fixed_abs, tag = 'smem constant byte address 0x4 - core index']
  #allocation1 [shape = 'u32[144,128]{1,0:T(1,128)}', space=vmem, size = 0x12000, scoped, tag = 'internal scratch']
  %s0 = inlined_call_operand.vmem [shape: bf16[32,16,128], index: 0, kind: input, shape index: {}, may-alias: {0,1}]
  %s1 = inlined_call_operand.vmem [shape: bf16[32,16,128], index: 1, kind: input, shape index: {}, may-alias: {0,1}]
  %s2 = inlined_call_operand.vmem [shape: bf16[32,8,64], index: 2, kind: output, shape index: {}]
  %s3 = sld [smem:[#allocation0]]
  $region100: #{perceptual_loss.11} parent=0
    _
  %s5 = ssub.s32 1, %s3
  %s6 = scalar_select 0, %s5, %s3
  $region1: #{perceptual_loss.11} parent=0
    #allocation2 [shape = 'u8[65536]{0}', space=vmem, size = 0x10000, scoped, tag = 'input window, operand 0, single buffered']
    #allocation3 [shape = 'u8[65536]{0}', space=vmem, size = 0x10000, scoped, tag = 'input window, operand 1, single buffered']
    // Predicated region
    $region2: #{perceptual_loss.11} parent=1 // pred_check
      _
    $region3: #{perceptual_loss.11} parent=1 // pred_check_branch
      %8 = sbr.rel (0) target = $region5
    $region4: #{perceptual_loss.11} parent=1 // pred_region
      // Predicated region
      $region6: #{perceptual_loss.11} parent=4 // pred_check
        _
      $region7: #{perceptual_loss.11} parent=4 // pred_check_branch
        %10 = sbr.rel (0) target = $region9
      $region8: #{perceptual_loss.11} parent=4 // pred_region
        // Predicated region
        $region10: #{perceptual_loss.11} parent=8 // pred_check
          _
        $region11: #{perceptual_loss.11} parent=8 // pred_check_branch
          %12 = sbr.rel target = $region13
        $region12: #{perceptual_loss.11} parent=8 // pred_region
          // Predicated region
          $region25: #{perceptual_loss.11} parent=12 // pred_check
            _
          $region26: #{perceptual_loss.11} parent=12 // pred_check_branch
            %89 = sbr.rel (0) target = $region28
          $region27: #{perceptual_loss.11} parent=12 // pred_region
            loop: start=0, step=1, limit=1
            $region29: #{perceptual_loss.11} parent=27 // loop_pre_header
              _
            $region30: #{perceptual_loss.11} parent=27 // loop_header
              %s91 = sphi 0, %s95
              %p92 = scmp.ge.s32.totalorder %s91, 1
              %s96 = sphi %s0, %s0
              %s97 = sphi [#allocation2], [#allocation2]
            $region31: #{perceptual_loss.11} parent=27 // loop_header_branch
              %94 = sbr.rel (%p92) target = $region35
            $region32: #{perceptual_loss.11} parent=27 // loop_body
              _
            $region33: #{perceptual_loss.11} parent=27 // loop_footer
              %s95 = sadd.s32 1, %s91
            $region34: #{perceptual_loss.11} parent=27 // loop_footer_branch
              %90 = sbr.rel target = $region30
            $region35: #{perceptual_loss.11} parent=27 // loop_exit
              _
            loop: start=0, step=1, limit=1
            $region36: #{perceptual_loss.11} parent=27 // loop_pre_header
              _
            $region37: #{perceptual_loss.11} parent=27 // loop_header
              %s100 = sphi 0, %s104
              %p101 = scmp.ge.s32.totalorder %s100, 1
              %s105 = sphi %s0, %s0
              %s106 = sphi [#allocation2], [#allocation2]
            $region38: #{perceptual_loss.11} parent=27 // loop_header_branch
              %103 = sbr.rel (%p101) target = $region42
            $region39: #{perceptual_loss.11} parent=27 // loop_body
              %v107 = vld [vmem:[%s105] sm:$0xf]
              %108 = vst [vmem:[%s106] sm:$0xf] %v107
              %v109 = vld [vmem:[%s105 + $0x8] sm:$0xf]
              %110 = vst [vmem:[%s106 + $0x4] sm:$0xf] %v109
              %v111 = vld [vmem:[%s105 + $0x10] sm:$0xf]
              %112 = vst [vmem:[%s106 + $0x8] sm:$0xf] %v111
              %v113 = vld [vmem:[%s105 + $0x18] sm:$0xf]
              %114 = vst [vmem:[%s106 + $0xc] sm:$0xf] %v113
              %v115 = vld [vmem:[%s105 + $0x20] sm:$0xf]
              %116 = vst [vmem:[%s106 + $0x10] sm:$0xf] %v115
              %v117 = vld [vmem:[%s105 + $0x28] sm:$0xf]
              %118 = vst [vmem:[%s106 + $0x14] sm:$0xf] %v117
              %v119 = vld [vmem:[%s105 + $0x30] sm:$0xf]
              %120 = vst [vmem:[%s106 + $0x18] sm:$0xf] %v119
              %v121 = vld [vmem:[%s105 + $0x38] sm:$0xf]
              %122 = vst [vmem:[%s106 + $0x1c] sm:$0xf] %v121
              %v123 = vld [vmem:[%s105 + $0x40] sm:$0xf]
              %124 = vst [vmem:[%s106 + $0x20] sm:$0xf] %v123
              %v125 = vld [vmem:[%s105 + $0x48] sm:$0xf]
              %126 = vst [vmem:[%s106 + $0x24] sm:$0xf] %v125
              %v127 = vld [vmem:[%s105 + $0x50] sm:$0xf]
              %128 = vst [vmem:[%s106 + $0x28] sm:$0xf] %v127
              %v129 = vld [vmem:[%s105 + $0x58] sm:$0xf]
              %130 = vst [vmem:[%s106 + $0x2c] sm:$0xf] %v129
              %v131 = vld [vmem:[%s105 + $0x60] sm:$0xf]
              %132 = vst [vmem:[%s106 + $0x30] sm:$0xf] %v131
              %v133 = vld [vmem:[%s105 + $0x68] sm:$0xf]
              %134 = vst [vmem:[%s106 + $0x34] sm:$0xf] %v133
              %v135 = vld [vmem:[%s105 + $0x70] sm:$0xf]
              %136 = vst [vmem:[%s106 + $0x38] sm:$0xf] %v135
              %v137 = vld [vmem:[%s105 + $0x78] sm:$0xf]
              %138 = vst [vmem:[%s106 + $0x3c] sm:$0xf] %v137
              %v139 = vld [vmem:[%s105 + $0x80] sm:$0xf]
              %140 = vst [vmem:[%s106 + $0x40] sm:$0xf] %v139
              %v141 = vld [vmem:[%s105 + $0x88] sm:$0xf]
              %142 = vst [vmem:[%s106 + $0x44] sm:$0xf] %v141
              %v143 = vld [vmem:[%s105 + $0x90] sm:$0xf]
              %144 = vst [vmem:[%s106 + $0x48] sm:$0xf] %v143
              %v145 = vld [vmem:[%s105 + $0x98] sm:$0xf]
              %146 = vst [vmem:[%s106 + $0x4c] sm:$0xf] %v145
              %v147 = vld [vmem:[%s105 + $0xa0] sm:$0xf]
              %148 = vst [vmem:[%s106 + $0x50] sm:$0xf] %v147
              %v149 = vld [vmem:[%s105 + $0xa8] sm:$0xf]
              %150 = vst [vmem:[%s106 + $0x54] sm:$0xf] %v149
              %v151 = vld [vmem:[%s105 + $0xb0] sm:$0xf]
              %152 = vst [vmem:[%s106 + $0x58] sm:$0xf] %v151
              %v153 = vld [vmem:[%s105 + $0xb8] sm:$0xf]
              %154 = vst [vmem:[%s106 + $0x5c] sm:$0xf] %v153
              %v155 = vld [vmem:[%s105 + $0xc0] sm:$0xf]
              %156 = vst [vmem:[%s106 + $0x60] sm:$0xf] %v155
              %v157 = vld [vmem:[%s105 + $0xc8] sm:$0xf]
              %158 = vst [vmem:[%s106 + $0x64] sm:$0xf] %v157
              %v159 = vld [vmem:[%s105 + $0xd0] sm:$0xf]
              %160 = vst [vmem:[%s106 + $0x68] sm:$0xf] %v159
              %v161 = vld [vmem:[%s105 + $0xd8] sm:$0xf]
              %162 = vst [vmem:[%s106 + $0x6c] sm:$0xf] %v161
              %v163 = vld [vmem:[%s105 + $0xe0] sm:$0xf]
              %164 = vst [vmem:[%s106 + $0x70] sm:$0xf] %v163
              %v165 = vld [vmem:[%s105 + $0xe8] sm:$0xf]
              %166 = vst [vmem:[%s106 + $0x74] sm:$0xf] %v165
              %v167 = vld [vmem:[%s105 + $0xf0] sm:$0xf]
              %168 = vst [vmem:[%s106 + $0x78] sm:$0xf] %v167
              %v169 = vld [vmem:[%s105 + $0xf8] sm:$0xf]
              %170 = vst [vmem:[%s106 + $0x7c] sm:$0xf] %v169
            $region40: #{perceptual_loss.11} parent=27 // loop_footer
              %s104 = sadd.s32 1, %s100
            $region41: #{perceptual_loss.11} parent=27 // loop_footer_branch
              %99 = sbr.rel target = $region37
            $region42: #{perceptual_loss.11} parent=27 // loop_exit
              _
          $region28: #{perceptual_loss.11} parent=12 // pred_fallthru
            _
        $region13: #{perceptual_loss.11} parent=8 // pred_fallthru
          _
        // Predicated region
        $region14: #{perceptual_loss.11} parent=8 // pred_check
          _
        $region15: #{perceptual_loss.11} parent=8 // pred_check_branch
          %14 = sbr.rel (0) target = $region17
        $region16: #{perceptual_loss.11} parent=8 // pred_region
          loop: start=0, step=1, limit=1
          $region18: #{perceptual_loss.11} parent=16 // loop_pre_header
            _
          $region19: #{perceptual_loss.11} parent=16 // loop_header
            %s17 = sphi 0, %s21
            %p18 = scmp.ge.s32.totalorder %s17, 1
            %s22 = sphi %s0, %s0
            %s23 = sphi [#allocation2], [#allocation2]
          $region20: #{perceptual_loss.11} parent=16 // loop_header_branch
            %20 = sbr.rel (%p18) target = $region24
          $region21: #{perceptual_loss.11} parent=16 // loop_body
            %v24 = vld [vmem:[%s22] sm:$0xf]
            %25 = vst [vmem:[%s23] sm:$0xf] %v24
            %v26 = vld [vmem:[%s22 + $0x8] sm:$0xf]
            %27 = vst [vmem:[%s23 + $0x4] sm:$0xf] %v26
            %v28 = vld [vmem:[%s22 + $0x10] sm:$0xf]
            %29 = vst [vmem:[%s23 + $0x8] sm:$0xf] %v28
            %v30 = vld [vmem:[%s22 + $0x18] sm:$0xf]
            %31 = vst [vmem:[%s23 + $0xc] sm:$0xf] %v30
            %v32 = vld [vmem:[%s22 + $0x20] sm:$0xf]
            %33 = vst [vmem:[%s23 + $0x10] sm:$0xf] %v32
            %v34 = vld [vmem:[%s22 + $0x28] sm:$0xf]
            %35 = vst [vmem:[%s23 + $0x14] sm:$0xf] %v34
            %v36 = vld [vmem:[%s22 + $0x30] sm:$0xf]
            %37 = vst [vmem:[%s23 + $0x18] sm:$0xf] %v36
            %v38 = vld [vmem:[%s22 + $0x38] sm:$0xf]
            %39 = vst [vmem:[%s23 + $0x1c] sm:$0xf] %v38
            %v40 = vld [vmem:[%s22 + $0x40] sm:$0xf]
            %41 = vst [vmem:[%s23 + $0x20] sm:$0xf] %v40
            %v42 = vld [vmem:[%s22 + $0x48] sm:$0xf]
            %43 = vst [vmem:[%s23 + $0x24] sm:$0xf] %v42
            %v44 = vld [vmem:[%s22 + $0x50] sm:$0xf]
            %45 = vst [vmem:[%s23 + $0x28] sm:$0xf] %v44
            %v46 = vld [vmem:[%s22 + $0x58] sm:$0xf]
            %47 = vst [vmem:[%s23 + $0x2c] sm:$0xf] %v46
            %v48 = vld [vmem:[%s22 + $0x60] sm:$0xf]
            %49 = vst [vmem:[%s23 + $0x30] sm:$0xf] %v48
            %v50 = vld [vmem:[%s22 + $0x68] sm:$0xf]
            %51 = vst [vmem:[%s23 + $0x34] sm:$0xf] %v50
            %v52 = vld [vmem:[%s22 + $0x70] sm:$0xf]
            %53 = vst [vmem:[%s23 + $0x38] sm:$0xf] %v52
            %v54 = vld [vmem:[%s22 + $0x78] sm:$0xf]
            %55 = vst [vmem:[%s23 + $0x3c] sm:$0xf] %v54
            %v56 = vld [vmem:[%s22 + $0x80] sm:$0xf]
            %57 = vst [vmem:[%s23 + $0x40] sm:$0xf] %v56
            %v58 = vld [vmem:[%s22 + $0x88] sm:$0xf]
            %59 = vst [vmem:[%s23 + $0x44] sm:$0xf] %v58
            %v60 = vld [vmem:[%s22 + $0x90] sm:$0xf]
            %61 = vst [vmem:[%s23 + $0x48] sm:$0xf] %v60
            %v62 = vld [vmem:[%s22 + $0x98] sm:$0xf]
            %63 = vst [vmem:[%s23 + $0x4c] sm:$0xf] %v62
            %v64 = vld [vmem:[%s22 + $0xa0] sm:$0xf]
            %65 = vst [vmem:[%s23 + $0x50] sm:$0xf] %v64
            %v66 = vld [vmem:[%s22 + $0xa8] sm:$0xf]
            %67 = vst [vmem:[%s23 + $0x54] sm:$0xf] %v66
            %v68 = vld [vmem:[%s22 + $0xb0] sm:$0xf]
            %69 = vst [vmem:[%s23 + $0x58] sm:$0xf] %v68
            %v70 = vld [vmem:[%s22 + $0xb8] sm:$0xf]
            %71 = vst [vmem:[%s23 + $0x5c] sm:$0xf] %v70
            %v72 = vld [vmem:[%s22 + $0xc0] sm:$0xf]
            %73 = vst [vmem:[%s23 + $0x60] sm:$0xf] %v72
            %v74 = vld [vmem:[%s22 + $0xc8] sm:$0xf]
            %75 = vst [vmem:[%s23 + $0x64] sm:$0xf] %v74
            %v76 = vld [vmem:[%s22 + $0xd0] sm:$0xf]
            %77 = vst [vmem:[%s23 + $0x68] sm:$0xf] %v76
            %v78 = vld [vmem:[%s22 + $0xd8] sm:$0xf]
            %79 = vst [vmem:[%s23 + $0x6c] sm:$0xf] %v78
            %v80 = vld [vmem:[%s22 + $0xe0] sm:$0xf]
            %81 = vst [vmem:[%s23 + $0x70] sm:$0xf] %v80
            %v82 = vld [vmem:[%s22 + $0xe8] sm:$0xf]
            %83 = vst [vmem:[%s23 + $0x74] sm:$0xf] %v82
            %v84 = vld [vmem:[%s22 + $0xf0] sm:$0xf]
            %85 = vst [vmem:[%s23 + $0x78] sm:$0xf] %v84
            %v86 = vld [vmem:[%s22 + $0xf8] sm:$0xf]
            %87 = vst [vmem:[%s23 + $0x7c] sm:$0xf] %v86
          $region22: #{perceptual_loss.11} parent=16 // loop_footer
            %s21 = sadd.s32 1, %s17
          $region23: #{perceptual_loss.11} parent=16 // loop_footer_branch
            %16 = sbr.rel target = $region19
          $region24: #{perceptual_loss.11} parent=16 // loop_exit
            _
        $region17: #{perceptual_loss.11} parent=8 // pred_fallthru
          _
      $region9: #{perceptual_loss.11} parent=4 // pred_fallthru
        _
      %171 = vnop
    $region5: #{perceptual_loss.11} parent=1 // pred_fallthru
      _
    // Predicated region
    $region43: #{perceptual_loss.11} parent=1 // pred_check
      _
    $region44: #{perceptual_loss.11} parent=1 // pred_check_branch
      %173 = sbr.rel (0) target = $region46
    $region45: #{perceptual_loss.11} parent=1 // pred_region
      %s174 = scalar_lea.vmem %s1, 4
      // Predicated region
      $region47: #{perceptual_loss.11} parent=45 // pred_check
        _
      $region48: #{perceptual_loss.11} parent=45 // pred_check_branch
        %176 = sbr.rel (0) target = $region50
      $region49: #{perceptual_loss.11} parent=45 // pred_region
        // Predicated region
        $region51: #{perceptual_loss.11} parent=49 // pred_check
          _
        $region52: #{perceptual_loss.11} parent=49 // pred_check_branch
          %178 = sbr.rel target = $region54
        $region53: #{perceptual_loss.11} parent=49 // pred_region
          // Predicated region
          $region66: #{perceptual_loss.11} parent=53 // pred_check
            _
          $region67: #{perceptual_loss.11} parent=53 // pred_check_branch
            %255 = sbr.rel (0) target = $region69
          $region68: #{perceptual_loss.11} parent=53 // pred_region
            loop: start=0, step=1, limit=1
            $region70: #{perceptual_loss.11} parent=68 // loop_pre_header
              _
            $region71: #{perceptual_loss.11} parent=68 // loop_header
              %s257 = sphi 0, %s261
              %p258 = scmp.ge.s32.totalorder %s257, 1
              %s262 = sphi %s174, %s174
              %s263 = sphi [#allocation3], [#allocation3]
            $region72: #{perceptual_loss.11} parent=68 // loop_header_branch
              %260 = sbr.rel (%p258) target = $region76
            $region73: #{perceptual_loss.11} parent=68 // loop_body
              _
            $region74: #{perceptual_loss.11} parent=68 // loop_footer
              %s261 = sadd.s32 1, %s257
            $region75: #{perceptual_loss.11} parent=68 // loop_footer_branch
              %256 = sbr.rel target = $region71
            $region76: #{perceptual_loss.11} parent=68 // loop_exit
              _
            loop: start=0, step=1, limit=1
            $region77: #{perceptual_loss.11} parent=68 // loop_pre_header
              _
            $region78: #{perceptual_loss.11} parent=68 // loop_header
              %s266 = sphi 0, %s270
              %p267 = scmp.ge.s32.totalorder %s266, 1
              %s271 = sphi %s174, %s174
              %s272 = sphi [#allocation3], [#allocation3]
            $region79: #{perceptual_loss.11} parent=68 // loop_header_branch
              %269 = sbr.rel (%p267) target = $region83
            $region80: #{perceptual_loss.11} parent=68 // loop_body
              %v273 = vld [vmem:[%s271] sm:$0xf]
              %274 = vst [vmem:[%s272] sm:$0xf] %v273
              %v275 = vld [vmem:[%s271 + $0x8] sm:$0xf]
              %276 = vst [vmem:[%s272 + $0x4] sm:$0xf] %v275
              %v277 = vld [vmem:[%s271 + $0x10] sm:$0xf]
              %278 = vst [vmem:[%s272 + $0x8] sm:$0xf] %v277
              %v279 = vld [vmem:[%s271 + $0x18] sm:$0xf]
              %280 = vst [vmem:[%s272 + $0xc] sm:$0xf] %v279
              %v281 = vld [vmem:[%s271 + $0x20] sm:$0xf]
              %282 = vst [vmem:[%s272 + $0x10] sm:$0xf] %v281
              %v283 = vld [vmem:[%s271 + $0x28] sm:$0xf]
              %284 = vst [vmem:[%s272 + $0x14] sm:$0xf] %v283
              %v285 = vld [vmem:[%s271 + $0x30] sm:$0xf]
              %286 = vst [vmem:[%s272 + $0x18] sm:$0xf] %v285
              %v287 = vld [vmem:[%s271 + $0x38] sm:$0xf]
              %288 = vst [vmem:[%s272 + $0x1c] sm:$0xf] %v287
              %v289 = vld [vmem:[%s271 + $0x40] sm:$0xf]
              %290 = vst [vmem:[%s272 + $0x20] sm:$0xf] %v289
              %v291 = vld [vmem:[%s271 + $0x48] sm:$0xf]
              %292 = vst [vmem:[%s272 + $0x24] sm:$0xf] %v291
              %v293 = vld [vmem:[%s271 + $0x50] sm:$0xf]
              %294 = vst [vmem:[%s272 + $0x28] sm:$0xf] %v293
              %v295 = vld [vmem:[%s271 + $0x58] sm:$0xf]
              %296 = vst [vmem:[%s272 + $0x2c] sm:$0xf] %v295
              %v297 = vld [vmem:[%s271 + $0x60] sm:$0xf]
              %298 = vst [vmem:[%s272 + $0x30] sm:$0xf] %v297
              %v299 = vld [vmem:[%s271 + $0x68] sm:$0xf]
              %300 = vst [vmem:[%s272 + $0x34] sm:$0xf] %v299
              %v301 = vld [vmem:[%s271 + $0x70] sm:$0xf]
              %302 = vst [vmem:[%s272 + $0x38] sm:$0xf] %v301
              %v303 = vld [vmem:[%s271 + $0x78] sm:$0xf]
              %304 = vst [vmem:[%s272 + $0x3c] sm:$0xf] %v303
              %v305 = vld [vmem:[%s271 + $0x80] sm:$0xf]
              %306 = vst [vmem:[%s272 + $0x40] sm:$0xf] %v305
              %v307 = vld [vmem:[%s271 + $0x88] sm:$0xf]
              %308 = vst [vmem:[%s272 + $0x44] sm:$0xf] %v307
              %v309 = vld [vmem:[%s271 + $0x90] sm:$0xf]
              %310 = vst [vmem:[%s272 + $0x48] sm:$0xf] %v309
              %v311 = vld [vmem:[%s271 + $0x98] sm:$0xf]
              %312 = vst [vmem:[%s272 + $0x4c] sm:$0xf] %v311
              %v313 = vld [vmem:[%s271 + $0xa0] sm:$0xf]
              %314 = vst [vmem:[%s272 + $0x50] sm:$0xf] %v313
              %v315 = vld [vmem:[%s271 + $0xa8] sm:$0xf]
              %316 = vst [vmem:[%s272 + $0x54] sm:$0xf] %v315
              %v317 = vld [vmem:[%s271 + $0xb0] sm:$0xf]
              %318 = vst [vmem:[%s272 + $0x58] sm:$0xf] %v317
              %v319 = vld [vmem:[%s271 + $0xb8] sm:$0xf]
              %320 = vst [vmem:[%s272 + $0x5c] sm:$0xf] %v319
              %v321 = vld [vmem:[%s271 + $0xc0] sm:$0xf]
              %322 = vst [vmem:[%s272 + $0x60] sm:$0xf] %v321
              %v323 = vld [vmem:[%s271 + $0xc8] sm:$0xf]
              %324 = vst [vmem:[%s272 + $0x64] sm:$0xf] %v323
              %v325 = vld [vmem:[%s271 + $0xd0] sm:$0xf]
              %326 = vst [vmem:[%s272 + $0x68] sm:$0xf] %v325
              %v327 = vld [vmem:[%s271 + $0xd8] sm:$0xf]
              %328 = vst [vmem:[%s272 + $0x6c] sm:$0xf] %v327
              %v329 = vld [vmem:[%s271 + $0xe0] sm:$0xf]
              %330 = vst [vmem:[%s272 + $0x70] sm:$0xf] %v329
              %v331 = vld [vmem:[%s271 + $0xe8] sm:$0xf]
              %332 = vst [vmem:[%s272 + $0x74] sm:$0xf] %v331
              %v333 = vld [vmem:[%s271 + $0xf0] sm:$0xf]
              %334 = vst [vmem:[%s272 + $0x78] sm:$0xf] %v333
              %v335 = vld [vmem:[%s271 + $0xf8] sm:$0xf]
              %336 = vst [vmem:[%s272 + $0x7c] sm:$0xf] %v335
            $region81: #{perceptual_loss.11} parent=68 // loop_footer
              %s270 = sadd.s32 1, %s266
            $region82: #{perceptual_loss.11} parent=68 // loop_footer_branch
              %265 = sbr.rel target = $region78
            $region83: #{perceptual_loss.11} parent=68 // loop_exit
              _
          $region69: #{perceptual_loss.11} parent=53 // pred_fallthru
            _
        $region54: #{perceptual_loss.11} parent=49 // pred_fallthru
          _
        // Predicated region
        $region55: #{perceptual_loss.11} parent=49 // pred_check
          _
        $region56: #{perceptual_loss.11} parent=49 // pred_check_branch
          %180 = sbr.rel (0) target = $region58
        $region57: #{perceptual_loss.11} parent=49 // pred_region
          loop: start=0, step=1, limit=1
          $region59: #{perceptual_loss.11} parent=57 // loop_pre_header
            _
          $region60: #{perceptual_loss.11} parent=57 // loop_header
            %s183 = sphi 0, %s187
            %p184 = scmp.ge.s32.totalorder %s183, 1
            %s188 = sphi %s174, %s174
            %s189 = sphi [#allocation3], [#allocation3]
          $region61: #{perceptual_loss.11} parent=57 // loop_header_branch
            %186 = sbr.rel (%p184) target = $region65
          $region62: #{perceptual_loss.11} parent=57 // loop_body
            %v190 = vld [vmem:[%s188] sm:$0xf]
            %191 = vst [vmem:[%s189] sm:$0xf] %v190
            %v192 = vld [vmem:[%s188 + $0x8] sm:$0xf]
            %193 = vst [vmem:[%s189 + $0x4] sm:$0xf] %v192
            %v194 = vld [vmem:[%s188 + $0x10] sm:$0xf]
            %195 = vst [vmem:[%s189 + $0x8] sm:$0xf] %v194
            %v196 = vld [vmem:[%s188 + $0x18] sm:$0xf]
            %197 = vst [vmem:[%s189 + $0xc] sm:$0xf] %v196
            %v198 = vld [vmem:[%s188 + $0x20] sm:$0xf]
            %199 = vst [vmem:[%s189 + $0x10] sm:$0xf] %v198
            %v200 = vld [vmem:[%s188 + $0x28] sm:$0xf]
            %201 = vst [vmem:[%s189 + $0x14] sm:$0xf] %v200
            %v202 = vld [vmem:[%s188 + $0x30] sm:$0xf]
            %203 = vst [vmem:[%s189 + $0x18] sm:$0xf] %v202
            %v204 = vld [vmem:[%s188 + $0x38] sm:$0xf]
            %205 = vst [vmem:[%s189 + $0x1c] sm:$0xf] %v204
            %v206 = vld [vmem:[%s188 + $0x40] sm:$0xf]
            %207 = vst [vmem:[%s189 + $0x20] sm:$0xf] %v206
            %v208 = vld [vmem:[%s188 + $0x48] sm:$0xf]
            %209 = vst [vmem:[%s189 + $0x24] sm:$0xf] %v208
            %v210 = vld [vmem:[%s188 + $0x50] sm:$0xf]
            %211 = vst [vmem:[%s189 + $0x28] sm:$0xf] %v210
            %v212 = vld [vmem:[%s188 + $0x58] sm:$0xf]
            %213 = vst [vmem:[%s189 + $0x2c] sm:$0xf] %v212
            %v214 = vld [vmem:[%s188 + $0x60] sm:$0xf]
            %215 = vst [vmem:[%s189 + $0x30] sm:$0xf] %v214
            %v216 = vld [vmem:[%s188 + $0x68] sm:$0xf]
            %217 = vst [vmem:[%s189 + $0x34] sm:$0xf] %v216
            %v218 = vld [vmem:[%s188 + $0x70] sm:$0xf]
            %219 = vst [vmem:[%s189 + $0x38] sm:$0xf] %v218
            %v220 = vld [vmem:[%s188 + $0x78] sm:$0xf]
            %221 = vst [vmem:[%s189 + $0x3c] sm:$0xf] %v220
            %v222 = vld [vmem:[%s188 + $0x80] sm:$0xf]
            %223 = vst [vmem:[%s189 + $0x40] sm:$0xf] %v222
            %v224 = vld [vmem:[%s188 + $0x88] sm:$0xf]
            %225 = vst [vmem:[%s189 + $0x44] sm:$0xf] %v224
            %v226 = vld [vmem:[%s188 + $0x90] sm:$0xf]
            %227 = vst [vmem:[%s189 + $0x48] sm:$0xf] %v226
            %v228 = vld [vmem:[%s188 + $0x98] sm:$0xf]
            %229 = vst [vmem:[%s189 + $0x4c] sm:$0xf] %v228
            %v230 = vld [vmem:[%s188 + $0xa0] sm:$0xf]
            %231 = vst [vmem:[%s189 + $0x50] sm:$0xf] %v230
            %v232 = vld [vmem:[%s188 + $0xa8] sm:$0xf]
            %233 = vst [vmem:[%s189 + $0x54] sm:$0xf] %v232
            %v234 = vld [vmem:[%s188 + $0xb0] sm:$0xf]
            %235 = vst [vmem:[%s189 + $0x58] sm:$0xf] %v234
            %v236 = vld [vmem:[%s188 + $0xb8] sm:$0xf]
            %237 = vst [vmem:[%s189 + $0x5c] sm:$0xf] %v236
            %v238 = vld [vmem:[%s188 + $0xc0] sm:$0xf]
            %239 = vst [vmem:[%s189 + $0x60] sm:$0xf] %v238
            %v240 = vld [vmem:[%s188 + $0xc8] sm:$0xf]
            %241 = vst [vmem:[%s189 + $0x64] sm:$0xf] %v240
            %v242 = vld [vmem:[%s188 + $0xd0] sm:$0xf]
            %243 = vst [vmem:[%s189 + $0x68] sm:$0xf] %v242
            %v244 = vld [vmem:[%s188 + $0xd8] sm:$0xf]
            %245 = vst [vmem:[%s189 + $0x6c] sm:$0xf] %v244
            %v246 = vld [vmem:[%s188 + $0xe0] sm:$0xf]
            %247 = vst [vmem:[%s189 + $0x70] sm:$0xf] %v246
            %v248 = vld [vmem:[%s188 + $0xe8] sm:$0xf]
            %249 = vst [vmem:[%s189 + $0x74] sm:$0xf] %v248
            %v250 = vld [vmem:[%s188 + $0xf0] sm:$0xf]
            %251 = vst [vmem:[%s189 + $0x78] sm:$0xf] %v250
            %v252 = vld [vmem:[%s188 + $0xf8] sm:$0xf]
            %253 = vst [vmem:[%s189 + $0x7c] sm:$0xf] %v252
          $region63: #{perceptual_loss.11} parent=57 // loop_footer
            %s187 = sadd.s32 1, %s183
          $region64: #{perceptual_loss.11} parent=57 // loop_footer_branch
            %182 = sbr.rel target = $region60
          $region65: #{perceptual_loss.11} parent=57 // loop_exit
            _
        $region58: #{perceptual_loss.11} parent=49 // pred_fallthru
          _
      $region50: #{perceptual_loss.11} parent=45 // pred_fallthru
        _
      %337 = vnop
    $region46: #{perceptual_loss.11} parent=1 // pred_fallthru
      _
    // Predicated region
    $region84: #{perceptual_loss.11} parent=1 // pred_check
      _
    $region85: #{perceptual_loss.11} parent=1 // pred_check_branch
      %339 = sbr.rel (0) target = $region87
    $region86: #{perceptual_loss.11} parent=1 // pred_region
      _
    $region87: #{perceptual_loss.11} parent=1 // pred_fallthru
      _
    // Predicated region
    $region88: #{perceptual_loss.11} parent=1 // pred_check
      _
    $region89: #{perceptual_loss.11} parent=1 // pred_check_branch
      %341 = sbr.rel (0) target = $region91
    $region90: #{perceptual_loss.11} parent=1 // pred_region
      _
    $region91: #{perceptual_loss.11} parent=1 // pred_fallthru
      _
    %v342 = vld [vmem:[#allocation2] sm:$0xf]
    %v343 = vld [vmem:[#allocation2 + $0x4] sm:$0xf]
    %v344 = vld [vmem:[#allocation2 + $0x8] sm:$0xf]
    %v345 = vld [vmem:[#allocation2 + $0xc] sm:$0xf]
    %v346 = vld [vmem:[#allocation2 + $0x10] sm:$0xf]
    %v347 = vld [vmem:[#allocation2 + $0x14] sm:$0xf]
    %v348 = vld [vmem:[#allocation2 + $0x18] sm:$0xf]
    %v349 = vld [vmem:[#allocation2 + $0x1c] sm:$0xf]
    %v350 = vld [vmem:[#allocation2 + $0x20] sm:$0xf]
    %v351 = vld [vmem:[#allocation2 + $0x24] sm:$0xf]
    %v352 = vld [vmem:[#allocation2 + $0x28] sm:$0xf]
    %v353 = vld [vmem:[#allocation2 + $0x2c] sm:$0xf]
    %v354 = vld [vmem:[#allocation2 + $0x30] sm:$0xf]
    %v355 = vld [vmem:[#allocation2 + $0x34] sm:$0xf]
    %v356 = vld [vmem:[#allocation2 + $0x38] sm:$0xf]
    %v357 = vld [vmem:[#allocation2 + $0x3c] sm:$0xf]
    %v358 = vld [vmem:[#allocation2 + $0x40] sm:$0xf]
    %v359 = vld [vmem:[#allocation2 + $0x44] sm:$0xf]
    %v360 = vld [vmem:[#allocation2 + $0x48] sm:$0xf]
    %v361 = vld [vmem:[#allocation2 + $0x4c] sm:$0xf]
    %v362 = vld [vmem:[#allocation2 + $0x50] sm:$0xf]
    %v363 = vld [vmem:[#allocation2 + $0x54] sm:$0xf]
    %v364 = vld [vmem:[#allocation2 + $0x58] sm:$0xf]
    %v365 = vld [vmem:[#allocation2 + $0x5c] sm:$0xf]
    %v366 = vld [vmem:[#allocation2 + $0x60] sm:$0xf]
    %v367 = vld [vmem:[#allocation2 + $0x64] sm:$0xf]
    %v368 = vld [vmem:[#allocation2 + $0x68] sm:$0xf]
    %v369 = vld [vmem:[#allocation2 + $0x6c] sm:$0xf]
    %v370 = vld [vmem:[#allocation2 + $0x70] sm:$0xf]
    %v371 = vld [vmem:[#allocation2 + $0x74] sm:$0xf]
    %v372 = vld [vmem:[#allocation2 + $0x78] sm:$0xf]
    %v373 = vld [vmem:[#allocation2 + $0x7c] sm:$0xf]
    %v374 = vld [vmem:[#allocation3] sm:$0xf]
    %v375 = vld [vmem:[#allocation3 + $0x4] sm:$0xf]
    %v376 = vld [vmem:[#allocation3 + $0x8] sm:$0xf]
    %v377 = vld [vmem:[#allocation3 + $0xc] sm:$0xf]
    %v378 = vld [vmem:[#allocation3 + $0x10] sm:$0xf]
    %v379 = vld [vmem:[#allocation3 + $0x14] sm:$0xf]
    %v380 = vld [vmem:[#allocation3 + $0x18] sm:$0xf]
    %v381 = vld [vmem:[#allocation3 + $0x1c] sm:$0xf]
    %v382 = vld [vmem:[#allocation3 + $0x20] sm:$0xf]
    %v383 = vld [vmem:[#allocation3 + $0x24] sm:$0xf]
    %v384 = vld [vmem:[#allocation3 + $0x28] sm:$0xf]
    %v385 = vld [vmem:[#allocation3 + $0x2c] sm:$0xf]
    %v386 = vld [vmem:[#allocation3 + $0x30] sm:$0xf]
    %v387 = vld [vmem:[#allocation3 + $0x34] sm:$0xf]
    %v388 = vld [vmem:[#allocation3 + $0x38] sm:$0xf]
    %v389 = vld [vmem:[#allocation3 + $0x3c] sm:$0xf]
    %v390 = vld [vmem:[#allocation3 + $0x40] sm:$0xf]
    %v391 = vld [vmem:[#allocation3 + $0x44] sm:$0xf]
    %v392 = vld [vmem:[#allocation3 + $0x48] sm:$0xf]
    %v393 = vld [vmem:[#allocation3 + $0x4c] sm:$0xf]
    %v394 = vld [vmem:[#allocation3 + $0x50] sm:$0xf]
    %v395 = vld [vmem:[#allocation3 + $0x54] sm:$0xf]
    %v396 = vld [vmem:[#allocation3 + $0x58] sm:$0xf]
    %v397 = vld [vmem:[#allocation3 + $0x5c] sm:$0xf]
    %v398 = vld [vmem:[#allocation3 + $0x60] sm:$0xf]
    %v399 = vld [vmem:[#allocation3 + $0x64] sm:$0xf]
    %v400 = vld [vmem:[#allocation3 + $0x68] sm:$0xf]
    %v401 = vld [vmem:[#allocation3 + $0x6c] sm:$0xf]
    %v402 = vld [vmem:[#allocation3 + $0x70] sm:$0xf]
    %v403 = vld [vmem:[#allocation3 + $0x74] sm:$0xf]
    %v404 = vld [vmem:[#allocation3 + $0x78] sm:$0xf]
    %v405 = vld [vmem:[#allocation3 + $0x7c] sm:$0xf]
    %v406 = vmax.bf16 %v342, %v374
    %v407 = vmax.bf16 %v343, %v375
    %v408 = vmax.bf16 %v344, %v376
    %v409 = vmax.bf16 %v345, %v377
    %v410 = vmax.bf16 %v346, %v378
    %v411 = vmax.bf16 %v347, %v379
    %v412 = vmax.bf16 %v348, %v380
    %v413 = vmax.bf16 %v349, %v381
    %v414 = vmax.bf16 %v350, %v382
    %v415 = vmax.bf16 %v351, %v383
    %v416 = vmax.bf16 %v352, %v384
    %v417 = vmax.bf16 %v353, %v385
    %v418 = vmax.bf16 %v354, %v386
    %v419 = vmax.bf16 %v355, %v387
    %v420 = vmax.bf16 %v356, %v388
    %v421 = vmax.bf16 %v357, %v389
    %v422 = vmax.bf16 %v358, %v390
    %v423 = vmax.bf16 %v359, %v391
    %v424 = vmax.bf16 %v360, %v392
    %v425 = vmax.bf16 %v361, %v393
    %v426 = vmax.bf16 %v362, %v394
    %v427 = vmax.bf16 %v363, %v395
    %v428 = vmax.bf16 %v364, %v396
    %v429 = vmax.bf16 %v365, %v397
    %v430 = vmax.bf16 %v366, %v398
    %v431 = vmax.bf16 %v367, %v399
    %v432 = vmax.bf16 %v368, %v400
    %v433 = vmax.bf16 %v369, %v401
    %v434 = vmax.bf16 %v370, %v402
    %v435 = vmax.bf16 %v371, %v403
    %v436 = vmax.bf16 %v372, %v404
    %v437 = vmax.bf16 %v373, %v405
    %470 = vrot.lane.b32.xlu0 %v406, 64
    %v471 = vpop.permute.xlu0 %470
    %472 = vrot.lane.b32.xlu0 %v407, 64
    %v473 = vpop.permute.xlu0 %472
    %474 = vrot.lane.b32.xlu0 %v408, 64
    %v475 = vpop.permute.xlu0 %474
    %476 = vrot.lane.b32.xlu0 %v409, 64
    %v477 = vpop.permute.xlu0 %476
    %478 = vrot.lane.b32.xlu0 %v410, 64
    %v479 = vpop.permute.xlu0 %478
    %480 = vrot.lane.b32.xlu0 %v411, 64
    %v481 = vpop.permute.xlu0 %480
    %482 = vrot.lane.b32.xlu0 %v412, 64
    %v483 = vpop.permute.xlu0 %482
    %484 = vrot.lane.b32.xlu0 %v413, 64
    %v485 = vpop.permute.xlu0 %484
    %486 = vrot.lane.b32.xlu0 %v414, 64
    %v487 = vpop.permute.xlu0 %486
    %488 = vrot.lane.b32.xlu0 %v415, 64
    %v489 = vpop.permute.xlu0 %488
    %490 = vrot.lane.b32.xlu0 %v416, 64
    %v491 = vpop.permute.xlu0 %490
    %492 = vrot.lane.b32.xlu0 %v417, 64
    %v493 = vpop.permute.xlu0 %492
    %494 = vrot.lane.b32.xlu0 %v418, 64
    %v495 = vpop.permute.xlu0 %494
    %496 = vrot.lane.b32.xlu0 %v419, 64
    %v497 = vpop.permute.xlu0 %496
    %498 = vrot.lane.b32.xlu0 %v420, 64
    %v499 = vpop.permute.xlu0 %498
    %500 = vrot.lane.b32.xlu0 %v421, 64
    %v501 = vpop.permute.xlu0 %500
    %502 = vrot.lane.b32.xlu0 %v422, 64
    %v503 = vpop.permute.xlu0 %502
    %504 = vrot.lane.b32.xlu0 %v423, 64
    %v505 = vpop.permute.xlu0 %504
    %506 = vrot.lane.b32.xlu0 %v424, 64
    %v507 = vpop.permute.xlu0 %506
    %508 = vrot.lane.b32.xlu0 %v425, 64
    %v509 = vpop.permute.xlu0 %508
    %510 = vrot.lane.b32.xlu0 %v426, 64
    %v511 = vpop.permute.xlu0 %510
    %512 = vrot.lane.b32.xlu0 %v427, 64
    %v513 = vpop.permute.xlu0 %512
    %514 = vrot.lane.b32.xlu0 %v428, 64
    %v515 = vpop.permute.xlu0 %514
    %516 = vrot.lane.b32.xlu0 %v429, 64
    %v517 = vpop.permute.xlu0 %516
    %518 = vrot.lane.b32.xlu0 %v430, 64
    %v519 = vpop.permute.xlu0 %518
    %520 = vrot.lane.b32.xlu0 %v431, 64
    %v521 = vpop.permute.xlu0 %520
    %522 = vrot.lane.b32.xlu0 %v432, 64
    %v523 = vpop.permute.xlu0 %522
    %524 = vrot.lane.b32.xlu0 %v433, 64
    %v525 = vpop.permute.xlu0 %524
    %526 = vrot.lane.b32.xlu0 %v434, 64
    %v527 = vpop.permute.xlu0 %526
    %528 = vrot.lane.b32.xlu0 %v435, 64
    %v529 = vpop.permute.xlu0 %528
    %530 = vrot.lane.b32.xlu0 %v436, 64
    %v531 = vpop.permute.xlu0 %530
    %532 = vrot.lane.b32.xlu0 %v437, 64
    %v533 = vpop.permute.xlu0 %532
    %v566 = vmax.bf16 %v406, %v471
    %v567 = vmax.bf16 %v407, %v473
    %v568 = vmax.bf16 %v408, %v475
    %v569 = vmax.bf16 %v409, %v477
    %v570 = vmax.bf16 %v410, %v479
    %v571 = vmax.bf16 %v411, %v481
    %v572 = vmax.bf16 %v412, %v483
    %v573 = vmax.bf16 %v413, %v485
    %v574 = vmax.bf16 %v414, %v487
    %v575 = vmax.bf16 %v415, %v489
    %v576 = vmax.bf16 %v416, %v491
    %v577 = vmax.bf16 %v417, %v493
    %v578 = vmax.bf16 %v418, %v495
    %v579 = vmax.bf16 %v419, %v497
    %v580 = vmax.bf16 %v420, %v499
    %v581 = vmax.bf16 %v421, %v501
    %v582 = vmax.bf16 %v422, %v503
    %v583 = vmax.bf16 %v423, %v505
    %v584 = vmax.bf16 %v424, %v507
    %v585 = vmax.bf16 %v425, %v509
    %v586 = vmax.bf16 %v426, %v511
    %v587 = vmax.bf16 %v427, %v513
    %v588 = vmax.bf16 %v428, %v515
    %v589 = vmax.bf16 %v429, %v517
    %v590 = vmax.bf16 %v430, %v519
    %v591 = vmax.bf16 %v431, %v521
    %v592 = vmax.bf16 %v432, %v523
    %v593 = vmax.bf16 %v433, %v525
    %v594 = vmax.bf16 %v434, %v527
    %v595 = vmax.bf16 %v435, %v529
    %v596 = vmax.bf16 %v436, %v531
    %v597 = vmax.bf16 %v437, %v533
    %vm598 = vcmask 519168
    %599 = vst.msk [vmem:[%s2] sm:$0xf] %vm598, %v566
    %600 = vst.msk [vmem:[%s2 + $0x4] sm:$0xf] %vm598, %v567
    %601 = vst.msk [vmem:[%s2 + $0x8] sm:$0xf] %vm598, %v568
    %602 = vst.msk [vmem:[%s2 + $0xc] sm:$0xf] %vm598, %v569
    %603 = vst.msk [vmem:[%s2 + $0x10] sm:$0xf] %vm598, %v570
    %604 = vst.msk [vmem:[%s2 + $0x14] sm:$0xf] %vm598, %v571
    %605 = vst.msk [vmem:[%s2 + $0x18] sm:$0xf] %vm598, %v572
    %606 = vst.msk [vmem:[%s2 + $0x1c] sm:$0xf] %vm598, %v573
    %607 = vst.msk [vmem:[%s2 + $0x20] sm:$0xf] %vm598, %v574
    %608 = vst.msk [vmem:[%s2 + $0x24] sm:$0xf] %vm598, %v575
    %609 = vst.msk [vmem:[%s2 + $0x28] sm:$0xf] %vm598, %v576
    %610 = vst.msk [vmem:[%s2 + $0x2c] sm:$0xf] %vm598, %v577
    %611 = vst.msk [vmem:[%s2 + $0x30] sm:$0xf] %vm598, %v578
    %612 = vst.msk [vmem:[%s2 + $0x34] sm:$0xf] %vm598, %v579
    %613 = vst.msk [vmem:[%s2 + $0x38] sm:$0xf] %vm598, %v580
    %614 = vst.msk [vmem:[%s2 + $0x3c] sm:$0xf] %vm598, %v581
    %615 = vst.msk [vmem:[%s2 + $0x40] sm:$0xf] %vm598, %v582
    %616 = vst.msk [vmem:[%s2 + $0x44] sm:$0xf] %vm598, %v583
    %617 = vst.msk [vmem:[%s2 + $0x48] sm:$0xf] %vm598, %v584
    %618 = vst.msk [vmem:[%s2 + $0x4c] sm:$0xf] %vm598, %v585
    %619 = vst.msk [vmem:[%s2 + $0x50] sm:$0xf] %vm598, %v586
    %620 = vst.msk [vmem:[%s2 + $0x54] sm:$0xf] %vm598, %v587
    %621 = vst.msk [vmem:[%s2 + $0x58] sm:$0xf] %vm598, %v588
    %622 = vst.msk [vmem:[%s2 + $0x5c] sm:$0xf] %vm598, %v589
    %623 = vst.msk [vmem:[%s2 + $0x60] sm:$0xf] %vm598, %v590
    %624 = vst.msk [vmem:[%s2 + $0x64] sm:$0xf] %vm598, %v591
    %625 = vst.msk [vmem:[%s2 + $0x68] sm:$0xf] %vm598, %v592
    %626 = vst.msk [vmem:[%s2 + $0x6c] sm:$0xf] %vm598, %v593
    %627 = vst.msk [vmem:[%s2 + $0x70] sm:$0xf] %vm598, %v594
    %628 = vst.msk [vmem:[%s2 + $0x74] sm:$0xf] %vm598, %v595
    %629 = vst.msk [vmem:[%s2 + $0x78] sm:$0xf] %vm598, %v596
    %630 = vst.msk [vmem:[%s2 + $0x7c] sm:$0xf] %vm598, %v597
    // Predicated region
    $region92: #{perceptual_loss.11} parent=1 // pred_check
      _
    $region93: #{perceptual_loss.11} parent=1 // pred_check_branch
      %632 = sbr.rel (0) target = $region95
    $region94: #{perceptual_loss.11} parent=1 // pred_region
      _
    $region95: #{perceptual_loss.11} parent=1 // pred_fallthru
      _
    // Predicated region
    $region96: #{perceptual_loss.11} parent=1 // pred_check
      _
    $region97: #{perceptual_loss.11} parent=1 // pred_check_branch
      %634 = sbr.rel (0) target = $region99
    $region98: #{perceptual_loss.11} parent=1 // pred_region
      _
    $region99: #{perceptual_loss.11} parent=1 // pred_fallthru
      _

// kernel: perceptual_loss.10
$region0: #{perceptual_loss.10}
  #allocation0 [shape = 'u32[]', space=smem, size = 0x4, offset = 0x4, fixed_abs, tag = 'smem constant byte address 0x4 - core index']
  #allocation1 [shape = 'u32[144,128]{1,0:T(1,128)}', space=vmem, size = 0x12000, scoped, tag = 'internal scratch']
  %s0 = inlined_call_operand.vmem [shape: bf16[1024,576], index: 0, kind: input, shape index: {}]
  %s1 = inlined_call_operand.vmem [shape: bf16[576,64], index: 1, kind: input, shape index: {}]
  %s2 = inlined_call_operand.vmem [shape: f32[1,64], index: 2, kind: input, shape index: {}]
  %s3 = inlined_call_operand.vmem [shape: bf16[1024,64], index: 3, kind: output, shape index: {}]
  %s4 = sld [smem:[#allocation0]]
  $region45: #{perceptual_loss.10} parent=0
    _
  %s6 = ssub.s32 1, %s4
  %s7 = scalar_select 0, %s6, %s4
  loop: start=0, step=1, limit=4
  $region2: #{perceptual_loss.10} parent=0 // loop_pre_header
    _
  $region3: #{perceptual_loss.10} parent=0 // loop_header
    %s9 = sphi 0, %s13
    %p10 = scmp.ge.s32.totalorder %s9, 4
    %s19 = sphi 0, %s21
    %s22 = sphi 0, %s19
    %s23 = sphi 0, %s22
    %s39 = sphi 0, %s23
    %s43 = sphi 0, %s43
    %s45 = sphi 0, %s43
    %s46 = sphi 0, %s45
    %s60 = sphi 0, %s46
    %s64 = sphi 0, %s64
    %s66 = sphi 0, %s64
    %s67 = sphi 0, %s66
    %s81 = sphi 0, %s67
    %s87 = sphi 0, %s89
    %s90 = sphi 0, %s87
    %s91 = sphi 0, %s90
    %s107 = sphi 0, %s91
  $region4: #{perceptual_loss.10} parent=0 // loop_header_branch
    %12 = sbr.rel (%p10) target = $region8
  $region5: #{perceptual_loss.10} parent=0 // loop_body
    %s14 = ssub.s32 %s9, 1
    %s15 = ssub.s32 %s9, 2
    %s16 = sadd.s32 %s9, 1
    %s17 = ssub.s32 %s9, %s16
    %p18 = scmp.eq.s32.totalorder %s17, 0
    %s20 = sadd.s32 %s19, 1
    %s21 = scalar_select %p18, %s19, %s20
    %p24 = pneg %p18
    %p25 = scmp.eq.s32.totalorder %s9, 1
    %p26 = por %p24, %p25
    %p27 = scmp.ne.s32.totalorder %s19, %s22
    %p28 = scmp.eq.s32.totalorder %s9, 0
    %p29 = por %p27, %p28
    %p30 = scmp.ne.s32.totalorder %s19, %s22
    %p31 = scmp.eq.s32.totalorder %s14, 1
    %p32 = por %p30, %p31
    %p33 = scmp.ne.s32.totalorder %s22, %s23
    %p34 = scmp.eq.s32.totalorder %s14, 0
    %p35 = por %p33, %p34
    %p36 = scmp.ne.s32.totalorder %s22, %s23
    %p37 = scmp.eq.s32.totalorder %s15, 1
    %p38 = por %p36, %p37
    %p40 = scmp.ne.s32.totalorder %s23, %s39
    %p41 = scmp.eq.s32.totalorder %s15, 0
    %p42 = por %p40, %p41
    %s44 = sadd.s32 %s43, 1
    %p47 = scmp.eq.s32.totalorder %s9, 1
    %p48 = scmp.ne.s32.totalorder %s43, %s45
    %p49 = scmp.eq.s32.totalorder %s9, 0
    %p50 = por %p48, %p49
    %p51 = scmp.ne.s32.totalorder %s43, %s45
    %p52 = scmp.eq.s32.totalorder %s14, 1
    %p53 = por %p51, %p52
    %p54 = scmp.ne.s32.totalorder %s45, %s46
    %p55 = scmp.eq.s32.totalorder %s14, 0
    %p56 = por %p54, %p55
    %p57 = scmp.ne.s32.totalorder %s45, %s46
    %p58 = scmp.eq.s32.totalorder %s15, 1
    %p59 = por %p57, %p58
    %p61 = scmp.ne.s32.totalorder %s46, %s60
    %p62 = scmp.eq.s32.totalorder %s15, 0
    %p63 = por %p61, %p62
    %s65 = sadd.s32 %s64, 1
    %p68 = scmp.eq.s32.totalorder %s9, 1
    %p69 = scmp.ne.s32.totalorder %s64, %s66
    %p70 = scmp.eq.s32.totalorder %s9, 0
    %p71 = por %p69, %p70
    %p72 = scmp.ne.s32.totalorder %s64, %s66
    %p73 = scmp.eq.s32.totalorder %s14, 1
    %p74 = por %p72, %p73
    %p75 = scmp.ne.s32.totalorder %s66, %s67
    %p76 = scmp.eq.s32.totalorder %s14, 0
    %p77 = por %p75, %p76
    %p78 = scmp.ne.s32.totalorder %s66, %s67
    %p79 = scmp.eq.s32.totalorder %s15, 1
    %p80 = por %p78, %p79
    %p82 = scmp.ne.s32.totalorder %s67, %s81
    %p83 = scmp.eq.s32.totalorder %s15, 0
    %p84 = por %p82, %p83
    %s85 = ssub.s32 %s9, %s16
    %p86 = scmp.eq.s32.totalorder %s85, 0
    %s88 = sadd.s32 %s87, 1
    %s89 = scalar_select %p86, %s87, %s88
    %p92 = pneg %p86
    %p93 = scmp.eq.s32.totalorder %s9, 1
    %p94 = por %p92, %p93
    %p95 = scmp.ne.s32.totalorder %s87, %s90
    %p96 = scmp.eq.s32.totalorder %s9, 0
    %p97 = por %p95, %p96
    %p98 = scmp.ne.s32.totalorder %s87, %s90
    %p99 = scmp.eq.s32.totalorder %s14, 1
    %p100 = por %p98, %p99
    %p101 = scmp.ne.s32.totalorder %s90, %s91
    %p102 = scmp.eq.s32.totalorder %s14, 0
    %p103 = por %p101, %p102
    %p104 = scmp.ne.s32.totalorder %s90, %s91
    %p105 = scmp.eq.s32.totalorder %s15, 1
    %p106 = por %p104, %p105
    %p108 = scmp.ne.s32.totalorder %s91, %s107
    %p109 = scmp.eq.s32.totalorder %s15, 0
    %p110 = por %p108, %p109
    %p111 = scmp.le.s32.totalorder 1, %s9
    %p112 = scmp.lt.s32.totalorder %s9, 3
    %p113 = pnand %p111, %p112
    %p114 = pneg %p113
    // Predicated region
    $region9: #{perceptual_loss.10} parent=5 // pred_check
      _
    $region10: #{perceptual_loss.10} parent=5 // pred_check_branch
      %116 = sbr.rel (%p113) target = $region12
    $region11: #{perceptual_loss.10} parent=5 // pred_region
      %s117 = ssub.s32 %s9, 1
      // Predicated region
      $region13: #{perceptual_loss.10} parent=11 // pred_check
        %p118 = pneg %p56
      $region14: #{perceptual_loss.10} parent=11 // pred_check_branch
        %120 = sbr.rel (%p118) target = $region16
      $region15: #{perceptual_loss.10} parent=11 // pred_region
        _
      $region16: #{perceptual_loss.10} parent=11 // pred_fallthru
        _
      // Predicated region
      $region17: #{perceptual_loss.10} parent=11 // pred_check
        %p121 = pneg %p77
      $region18: #{perceptual_loss.10} parent=11 // pred_check_branch
        %123 = sbr.rel (%p121) target = $region20
      $region19: #{perceptual_loss.10} parent=11 // pred_region
        _
      $region20: #{perceptual_loss.10} parent=11 // pred_fallthru
        _
    $region12: #{perceptual_loss.10} parent=5 // pred_fallthru
      _
    %p124 = scmp.lt.s32.totalorder %s9, 2
    // Predicated region
    $region21: #{perceptual_loss.10} parent=5 // pred_check
      %p125 = pneg %p124
    $region22: #{perceptual_loss.10} parent=5 // pred_check_branch
      %127 = sbr.rel (%p125) target = $region24
    $region23: #{perceptual_loss.10} parent=5 // pred_region
      // Predicated region
      $region25: #{perceptual_loss.10} parent=23 // pred_check
        %p128 = pneg %p29
      $region26: #{perceptual_loss.10} parent=23 // pred_check_branch
        %130 = sbr.rel (%p128) target = $region28
      $region27: #{perceptual_loss.10} parent=23 // pred_region
        %s131 = smul.u32 64, %s9
        %p132 = scmp.lt.s32.totalorder %s131, 127
        %s133 = scalar_select %p132, %s131, 127
        %s134 = smul.addr %s133, 5
        %s135 = smul.addr %s134, 4
        %s136 = scalar_lea.vmem %s0, %s135
        %s137 = smul.u32 64, %s9
      $region28: #{perceptual_loss.10} parent=23 // pred_fallthru
        _
    $region24: #{perceptual_loss.10} parent=5 // pred_fallthru
      _
    %p138 = scmp.le.s32.totalorder 1, %s9
    %p139 = scmp.lt.s32.totalorder %s9, 3
    %p140 = pnand %p138, %p139
    %p141 = pneg %p140
    // Predicated region
    $region29: #{perceptual_loss.10} parent=5 // pred_check
      _
    $region30: #{perceptual_loss.10} parent=5 // pred_check_branch
      %143 = sbr.rel (%p140) target = $region32
    $region31: #{perceptual_loss.10} parent=5 // pred_region
      %s144 = ssub.s32 %s9, 1
      %s145 = smul.u32 64, %s14
      %p146 = scmp.lt.s32.totalorder %s145, 127
      %s147 = scalar_select %p146, %s145, 127
      %s148 = smul.addr %s147, 5
      %s149 = smul.addr %s148, 4
      %s150 = scalar_lea.vmem %s0, %s149
      %p151 = pneg %p35
      %p152 = pneg %p32
      %p153 = pneg %p56
      %p154 = pneg %p53
      %p155 = pneg %p77
      %p156 = pneg %p74
      %p157 = pneg %p103
      %p158 = pneg %p100
      %s159 = smul.u32 64, %s14
      %p160 = scmp.lt.s32.totalorder %s159, 127
      %s161 = scalar_select %p160, %s159, 127
      %s162 = smul.addr %s161, 4
      %s163 = scalar_lea.vmem %s3, %s162
      %s164 = smul.u32 64, %s14
      %p165 = scmp.lt.s32.totalorder %s164, 127
      %s166 = scalar_select %p165, %s164, 127
      %s167 = smul.addr %s166, 5
      %s168 = smul.addr %s167, 4
      %s169 = scalar_lea.vmem %s0, %s168
      %s170 = smul.u32 64, %s14
      %s171 = smul.u32 64, %s14
      %p172 = scmp.lt.s32.totalorder %s171, 127
      %s173 = scalar_select %p172, %s171, 127
      %s174 = smul.addr %s173, 4
      %s175 = scalar_lea.vmem %s3, %s174
      %s176 = smul.u32 64, %s14
      %v178 = vld [vmem:[%s169] sm:$0xff]
      %v179 = vld [vmem:[%s169 + $0x8] sm:$0xff]
      %v180 = vld [vmem:[%s169 + $0x10] sm:$0xf]
      %v181 = vld [vmem:[%s169 + $0x14] sm:$0xff]
      %v182 = vld [vmem:[%s169 + $0x1c] sm:$0xff]
      %v183 = vld [vmem:[%s169 + $0x24] sm:$0xf]
      %v184 = vld [vmem:[%s169 + $0x28] sm:$0xff]
      %v185 = vld [vmem:[%s169 + $0x30] sm:$0xff]
      %v186 = vld [vmem:[%s169 + $0x38] sm:$0xf]
      %v187 = vld [vmem:[%s169 + $0x3c] sm:$0xff]
      %v188 = vld [vmem:[%s169 + $0x44] sm:$0xff]
      %v189 = vld [vmem:[%s169 + $0x4c] sm:$0xf]
      %v190 = vld [vmem:[%s169 + $0x50] sm:$0xff]
      %v191 = vld [vmem:[%s169 + $0x58] sm:$0xff]
      %v192 = vld [vmem:[%s169 + $0x60] sm:$0xf]
      %v193 = vld [vmem:[%s169 + $0x64] sm:$0xff]
      %v194 = vld [vmem:[%s169 + $0x6c] sm:$0xff]
      %v195 = vld [vmem:[%s169 + $0x74] sm:$0xf]
      %v196 = vld [vmem:[%s169 + $0x78] sm:$0xff]
      %v197 = vld [vmem:[%s169 + $0x80] sm:$0xff]
      %v198 = vld [vmem:[%s169 + $0x88] sm:$0xf]
      %v199 = vld [vmem:[%s169 + $0x8c] sm:$0xff]
      %v200 = vld [vmem:[%s169 + $0x94] sm:$0xff]
      %v201 = vld [vmem:[%s169 + $0x9c] sm:$0xf]
      %v202 = vld [vmem:[%s169 + $0xa0] sm:$0xff]
      %v203 = vld [vmem:[%s169 + $0xa8] sm:$0xff]
      %v204 = vld [vmem:[%s169 + $0xb0] sm:$0xf]
      %v205 = vld [vmem:[%s169 + $0xb4] sm:$0xff]
      %v206 = vld [vmem:[%s169 + $0xbc] sm:$0xff]
      %v207 = vld [vmem:[%s169 + $0xc4] sm:$0xf]
      %v208 = vld [vmem:[%s169 + $0xc8] sm:$0xff]
      %v209 = vld [vmem:[%s169 + $0xd0] sm:$0xff]
      %v210 = vld [vmem:[%s169 + $0xd8] sm:$0xf]
      %v211 = vld [vmem:[%s169 + $0xdc] sm:$0xff]
      %v212 = vld [vmem:[%s169 + $0xe4] sm:$0xff]
      %v213 = vld [vmem:[%s169 + $0xec] sm:$0xf]
      %v214 = vld [vmem:[%s169 + $0xf0] sm:$0xff]
      %v215 = vld [vmem:[%s169 + $0xf8] sm:$0xff]
      %v216 = vld [vmem:[%s169 + $0x100] sm:$0xf]
      %v217 = vld [vmem:[%s169 + $0x104] sm:$0xff]
      %v218 = vld [vmem:[%s169 + $0x10c] sm:$0xff]
      %v219 = vld [vmem:[%s169 + $0x114] sm:$0xf]
      %v220 = vld [vmem:[%s169 + $0x118] sm:$0xff]
      %v221 = vld [vmem:[%s169 + $0x120] sm:$0xff]
      %v222 = vld [vmem:[%s169 + $0x128] sm:$0xf]
      %v223 = vld [vmem:[%s169 + $0x12c] sm:$0xff]
      %v224 = vld [vmem:[%s169 + $0x134] sm:$0xff]
      %v225 = vld [vmem:[%s169 + $0x13c] sm:$0xf]
      %v226 = vld [vmem:[%s169 + $0x140] sm:$0xff]
      %v227 = vld [vmem:[%s169 + $0x148] sm:$0xff]
      %v228 = vld [vmem:[%s169 + $0x150] sm:$0xf]
      %v229 = vld [vmem:[%s169 + $0x154] sm:$0xff]
      %v230 = vld [vmem:[%s169 + $0x15c] sm:$0xff]
      %v231 = vld [vmem:[%s169 + $0x164] sm:$0xf]
      %v232 = vld [vmem:[%s169 + $0x168] sm:$0xff]
      %v233 = vld [vmem:[%s169 + $0x170] sm:$0xff]
      %v234 = vld [vmem:[%s169 + $0x178] sm:$0xf]
      %v235 = vld [vmem:[%s169 + $0x17c] sm:$0xff]
      %v236 = vld [vmem:[%s169 + $0x184] sm:$0xff]
      %v237 = vld [vmem:[%s169 + $0x18c] sm:$0xf]
      %v238 = vld [vmem:[%s169 + $0x190] sm:$0xff]
      %v239 = vld [vmem:[%s169 + $0x198] sm:$0xff]
      %v240 = vld [vmem:[%s169 + $0x1a0] sm:$0xf]
      %v241 = vld [vmem:[%s169 + $0x1a4] sm:$0xff]
      %v242 = vld [vmem:[%s169 + $0x1ac] sm:$0xff]
      %v243 = vld [vmem:[%s169 + $0x1b4] sm:$0xf]
      %v244 = vld [vmem:[%s169 + $0x1b8] sm:$0xff]
      %v245 = vld [vmem:[%s169 + $0x1c0] sm:$0xff]
      %v246 = vld [vmem:[%s169 + $0x1c8] sm:$0xf]
      %v247 = vld [vmem:[%s169 + $0x1cc] sm:$0xff]
      %v248 = vld [vmem:[%s169 + $0x1d4] sm:$0xff]
      %v249 = vld [vmem:[%s169 + $0x1dc] sm:$0xf]
      %v250 = vld [vmem:[%s169 + $0x1e0] sm:$0xff]
      %v251 = vld [vmem:[%s169 + $0x1e8] sm:$0xff]
      %v252 = vld [vmem:[%s169 + $0x1f0] sm:$0xf]
      %v253 = vld [vmem:[%s169 + $0x1f4] sm:$0xff]
      %v254 = vld [vmem:[%s169 + $0x1fc] sm:$0xff]
      %v255 = vld [vmem:[%s169 + $0x204] sm:$0xf]
      %v256 = vld [vmem:[%s169 + $0x208] sm:$0xff]
      %v257 = vld [vmem:[%s169 + $0x210] sm:$0xff]
      %v258 = vld [vmem:[%s169 + $0x218] sm:$0xf]
      %v259 = vld [vmem:[%s169 + $0x21c] sm:$0xff]
      %v260 = vld [vmem:[%s169 + $0x224] sm:$0xff]
      %v261 = vld [vmem:[%s169 + $0x22c] sm:$0xf]
      %v262 = vld [vmem:[%s169 + $0x230] sm:$0xff]
      %v263 = vld [vmem:[%s169 + $0x238] sm:$0xff]
      %v264 = vld [vmem:[%s169 + $0x240] sm:$0xf]
      %v265 = vld [vmem:[%s169 + $0x244] sm:$0xff]
      %v266 = vld [vmem:[%s169 + $0x24c] sm:$0xff]
      %v267 = vld [vmem:[%s169 + $0x254] sm:$0xf]
      %v268 = vld [vmem:[%s169 + $0x258] sm:$0xff]
      %v269 = vld [vmem:[%s169 + $0x260] sm:$0xff]
      %v270 = vld [vmem:[%s169 + $0x268] sm:$0xf]
      %v271 = vld [vmem:[%s169 + $0x26c] sm:$0xff]
      %v272 = vld [vmem:[%s169 + $0x274] sm:$0xff]
      %v273 = vld [vmem:[%s169 + $0x27c] sm:$0xf]
      %v274 = vld [vmem:[%s169 + $0x280] sm:$0xff]
      %v275 = vld [vmem:[%s169 + $0x288] sm:$0xff]
      %v276 = vld [vmem:[%s169 + $0x290] sm:$0xf]
      %v277 = vld [vmem:[%s169 + $0x294] sm:$0xff]
      %v278 = vld [vmem:[%s169 + $0x29c] sm:$0xff]
      %v279 = vld [vmem:[%s169 + $0x2a4] sm:$0xf]
      %v280 = vld [vmem:[%s169 + $0x2a8] sm:$0xff]
      %v281 = vld [vmem:[%s169 + $0x2b0] sm:$0xff]
      %v282 = vld [vmem:[%s169 + $0x2b8] sm:$0xf]
      %v283 = vld [vmem:[%s169 + $0x2bc] sm:$0xff]
      %v284 = vld [vmem:[%s169 + $0x2c4] sm:$0xff]
      %v285 = vld [vmem:[%s169 + $0x2cc] sm:$0xf]
      %v286 = vld [vmem:[%s169 + $0x2d0] sm:$0xff]
      %v287 = vld [vmem:[%s169 + $0x2d8] sm:$0xff]
      %v288 = vld [vmem:[%s169 + $0x2e0] sm:$0xf]
      %v289 = vld [vmem:[%s169 + $0x2e4] sm:$0xff]
      %v290 = vld [vmem:[%s169 + $0x2ec] sm:$0xff]
      %v291 = vld [vmem:[%s169 + $0x2f4] sm:$0xf]
      %v292 = vld [vmem:[%s169 + $0x2f8] sm:$0xff]
      %v293 = vld [vmem:[%s169 + $0x300] sm:$0xff]
      %v294 = vld [vmem:[%s169 + $0x308] sm:$0xf]
      %v295 = vld [vmem:[%s169 + $0x30c] sm:$0xff]
      %v296 = vld [vmem:[%s169 + $0x314] sm:$0xff]
      %v297 = vld [vmem:[%s169 + $0x31c] sm:$0xf]
      %v298 = vld [vmem:[%s169 + $0x320] sm:$0xff]
      %v299 = vld [vmem:[%s169 + $0x328] sm:$0xff]
      %v300 = vld [vmem:[%s169 + $0x330] sm:$0xf]
      %v301 = vld [vmem:[%s169 + $0x334] sm:$0xff]
      %v302 = vld [vmem:[%s169 + $0x33c] sm:$0xff]
      %v303 = vld [vmem:[%s169 + $0x344] sm:$0xf]
      %v304 = vld [vmem:[%s169 + $0x348] sm:$0xff]
      %v305 = vld [vmem:[%s169 + $0x350] sm:$0xff]
      %v306 = vld [vmem:[%s169 + $0x358] sm:$0xf]
      %v307 = vld [vmem:[%s169 + $0x35c] sm:$0xff]
      %v308 = vld [vmem:[%s169 + $0x364] sm:$0xff]
      %v309 = vld [vmem:[%s169 + $0x36c] sm:$0xf]
      %v310 = vld [vmem:[%s169 + $0x370] sm:$0xff]
      %v311 = vld [vmem:[%s169 + $0x378] sm:$0xff]
      %v312 = vld [vmem:[%s169 + $0x380] sm:$0xf]
      %v313 = vld [vmem:[%s169 + $0x384] sm:$0xff]
      %v314 = vld [vmem:[%s169 + $0x38c] sm:$0xff]
      %v315 = vld [vmem:[%s169 + $0x394] sm:$0xf]
      %v316 = vld [vmem:[%s169 + $0x398] sm:$0xff]
      %v317 = vld [vmem:[%s169 + $0x3a0] sm:$0xff]
      %v318 = vld [vmem:[%s169 + $0x3a8] sm:$0xf]
      %v319 = vld [vmem:[%s169 + $0x3ac] sm:$0xff]
      %v320 = vld [vmem:[%s169 + $0x3b4] sm:$0xff]
      %v321 = vld [vmem:[%s169 + $0x3bc] sm:$0xf]
      %v322 = vld [vmem:[%s169 + $0x3c0] sm:$0xff]
      %v323 = vld [vmem:[%s169 + $0x3c8] sm:$0xff]
      %v324 = vld [vmem:[%s169 + $0x3d0] sm:$0xf]
      %v325 = vld [vmem:[%s169 + $0x3d4] sm:$0xff]
      %v326 = vld [vmem:[%s169 + $0x3dc] sm:$0xff]
      %v327 = vld [vmem:[%s169 + $0x3e4] sm:$0xf]
      %v328 = vld [vmem:[%s169 + $0x3e8] sm:$0xff]
      %v329 = vld [vmem:[%s169 + $0x3f0] sm:$0xff]
      %v330 = vld [vmem:[%s169 + $0x3f8] sm:$0xf]
      %v331 = vld [vmem:[%s169 + $0x3fc] sm:$0xff]
      %v332 = vld [vmem:[%s169 + $0x404] sm:$0xff]
      %v333 = vld [vmem:[%s169 + $0x40c] sm:$0xf]
      %v334 = vld [vmem:[%s169 + $0x410] sm:$0xff]
      %v335 = vld [vmem:[%s169 + $0x418] sm:$0xff]
      %v336 = vld [vmem:[%s169 + $0x420] sm:$0xf]
      %v337 = vld [vmem:[%s169 + $0x424] sm:$0xff]
      %v338 = vld [vmem:[%s169 + $0x42c] sm:$0xff]
      %v339 = vld [vmem:[%s169 + $0x434] sm:$0xf]
      %v340 = vld [vmem:[%s169 + $0x438] sm:$0xff]
      %v341 = vld [vmem:[%s169 + $0x440] sm:$0xff]
      %v342 = vld [vmem:[%s169 + $0x448] sm:$0xf]
      %v343 = vld [vmem:[%s169 + $0x44c] sm:$0xff]
      %v344 = vld [vmem:[%s169 + $0x454] sm:$0xff]
      %v345 = vld [vmem:[%s169 + $0x45c] sm:$0xf]
      %v346 = vld [vmem:[%s169 + $0x460] sm:$0xff]
      %v347 = vld [vmem:[%s169 + $0x468] sm:$0xff]
      %v348 = vld [vmem:[%s169 + $0x470] sm:$0xf]
      %v349 = vld [vmem:[%s169 + $0x474] sm:$0xff]
      %v350 = vld [vmem:[%s169 + $0x47c] sm:$0xff]
      %v351 = vld [vmem:[%s169 + $0x484] sm:$0xf]
      %v352 = vld [vmem:[%s169 + $0x488] sm:$0xff]
      %v353 = vld [vmem:[%s169 + $0x490] sm:$0xff]
      %v354 = vld [vmem:[%s169 + $0x498] sm:$0xf]
      %v355 = vld [vmem:[%s169 + $0x49c] sm:$0xff]
      %v356 = vld [vmem:[%s169 + $0x4a4] sm:$0xff]
      %v357 = vld [vmem:[%s169 + $0x4ac] sm:$0xf]
      %v358 = vld [vmem:[%s169 + $0x4b0] sm:$0xff]
      %v359 = vld [vmem:[%s169 + $0x4b8] sm:$0xff]
      %v360 = vld [vmem:[%s169 + $0x4c0] sm:$0xf]
      %v361 = vld [vmem:[%s169 + $0x4c4] sm:$0xff]
      %v362 = vld [vmem:[%s169 + $0x4cc] sm:$0xff]
      %v363 = vld [vmem:[%s169 + $0x4d4] sm:$0xf]
      %v364 = vld [vmem:[%s169 + $0x4d8] sm:$0xff]
      %v365 = vld [vmem:[%s169 + $0x4e0] sm:$0xff]
      %v366 = vld [vmem:[%s169 + $0x4e8] sm:$0xf]
      %v367 = vld [vmem:[%s169 + $0x4ec] sm:$0xff]
      %v368 = vld [vmem:[%s169 + $0x4f4] sm:$0xff]
      %v369 = vld [vmem:[%s169 + $0x4fc] sm:$0xf]
      %v370 = vld [vmem:[%s1] sm:$0xf]
      %v371 = vld [vmem:[%s1 + $0x4] sm:$0xf]
      %v372 = vld [vmem:[%s1 + $0x8] sm:$0xf]
      %v373 = vld [vmem:[%s1 + $0xc] sm:$0xf]
      %v374 = vld [vmem:[%s1 + $0x10] sm:$0xf]
      %v375 = vld [vmem:[%s1 + $0x14] sm:$0xf]
      %v376 = vld [vmem:[%s1 + $0x18] sm:$0xf]
      %v377 = vld [vmem:[%s1 + $0x1c] sm:$0xf]
      %v378 = vld [vmem:[%s1 + $0x20] sm:$0xf]
      %v379 = vld [vmem:[%s1 + $0x24] sm:$0xf]
      %v380 = vld [vmem:[%s1 + $0x28] sm:$0xf]
      %v381 = vld [vmem:[%s1 + $0x2c] sm:$0xf]
      %v382 = vld [vmem:[%s1 + $0x30] sm:$0xf]
      %v383 = vld [vmem:[%s1 + $0x34] sm:$0xf]
      %v384 = vld [vmem:[%s1 + $0x38] sm:$0xf]
      %v385 = vld [vmem:[%s1 + $0x3c] sm:$0xf]
      %v386 = vld [vmem:[%s1 + $0x40] sm:$0xf]
      %v387 = vld [vmem:[%s1 + $0x44] sm:$0xf]
      %v388 = vld [vmem:[%s1 + $0x48] sm:$0xf]
      %v389 = vld [vmem:[%s1 + $0x4c] sm:$0xf]
      %v390 = vld [vmem:[%s1 + $0x50] sm:$0xf]
      %v391 = vld [vmem:[%s1 + $0x54] sm:$0xf]
      %v392 = vld [vmem:[%s1 + $0x58] sm:$0xf]
      %v393 = vld [vmem:[%s1 + $0x5c] sm:$0xf]
      %v394 = vld [vmem:[%s1 + $0x60] sm:$0xf]
      %v395 = vld [vmem:[%s1 + $0x64] sm:$0xf]
      %v396 = vld [vmem:[%s1 + $0x68] sm:$0xf]
      %v397 = vld [vmem:[%s1 + $0x6c] sm:$0xf]
      %v398 = vld [vmem:[%s1 + $0x70] sm:$0xf]
      %v399 = vld [vmem:[%s1 + $0x74] sm:$0xf]
      %v400 = vld [vmem:[%s1 + $0x78] sm:$0xf]
      %v401 = vld [vmem:[%s1 + $0x7c] sm:$0xf]
      %v402 = vld [vmem:[%s1 + $0x80] sm:$0xf]
      %v403 = vld [vmem:[%s1 + $0x84] sm:$0xf]
      %v404 = vld [vmem:[%s1 + $0x88] sm:$0xf]
      %v405 = vld [vmem:[%s1 + $0x8c] sm:$0xf]
      %v406 = vld [vmem:[%s1 + $0x90] sm:$0xf]
      %v407 = vld [vmem:[%s1 + $0x94] sm:$0xf]
      %v408 = vld [vmem:[%s1 + $0x98] sm:$0xf]
      %v409 = vld [vmem:[%s1 + $0x9c] sm:$0xf]
      %v410 = vld [vmem:[%s1 + $0xa0] sm:$0xf]
      %v411 = vld [vmem:[%s1 + $0xa4] sm:$0xf]
      %v412 = vld [vmem:[%s1 + $0xa8] sm:$0xf]
      %v413 = vld [vmem:[%s1 + $0xac] sm:$0xf]
      %v414 = vld [vmem:[%s1 + $0xb0] sm:$0xf]
      %v415 = vld [vmem:[%s1 + $0xb4] sm:$0xf]
      %v416 = vld [vmem:[%s1 + $0xb8] sm:$0xf]
      %v417 = vld [vmem:[%s1 + $0xbc] sm:$0xf]
      %v418 = vld [vmem:[%s1 + $0xc0] sm:$0xf]
      %v419 = vld [vmem:[%s1 + $0xc4] sm:$0xf]
      %v420 = vld [vmem:[%s1 + $0xc8] sm:$0xf]
      %v421 = vld [vmem:[%s1 + $0xcc] sm:$0xf]
      %v422 = vld [vmem:[%s1 + $0xd0] sm:$0xf]
      %v423 = vld [vmem:[%s1 + $0xd4] sm:$0xf]
      %v424 = vld [vmem:[%s1 + $0xd8] sm:$0xf]
      %v425 = vld [vmem:[%s1 + $0xdc] sm:$0xf]
      %v426 = vld [vmem:[%s1 + $0xe0] sm:$0xf]
      %v427 = vld [vmem:[%s1 + $0xe4] sm:$0xf]
      %v428 = vld [vmem:[%s1 + $0xe8] sm:$0xf]
      %v429 = vld [vmem:[%s1 + $0xec] sm:$0xf]
      %v430 = vld [vmem:[%s1 + $0xf0] sm:$0xf]
      %v431 = vld [vmem:[%s1 + $0xf4] sm:$0xf]
      %v432 = vld [vmem:[%s1 + $0xf8] sm:$0xf]
      %v433 = vld [vmem:[%s1 + $0xfc] sm:$0xf]
      %v434 = vld [vmem:[%s1 + $0x100] sm:$0xf]
      %v435 = vld [vmem:[%s1 + $0x104] sm:$0xf]
      %v436 = vld [vmem:[%s1 + $0x108] sm:$0xf]
      %v437 = vld [vmem:[%s1 + $0x10c] sm:$0xf]
      %v438 = vld [vmem:[%s1 + $0x110] sm:$0xf]
      %v439 = vld [vmem:[%s1 + $0x114] sm:$0xf]
      %v440 = vld [vmem:[%s1 + $0x118] sm:$0xf]
      %v441 = vld [vmem:[%s1 + $0x11c] sm:$0xf]
      %v442 = vld [vmem:[%s2] sm:$0x1]
      %v444 = vlaneseq
      %v445 = vshrl.u32 %v444, 7
      %v446 = vsub.s32 0, %v445
      %v447 = vrot.slane %v442, %v446
      %v641 = vunpack.c.l.b16 %v178
      %v642 = vunpack.c.h.b16 %v178
      %v643 = vunpack.c.l.b16 %v179
      %v644 = vunpack.c.h.b16 %v179
      %v645 = vunpack.c.l.b16 %v180
      %v646 = vunpack.c.l.b16 %v181
      %v647 = vunpack.c.h.b16 %v181
      %v648 = vunpack.c.l.b16 %v182
      %v649 = vunpack.c.h.b16 %v182
      %v650 = vunpack.c.l.b16 %v183
      %v651 = vunpack.c.l.b16 %v184
      %v652 = vunpack.c.h.b16 %v184
      %v653 = vunpack.c.l.b16 %v185
      %v654 = vunpack.c.h.b16 %v185
      %v655 = vunpack.c.l.b16 %v186
      %v656 = vunpack.c.l.b16 %v187
      %v657 = vunpack.c.h.b16 %v187
      %v658 = vunpack.c.l.b16 %v188
      %v659 = vunpack.c.h.b16 %v188
      %v660 = vunpack.c.l.b16 %v189
      %v661 = vunpack.c.l.b16 %v190
      %v662 = vunpack.c.h.b16 %v190
      %v663 = vunpack.c.l.b16 %v191
      %v664 = vunpack.c.h.b16 %v191
      %v665 = vunpack.c.l.b16 %v192
      %v666 = vunpack.c.l.b16 %v193
      %v667 = vunpack.c.h.b16 %v193
      %v668 = vunpack.c.l.b16 %v194
      %v669 = vunpack.c.h.b16 %v194
      %v670 = vunpack.c.l.b16 %v195
      %v671 = vunpack.c.l.b16 %v196
      %v672 = vunpack.c.h.b16 %v196
      %v673 = vunpack.c.l.b16 %v197
      %v674 = vunpack.c.h.b16 %v197
      %v675 = vunpack.c.l.b16 %v198
      %v676 = vunpack.c.l.b16 %v199
      %v677 = vunpack.c.h.b16 %v199
      %v678 = vunpack.c.l.b16 %v200
      %v679 = vunpack.c.h.b16 %v200
      %v680 = vunpack.c.l.b16 %v201
      %v681 = vunpack.c.l.b16 %v202
      %v682 = vunpack.c.h.b16 %v202
      %v683 = vunpack.c.l.b16 %v203
      %v684 = vunpack.c.h.b16 %v203
      %v685 = vunpack.c.l.b16 %v204
      %v686 = vunpack.c.l.b16 %v205
      %v687 = vunpack.c.h.b16 %v205
      %v688 = vunpack.c.l.b16 %v206
      %v689 = vunpack.c.h.b16 %v206
      %v690 = vunpack.c.l.b16 %v207
      %v691 = vunpack.c.l.b16 %v208
      %v692 = vunpack.c.h.b16 %v208
      %v693 = vunpack.c.l.b16 %v209
      %v694 = vunpack.c.h.b16 %v209
      %v695 = vunpack.c.l.b16 %v210
      %v696 = vunpack.c.l.b16 %v211
      %v697 = vunpack.c.h.b16 %v211
      %v698 = vunpack.c.l.b16 %v212
      %v699 = vunpack.c.h.b16 %v212
      %v700 = vunpack.c.l.b16 %v213
      %v701 = vunpack.c.l.b16 %v214
      %v702 = vunpack.c.h.b16 %v214
      %v703 = vunpack.c.l.b16 %v215
      %v704 = vunpack.c.h.b16 %v215
      %v705 = vunpack.c.l.b16 %v216
      %v706 = vunpack.c.l.b16 %v217
      %v707 = vunpack.c.h.b16 %v217
      %v708 = vunpack.c.l.b16 %v218
      %v709 = vunpack.c.h.b16 %v218
      %v710 = vunpack.c.l.b16 %v219
      %v711 = vunpack.c.l.b16 %v220
      %v712 = vunpack.c.h.b16 %v220
      %v713 = vunpack.c.l.b16 %v221
      %v714 = vunpack.c.h.b16 %v221
      %v715 = vunpack.c.l.b16 %v222
      %v716 = vunpack.c.l.b16 %v223
      %v717 = vunpack.c.h.b16 %v223
      %v718 = vunpack.c.l.b16 %v224
      %v719 = vunpack.c.h.b16 %v224
      %v720 = vunpack.c.l.b16 %v225
      %v721 = vunpack.c.l.b16 %v226
      %v722 = vunpack.c.h.b16 %v226
      %v723 = vunpack.c.l.b16 %v227
      %v724 = vunpack.c.h.b16 %v227
      %v725 = vunpack.c.l.b16 %v228
      %v726 = vunpack.c.l.b16 %v229
      %v727 = vunpack.c.h.b16 %v229
      %v728 = vunpack.c.l.b16 %v230
      %v729 = vunpack.c.h.b16 %v230
      %v730 = vunpack.c.l.b16 %v231
      %v731 = vunpack.c.l.b16 %v232
      %v732 = vunpack.c.h.b16 %v232
      %v733 = vunpack.c.l.b16 %v233
      %v734 = vunpack.c.h.b16 %v233
      %v735 = vunpack.c.l.b16 %v234
      %v736 = vunpack.c.l.b16 %v235
      %v737 = vunpack.c.h.b16 %v235
      %v738 = vunpack.c.l.b16 %v236
      %v739 = vunpack.c.h.b16 %v236
      %v740 = vunpack.c.l.b16 %v237
      %v741 = vunpack.c.l.b16 %v238
      %v742 = vunpack.c.h.b16 %v238
      %v743 = vunpack.c.l.b16 %v239
      %v744 = vunpack.c.h.b16 %v239
      %v745 = vunpack.c.l.b16 %v240
      %v746 = vunpack.c.l.b16 %v241
      %v747 = vunpack.c.h.b16 %v241
      %v748 = vunpack.c.l.b16 %v242
      %v749 = vunpack.c.h.b16 %v242
      %v750 = vunpack.c.l.b16 %v243
      %v751 = vunpack.c.l.b16 %v244
      %v752 = vunpack.c.h.b16 %v244
      %v753 = vunpack.c.l.b16 %v245
      %v754 = vunpack.c.h.b16 %v245
      %v755 = vunpack.c.l.b16 %v246
      %v756 = vunpack.c.l.b16 %v247
      %v757 = vunpack.c.h.b16 %v247
      %v758 = vunpack.c.l.b16 %v248
      %v759 = vunpack.c.h.b16 %v248
      %v760 = vunpack.c.l.b16 %v249
      %v761 = vunpack.c.l.b16 %v250
      %v762 = vunpack.c.h.b16 %v250
      %v763 = vunpack.c.l.b16 %v251
      %v764 = vunpack.c.h.b16 %v251
      %v765 = vunpack.c.l.b16 %v252
      %v766 = vunpack.c.l.b16 %v253
      %v767 = vunpack.c.h.b16 %v253
      %v768 = vunpack.c.l.b16 %v254
      %v769 = vunpack.c.h.b16 %v254
      %v770 = vunpack.c.l.b16 %v255
      %v771 = vunpack.c.l.b16 %v256
      %v772 = vunpack.c.h.b16 %v256
      %v773 = vunpack.c.l.b16 %v257
      %v774 = vunpack.c.h.b16 %v257
      %v775 = vunpack.c.l.b16 %v258
      %v776 = vunpack.c.l.b16 %v259
      %v777 = vunpack.c.h.b16 %v259
      %v778 = vunpack.c.l.b16 %v260
      %v779 = vunpack.c.h.b16 %v260
      %v780 = vunpack.c.l.b16 %v261
      %v781 = vunpack.c.l.b16 %v262
      %v782 = vunpack.c.h.b16 %v262
      %v783 = vunpack.c.l.b16 %v263
      %v784 = vunpack.c.h.b16 %v263
      %v785 = vunpack.c.l.b16 %v264
      %v786 = vunpack.c.l.b16 %v265
      %v787 = vunpack.c.h.b16 %v265
      %v788 = vunpack.c.l.b16 %v266
      %v789 = vunpack.c.h.b16 %v266
      %v790 = vunpack.c.l.b16 %v267
      %v791 = vunpack.c.l.b16 %v268
      %v792 = vunpack.c.h.b16 %v268
      %v793 = vunpack.c.l.b16 %v269
      %v794 = vunpack.c.h.b16 %v269
      %v795 = vunpack.c.l.b16 %v270
      %v796 = vunpack.c.l.b16 %v271
      %v797 = vunpack.c.h.b16 %v271
      %v798 = vunpack.c.l.b16 %v272
      %v799 = vunpack.c.h.b16 %v272
      %v800 = vunpack.c.l.b16 %v273
      %v801 = vunpack.c.l.b16 %v274
      %v802 = vunpack.c.h.b16 %v274
      %v803 = vunpack.c.l.b16 %v275
      %v804 = vunpack.c.h.b16 %v275
      %v805 = vunpack.c.l.b16 %v276
      %v806 = vunpack.c.l.b16 %v277
      %v807 = vunpack.c.h.b16 %v277
      %v808 = vunpack.c.l.b16 %v278
      %v809 = vunpack.c.h.b16 %v278
      %v810 = vunpack.c.l.b16 %v279
      %v811 = vunpack.c.l.b16 %v280
      %v812 = vunpack.c.h.b16 %v280
      %v813 = vunpack.c.l.b16 %v281
      %v814 = vunpack.c.h.b16 %v281
      %v815 = vunpack.c.l.b16 %v282
      %v816 = vunpack.c.l.b16 %v283
      %v817 = vunpack.c.h.b16 %v283
      %v818 = vunpack.c.l.b16 %v284
      %v819 = vunpack.c.h.b16 %v284
      %v820 = vunpack.c.l.b16 %v285
      %v821 = vunpack.c.l.b16 %v286
      %v822 = vunpack.c.h.b16 %v286
      %v823 = vunpack.c.l.b16 %v287
      %v824 = vunpack.c.h.b16 %v287
      %v825 = vunpack.c.l.b16 %v288
      %v826 = vunpack.c.l.b16 %v289
      %v827 = vunpack.c.h.b16 %v289
      %v828 = vunpack.c.l.b16 %v290
      %v829 = vunpack.c.h.b16 %v290
      %v830 = vunpack.c.l.b16 %v291
      %v831 = vunpack.c.l.b16 %v292
      %v832 = vunpack.c.h.b16 %v292
      %v833 = vunpack.c.l.b16 %v293
      %v834 = vunpack.c.h.b16 %v293
      %v835 = vunpack.c.l.b16 %v294
      %v836 = vunpack.c.l.b16 %v295
      %v837 = vunpack.c.h.b16 %v295
      %v838 = vunpack.c.l.b16 %v296
      %v839 = vunpack.c.h.b16 %v296
      %v840 = vunpack.c.l.b16 %v297
      %v841 = vunpack.c.l.b16 %v298
      %v842 = vunpack.c.h.b16 %v298
      %v843 = vunpack.c.l.b16 %v299
      %v844 = vunpack.c.h.b16 %v299
      %v845 = vunpack.c.l.b16 %v300
      %v846 = vunpack.c.l.b16 %v301
      %v847 = vunpack.c.h.b16 %v301
      %v848 = vunpack.c.l.b16 %v302
      %v849 = vunpack.c.h.b16 %v302
      %v850 = vunpack.c.l.b16 %v303
      %v851 = vunpack.c.l.b16 %v304
      %v852 = vunpack.c.h.b16 %v304
      %v853 = vunpack.c.l.b16 %v305
      %v854 = vunpack.c.h.b16 %v305
      %v855 = vunpack.c.l.b16 %v306
      %v856 = vunpack.c.l.b16 %v307
      %v857 = vunpack.c.h.b16 %v307
      %v858 = vunpack.c.l.b16 %v308
      %v859 = vunpack.c.h.b16 %v308
      %v860 = vunpack.c.l.b16 %v309
      %v861 = vunpack.c.l.b16 %v310
      %v862 = vunpack.c.h.b16 %v310
      %v863 = vunpack.c.l.b16 %v311
      %v864 = vunpack.c.h.b16 %v311
      %v865 = vunpack.c.l.b16 %v312
      %v866 = vunpack.c.l.b16 %v313
      %v867 = vunpack.c.h.b16 %v313
      %v868 = vunpack.c.l.b16 %v314
      %v869 = vunpack.c.h.b16 %v314
      %v870 = vunpack.c.l.b16 %v315
      %v871 = vunpack.c.l.b16 %v316
      %v872 = vunpack.c.h.b16 %v316
      %v873 = vunpack.c.l.b16 %v317
      %v874 = vunpack.c.h.b16 %v317
      %v875 = vunpack.c.l.b16 %v318
      %v876 = vunpack.c.l.b16 %v319
      %v877 = vunpack.c.h.b16 %v319
      %v878 = vunpack.c.l.b16 %v320
      %v879 = vunpack.c.h.b16 %v320
      %v880 = vunpack.c.l.b16 %v321
      %v881 = vunpack.c.l.b16 %v322
      %v882 = vunpack.c.h.b16 %v322
      %v883 = vunpack.c.l.b16 %v323
      %v884 = vunpack.c.h.b16 %v323
      %v885 = vunpack.c.l.b16 %v324
      %v886 = vunpack.c.l.b16 %v325
      %v887 = vunpack.c.h.b16 %v325
      %v888 = vunpack.c.l.b16 %v326
      %v889 = vunpack.c.h.b16 %v326
      %v890 = vunpack.c.l.b16 %v327
      %v891 = vunpack.c.l.b16 %v328
      %v892 = vunpack.c.h.b16 %v328
      %v893 = vunpack.c.l.b16 %v329
      %v894 = vunpack.c.h.b16 %v329
      %v895 = vunpack.c.l.b16 %v330
      %v896 = vunpack.c.l.b16 %v331
      %v897 = vunpack.c.h.b16 %v331
      %v898 = vunpack.c.l.b16 %v332
      %v899 = vunpack.c.h.b16 %v332
      %v900 = vunpack.c.l.b16 %v333
      %v901 = vunpack.c.l.b16 %v334
      %v902 = vunpack.c.h.b16 %v334
      %v903 = vunpack.c.l.b16 %v335
      %v904 = vunpack.c.h.b16 %v335
      %v905 = vunpack.c.l.b16 %v336
      %v906 = vunpack.c.l.b16 %v337
      %v907 = vunpack.c.h.b16 %v337
      %v908 = vunpack.c.l.b16 %v338
      %v909 = vunpack.c.h.b16 %v338
      %v910 = vunpack.c.l.b16 %v339
      %v911 = vunpack.c.l.b16 %v340
      %v912 = vunpack.c.h.b16 %v340
      %v913 = vunpack.c.l.b16 %v341
      %v914 = vunpack.c.h.b16 %v341
      %v915 = vunpack.c.l.b16 %v342
      %v916 = vunpack.c.l.b16 %v343
      %v917 = vunpack.c.h.b16 %v343
      %v918 = vunpack.c.l.b16 %v344
      %v919 = vunpack.c.h.b16 %v344
      %v920 = vunpack.c.l.b16 %v345
      %v921 = vunpack.c.l.b16 %v346
      %v922 = vunpack.c.h.b16 %v346
      %v923 = vunpack.c.l.b16 %v347
      %v924 = vunpack.c.h.b16 %v347
      %v925 = vunpack.c.l.b16 %v348
      %v926 = vunpack.c.l.b16 %v349
      %v927 = vunpack.c.h.b16 %v349
      %v928 = vunpack.c.l.b16 %v350
      %v929 = vunpack.c.h.b16 %v350
      %v930 = vunpack.c.l.b16 %v351
      %v931 = vunpack.c.l.b16 %v352
      %v932 = vunpack.c.h.b16 %v352
      %v933 = vunpack.c.l.b16 %v353
      %v934 = vunpack.c.h.b16 %v353
      %v935 = vunpack.c.l.b16 %v354
      %v936 = vunpack.c.l.b16 %v355
      %v937 = vunpack.c.h.b16 %v355
      %v938 = vunpack.c.l.b16 %v356
      %v939 = vunpack.c.h.b16 %v356
      %v940 = vunpack.c.l.b16 %v357
      %v941 = vunpack.c.l.b16 %v358
      %v942 = vunpack.c.h.b16 %v358
      %v943 = vunpack.c.l.b16 %v359
      %v944 = vunpack.c.h.b16 %v359
      %v945 = vunpack.c.l.b16 %v360
      %v946 = vunpack.c.l.b16 %v361
      %v947 = vunpack.c.h.b16 %v361
      %v948 = vunpack.c.l.b16 %v362
      %v949 = vunpack.c.h.b16 %v362
      %v950 = vunpack.c.l.b16 %v363
      %v951 = vunpack.c.l.b16 %v364
      %v952 = vunpack.c.h.b16 %v364
      %v953 = vunpack.c.l.b16 %v365
      %v954 = vunpack.c.h.b16 %v365
      %v955 = vunpack.c.l.b16 %v366
      %v956 = vunpack.c.l.b16 %v367
      %v957 = vunpack.c.h.b16 %v367
      %v958 = vunpack.c.l.b16 %v368
      %v959 = vunpack.c.h.b16 %v368
      %v960 = vunpack.c.l.b16 %v369
      %v961 = vpack.c.b16 %v646, %v641
      %v962 = vpack.c.b16 %v647, %v642
      %v963 = vpack.c.b16 %v648, %v643
      %v964 = vpack.c.b16 %v649, %v644
      %v965 = vpack.c.b16 %v650, %v645
      %v966 = vpack.c.b16 %v656, %v651
      %v967 = vpack.c.b16 %v657, %v652
      %v968 = vpack.c.b16 %v658, %v653
      %v969 = vpack.c.b16 %v659, %v654
      %v970 = vpack.c.b16 %v660, %v655
      %v971 = vpack.c.b16 %v666, %v661
      %v972 = vpack.c.b16 %v667, %v662
      %v973 = vpack.c.b16 %v668, %v663
      %v974 = vpack.c.b16 %v669, %v664
      %v975 = vpack.c.b16 %v670, %v665
      %v976 = vpack.c.b16 %v676, %v671
      %v977 = vpack.c.b16 %v677, %v672
      %v978 = vpack.c.b16 %v678, %v673
      %v979 = vpack.c.b16 %v679, %v674
      %v980 = vpack.c.b16 %v680, %v675
      %v981 = vpack.c.b16 %v686, %v681
      %v982 = vpack.c.b16 %v687, %v682
      %v983 = vpack.c.b16 %v688, %v683
      %v984 = vpack.c.b16 %v689, %v684
      %v985 = vpack.c.b16 %v690, %v685
      %v986 = vpack.c.b16 %v696, %v691
      %v987 = vpack.c.b16 %v697, %v692
      %v988 = vpack.c.b16 %v698, %v693
      %v989 = vpack.c.b16 %v699, %v694
      %v990 = vpack.c.b16 %v700, %v695
      %v991 = vpack.c.b16 %v706, %v701
      %v992 = vpack.c.b16 %v707, %v702
      %v993 = vpack.c.b16 %v708, %v703
      %v994 = vpack.c.b16 %v709, %v704
      %v995 = vpack.c.b16 %v710, %v705
      %v996 = vpack.c.b16 %v716, %v711
      %v997 = vpack.c.b16 %v717, %v712
      %v998 = vpack.c.b16 %v718, %v713
      %v999 = vpack.c.b16 %v719, %v714
      %v1000 = vpack.c.b16 %v720, %v715
      %v1001 = vpack.c.b16 %v726, %v721
      %v1002 = vpack.c.b16 %v727, %v722
      %v1003 = vpack.c.b16 %v728, %v723
      %v1004 = vpack.c.b16 %v729, %v724
      %v1005 = vpack.c.b16 %v730, %v725
      %v1006 = vpack.c.b16 %v736, %v731
      %v1007 = vpack.c.b16 %v737, %v732
      %v1008 = vpack.c.b16 %v738, %v733
      %v1009 = vpack.c.b16 %v739, %v734
      %v1010 = vpack.c.b16 %v740, %v735
      %v1011 = vpack.c.b16 %v746, %v741
      %v1012 = vpack.c.b16 %v747, %v742
      %v1013 = vpack.c.b16 %v748, %v743
      %v1014 = vpack.c.b16 %v749, %v744
      %v1015 = vpack.c.b16 %v750, %v745
      %v1016 = vpack.c.b16 %v756, %v751
      %v1017 = vpack.c.b16 %v757, %v752
      %v1018 = vpack.c.b16 %v758, %v753
      %v1019 = vpack.c.b16 %v759, %v754
      %v1020 = vpack.c.b16 %v760, %v755
      %v1021 = vpack.c.b16 %v766, %v761
      %v1022 = vpack.c.b16 %v767, %v762
      %v1023 = vpack.c.b16 %v768, %v763
      %v1024 = vpack.c.b16 %v769, %v764
      %v1025 = vpack.c.b16 %v770, %v765
      %v1026 = vpack.c.b16 %v776, %v771
      %v1027 = vpack.c.b16 %v777, %v772
      %v1028 = vpack.c.b16 %v778, %v773
      %v1029 = vpack.c.b16 %v779, %v774
      %v1030 = vpack.c.b16 %v780, %v775
      %v1031 = vpack.c.b16 %v786, %v781
      %v1032 = vpack.c.b16 %v787, %v782
      %v1033 = vpack.c.b16 %v788, %v783
      %v1034 = vpack.c.b16 %v789, %v784
      %v1035 = vpack.c.b16 %v790, %v785
      %v1036 = vpack.c.b16 %v796, %v791
      %v1037 = vpack.c.b16 %v797, %v792
      %v1038 = vpack.c.b16 %v798, %v793
      %v1039 = vpack.c.b16 %v799, %v794
      %v1040 = vpack.c.b16 %v800, %v795
      %v1041 = vpack.c.b16 %v806, %v801
      %v1042 = vpack.c.b16 %v807, %v802
      %v1043 = vpack.c.b16 %v808, %v803
      %v1044 = vpack.c.b16 %v809, %v804
      %v1045 = vpack.c.b16 %v810, %v805
      %v1046 = vpack.c.b16 %v816, %v811
      %v1047 = vpack.c.b16 %v817, %v812
      %v1048 = vpack.c.b16 %v818, %v813
      %v1049 = vpack.c.b16 %v819, %v814
      %v1050 = vpack.c.b16 %v820, %v815
      %v1051 = vpack.c.b16 %v826, %v821
      %v1052 = vpack.c.b16 %v827, %v822
      %v1053 = vpack.c.b16 %v828, %v823
      %v1054 = vpack.c.b16 %v829, %v824
      %v1055 = vpack.c.b16 %v830, %v825
      %v1056 = vpack.c.b16 %v836, %v831
      %v1057 = vpack.c.b16 %v837, %v832
      %v1058 = vpack.c.b16 %v838, %v833
      %v1059 = vpack.c.b16 %v839, %v834
      %v1060 = vpack.c.b16 %v840, %v835
      %v1061 = vpack.c.b16 %v846, %v841
      %v1062 = vpack.c.b16 %v847, %v842
      %v1063 = vpack.c.b16 %v848, %v843
      %v1064 = vpack.c.b16 %v849, %v844
      %v1065 = vpack.c.b16 %v850, %v845
      %v1066 = vpack.c.b16 %v856, %v851
      %v1067 = vpack.c.b16 %v857, %v852
      %v1068 = vpack.c.b16 %v858, %v853
      %v1069 = vpack.c.b16 %v859, %v854
      %v1070 = vpack.c.b16 %v860, %v855
      %v1071 = vpack.c.b16 %v866, %v861
      %v1072 = vpack.c.b16 %v867, %v862
      %v1073 = vpack.c.b16 %v868, %v863
      %v1074 = vpack.c.b16 %v869, %v864
      %v1075 = vpack.c.b16 %v870, %v865
      %v1076 = vpack.c.b16 %v876, %v871
      %v1077 = vpack.c.b16 %v877, %v872
      %v1078 = vpack.c.b16 %v878, %v873
      %v1079 = vpack.c.b16 %v879, %v874
      %v1080 = vpack.c.b16 %v880, %v875
      %v1081 = vpack.c.b16 %v886, %v881
      %v1082 = vpack.c.b16 %v887, %v882
      %v1083 = vpack.c.b16 %v888, %v883
      %v1084 = vpack.c.b16 %v889, %v884
      %v1085 = vpack.c.b16 %v890, %v885
      %v1086 = vpack.c.b16 %v896, %v891
      %v1087 = vpack.c.b16 %v897, %v892
      %v1088 = vpack.c.b16 %v898, %v893
      %v1089 = vpack.c.b16 %v899, %v894
      %v1090 = vpack.c.b16 %v900, %v895
      %v1091 = vpack.c.b16 %v906, %v901
      %v1092 = vpack.c.b16 %v907, %v902
      %v1093 = vpack.c.b16 %v908, %v903
      %v1094 = vpack.c.b16 %v909, %v904
      %v1095 = vpack.c.b16 %v910, %v905
      %v1096 = vpack.c.b16 %v916, %v911
      %v1097 = vpack.c.b16 %v917, %v912
      %v1098 = vpack.c.b16 %v918, %v913
      %v1099 = vpack.c.b16 %v919, %v914
      %v1100 = vpack.c.b16 %v920, %v915
      %v1101 = vpack.c.b16 %v926, %v921
      %v1102 = vpack.c.b16 %v927, %v922
      %v1103 = vpack.c.b16 %v928, %v923
      %v1104 = vpack.c.b16 %v929, %v924
      %v1105 = vpack.c.b16 %v930, %v925
      %v1106 = vpack.c.b16 %v936, %v931
      %v1107 = vpack.c.b16 %v937, %v932
      %v1108 = vpack.c.b16 %v938, %v933
      %v1109 = vpack.c.b16 %v939, %v934
      %v1110 = vpack.c.b16 %v940, %v935
      %v1111 = vpack.c.b16 %v946, %v941
      %v1112 = vpack.c.b16 %v947, %v942
      %v1113 = vpack.c.b16 %v948, %v943
      %v1114 = vpack.c.b16 %v949, %v944
      %v1115 = vpack.c.b16 %v950, %v945
      %v1116 = vpack.c.b16 %v956, %v951
      %v1117 = vpack.c.b16 %v957, %v952
      %v1118 = vpack.c.b16 %v958, %v953
      %v1119 = vpack.c.b16 %v959, %v954
      %v1120 = vpack.c.b16 %v960, %v955
      %v1321 = vunpack.c.l.b16 %v370
      %v1322 = vunpack.c.l.b16 %v371
      %v1323 = vunpack.c.l.b16 %v372
      %v1324 = vunpack.c.l.b16 %v373
      %v1325 = vunpack.c.l.b16 %v374
      %v1326 = vunpack.c.l.b16 %v375
      %v1327 = vunpack.c.l.b16 %v376
      %v1328 = vunpack.c.l.b16 %v377
      %v1329 = vunpack.c.l.b16 %v378
      %v1330 = vunpack.c.l.b16 %v379
      %v1331 = vunpack.c.l.b16 %v380
      %v1332 = vunpack.c.l.b16 %v381
      %v1333 = vunpack.c.l.b16 %v382
      %v1334 = vunpack.c.l.b16 %v383
      %v1335 = vunpack.c.l.b16 %v384
      %v1336 = vunpack.c.l.b16 %v385
      %v1337 = vunpack.c.l.b16 %v386
      %v1338 = vunpack.c.l.b16 %v387
      %v1339 = vunpack.c.l.b16 %v388
      %v1340 = vunpack.c.l.b16 %v389
      %v1341 = vunpack.c.l.b16 %v390
      %v1342 = vunpack.c.l.b16 %v391
      %v1343 = vunpack.c.l.b16 %v392
      %v1344 = vunpack.c.l.b16 %v393
      %v1345 = vunpack.c.l.b16 %v394
      %v1346 = vunpack.c.l.b16 %v395
      %v1347 = vunpack.c.l.b16 %v396
      %v1348 = vunpack.c.l.b16 %v397
      %v1349 = vunpack.c.l.b16 %v398
      %v1350 = vunpack.c.l.b16 %v399
      %v1351 = vunpack.c.l.b16 %v400
      %v1352 = vunpack.c.l.b16 %v401
      %v1353 = vunpack.c.l.b16 %v402
      %v1354 = vunpack.c.l.b16 %v403
      %v1355 = vunpack.c.l.b16 %v404
      %v1356 = vunpack.c.l.b16 %v405
      %v1357 = vunpack.c.l.b16 %v406
      %v1358 = vunpack.c.l.b16 %v407
      %v1359 = vunpack.c.l.b16 %v408
      %v1360 = vunpack.c.l.b16 %v409
      %v1361 = vunpack.c.l.b16 %v410
      %v1362 = vunpack.c.l.b16 %v411
      %v1363 = vunpack.c.l.b16 %v412
      %v1364 = vunpack.c.l.b16 %v413
      %v1365 = vunpack.c.l.b16 %v414
      %v1366 = vunpack.c.l.b16 %v415
      %v1367 = vunpack.c.l.b16 %v416
      %v1368 = vunpack.c.l.b16 %v417
      %v1369 = vunpack.c.l.b16 %v418
      %v1370 = vunpack.c.l.b16 %v419
      %v1371 = vunpack.c.l.b16 %v420
      %v1372 = vunpack.c.l.b16 %v421
      %v1373 = vunpack.c.l.b16 %v422
      %v1374 = vunpack.c.l.b16 %v423
      %v1375 = vunpack.c.l.b16 %v424
      %v1376 = vunpack.c.l.b16 %v425
      %v1377 = vunpack.c.l.b16 %v426
      %v1378 = vunpack.c.l.b16 %v427
      %v1379 = vunpack.c.l.b16 %v428
      %v1380 = vunpack.c.l.b16 %v429
      %v1381 = vunpack.c.l.b16 %v430
      %v1382 = vunpack.c.l.b16 %v431
      %v1383 = vunpack.c.l.b16 %v432
      %v1384 = vunpack.c.l.b16 %v433
      %v1385 = vunpack.c.l.b16 %v434
      %v1386 = vunpack.c.l.b16 %v435
      %v1387 = vunpack.c.l.b16 %v436
      %v1388 = vunpack.c.l.b16 %v437
      %v1389 = vunpack.c.l.b16 %v438
      %v1390 = vunpack.c.l.b16 %v439
      %v1391 = vunpack.c.l.b16 %v440
      %v1392 = vunpack.c.l.b16 %v441
      %v1393 = vpack.c.b16 %v1322, %v1321
      %v1394 = vpack.c.b16 %v1324, %v1323
      %v1395 = vpack.c.b16 %v1326, %v1325
      %v1396 = vpack.c.b16 %v1328, %v1327
      %v1397 = vpack.c.b16 %v1330, %v1329
      %v1398 = vpack.c.b16 %v1332, %v1331
      %v1399 = vpack.c.b16 %v1334, %v1333
      %v1400 = vpack.c.b16 %v1336, %v1335
      %v1401 = vpack.c.b16 %v1338, %v1337
      %v1402 = vpack.c.b16 %v1340, %v1339
      %v1403 = vpack.c.b16 %v1342, %v1341
      %v1404 = vpack.c.b16 %v1344, %v1343
      %v1405 = vpack.c.b16 %v1346, %v1345
      %v1406 = vpack.c.b16 %v1348, %v1347
      %v1407 = vpack.c.b16 %v1350, %v1349
      %v1408 = vpack.c.b16 %v1352, %v1351
      %v1409 = vpack.c.b16 %v1354, %v1353
      %v1410 = vpack.c.b16 %v1356, %v1355
      %v1411 = vpack.c.b16 %v1358, %v1357
      %v1412 = vpack.c.b16 %v1360, %v1359
      %v1413 = vpack.c.b16 %v1362, %v1361
      %v1414 = vpack.c.b16 %v1364, %v1363
      %v1415 = vpack.c.b16 %v1366, %v1365
      %v1416 = vpack.c.b16 %v1368, %v1367
      %v1417 = vpack.c.b16 %v1370, %v1369
      %v1418 = vpack.c.b16 %v1372, %v1371
      %v1419 = vpack.c.b16 %v1374, %v1373
      %v1420 = vpack.c.b16 %v1376, %v1375
      %v1421 = vpack.c.b16 %v1378, %v1377
      %v1422 = vpack.c.b16 %v1380, %v1379
      %v1423 = vpack.c.b16 %v1382, %v1381
      %v1424 = vpack.c.b16 %v1384, %v1383
      %v1425 = vpack.c.b16 %v1386, %v1385
      %v1426 = vpack.c.b16 %v1388, %v1387
      %v1427 = vpack.c.b16 %v1390, %v1389
      %v1428 = vpack.c.b16 %v1392, %v1391
      %vm1465 = vcmask 523264
      %v1467 = vsel %vm1465, %v965, 0
      %v1470 = vsel %vm1465, %v970, 0
      %v1473 = vsel %vm1465, %v975, 0
      %v1476 = vsel %vm1465, %v980, 0
      %v1479 = vsel %vm1465, %v985, 0
      %v1482 = vsel %vm1465, %v990, 0
      %v1485 = vsel %vm1465, %v995, 0
      %v1488 = vsel %vm1465, %v1000, 0
      %v1491 = vsel %vm1465, %v1005, 0
      %v1494 = vsel %vm1465, %v1010, 0
      %v1497 = vsel %vm1465, %v1015, 0
      %v1500 = vsel %vm1465, %v1020, 0
      %v1503 = vsel %vm1465, %v1025, 0
      %v1506 = vsel %vm1465, %v1030, 0
      %v1509 = vsel %vm1465, %v1035, 0
      %v1512 = vsel %vm1465, %v1040, 0
      %v1515 = vsel %vm1465, %v1045, 0
      %v1518 = vsel %vm1465, %v1050, 0
      %v1521 = vsel %vm1465, %v1055, 0
      %v1524 = vsel %vm1465, %v1060, 0
      %v1527 = vsel %vm1465, %v1065, 0
      %v1530 = vsel %vm1465, %v1070, 0
      %v1533 = vsel %vm1465, %v1075, 0
      %v1536 = vsel %vm1465, %v1080, 0
      %v1539 = vsel %vm1465, %v1085, 0
      %v1542 = vsel %vm1465, %v1090, 0
      %v1545 = vsel %vm1465, %v1095, 0
      %v1548 = vsel %vm1465, %v1100, 0
      %v1551 = vsel %vm1465, %v1105, 0
      %v1554 = vsel %vm1465, %v1110, 0
      %v1557 = vsel %vm1465, %v1115, 0
      %v1560 = vsel %vm1465, %v1120, 0
      %1562 = vmatprep.subr.bf16.mxu0 0
      %1563 = vmatpush1.bf16.msra.mxu0 %v1393
      %1564 = vmatprep.subr.bf16.mxu0 0
      %1565 = vmatpush1.bf16.msra.mxu0 %v1394
      %1566 = vmatprep.subr.bf16.mxu0 0
      %1567 = vmatpush1.bf16.msra.mxu0 %v1395
      %1568 = vmatprep.subr.bf16.mxu0 0
      %1569 = vmatpush1.bf16.msra.mxu0 %v1396
      %1570 = vmatprep.subr.bf16.mxu0 0
      %1571 = vmatpush1.bf16.msra.mxu0 %v1397
      %1572 = vmatprep.subr.bf16.mxu0 0
      %1573 = vmatpush1.bf16.msra.mxu0 %v1398
      %1574 = vmatprep.subr.bf16.mxu0 0
      %1575 = vmatpush1.bf16.msra.mxu0 %v1399
      %1576 = vmatprep.subr.bf16.mxu0 0
      %1577 = vmatpush1.bf16.msra.mxu0 %v1400
      %1578 = vmatprep.subr.bf16.mxu0 0
      %1579 = vmatpush1.bf16.msra.mxu0 %v1401
      %1580 = vmatprep.subr.bf16.mxu0 0
      %1581 = vmatpush1.bf16.msra.mxu0 %v1402
      %1582 = vmatprep.subr.bf16.mxu0 0
      %1583 = vmatpush1.bf16.msra.mxu0 %v1403
      %1584 = vmatprep.subr.bf16.mxu0 0
      %1585 = vmatpush1.bf16.msra.mxu0 %v1404
      %1586 = vmatprep.subr.bf16.mxu0 0
      %1587 = vmatpush1.bf16.msra.mxu0 %v1405
      %1588 = vmatprep.subr.bf16.mxu0 0
      %1589 = vmatpush1.bf16.msra.mxu0 %v1406
      %1590 = vmatprep.subr.bf16.mxu0 0
      %1591 = vmatpush1.bf16.msra.mxu0 %v1407
      %1592 = vmatprep.subr.bf16.mxu0 0
      %1593 = vmatpush1.bf16.msra.mxu0 %v1408
      %1594 = vmatprep.mubr.bf16.mxu0 %v962
      %1595 = vmatmul.mubr.bf16.gmra.mrb[0].mxu0 %v961
      %v1596 = vpop.f32.mrb[0].mxu0
      %v1597 = vadd.f32 %v447, %v1596
      %v1598 = vpop.f32.mrb[0].mxu0
      %v1599 = vpop.f32.mrb[0].mxu0
      %v1600 = vadd.f32 %v447, %v1599
      %v1601 = vpop.f32.mrb[0].mxu0
      %1602 = vmatprep.mubr.bf16.mxu0 %v967
      %1603 = vmatmul.mubr.bf16.gmra.mrb[0].mxu0 %v966
      %v1604 = vpop.f32.mrb[0].mxu0
      %v1605 = vadd.f32 %v447, %v1604
      %v1606 = vpop.f32.mrb[0].mxu0
      %v1607 = vpop.f32.mrb[0].mxu0
      %v1608 = vadd.f32 %v447, %v1607
      %v1609 = vpop.f32.mrb[0].mxu0
      %1610 = vmatprep.mubr.bf16.mxu0 %v972
      %1611 = vmatmul.mubr.bf16.gmra.mrb[0].mxu0 %v971
      %v1612 = vpop.f32.mrb[0].mxu0
      %v1613 = vadd.f32 %v447, %v1612
      %v1614 = vpop.f32.mrb[0].mxu0
      %v1615 = vpop.f32.mrb[0].mxu0
      %v1616 = vadd.f32 %v447, %v1615
      %v1617 = vpop.f32.mrb[0].mxu0
      %1618 = vmatprep.mubr.bf16.mxu0 %v977
      %1619 = vmatmul.mubr.bf16.gmra.mrb[0].mxu0 %v976
      %v1620 = vpop.f32.mrb[0].mxu0
      %v1621 = vadd.f32 %v447, %v1620
      %v1622 = vpop.f32.mrb[0].mxu0
      %v1623 = vpop.f32.mrb[0].mxu0
      %v1624 = vadd.f32 %v447, %v1623
      %v1625 = vpop.f32.mrb[0].mxu0
      %1626 = vmatprep.mubr.bf16.mxu0 %v982
      %1627 = vmatmul.mubr.bf16.gmra.mrb[0].mxu0 %v981
      %v1628 = vpop.f32.mrb[0].mxu0
      %v1629 = vadd.f32 %v447, %v1628
      %v1630 = vpop.f32.mrb[0].mxu0
      %v1631 = vpop.f32.mrb[0].mxu0
      %v1632 = vadd.f32 %v447, %v1631
      %v1633 = vpop.f32.mrb[0].mxu0
      %1634 = vmatprep.mubr.bf16.mxu0 %v987
      %1635 = vmatmul.mubr.bf16.gmra.mrb[0].mxu0 %v986
      %v1636 = vpop.f32.mrb[0].mxu0
      %v1637 = vadd.f32 %v447, %v1636
      %v1638 = vpop.f32.mrb[0].mxu0
      %v1639 = vpop.f32.mrb[0].mxu0
      %v1640 = vadd.f32 %v447, %v1639
      %v1641 = vpop.f32.mrb[0].mxu0
      %1642 = vmatprep.mubr.bf16.mxu0 %v992
      %1643 = vmatmul.mubr.bf16.gmra.mrb[0].mxu0 %v991
      %v1644 = vpop.f32.mrb[0].mxu0
      %v1645 = vadd.f32 %v447, %v1644
      %v1646 = vpop.f32.mrb[0].mxu0
      %v1647 = vpop.f32.mrb[0].mxu0
      %v1648 = vadd.f32 %v447, %v1647
      %v1649 = vpop.f32.mrb[0].mxu0
      %1650 = vmatprep.mubr.bf16.mxu0 %v997
      %1651 = vmatmul.mubr.bf16.gmra.mrb[0].mxu0 %v996
      %v1652 = vpop.f32.mrb[0].mxu0
      %v1653 = vadd.f32 %v447, %v1652
      %v1654 = vpop.f32.mrb[0].mxu0
      %v1655 = vpop.f32.mrb[0].mxu0
      %v1656 = vadd.f32 %v447, %v1655
      %v1657 = vpop.f32.mrb[0].mxu0
      %1658 = vmatprep.mubr.bf16.mxu0 %v1002
      %1659 = vmatmul.mubr.bf16.gmra.mrb[0].mxu0 %v1001
      %v1660 = vpop.f32.mrb[0].mxu0
      %v1661 = vadd.f32 %v447, %v1660
      %v1662 = vpop.f32.mrb[0].mxu0
      %v1663 = vpop.f32.mrb[0].mxu0
      %v1664 = vadd.f32 %v447, %v1663
      %v1665 = vpop.f32.mrb[0].mxu0
      %1666 = vmatprep.mubr.bf16.mxu0 %v1007
      %1667 = vmatmul.mubr.bf16.gmra.mrb[0].mxu0 %v1006
      %v1668 = vpop.f32.mrb[0].mxu0
      %v1669 = vadd.f32 %v447, %v1668
      %v1670 = vpop.f32.mrb[0].mxu0
      %v1671 = vpop.f32.mrb[0].mxu0
      %v1672 = vadd.f32 %v447, %v1671
      %v1673 = vpop.f32.mrb[0].mxu0
      %1674 = vmatprep.mubr.bf16.mxu0 %v1012
      %1675 = vmatmul.mubr.bf16.gmra.mrb[0].mxu0 %v1011
      %v1676 = vpop.f32.mrb[0].mxu0
      %v1677 = vadd.f32 %v447, %v1676
      %v1678 = vpop.f32.mrb[0].mxu0
      %v1679 = vpop.f32.mrb[0].mxu0
      %v1680 = vadd.f32 %v447, %v1679
      %v1681 = vpop.f32.mrb[0].mxu0
      %1682 = vmatprep.mubr.bf16.mxu0 %v1017
      %1683 = vmatmul.mubr.bf16.gmra.mrb[0].mxu0 %v1016
      %v1684 = vpop.f32.mrb[0].mxu0
      %v1685 = vadd.f32 %v447, %v1684
      %v1686 = vpop.f32.mrb[0].mxu0
      %v1687 = vpop.f32.mrb[0].mxu0
      %v1688 = vadd.f32 %v447, %v1687
      %v1689 = vpop.f32.mrb[0].mxu0
      %1690 = vmatprep.mubr.bf16.mxu0 %v1022
      %1691 = vmatmul.mubr.bf16.gmra.mrb[0].mxu0 %v1021
      %v1692 = vpop.f32.mrb[0].mxu0
      %v1693 = vadd.f32 %v447, %v1692
      %v1694 = vpop.f32.mrb[0].mxu0
      %v1695 = vpop.f32.mrb[0].mxu0
      %v1696 = vadd.f32 %v447, %v1695
      %v1697 = vpop.f32.mrb[0].mxu0
      %1698 = vmatprep.mubr.bf16.mxu0 %v1027
      %1699 = vmatmul.mubr.bf16.gmra.mrb[0].mxu0 %v1026
      %v1700 = vpop.f32.mrb[0].mxu0
      %v1701 = vadd.f32 %v447, %v1700
      %v1702 = vpop.f32.mrb[0].mxu0
      %v1703 = vpop.f32.mrb[0].mxu0
      %v1704 = vadd.f32 %v447, %v1703
      %v1705 = vpop.f32.mrb[0].mxu0
      %1706 = vmatprep.mubr.bf16.mxu0 %v1032
      %1707 = vmatmul.mubr.bf16.gmra.mrb[0].mxu0 %v1031
      %v1708 = vpop.f32.mrb[0].mxu0
      %v1709 = vadd.f32 %v447, %v1708
      %v1710 = vpop.f32.mrb[0].mxu0
      %v1711 = vpop.f32.mrb[0].mxu0
      %v1712 = vadd.f32 %v447, %v1711
      %v1713 = vpop.f32.mrb[0].mxu0
      %1714 = vmatprep.mubr.bf16.mxu0 %v1037
      %1715 = vmatmul.mubr.bf16.gmra.mrb[0].mxu0 %v1036
      %v1716 = vpop.f32.mrb[0].mxu0
      %v1717 = vadd.f32 %v447, %v1716
      %v1718 = vpop.f32.mrb[0].mxu0
      %v1719 = vpop.f32.mrb[0].mxu0
      %v1720 = vadd.f32 %v447, %v1719
      %v1721 = vpop.f32.mrb[0].mxu0
      %1722 = vmatprep.mubr.bf16.mxu0 %v1042
      %1723 = vmatmul.mubr.bf16.gmra.mrb[0].mxu0 %v1041
      %v1724 = vpop.f32.mrb[0].mxu0
      %v1725 = vadd.f32 %v447, %v1724
      %v1726 = vpop.f32.mrb[0].mxu0
      %v1727 = vpop.f32.mrb[0].mxu0
      %v1728 = vadd.f32 %v447, %v1727
      %v1729 = vpop.f32.mrb[0].mxu0
      %1730 = vmatprep.mubr.bf16.mxu0 %v1047
      %1731 = vmatmul.mubr.bf16.gmra.mrb[0].mxu0 %v1046
      %v1732 = vpop.f32.mrb[0].mxu0
      %v1733 = vadd.f32 %v447, %v1732
      %v1734 = vpop.f32.mrb[0].mxu0
      %v1735 = vpop.f32.mrb[0].mxu0
      %v1736 = vadd.f32 %v447, %v1735
      %v1737 = vpop.f32.mrb[0].mxu0
      %1738 = vmatprep.mubr.bf16.mxu0 %v1052
      %1739 = vmatmul.mubr.bf16.gmra.mrb[0].mxu0 %v1051
      %v1740 = vpop.f32.mrb[0].mxu0
      %v1741 = vadd.f32 %v447, %v1740
      %v1742 = vpop.f32.mrb[0].mxu0
      %v1743 = vpop.f32.mrb[0].mxu0
      %v1744 = vadd.f32 %v447, %v1743
      %v1745 = vpop.f32.mrb[0].mxu0
      %1746 = vmatprep.mubr.bf16.mxu0 %v1057
      %1747 = vmatmul.mubr.bf16.gmra.mrb[0].mxu0 %v1056
      %v1748 = vpop.f32.mrb[0].mxu0
      %v1749 = vadd.f32 %v447, %v1748
      %v1750 = vpop.f32.mrb[0].mxu0
      %v1751 = vpop.f32.mrb[0].mxu0
      %v1752 = vadd.f32 %v447, %v1751
      %v1753 = vpop.f32.mrb[0].mxu0
      %1754 = vmatprep.mubr.bf16.mxu0 %v1062
      %1755 = vmatmul.mubr.bf16.gmra.mrb[0].mxu0 %v1061
      %v1756 = vpop.f32.mrb[0].mxu0
      %v1757 = vadd.f32 %v447, %v1756
      %v1758 = vpop.f32.mrb[0].mxu0
      %v1759 = vpop.f32.mrb[0].mxu0
      %v1760 = vadd.f32 %v447, %v1759
      %v1761 = vpop.f32.mrb[0].mxu0
      %1762 = vmatprep.mubr.bf16.mxu0 %v1067
      %1763 = vmatmul.mubr.bf16.gmra.mrb[0].mxu0 %v1066
      %v1764 = vpop.f32.mrb[0].mxu0
      %v1765 = vadd.f32 %v447, %v1764
      %v1766 = vpop.f32.mrb[0].mxu0
      %v1767 = vpop.f32.mrb[0].mxu0
      %v1768 = vadd.f32 %v447, %v1767
      %v1769 = vpop.f32.mrb[0].mxu0
      %1770 = vmatprep.mubr.bf16.mxu0 %v1072
      %1771 = vmatmul.mubr.bf16.gmra.mrb[0].mxu0 %v1071
      %v1772 = vpop.f32.mrb[0].mxu0
      %v1773 = vadd.f32 %v447, %v1772
      %v1774 = vpop.f32.mrb[0].mxu0
      %v1775 = vpop.f32.mrb[0].mxu0
      %v1776 = vadd.f32 %v447, %v1775
      %v1777 = vpop.f32.mrb[0].mxu0
      %1778 = vmatprep.mubr.bf16.mxu0 %v1077
      %1779 = vmatmul.mubr.bf16.gmra.mrb[0].mxu0 %v1076
      %v1780 = vpop.f32.mrb[0].mxu0
      %v1781 = vadd.f32 %v447, %v1780
      %v1782 = vpop.f32.mrb[0].mxu0
      %v1783 = vpop.f32.mrb[0].mxu0
      %v1784 = vadd.f32 %v447, %v1783
      %v1785 = vpop.f32.mrb[0].mxu0
      %1786 = vmatprep.mubr.bf16.mxu0 %v1082
      %1787 = vmatmul.mubr.bf16.gmra.mrb[0].mxu0 %v1081
      %v1788 = vpop.f32.mrb[0].mxu0
      %v1789 = vadd.f32 %v447, %v1788
      %v1790 = vpop.f32.mrb[0].mxu0
      %v1791 = vpop.f32.mrb[0].mxu0
      %v1792 = vadd.f32 %v447, %v1791
      %v1793 = vpop.f32.mrb[0].mxu0
      %1794 = vmatprep.mubr.bf16.mxu0 %v1087
      %1795 = vmatmul.mubr.bf16.gmra.mrb[0].mxu0 %v1086
      %v1796 = vpop.f32.mrb[0].mxu0
      %v1797 = vadd.f32 %v447, %v1796
      %v1798 = vpop.f32.mrb[0].mxu0
      %v1799 = vpop.f32.mrb[0].mxu0
      %v1800 = vadd.f32 %v447, %v1799
      %v1801 = vpop.f32.mrb[0].mxu0
      %1802 = vmatprep.mubr.bf16.mxu0 %v1092
      %1803 = vmatmul.mubr.bf16.gmra.mrb[0].mxu0 %v1091
      %v1804 = vpop.f32.mrb[0].mxu0
      %v1805 = vadd.f32 %v447, %v1804
      %v1806 = vpop.f32.mrb[0].mxu0
      %v1807 = vpop.f32.mrb[0].mxu0
      %v1808 = vadd.f32 %v447, %v1807
      %v1809 = vpop.f32.mrb[0].mxu0
      %1810 = vmatprep.mubr.bf16.mxu0 %v1097
      %1811 = vmatmul.mubr.bf16.gmra.mrb[0].mxu0 %v1096
      %v1812 = vpop.f32.mrb[0].mxu0
      %v1813 = vadd.f32 %v447, %v1812
      %v1814 = vpop.f32.mrb[0].mxu0
      %v1815 = vpop.f32.mrb[0].mxu0
      %v1816 = vadd.f32 %v447, %v1815
      %v1817 = vpop.f32.mrb[0].mxu0
      %1818 = vmatprep.mubr.bf16.mxu0 %v1102
      %1819 = vmatmul.mubr.bf16.gmra.mrb[0].mxu0 %v1101
      %v1820 = vpop.f32.mrb[0].mxu0
      %v1821 = vadd.f32 %v447, %v1820
      %v1822 = vpop.f32.mrb[0].mxu0
      %v1823 = vpop.f32.mrb[0].mxu0
      %v1824 = vadd.f32 %v447, %v1823
      %v1825 = vpop.f32.mrb[0].mxu0
      %1826 = vmatprep.mubr.bf16.mxu0 %v1107
      %1827 = vmatmul.mubr.bf16.gmra.mrb[0].mxu0 %v1106
      %v1828 = vpop.f32.mrb[0].mxu0
      %v1829 = vadd.f32 %v447, %v1828
      %v1830 = vpop.f32.mrb[0].mxu0
      %v1831 = vpop.f32.mrb[0].mxu0
      %v1832 = vadd.f32 %v447, %v1831
      %v1833 = vpop.f32.mrb[0].mxu0
      %1834 = vmatprep.mubr.bf16.mxu0 %v1112
      %1835 = vmatmul.mubr.bf16.gmra.mrb[0].mxu0 %v1111
      %v1836 = vpop.f32.mrb[0].mxu0
      %v1837 = vadd.f32 %v447, %v1836
      %v1838 = vpop.f32.mrb[0].mxu0
      %v1839 = vpop.f32.mrb[0].mxu0
      %v1840 = vadd.f32 %v447, %v1839
      %v1841 = vpop.f32.mrb[0].mxu0
      %1842 = vmatprep.mubr.bf16.mxu0 %v1117
      %1843 = vmatmul.mubr.bf16.gmra.mrb[0].mxu0 %v1116
      %v1844 = vpop.f32.mrb[0].mxu0
      %v1845 = vadd.f32 %v447, %v1844
      %v1846 = vpop.f32.mrb[0].mxu0
      %v1847 = vpop.f32.mrb[0].mxu0
      %v1848 = vadd.f32 %v447, %v1847
      %v1849 = vpop.f32.mrb[0].mxu0
      %1850 = vdwg.mxu0
      %1851 = vmatprep.subr.bf16.mxu0 0
      %1852 = vmatpush1.bf16.msra.mxu0 %v1409
      %1853 = vmatprep.subr.bf16.mxu0 0
      %1854 = vmatpush1.bf16.msra.mxu0 %v1410
      %1855 = vmatprep.subr.bf16.mxu0 0
      %1856 = vmatpush1.bf16.msra.mxu0 %v1411
      %1857 = vmatprep.subr.bf16.mxu0 0
      %1858 = vmatpush1.bf16.msra.mxu0 %v1412
      %1859 = vmatprep.subr.bf16.mxu0 0
      %1860 = vmatpush1.bf16.msra.mxu0 %v1413
      %1861 = vmatprep.subr.bf16.mxu0 0
      %1862 = vmatpush1.bf16.msra.mxu0 %v1414
      %1863 = vmatprep.subr.bf16.mxu0 0
      %1864 = vmatpush1.bf16.msra.mxu0 %v1415
      %1865 = vmatprep.subr.bf16.mxu0 0
      %1866 = vmatpush1.bf16.msra.mxu0 %v1416
      %1867 = vmatprep.subr.bf16.mxu0 0
      %1868 = vmatpush1.bf16.msra.mxu0 %v1417
      %1869 = vmatprep.subr.bf16.mxu0 0
      %1870 = vmatpush1.bf16.msra.mxu0 %v1418
      %1871 = vmatprep.subr.bf16.mxu0 0
      %1872 = vmatpush1.bf16.msra.mxu0 %v1419
      %1873 = vmatprep.subr.bf16.mxu0 0
      %1874 = vmatpush1.bf16.msra.mxu0 %v1420
      %1875 = vmatprep.subr.bf16.mxu0 0
      %1876 = vmatpush1.bf16.msra.mxu0 %v1421
      %1877 = vmatprep.subr.bf16.mxu0 0
      %1878 = vmatpush1.bf16.msra.mxu0 %v1422
      %1879 = vmatprep.subr.bf16.mxu0 0
      %1880 = vmatpush1.bf16.msra.mxu0 %v1423
      %1881 = vmatprep.subr.bf16.mxu0 0
      %1882 = vmatpush1.bf16.msra.mxu0 %v1424
      %1883 = vmatprep.mubr.bf16.mxu0 %v964
      %1884 = vmatmul.mubr.bf16.gmra.mrb[0].mxu0 %v963
      %v1885 = vpop.f32.mrb[0].mxu0
      %v1886 = vadd.f32 %v1597, %v1885
      %v1887 = vpop.f32.mrb[0].mxu0
      %v1888 = vpop.f32.mrb[0].mxu0
      %v1889 = vadd.f32 %v1600, %v1888
      %v1890 = vpop.f32.mrb[0].mxu0
      %1891 = vmatprep.mubr.bf16.mxu0 %v969
      %1892 = vmatmul.mubr.bf16.gmra.mrb[0].mxu0 %v968
      %v1893 = vpop.f32.mrb[0].mxu0
      %v1894 = vadd.f32 %v1605, %v1893
      %v1895 = vpop.f32.mrb[0].mxu0
      %v1896 = vpop.f32.mrb[0].mxu0
      %v1897 = vadd.f32 %v1608, %v1896
      %v1898 = vpop.f32.mrb[0].mxu0
      %1899 = vmatprep.mubr.bf16.mxu0 %v974
      %1900 = vmatmul.mubr.bf16.gmra.mrb[0].mxu0 %v973
      %v1901 = vpop.f32.mrb[0].mxu0
      %v1902 = vadd.f32 %v1613, %v1901
      %v1903 = vpop.f32.mrb[0].mxu0
      %v1904 = vpop.f32.mrb[0].mxu0
      %v1905 = vadd.f32 %v1616, %v1904
      %v1906 = vpop.f32.mrb[0].mxu0
      %1907 = vmatprep.mubr.bf16.mxu0 %v979
      %1908 = vmatmul.mubr.bf16.gmra.mrb[0].mxu0 %v978
      %v1909 = vpop.f32.mrb[0].mxu0
      %v1910 = vadd.f32 %v1621, %v1909
      %v1911 = vpop.f32.mrb[0].mxu0
      %v1912 = vpop.f32.mrb[0].mxu0
      %v1913 = vadd.f32 %v1624, %v1912
      %v1914 = vpop.f32.mrb[0].mxu0
      %1915 = vmatprep.mubr.bf16.mxu0 %v984
      %1916 = vmatmul.mubr.bf16.gmra.mrb[0].mxu0 %v983
      %v1917 = vpop.f32.mrb[0].mxu0
      %v1918 = vadd.f32 %v1629, %v1917
      %v1919 = vpop.f32.mrb[0].mxu0
      %v1920 = vpop.f32.mrb[0].mxu0
      %v1921 = vadd.f32 %v1632, %v1920
      %v1922 = vpop.f32.mrb[0].mxu0
      %1923 = vmatprep.mubr.bf16.mxu0 %v989
      %1924 = vmatmul.mubr.bf16.gmra.mrb[0].mxu0 %v988
      %v1925 = vpop.f32.mrb[0].mxu0
      %v1926 = vadd.f32 %v1637, %v1925
      %v1927 = vpop.f32.mrb[0].mxu0
      %v1928 = vpop.f32.mrb[0].mxu0
      %v1929 = vadd.f32 %v1640, %v1928
      %v1930 = vpop.f32.mrb[0].mxu0
      %1931 = vmatprep.mubr.bf16.mxu0 %v994
      %1932 = vmatmul.mubr.bf16.gmra.mrb[0].mxu0 %v993
      %v1933 = vpop.f32.mrb[0].mxu0
      %v1934 = vadd.f32 %v1645, %v1933
      %v1935 = vpop.f32.mrb[0].mxu0
      %v1936 = vpop.f32.mrb[0].mxu0
      %v1937 = vadd.f32 %v1648, %v1936
      %v1938 = vpop.f32.mrb[0].mxu0
      %1939 = vmatprep.mubr.bf16.mxu0 %v999
      %1940 = vmatmul.mubr.bf16.gmra.mrb[0].mxu0 %v998
      %v1941 = vpop.f32.mrb[0].mxu0
      %v1942 = vadd.f32 %v1653, %v1941
      %v1943 = vpop.f32.mrb[0].mxu0
      %v1944 = vpop.f32.mrb[0].mxu0
      %v1945 = vadd.f32 %v1656, %v1944
      %v1946 = vpop.f32.mrb[0].mxu0
      %1947 = vmatprep.mubr.bf16.mxu0 %v1004
      %1948 = vmatmul.mubr.bf16.gmra.mrb[0].mxu0 %v1003
      %v1949 = vpop.f32.mrb[0].mxu0
      %v1950 = vadd.f32 %v1661, %v1949
      %v1951 = vpop.f32.mrb[0].mxu0
      %v1952 = vpop.f32.mrb[0].mxu0
      %v1953 = vadd.f32 %v1664, %v1952
      %v1954 = vpop.f32.mrb[0].mxu0
      %1955 = vmatprep.mubr.bf16.mxu0 %v1009
      %1956 = vmatmul.mubr.bf16.gmra.mrb[0].mxu0 %v1008
      %v1957 = vpop.f32.mrb[0].mxu0
      %v1958 = vadd.f32 %v1669, %v1957
      %v1959 = vpop.f32.mrb[0].mxu0
      %v1960 = vpop.f32.mrb[0].mxu0
      %v1961 = vadd.f32 %v1672, %v1960
      %v1962 = vpop.f32.mrb[0].mxu0
      %1963 = vmatprep.mubr.bf16.mxu0 %v1014
      %1964 = vmatmul.mubr.bf16.gmra.mrb[0].mxu0 %v1013
      %v1965 = vpop.f32.mrb[0].mxu0
      %v1966 = vadd.f32 %v1677, %v1965
      %v1967 = vpop.f32.mrb[0].mxu0
      %v1968 = vpop.f32.mrb[0].mxu0
      %v1969 = vadd.f32 %v1680, %v1968
      %v1970 = vpop.f32.mrb[0].mxu0
      %1971 = vmatprep.mubr.bf16.mxu0 %v1019
      %1972 = vmatmul.mubr.bf16.gmra.mrb[0].mxu0 %v1018
      %v1973 = vpop.f32.mrb[0].mxu0
      %v1974 = vadd.f32 %v1685, %v1973
      %v1975 = vpop.f32.mrb[0].mxu0
      %v1976 = vpop.f32.mrb[0].mxu0
      %v1977 = vadd.f32 %v1688, %v1976
      %v1978 = vpop.f32.mrb[0].mxu0
      %1979 = vmatprep.mubr.bf16.mxu0 %v1024
      %1980 = vmatmul.mubr.bf16.gmra.mrb[0].mxu0 %v1023
      %v1981 = vpop.f32.mrb[0].mxu0
      %v1982 = vadd.f32 %v1693, %v1981
      %v1983 = vpop.f32.mrb[0].mxu0
      %v1984 = vpop.f32.mrb[0].mxu0
      %v1985 = vadd.f32 %v1696, %v1984
      %v1986 = vpop.f32.mrb[0].mxu0
      %1987 = vmatprep.mubr.bf16.mxu0 %v1029
      %1988 = vmatmul.mubr.bf16.gmra.mrb[0].mxu0 %v1028
      %v1989 = vpop.f32.mrb[0].mxu0
      %v1990 = vadd.f32 %v1701, %v1989
      %v1991 = vpop.f32.mrb[0].mxu0
      %v1992 = vpop.f32.mrb[0].mxu0
      %v1993 = vadd.f32 %v1704, %v1992
      %v1994 = vpop.f32.mrb[0].mxu0
      %1995 = vmatprep.mubr.bf16.mxu0 %v1034
      %1996 = vmatmul.mubr.bf16.gmra.mrb[0].mxu0 %v1033
      %v1997 = vpop.f32.mrb[0].mxu0
      %v1998 = vadd.f32 %v1709, %v1997
      %v1999 = vpop.f32.mrb[0].mxu0
      %v2000 = vpop.f32.mrb[0].mxu0
      %v2001 = vadd.f32 %v1712, %v2000
      %v2002 = vpop.f32.mrb[0].mxu0
      %2003 = vmatprep.mubr.bf16.mxu0 %v1039
      %2004 = vmatmul.mubr.bf16.gmra.mrb[0].mxu0 %v1038
      %v2005 = vpop.f32.mrb[0].mxu0
      %v2006 = vadd.f32 %v1717, %v2005
      %v2007 = vpop.f32.mrb[0].mxu0
      %v2008 = vpop.f32.mrb[0].mxu0
      %v2009 = vadd.f32 %v1720, %v2008
      %v2010 = vpop.f32.mrb[0].mxu0
      %2011 = vmatprep.mubr.bf16.mxu0 %v1044
      %2012 = vmatmul.mubr.bf16.gmra.mrb[0].mxu0 %v1043
      %v2013 = vpop.f32.mrb[0].mxu0
      %v2014 = vadd.f32 %v1725, %v2013
      %v2015 = vpop.f32.mrb[0].mxu0
      %v2016 = vpop.f32.mrb[0].mxu0
      %v2017 = vadd.f32 %v1728, %v2016
      %v2018 = vpop.f32.mrb[0].mxu0
      %2019 = vmatprep.mubr.bf16.mxu0 %v1049
      %2020 = vmatmul.mubr.bf16.gmra.mrb[0].mxu0 %v1048
      %v2021 = vpop.f32.mrb[0].mxu0
      %v2022 = vadd.f32 %v1733, %v2021
      %v2023 = vpop.f32.mrb[0].mxu0
      %v2024 = vpop.f32.mrb[0].mxu0
      %v2025 = vadd.f32 %v1736, %v2024
      %v2026 = vpop.f32.mrb[0].mxu0
      %2027 = vmatprep.mubr.bf16.mxu0 %v1054
      %2028 = vmatmul.mubr.bf16.gmra.mrb[0].mxu0 %v1053
      %v2029 = vpop.f32.mrb[0].mxu0
      %v2030 = vadd.f32 %v1741, %v2029
      %v2031 = vpop.f32.mrb[0].mxu0
      %v2032 = vpop.f32.mrb[0].mxu0
      %v2033 = vadd.f32 %v1744, %v2032
      %v2034 = vpop.f32.mrb[0].mxu0
      %2035 = vmatprep.mubr.bf16.mxu0 %v1059
      %2036 = vmatmul.mubr.bf16.gmra.mrb[0].mxu0 %v1058
      %v2037 = vpop.f32.mrb[0].mxu0
      %v2038 = vadd.f32 %v1749, %v2037
      %v2039 = vpop.f32.mrb[0].mxu0
      %v2040 = vpop.f32.mrb[0].mxu0
      %v2041 = vadd.f32 %v1752, %v2040
      %v2042 = vpop.f32.mrb[0].mxu0
      %2043 = vmatprep.mubr.bf16.mxu0 %v1064
      %2044 = vmatmul.mubr.bf16.gmra.mrb[0].mxu0 %v1063
      %v2045 = vpop.f32.mrb[0].mxu0
      %v2046 = vadd.f32 %v1757, %v2045
      %v2047 = vpop.f32.mrb[0].mxu0
      %v2048 = vpop.f32.mrb[0].mxu0
      %v2049 = vadd.f32 %v1760, %v2048
      %v2050 = vpop.f32.mrb[0].mxu0
      %2051 = vmatprep.mubr.bf16.mxu0 %v1069
      %2052 = vmatmul.mubr.bf16.gmra.mrb[0].mxu0 %v1068
      %v2053 = vpop.f32.mrb[0].mxu0
      %v2054 = vadd.f32 %v1765, %v2053
      %v2055 = vpop.f32.mrb[0].mxu0
      %v2056 = vpop.f32.mrb[0].mxu0
      %v2057 = vadd.f32 %v1768, %v2056
      %v2058 = vpop.f32.mrb[0].mxu0
      %2059 = vmatprep.mubr.bf16.mxu0 %v1074
      %2060 = vmatmul.mubr.bf16.gmra.mrb[0].mxu0 %v1073
      %v2061 = vpop.f32.mrb[0].mxu0
      %v2062 = vadd.f32 %v1773, %v2061
      %v2063 = vpop.f32.mrb[0].mxu0
      %v2064 = vpop.f32.mrb[0].mxu0
      %v2065 = vadd.f32 %v1776, %v2064
      %v2066 = vpop.f32.mrb[0].mxu0
      %2067 = vmatprep.mubr.bf16.mxu0 %v1079
      %2068 = vmatmul.mubr.bf16.gmra.mrb[0].mxu0 %v1078
      %v2069 = vpop.f32.mrb[0].mxu0
      %v2070 = vadd.f32 %v1781, %v2069
      %v2071 = vpop.f32.mrb[0].mxu0
      %v2072 = vpop.f32.mrb[0].mxu0
      %v2073 = vadd.f32 %v1784, %v2072
      %v2074 = vpop.f32.mrb[0].mxu0
      %2075 = vmatprep.mubr.bf16.mxu0 %v1084
      %2076 = vmatmul.mubr.bf16.gmra.mrb[0].mxu0 %v1083
      %v2077 = vpop.f32.mrb[0].mxu0
      %v2078 = vadd.f32 %v1789, %v2077
      %v2079 = vpop.f32.mrb[0].mxu0
      %v2080 = vpop.f32.mrb[0].mxu0
      %v2081 = vadd.f32 %v1792, %v2080
      %v2082 = vpop.f32.mrb[0].mxu0
      %2083 = vmatprep.mubr.bf16.mxu0 %v1089
      %2084 = vmatmul.mubr.bf16.gmra.mrb[0].mxu0 %v1088
      %v2085 = vpop.f32.mrb[0].mxu0
      %v2086 = vadd.f32 %v1797, %v2085
      %v2087 = vpop.f32.mrb[0].mxu0
      %v2088 = vpop.f32.mrb[0].mxu0
      %v2089 = vadd.f32 %v1800, %v2088
      %v2090 = vpop.f32.mrb[0].mxu0
      %2091 = vmatprep.mubr.bf16.mxu0 %v1094
      %2092 = vmatmul.mubr.bf16.gmra.mrb[0].mxu0 %v1093
      %v2093 = vpop.f32.mrb[0].mxu0
      %v2094 = vadd.f32 %v1805, %v2093
      %v2095 = vpop.f32.mrb[0].mxu0
      %v2096 = vpop.f32.mrb[0].mxu0
      %v2097 = vadd.f32 %v1808, %v2096
      %v2098 = vpop.f32.mrb[0].mxu0
      %2099 = vmatprep.mubr.bf16.mxu0 %v1099
      %2100 = vmatmul.mubr.bf16.gmra.mrb[0].mxu0 %v1098
      %v2101 = vpop.f32.mrb[0].mxu0
      %v2102 = vadd.f32 %v1813, %v2101
      %v2103 = vpop.f32.mrb[0].mxu0
      %v2104 = vpop.f32.mrb[0].mxu0
      %v2105 = vadd.f32 %v1816, %v2104
      %v2106 = vpop.f32.mrb[0].mxu0
      %2107 = vmatprep.mubr.bf16.mxu0 %v1104
      %2108 = vmatmul.mubr.bf16.gmra.mrb[0].mxu0 %v1103
      %v2109 = vpop.f32.mrb[0].mxu0
      %v2110 = vadd.f32 %v1821, %v2109
      %v2111 = vpop.f32.mrb[0].mxu0
      %v2112 = vpop.f32.mrb[0].mxu0
      %v2113 = vadd.f32 %v1824, %v2112
      %v2114 = vpop.f32.mrb[0].mxu0
      %2115 = vmatprep.mubr.bf16.mxu0 %v1109
      %2116 = vmatmul.mubr.bf16.gmra.mrb[0].mxu0 %v1108
      %v2117 = vpop.f32.mrb[0].mxu0
      %v2118 = vadd.f32 %v1829, %v2117
      %v2119 = vpop.f32.mrb[0].mxu0
      %v2120 = vpop.f32.mrb[0].mxu0
      %v2121 = vadd.f32 %v1832, %v2120
      %v2122 = vpop.f32.mrb[0].mxu0
      %2123 = vmatprep.mubr.bf16.mxu0 %v1114
      %2124 = vmatmul.mubr.bf16.gmra.mrb[0].mxu0 %v1113
      %v2125 = vpop.f32.mrb[0].mxu0
      %v2126 = vadd.f32 %v1837, %v2125
      %v2127 = vpop.f32.mrb[0].mxu0
      %v2128 = vpop.f32.mrb[0].mxu0
      %v2129 = vadd.f32 %v1840, %v2128
      %v2130 = vpop.f32.mrb[0].mxu0
      %2131 = vmatprep.mubr.bf16.mxu0 %v1119
      %2132 = vmatmul.mubr.bf16.gmra.mrb[0].mxu0 %v1118
      %v2133 = vpop.f32.mrb[0].mxu0
      %v2134 = vadd.f32 %v1845, %v2133
      %v2135 = vpop.f32.mrb[0].mxu0
      %v2136 = vpop.f32.mrb[0].mxu0
      %v2137 = vadd.f32 %v1848, %v2136
      %v2138 = vpop.f32.mrb[0].mxu0
      %2139 = vdwg.mxu0
      %2140 = vmatprep.subr.bf16.mxu0 0
      %2141 = vmatpush1.bf16.msra.mxu0 %v1425
      %2142 = vmatprep.subr.bf16.mxu0 0
      %2143 = vmatpush1.bf16.msra.mxu0 %v1426
      %2144 = vmatprep.subr.bf16.mxu0 0
      %2145 = vmatpush1.bf16.msra.mxu0 %v1427
      %2146 = vmatprep.subr.bf16.mxu0 0
      %2147 = vmatpush1.bf16.msra.mxu0 %v1428
      %2148 = vmatprep.subr.bf16.mxu0 0
      %2149 = vmatpush1.bf16.msra.mxu0 0
      %2150 = vmatprep.subr.bf16.mxu0 0
      %2151 = vmatpush1.bf16.msra.mxu0 0
      %2152 = vmatprep.subr.bf16.mxu0 0
      %2153 = vmatpush1.bf16.msra.mxu0 0
      %2154 = vmatprep.subr.bf16.mxu0 0
      %2155 = vmatpush1.bf16.msra.mxu0 0
      %2156 = vmatprep.subr.bf16.mxu0 0
      %2157 = vmatpush1.bf16.msra.mxu0 0
      %2158 = vmatprep.subr.bf16.mxu0 0
      %2159 = vmatpush1.bf16.msra.mxu0 0
      %2160 = vmatprep.subr.bf16.mxu0 0
      %2161 = vmatpush1.bf16.msra.mxu0 0
      %2162 = vmatprep.subr.bf16.mxu0 0
      %2163 = vmatpush1.bf16.msra.mxu0 0
      %2164 = vmatprep.subr.bf16.mxu0 0
      %2165 = vmatpush1.bf16.msra.mxu0 0
      %2166 = vmatprep.subr.bf16.mxu0 0
      %2167 = vmatpush1.bf16.msra.mxu0 0
      %2168 = vmatprep.subr.bf16.mxu0 0
      %2169 = vmatpush1.bf16.msra.mxu0 0
      %2170 = vmatprep.subr.bf16.mxu0 0
      %2171 = vmatpush1.bf16.msra.mxu0 0
      %2172 = vmatprep.mubr.bf16.mxu0 0
      %2173 = vmatmul.mubr.bf16.gmra.mrb[0].mxu0 %v1467
      %v2174 = vpop.f32.mrb[0].mxu0
      %v2175 = vadd.f32 %v1886, %v2174
      %v2176 = vpop.f32.mrb[0].mxu0
      %v2177 = vpop.f32.mrb[0].mxu0
      %v2178 = vadd.f32 %v1889, %v2177
      %v2179 = vpop.f32.mrb[0].mxu0
      %2180 = vmatprep.mubr.bf16.mxu0 0
      %2181 = vmatmul.mubr.bf16.gmra.mrb[0].mxu0 %v1470
      %v2182 = vpop.f32.mrb[0].mxu0
      %v2183 = vadd.f32 %v1894, %v2182
      %v2184 = vpop.f32.mrb[0].mxu0
      %v2185 = vpop.f32.mrb[0].mxu0
      %v2186 = vadd.f32 %v1897, %v2185
      %v2187 = vpop.f32.mrb[0].mxu0
      %2188 = vmatprep.mubr.bf16.mxu0 0
      %2189 = vmatmul.mubr.bf16.gmra.mrb[0].mxu0 %v1473
      %v2190 = vpop.f32.mrb[0].mxu0
      %v2191 = vadd.f32 %v1902, %v2190
      %v2192 = vpop.f32.mrb[0].mxu0
      %v2193 = vpop.f32.mrb[0].mxu0
      %v2194 = vadd.f32 %v1905, %v2193
      %v2195 = vpop.f32.mrb[0].mxu0
      %2196 = vmatprep.mubr.bf16.mxu0 0
      %2197 = vmatmul.mubr.bf16.gmra.mrb[0].mxu0 %v1476
      %v2198 = vpop.f32.mrb[0].mxu0
      %v2199 = vadd.f32 %v1910, %v2198
      %v2200 = vpop.f32.mrb[0].mxu0
      %v2201 = vpop.f32.mrb[0].mxu0
      %v2202 = vadd.f32 %v1913, %v2201
      %v2203 = vpop.f32.mrb[0].mxu0
      %2204 = vmatprep.mubr.bf16.mxu0 0
      %2205 = vmatmul.mubr.bf16.gmra.mrb[0].mxu0 %v1479
      %v2206 = vpop.f32.mrb[0].mxu0
      %v2207 = vadd.f32 %v1918, %v2206
      %v2208 = vpop.f32.mrb[0].mxu0
      %v2209 = vpop.f32.mrb[0].mxu0
      %v2210 = vadd.f32 %v1921, %v2209
      %v2211 = vpop.f32.mrb[0].mxu0
      %2212 = vmatprep.mubr.bf16.mxu0 0
      %2213 = vmatmul.mubr.bf16.gmra.mrb[0].mxu0 %v1482
      %v2214 = vpop.f32.mrb[0].mxu0
      %v2215 = vadd.f32 %v1926, %v2214
      %v2216 = vpop.f32.mrb[0].mxu0
      %v2217 = vpop.f32.mrb[0].mxu0
      %v2218 = vadd.f32 %v1929, %v2217
      %v2219 = vpop.f32.mrb[0].mxu0
      %2220 = vmatprep.mubr.bf16.mxu0 0
      %2221 = vmatmul.mubr.bf16.gmra.mrb[0].mxu0 %v1485
      %v2222 = vpop.f32.mrb[0].mxu0
      %v2223 = vadd.f32 %v1934, %v2222
      %v2224 = vpop.f32.mrb[0].mxu0
      %v2225 = vpop.f32.mrb[0].mxu0
      %v2226 = vadd.f32 %v1937, %v2225
      %v2227 = vpop.f32.mrb[0].mxu0
      %2228 = vmatprep.mubr.bf16.mxu0 0
      %2229 = vmatmul.mubr.bf16.gmra.mrb[0].mxu0 %v1488
      %v2230 = vpop.f32.mrb[0].mxu0
      %v2231 = vadd.f32 %v1942, %v2230
      %v2232 = vpop.f32.mrb[0].mxu0
      %v2233 = vpop.f32.mrb[0].mxu0
      %v2234 = vadd.f32 %v1945, %v2233
      %v2235 = vpop.f32.mrb[0].mxu0
      %2236 = vmatprep.mubr.bf16.mxu0 0
      %2237 = vmatmul.mubr.bf16.gmra.mrb[0].mxu0 %v1491
      %v2238 = vpop.f32.mrb[0].mxu0
      %v2239 = vadd.f32 %v1950, %v2238
      %v2240 = vpop.f32.mrb[0].mxu0
      %v2241 = vpop.f32.mrb[0].mxu0
      %v2242 = vadd.f32 %v1953, %v2241
      %v2243 = vpop.f32.mrb[0].mxu0
      %2244 = vmatprep.mubr.bf16.mxu0 0
      %2245 = vmatmul.mubr.bf16.gmra.mrb[0].mxu0 %v1494
      %v2246 = vpop.f32.mrb[0].mxu0
      %v2247 = vadd.f32 %v1958, %v2246
      %v2248 = vpop.f32.mrb[0].mxu0
      %v2249 = vpop.f32.mrb[0].mxu0
      %v2250 = vadd.f32 %v1961, %v2249
      %v2251 = vpop.f32.mrb[0].mxu0
      %2252 = vmatprep.mubr.bf16.mxu0 0
      %2253 = vmatmul.mubr.bf16.gmra.mrb[0].mxu0 %v1497
      %v2254 = vpop.f32.mrb[0].mxu0
      %v2255 = vadd.f32 %v1966, %v2254
      %v2256 = vpop.f32.mrb[0].mxu0
      %v2257 = vpop.f32.mrb[0].mxu0
      %v2258 = vadd.f32 %v1969, %v2257
      %v2259 = vpop.f32.mrb[0].mxu0
      %2260 = vmatprep.mubr.bf16.mxu0 0
      %2261 = vmatmul.mubr.bf16.gmra.mrb[0].mxu0 %v1500
      %v2262 = vpop.f32.mrb[0].mxu0
      %v2263 = vadd.f32 %v1974, %v2262
      %v2264 = vpop.f32.mrb[0].mxu0
      %v2265 = vpop.f32.mrb[0].mxu0
      %v2266 = vadd.f32 %v1977, %v2265
      %v2267 = vpop.f32.mrb[0].mxu0
      %2268 = vmatprep.mubr.bf16.mxu0 0
      %2269 = vmatmul.mubr.bf16.gmra.mrb[0].mxu0 %v1503
      %v2270 = vpop.f32.mrb[0].mxu0
      %v2271 = vadd.f32 %v1982, %v2270
      %v2272 = vpop.f32.mrb[0].mxu0
      %v2273 = vpop.f32.mrb[0].mxu0
      %v2274 = vadd.f32 %v1985, %v2273
      %v2275 = vpop.f32.mrb[0].mxu0
      %2276 = vmatprep.mubr.bf16.mxu0 0
      %2277 = vmatmul.mubr.bf16.gmra.mrb[0].mxu0 %v1506
      %v2278 = vpop.f32.mrb[0].mxu0
      %v2279 = vadd.f32 %v1990, %v2278
      %v2280 = vpop.f32.mrb[0].mxu0
      %v2281 = vpop.f32.mrb[0].mxu0
      %v2282 = vadd.f32 %v1993, %v2281
      %v2283 = vpop.f32.mrb[0].mxu0
      %2284 = vmatprep.mubr.bf16.mxu0 0
      %2285 = vmatmul.mubr.bf16.gmra.mrb[0].mxu0 %v1509
      %v2286 = vpop.f32.mrb[0].mxu0
      %v2287 = vadd.f32 %v1998, %v2286
      %v2288 = vpop.f32.mrb[0].mxu0
      %v2289 = vpop.f32.mrb[0].mxu0
      %v2290 = vadd.f32 %v2001, %v2289
      %v2291 = vpop.f32.mrb[0].mxu0
      %2292 = vmatprep.mubr.bf16.mxu0 0
      %2293 = vmatmul.mubr.bf16.gmra.mrb[0].mxu0 %v1512
      %v2294 = vpop.f32.mrb[0].mxu0
      %v2295 = vadd.f32 %v2006, %v2294
      %v2296 = vpop.f32.mrb[0].mxu0
      %v2297 = vpop.f32.mrb[0].mxu0
      %v2298 = vadd.f32 %v2009, %v2297
      %v2299 = vpop.f32.mrb[0].mxu0
      %2300 = vmatprep.mubr.bf16.mxu0 0
      %2301 = vmatmul.mubr.bf16.gmra.mrb[0].mxu0 %v1515
      %v2302 = vpop.f32.mrb[0].mxu0
      %v2303 = vadd.f32 %v2014, %v2302
      %v2304 = vpop.f32.mrb[0].mxu0
      %v2305 = vpop.f32.mrb[0].mxu0
      %v2306 = vadd.f32 %v2017, %v2305
      %v2307 = vpop.f32.mrb[0].mxu0
      %2308 = vmatprep.mubr.bf16.mxu0 0
      %2309 = vmatmul.mubr.bf16.gmra.mrb[0].mxu0 %v1518
      %v2310 = vpop.f32.mrb[0].mxu0
      %v2311 = vadd.f32 %v2022, %v2310
      %v2312 = vpop.f32.mrb[0].mxu0
      %v2313 = vpop.f32.mrb[0].mxu0
      %v2314 = vadd.f32 %v2025, %v2313
      %v2315 = vpop.f32.mrb[0].mxu0
      %2316 = vmatprep.mubr.bf16.mxu0 0
      %2317 = vmatmul.mubr.bf16.gmra.mrb[0].mxu0 %v1521
      %v2318 = vpop.f32.mrb[0].mxu0
      %v2319 = vadd.f32 %v2030, %v2318
      %v2320 = vpop.f32.mrb[0].mxu0
      %v2321 = vpop.f32.mrb[0].mxu0
      %v2322 = vadd.f32 %v2033, %v2321
      %v2323 = vpop.f32.mrb[0].mxu0
      %2324 = vmatprep.mubr.bf16.mxu0 0
      %2325 = vmatmul.mubr.bf16.gmra.mrb[0].mxu0 %v1524
      %v2326 = vpop.f32.mrb[0].mxu0
      %v2327 = vadd.f32 %v2038, %v2326
      %v2328 = vpop.f32.mrb[0].mxu0
      %v2329 = vpop.f32.mrb[0].mxu0
      %v2330 = vadd.f32 %v2041, %v2329
      %v2331 = vpop.f32.mrb[0].mxu0
      %2332 = vmatprep.mubr.bf16.mxu0 0
      %2333 = vmatmul.mubr.bf16.gmra.mrb[0].mxu0 %v1527
      %v2334 = vpop.f32.mrb[0].mxu0
      %v2335 = vadd.f32 %v2046, %v2334
      %v2336 = vpop.f32.mrb[0].mxu0
      %v2337 = vpop.f32.mrb[0].mxu0
      %v2338 = vadd.f32 %v2049, %v2337
      %v2339 = vpop.f32.mrb[0].mxu0
      %2340 = vmatprep.mubr.bf16.mxu0 0
      %2341 = vmatmul.mubr.bf16.gmra.mrb[0].mxu0 %v1530
      %v2342 = vpop.f32.mrb[0].mxu0
      %v2343 = vadd.f32 %v2054, %v2342
      %v2344 = vpop.f32.mrb[0].mxu0
      %v2345 = vpop.f32.mrb[0].mxu0
      %v2346 = vadd.f32 %v2057, %v2345
      %v2347 = vpop.f32.mrb[0].mxu0
      %2348 = vmatprep.mubr.bf16.mxu0 0
      %2349 = vmatmul.mubr.bf16.gmra.mrb[0].mxu0 %v1533
      %v2350 = vpop.f32.mrb[0].mxu0
      %v2351 = vadd.f32 %v2062, %v2350
      %v2352 = vpop.f32.mrb[0].mxu0
      %v2353 = vpop.f32.mrb[0].mxu0
      %v2354 = vadd.f32 %v2065, %v2353
      %v2355 = vpop.f32.mrb[0].mxu0
      %2356 = vmatprep.mubr.bf16.mxu0 0
      %2357 = vmatmul.mubr.bf16.gmra.mrb[0].mxu0 %v1536
      %v2358 = vpop.f32.mrb[0].mxu0
      %v2359 = vadd.f32 %v2070, %v2358
      %v2360 = vpop.f32.mrb[0].mxu0
      %v2361 = vpop.f32.mrb[0].mxu0
      %v2362 = vadd.f32 %v2073, %v2361
      %v2363 = vpop.f32.mrb[0].mxu0
      %2364 = vmatprep.mubr.bf16.mxu0 0
      %2365 = vmatmul.mubr.bf16.gmra.mrb[0].mxu0 %v1539
      %v2366 = vpop.f32.mrb[0].mxu0
      %v2367 = vadd.f32 %v2078, %v2366
      %v2368 = vpop.f32.mrb[0].mxu0
      %v2369 = vpop.f32.mrb[0].mxu0
      %v2370 = vadd.f32 %v2081, %v2369
      %v2371 = vpop.f32.mrb[0].mxu0
      %2372 = vmatprep.mubr.bf16.mxu0 0
      %2373 = vmatmul.mubr.bf16.gmra.mrb[0].mxu0 %v1542
      %v2374 = vpop.f32.mrb[0].mxu0
      %v2375 = vadd.f32 %v2086, %v2374
      %v2376 = vpop.f32.mrb[0].mxu0
      %v2377 = vpop.f32.mrb[0].mxu0
      %v2378 = vadd.f32 %v2089, %v2377
      %v2379 = vpop.f32.mrb[0].mxu0
      %2380 = vmatprep.mubr.bf16.mxu0 0
      %2381 = vmatmul.mubr.bf16.gmra.mrb[0].mxu0 %v1545
      %v2382 = vpop.f32.mrb[0].mxu0
      %v2383 = vadd.f32 %v2094, %v2382
      %v2384 = vpop.f32.mrb[0].mxu0
      %v2385 = vpop.f32.mrb[0].mxu0
      %v2386 = vadd.f32 %v2097, %v2385
      %v2387 = vpop.f32.mrb[0].mxu0
      %2388 = vmatprep.mubr.bf16.mxu0 0
      %2389 = vmatmul.mubr.bf16.gmra.mrb[0].mxu0 %v1548
      %v2390 = vpop.f32.mrb[0].mxu0
      %v2391 = vadd.f32 %v2102, %v2390
      %v2392 = vpop.f32.mrb[0].mxu0
      %v2393 = vpop.f32.mrb[0].mxu0
      %v2394 = vadd.f32 %v2105, %v2393
      %v2395 = vpop.f32.mrb[0].mxu0
      %2396 = vmatprep.mubr.bf16.mxu0 0
      %2397 = vmatmul.mubr.bf16.gmra.mrb[0].mxu0 %v1551
      %v2398 = vpop.f32.mrb[0].mxu0
      %v2399 = vadd.f32 %v2110, %v2398
      %v2400 = vpop.f32.mrb[0].mxu0
      %v2401 = vpop.f32.mrb[0].mxu0
      %v2402 = vadd.f32 %v2113, %v2401
      %v2403 = vpop.f32.mrb[0].mxu0
      %2404 = vmatprep.mubr.bf16.mxu0 0
      %2405 = vmatmul.mubr.bf16.gmra.mrb[0].mxu0 %v1554
      %v2406 = vpop.f32.mrb[0].mxu0
      %v2407 = vadd.f32 %v2118, %v2406
      %v2408 = vpop.f32.mrb[0].mxu0
      %v2409 = vpop.f32.mrb[0].mxu0
      %v2410 = vadd.f32 %v2121, %v2409
      %v2411 = vpop.f32.mrb[0].mxu0
      %2412 = vmatprep.mubr.bf16.mxu0 0
      %2413 = vmatmul.mubr.bf16.gmra.mrb[0].mxu0 %v1557
      %v2414 = vpop.f32.mrb[0].mxu0
      %v2415 = vadd.f32 %v2126, %v2414
      %v2416 = vpop.f32.mrb[0].mxu0
      %v2417 = vpop.f32.mrb[0].mxu0
      %v2418 = vadd.f32 %v2129, %v2417
      %v2419 = vpop.f32.mrb[0].mxu0
      %2420 = vmatprep.mubr.bf16.mxu0 0
      %2421 = vmatmul.mubr.bf16.gmra.mrb[0].mxu0 %v1560
      %v2422 = vpop.f32.mrb[0].mxu0
      %v2423 = vadd.f32 %v2134, %v2422
      %v2424 = vpop.f32.mrb[0].mxu0
      %v2425 = vpop.f32.mrb[0].mxu0
      %v2426 = vadd.f32 %v2137, %v2425
      %v2427 = vpop.f32.mrb[0].mxu0
      %2428 = vdwg.mxu0
      %v2429 = vmax.f32 %v2175, 0.0
      %v2430 = vmax.f32 %v2178, 0.0
      %v2431 = vmax.f32 %v2183, 0.0
      %v2432 = vmax.f32 %v2186, 0.0
      %v2433 = vmax.f32 %v2191, 0.0
      %v2434 = vmax.f32 %v2194, 0.0
      %v2435 = vmax.f32 %v2199, 0.0
      %v2436 = vmax.f32 %v2202, 0.0
      %v2437 = vmax.f32 %v2207, 0.0
      %v2438 = vmax.f32 %v2210, 0.0
      %v2439 = vmax.f32 %v2215, 0.0
      %v2440 = vmax.f32 %v2218, 0.0
      %v2441 = vmax.f32 %v2223, 0.0
      %v2442 = vmax.f32 %v2226, 0.0
      %v2443 = vmax.f32 %v2231, 0.0
      %v2444 = vmax.f32 %v2234, 0.0
      %v2445 = vmax.f32 %v2239, 0.0
      %v2446 = vmax.f32 %v2242, 0.0
      %v2447 = vmax.f32 %v2247, 0.0
      %v2448 = vmax.f32 %v2250, 0.0
      %v2449 = vmax.f32 %v2255, 0.0
      %v2450 = vmax.f32 %v2258, 0.0
      %v2451 = vmax.f32 %v2263, 0.0
      %v2452 = vmax.f32 %v2266, 0.0
      %v2453 = vmax.f32 %v2271, 0.0
      %v2454 = vmax.f32 %v2274, 0.0
      %v2455 = vmax.f32 %v2279, 0.0
      %v2456 = vmax.f32 %v2282, 0.0
      %v2457 = vmax.f32 %v2287, 0.0
      %v2458 = vmax.f32 %v2290, 0.0
      %v2459 = vmax.f32 %v2295, 0.0
      %v2460 = vmax.f32 %v2298, 0.0
      %v2461 = vmax.f32 %v2303, 0.0
      %v2462 = vmax.f32 %v2306, 0.0
      %v2463 = vmax.f32 %v2311, 0.0
      %v2464 = vmax.f32 %v2314, 0.0
      %v2465 = vmax.f32 %v2319, 0.0
      %v2466 = vmax.f32 %v2322, 0.0
      %v2467 = vmax.f32 %v2327, 0.0
      %v2468 = vmax.f32 %v2330, 0.0
      %v2469 = vmax.f32 %v2335, 0.0
      %v2470 = vmax.f32 %v2338, 0.0
      %v2471 = vmax.f32 %v2343, 0.0
      %v2472 = vmax.f32 %v2346, 0.0
      %v2473 = vmax.f32 %v2351, 0.0
      %v2474 = vmax.f32 %v2354, 0.0
      %v2475 = vmax.f32 %v2359, 0.0
      %v2476 = vmax.f32 %v2362, 0.0
      %v2477 = vmax.f32 %v2367, 0.0
      %v2478 = vmax.f32 %v2370, 0.0
      %v2479 = vmax.f32 %v2375, 0.0
      %v2480 = vmax.f32 %v2378, 0.0
      %v2481 = vmax.f32 %v2383, 0.0
      %v2482 = vmax.f32 %v2386, 0.0
      %v2483 = vmax.f32 %v2391, 0.0
      %v2484 = vmax.f32 %v2394, 0.0
      %v2485 = vmax.f32 %v2399, 0.0
      %v2486 = vmax.f32 %v2402, 0.0
      %v2487 = vmax.f32 %v2407, 0.0
      %v2488 = vmax.f32 %v2410, 0.0
      %v2489 = vmax.f32 %v2415, 0.0
      %v2490 = vmax.f32 %v2418, 0.0
      %v2491 = vmax.f32 %v2423, 0.0
      %v2492 = vmax.f32 %v2426, 0.0
      %v2493 = vpack.c.bf16 %v2430, %v2429
      %v2494 = vpack.c.bf16 %v2432, %v2431
      %v2495 = vpack.c.bf16 %v2434, %v2433
      %v2496 = vpack.c.bf16 %v2436, %v2435
      %v2497 = vpack.c.bf16 %v2438, %v2437
      %v2498 = vpack.c.bf16 %v2440, %v2439
      %v2499 = vpack.c.bf16 %v2442, %v2441
      %v2500 = vpack.c.bf16 %v2444, %v2443
      %v2501 = vpack.c.bf16 %v2446, %v2445
      %v2502 = vpack.c.bf16 %v2448, %v2447
      %v2503 = vpack.c.bf16 %v2450, %v2449
      %v2504 = vpack.c.bf16 %v2452, %v2451
      %v2505 = vpack.c.bf16 %v2454, %v2453
      %v2506 = vpack.c.bf16 %v2456, %v2455
      %v2507 = vpack.c.bf16 %v2458, %v2457
      %v2508 = vpack.c.bf16 %v2460, %v2459
      %v2509 = vpack.c.bf16 %v2462, %v2461
      %v2510 = vpack.c.bf16 %v2464, %v2463
      %v2511 = vpack.c.bf16 %v2466, %v2465
      %v2512 = vpack.c.bf16 %v2468, %v2467
      %v2513 = vpack.c.bf16 %v2470, %v2469
      %v2514 = vpack.c.bf16 %v2472, %v2471
      %v2515 = vpack.c.bf16 %v2474, %v2473
      %v2516 = vpack.c.bf16 %v2476, %v2475
      %v2517 = vpack.c.bf16 %v2478, %v2477
      %v2518 = vpack.c.bf16 %v2480, %v2479
      %v2519 = vpack.c.bf16 %v2482, %v2481
      %v2520 = vpack.c.bf16 %v2484, %v2483
      %v2521 = vpack.c.bf16 %v2486, %v2485
      %v2522 = vpack.c.bf16 %v2488, %v2487
      %v2523 = vpack.c.bf16 %v2490, %v2489
      %v2524 = vpack.c.bf16 %v2492, %v2491
      %v2557 = vunpack.c.l.b16 %v2493
      %v2558 = vunpack.c.h.b16 %v2493
      %v2559 = vunpack.c.l.b16 %v2494
      %v2560 = vunpack.c.h.b16 %v2494
      %v2561 = vunpack.c.l.b16 %v2495
      %v2562 = vunpack.c.h.b16 %v2495
      %v2563 = vunpack.c.l.b16 %v2496
      %v2564 = vunpack.c.h.b16 %v2496
      %v2565 = vunpack.c.l.b16 %v2497
      %v2566 = vunpack.c.h.b16 %v2497
      %v2567 = vunpack.c.l.b16 %v2498
      %v2568 = vunpack.c.h.b16 %v2498
      %v2569 = vunpack.c.l.b16 %v2499
      %v2570 = vunpack.c.h.b16 %v2499
      %v2571 = vunpack.c.l.b16 %v2500
      %v2572 = vunpack.c.h.b16 %v2500
      %v2573 = vunpack.c.l.b16 %v2501
      %v2574 = vunpack.c.h.b16 %v2501
      %v2575 = vunpack.c.l.b16 %v2502
      %v2576 = vunpack.c.h.b16 %v2502
      %v2577 = vunpack.c.l.b16 %v2503
      %v2578 = vunpack.c.h.b16 %v2503
      %v2579 = vunpack.c.l.b16 %v2504
      %v2580 = vunpack.c.h.b16 %v2504
      %v2581 = vunpack.c.l.b16 %v2505
      %v2582 = vunpack.c.h.b16 %v2505
      %v2583 = vunpack.c.l.b16 %v2506
      %v2584 = vunpack.c.h.b16 %v2506
      %v2585 = vunpack.c.l.b16 %v2507
      %v2586 = vunpack.c.h.b16 %v2507
      %v2587 = vunpack.c.l.b16 %v2508
      %v2588 = vunpack.c.h.b16 %v2508
      %v2589 = vunpack.c.l.b16 %v2509
      %v2590 = vunpack.c.h.b16 %v2509
      %v2591 = vunpack.c.l.b16 %v2510
      %v2592 = vunpack.c.h.b16 %v2510
      %v2593 = vunpack.c.l.b16 %v2511
      %v2594 = vunpack.c.h.b16 %v2511
      %v2595 = vunpack.c.l.b16 %v2512
      %v2596 = vunpack.c.h.b16 %v2512
      %v2597 = vunpack.c.l.b16 %v2513
      %v2598 = vunpack.c.h.b16 %v2513
      %v2599 = vunpack.c.l.b16 %v2514
      %v2600 = vunpack.c.h.b16 %v2514
      %v2601 = vunpack.c.l.b16 %v2515
      %v2602 = vunpack.c.h.b16 %v2515
      %v2603 = vunpack.c.l.b16 %v2516
      %v2604 = vunpack.c.h.b16 %v2516
      %v2605 = vunpack.c.l.b16 %v2517
      %v2606 = vunpack.c.h.b16 %v2517
      %v2607 = vunpack.c.l.b16 %v2518
      %v2608 = vunpack.c.h.b16 %v2518
      %v2609 = vunpack.c.l.b16 %v2519
      %v2610 = vunpack.c.h.b16 %v2519
      %v2611 = vunpack.c.l.b16 %v2520
      %v2612 = vunpack.c.h.b16 %v2520
      %v2613 = vunpack.c.l.b16 %v2521
      %v2614 = vunpack.c.h.b16 %v2521
      %v2615 = vunpack.c.l.b16 %v2522
      %v2616 = vunpack.c.h.b16 %v2522
      %v2617 = vunpack.c.l.b16 %v2523
      %v2618 = vunpack.c.h.b16 %v2523
      %v2619 = vunpack.c.l.b16 %v2524
      %v2620 = vunpack.c.h.b16 %v2524
      %v2621 = vpack.c.b16 %v2557, %v2557
      %v2622 = vpack.c.b16 %v2558, %v2558
      %v2623 = vpack.c.b16 %v2559, %v2559
      %v2624 = vpack.c.b16 %v2560, %v2560
      %v2625 = vpack.c.b16 %v2561, %v2561
      %v2626 = vpack.c.b16 %v2562, %v2562
      %v2627 = vpack.c.b16 %v2563, %v2563
      %v2628 = vpack.c.b16 %v2564, %v2564
      %v2629 = vpack.c.b16 %v2565, %v2565
      %v2630 = vpack.c.b16 %v2566, %v2566
      %v2631 = vpack.c.b16 %v2567, %v2567
      %v2632 = vpack.c.b16 %v2568, %v2568
      %v2633 = vpack.c.b16 %v2569, %v2569
      %v2634 = vpack.c.b16 %v2570, %v2570
      %v2635 = vpack.c.b16 %v2571, %v2571
      %v2636 = vpack.c.b16 %v2572, %v2572
      %v2637 = vpack.c.b16 %v2573, %v2573
      %v2638 = vpack.c.b16 %v2574, %v2574
      %v2639 = vpack.c.b16 %v2575, %v2575
      %v2640 = vpack.c.b16 %v2576, %v2576
      %v2641 = vpack.c.b16 %v2577, %v2577
      %v2642 = vpack.c.b16 %v2578, %v2578
      %v2643 = vpack.c.b16 %v2579, %v2579
      %v2644 = vpack.c.b16 %v2580, %v2580
      %v2645 = vpack.c.b16 %v2581, %v2581
      %v2646 = vpack.c.b16 %v2582, %v2582
      %v2647 = vpack.c.b16 %v2583, %v2583
      %v2648 = vpack.c.b16 %v2584, %v2584
      %v2649 = vpack.c.b16 %v2585, %v2585
      %v2650 = vpack.c.b16 %v2586, %v2586
      %v2651 = vpack.c.b16 %v2587, %v2587
      %v2652 = vpack.c.b16 %v2588, %v2588
      %v2653 = vpack.c.b16 %v2589, %v2589
      %v2654 = vpack.c.b16 %v2590, %v2590
      %v2655 = vpack.c.b16 %v2591, %v2591
      %v2656 = vpack.c.b16 %v2592, %v2592
      %v2657 = vpack.c.b16 %v2593, %v2593
      %v2658 = vpack.c.b16 %v2594, %v2594
      %v2659 = vpack.c.b16 %v2595, %v2595
      %v2660 = vpack.c.b16 %v2596, %v2596
      %v2661 = vpack.c.b16 %v2597, %v2597
      %v2662 = vpack.c.b16 %v2598, %v2598
      %v2663 = vpack.c.b16 %v2599, %v2599
      %v2664 = vpack.c.b16 %v2600, %v2600
      %v2665 = vpack.c.b16 %v2601, %v2601
      %v2666 = vpack.c.b16 %v2602, %v2602
      %v2667 = vpack.c.b16 %v2603, %v2603
      %v2668 = vpack.c.b16 %v2604, %v2604
      %v2669 = vpack.c.b16 %v2605, %v2605
      %v2670 = vpack.c.b16 %v2606, %v2606
      %v2671 = vpack.c.b16 %v2607, %v2607
      %v2672 = vpack.c.b16 %v2608, %v2608
      %v2673 = vpack.c.b16 %v2609, %v2609
      %v2674 = vpack.c.b16 %v2610, %v2610
      %v2675 = vpack.c.b16 %v2611, %v2611
      %v2676 = vpack.c.b16 %v2612, %v2612
      %v2677 = vpack.c.b16 %v2613, %v2613
      %v2678 = vpack.c.b16 %v2614, %v2614
      %v2679 = vpack.c.b16 %v2615, %v2615
      %v2680 = vpack.c.b16 %v2616, %v2616
      %v2681 = vpack.c.b16 %v2617, %v2617
      %v2682 = vpack.c.b16 %v2618, %v2618
      %v2683 = vpack.c.b16 %v2619, %v2619
      %v2684 = vpack.c.b16 %v2620, %v2620
      %vm2749 = vcmask 519168
      %2750 = vst.msk [vmem:[%s175] sm:$0xf] %vm2749, %v2621
      %2751 = vst.msk [vmem:[%s175 + $0x4] sm:$0xf] %vm2749, %v2622
      %2752 = vst.msk [vmem:[%s175 + $0x8] sm:$0xf] %vm2749, %v2623
      %2753 = vst.msk [vmem:[%s175 + $0xc] sm:$0xf] %vm2749, %v2624
      %2754 = vst.msk [vmem:[%s175 + $0x10] sm:$0xf] %vm2749, %v2625
      %2755 = vst.msk [vmem:[%s175 + $0x14] sm:$0xf] %vm2749, %v2626
      %2756 = vst.msk [vmem:[%s175 + $0x18] sm:$0xf] %vm2749, %v2627
      %2757 = vst.msk [vmem:[%s175 + $0x1c] sm:$0xf] %vm2749, %v2628
      %2758 = vst.msk [vmem:[%s175 + $0x20] sm:$0xf] %vm2749, %v2629
      %2759 = vst.msk [vmem:[%s175 + $0x24] sm:$0xf] %vm2749, %v2630
      %2760 = vst.msk [vmem:[%s175 + $0x28] sm:$0xf] %vm2749, %v2631
      %2761 = vst.msk [vmem:[%s175 + $0x2c] sm:$0xf] %vm2749, %v2632
      %2762 = vst.msk [vmem:[%s175 + $0x30] sm:$0xf] %vm2749, %v2633
      %2763 = vst.msk [vmem:[%s175 + $0x34] sm:$0xf] %vm2749, %v2634
      %2764 = vst.msk [vmem:[%s175 + $0x38] sm:$0xf] %vm2749, %v2635
      %2765 = vst.msk [vmem:[%s175 + $0x3c] sm:$0xf] %vm2749, %v2636
      %2766 = vst.msk [vmem:[%s175 + $0x40] sm:$0xf] %vm2749, %v2637
      %2767 = vst.msk [vmem:[%s175 + $0x44] sm:$0xf] %vm2749, %v2638
      %2768 = vst.msk [vmem:[%s175 + $0x48] sm:$0xf] %vm2749, %v2639
      %2769 = vst.msk [vmem:[%s175 + $0x4c] sm:$0xf] %vm2749, %v2640
      %2770 = vst.msk [vmem:[%s175 + $0x50] sm:$0xf] %vm2749, %v2641
      %2771 = vst.msk [vmem:[%s175 + $0x54] sm:$0xf] %vm2749, %v2642
      %2772 = vst.msk [vmem:[%s175 + $0x58] sm:$0xf] %vm2749, %v2643
      %2773 = vst.msk [vmem:[%s175 + $0x5c] sm:$0xf] %vm2749, %v2644
      %2774 = vst.msk [vmem:[%s175 + $0x60] sm:$0xf] %vm2749, %v2645
      %2775 = vst.msk [vmem:[%s175 + $0x64] sm:$0xf] %vm2749, %v2646
      %2776 = vst.msk [vmem:[%s175 + $0x68] sm:$0xf] %vm2749, %v2647
      %2777 = vst.msk [vmem:[%s175 + $0x6c] sm:$0xf] %vm2749, %v2648
      %2778 = vst.msk [vmem:[%s175 + $0x70] sm:$0xf] %vm2749, %v2649
      %2779 = vst.msk [vmem:[%s175 + $0x74] sm:$0xf] %vm2749, %v2650
      %2780 = vst.msk [vmem:[%s175 + $0x78] sm:$0xf] %vm2749, %v2651
      %2781 = vst.msk [vmem:[%s175 + $0x7c] sm:$0xf] %vm2749, %v2652
      %2782 = vst.msk [vmem:[%s175 + $0x80] sm:$0xf] %vm2749, %v2653
      %2783 = vst.msk [vmem:[%s175 + $0x84] sm:$0xf] %vm2749, %v2654
      %2784 = vst.msk [vmem:[%s175 + $0x88] sm:$0xf] %vm2749, %v2655
      %2785 = vst.msk [vmem:[%s175 + $0x8c] sm:$0xf] %vm2749, %v2656
      %2786 = vst.msk [vmem:[%s175 + $0x90] sm:$0xf] %vm2749, %v2657
      %2787 = vst.msk [vmem:[%s175 + $0x94] sm:$0xf] %vm2749, %v2658
      %2788 = vst.msk [vmem:[%s175 + $0x98] sm:$0xf] %vm2749, %v2659
      %2789 = vst.msk [vmem:[%s175 + $0x9c] sm:$0xf] %vm2749, %v2660
      %2790 = vst.msk [vmem:[%s175 + $0xa0] sm:$0xf] %vm2749, %v2661
      %2791 = vst.msk [vmem:[%s175 + $0xa4] sm:$0xf] %vm2749, %v2662
      %2792 = vst.msk [vmem:[%s175 + $0xa8] sm:$0xf] %vm2749, %v2663
      %2793 = vst.msk [vmem:[%s175 + $0xac] sm:$0xf] %vm2749, %v2664
      %2794 = vst.msk [vmem:[%s175 + $0xb0] sm:$0xf] %vm2749, %v2665
      %2795 = vst.msk [vmem:[%s175 + $0xb4] sm:$0xf] %vm2749, %v2666
      %2796 = vst.msk [vmem:[%s175 + $0xb8] sm:$0xf] %vm2749, %v2667
      %2797 = vst.msk [vmem:[%s175 + $0xbc] sm:$0xf] %vm2749, %v2668
      %2798 = vst.msk [vmem:[%s175 + $0xc0] sm:$0xf] %vm2749, %v2669
      %2799 = vst.msk [vmem:[%s175 + $0xc4] sm:$0xf] %vm2749, %v2670
      %2800 = vst.msk [vmem:[%s175 + $0xc8] sm:$0xf] %vm2749, %v2671
      %2801 = vst.msk [vmem:[%s175 + $0xcc] sm:$0xf] %vm2749, %v2672
      %2802 = vst.msk [vmem:[%s175 + $0xd0] sm:$0xf] %vm2749, %v2673
      %2803 = vst.msk [vmem:[%s175 + $0xd4] sm:$0xf] %vm2749, %v2674
      %2804 = vst.msk [vmem:[%s175 + $0xd8] sm:$0xf] %vm2749, %v2675
      %2805 = vst.msk [vmem:[%s175 + $0xdc] sm:$0xf] %vm2749, %v2676
      %2806 = vst.msk [vmem:[%s175 + $0xe0] sm:$0xf] %vm2749, %v2677
      %2807 = vst.msk [vmem:[%s175 + $0xe4] sm:$0xf] %vm2749, %v2678
      %2808 = vst.msk [vmem:[%s175 + $0xe8] sm:$0xf] %vm2749, %v2679
      %2809 = vst.msk [vmem:[%s175 + $0xec] sm:$0xf] %vm2749, %v2680
      %2810 = vst.msk [vmem:[%s175 + $0xf0] sm:$0xf] %vm2749, %v2681
      %2811 = vst.msk [vmem:[%s175 + $0xf4] sm:$0xf] %vm2749, %v2682
      %2812 = vst.msk [vmem:[%s175 + $0xf8] sm:$0xf] %vm2749, %v2683
      %2813 = vst.msk [vmem:[%s175 + $0xfc] sm:$0xf] %vm2749, %v2684
      %s2814 = smul.u32 64, %s14
      %p2815 = scmp.lt.s32.totalorder %s2814, 127
      %s2816 = scalar_select %p2815, %s2814, 127
      %s2817 = smul.addr %s2816, 4
      %s2818 = scalar_lea.vmem %s3, %s2817
      // Predicated region
      $region33: #{perceptual_loss.10} parent=31 // pred_check
        %p2819 = pneg %p100
      $region34: #{perceptual_loss.10} parent=31 // pred_check_branch
        %2821 = sbr.rel (%p2819) target = $region36
      $region35: #{perceptual_loss.10} parent=31 // pred_region
        %s2822 = smul.u32 64, %s14
      $region36: #{perceptual_loss.10} parent=31 // pred_fallthru
        _
    $region32: #{perceptual_loss.10} parent=5 // pred_fallthru
      _
    %p2823 = scmp.le.s32.totalorder 2, %s9
    // Predicated region
    $region37: #{perceptual_loss.10} parent=5 // pred_check
      %p2824 = pneg %p2823
    $region38: #{perceptual_loss.10} parent=5 // pred_check_branch
      %2826 = sbr.rel (%p2824) target = $region40
    $region39: #{perceptual_loss.10} parent=5 // pred_region
      %s2827 = ssub.s32 %s9, 2
      // Predicated region
      $region41: #{perceptual_loss.10} parent=39 // pred_check
        %p2828 = pneg %p106
      $region42: #{perceptual_loss.10} parent=39 // pred_check_branch
        %2830 = sbr.rel (%p2828) target = $region44
      $region43: #{perceptual_loss.10} parent=39 // pred_region
        %s2831 = smul.u32 64, %s15
        %p2832 = scmp.lt.s32.totalorder %s2831, 127
        %s2833 = scalar_select %p2832, %s2831, 127
        %s2834 = smul.addr %s2833, 4
        %s2835 = scalar_lea.vmem %s3, %s2834
      $region44: #{perceptual_loss.10} parent=39 // pred_fallthru
        _
    $region40: #{perceptual_loss.10} parent=5 // pred_fallthru
      _
  $region6: #{perceptual_loss.10} parent=0 // loop_footer
    %s13 = sadd.s32 1, %s9
  $region7: #{perceptual_loss.10} parent=0 // loop_footer_branch
    %8 = sbr.rel target = $region3
  $region8: #{perceptual_loss.10} parent=0 // loop_exit
    _

// kernel: perceptual_loss.16
$region0: #{perceptual_loss.16}
  #allocation0 [shape = 'u32[]', space=smem, size = 0x4, offset = 0x4, fixed_abs, tag = 'smem constant byte address 0x4 - core index']
  #allocation1 [shape = 'u32[144,128]{1,0:T(1,128)}', space=vmem, size = 0x12000, scoped, tag = 'internal scratch']
  #allocation2 [shape = 'f32[64,64]{1,0:T(8,128)}', space=vmem, size = 0x8000, scoped, tag = 'scratch operand']
  %s0 = inlined_call_operand.vmem [shape: bf16[4,64,64], index: 0, kind: input, shape index: {}]
  %s1 = inlined_call_operand.vmem [shape: f32[4,64,64], index: 1, kind: output, shape index: {}]
  %s2 = sld [smem:[#allocation0]]
  $region45: #{perceptual_loss.16} parent=0
    _
  %s4 = ssub.s32 1, %s2
  %s5 = scalar_select 0, %s4, %s2
  loop: start=0, step=1, limit=6
  $region2: #{perceptual_loss.16} parent=0 // loop_pre_header
    _
  $region3: #{perceptual_loss.16} parent=0 // loop_header
    %s7 = sphi 0, %s11
    %p8 = scmp.ge.s32.totalorder %s7, 6
    %s14 = sphi 0, %s26
    %s15 = sphi 0, %s22
    %s16 = sphi 0, %s14
    %s17 = sphi 0, %s15
    %s18 = sphi 0, %s16
    %s19 = sphi 0, %s17
    %s31 = sphi 0, %s33
    %s34 = sphi 0, %s31
    %s35 = sphi 0, %s34
    %s51 = sphi 0, %s35
    %s57 = sphi 0, %s59
    %s60 = sphi 0, %s57
    %s61 = sphi 0, %s60
    %s77 = sphi 0, %s61
  $region4: #{perceptual_loss.16} parent=0 // loop_header_branch
    %10 = sbr.rel (%p8) target = $region8
  $region5: #{perceptual_loss.16} parent=0 // loop_body
    %s12 = ssub.s32 %s7, 1
    %s13 = ssub.s32 %s7, 2
    %s20 = sadd.s32 1, %s15
    %p21 = scmp.ge.s32.totalorder %s20, 1
    %s22 = scalar_select %p21, 0, %s20
    %s23 = sadd.s32 1, %s14
    %s24 = scalar_select %p21, %s23, %s14
    %p25 = scmp.ge.s32.totalorder %s24, 4
    %s26 = scalar_select %p25, 0, %s24
    %s27 = ssub.s32 %s14, %s26
    %s28 = ssub.s32 %s15, %s22
    %s29 = sor.u32 %s27, %s28
    %p30 = scmp.eq.s32.totalorder %s29, 0
    %s32 = sadd.s32 %s31, 1
    %s33 = scalar_select %p30, %s31, %s32
    %p36 = pneg %p30
    %p37 = scmp.eq.s32.totalorder %s7, 3
    %p38 = por %p36, %p37
    %p39 = scmp.ne.s32.totalorder %s31, %s34
    %p40 = scmp.eq.s32.totalorder %s7, 0
    %p41 = por %p39, %p40
    %p42 = scmp.ne.s32.totalorder %s31, %s34
    %p43 = scmp.eq.s32.totalorder %s12, 3
    %p44 = por %p42, %p43
    %p45 = scmp.ne.s32.totalorder %s34, %s35
    %p46 = scmp.eq.s32.totalorder %s12, 0
    %p47 = por %p45, %p46
    %p48 = scmp.ne.s32.totalorder %s34, %s35
    %p49 = scmp.eq.s32.totalorder %s13, 3
    %p50 = por %p48, %p49
    %p52 = scmp.ne.s32.totalorder %s35, %s51
    %p53 = scmp.eq.s32.totalorder %s13, 0
    %p54 = por %p52, %p53
    %s55 = ssub.s32 %s14, %s26
    %p56 = scmp.eq.s32.totalorder %s55, 0
    %s58 = sadd.s32 %s57, 1
    %s59 = scalar_select %p56, %s57, %s58
    %p62 = pneg %p56
    %p63 = scmp.eq.s32.totalorder %s7, 3
    %p64 = por %p62, %p63
    %p65 = scmp.ne.s32.totalorder %s57, %s60
    %p66 = scmp.eq.s32.totalorder %s7, 0
    %p67 = por %p65, %p66
    %p68 = scmp.ne.s32.totalorder %s57, %s60
    %p69 = scmp.eq.s32.totalorder %s12, 3
    %p70 = por %p68, %p69
    %p71 = scmp.ne.s32.totalorder %s60, %s61
    %p72 = scmp.eq.s32.totalorder %s12, 0
    %p73 = por %p71, %p72
    %p74 = scmp.ne.s32.totalorder %s60, %s61
    %p75 = scmp.eq.s32.totalorder %s13, 3
    %p76 = por %p74, %p75
    %p78 = scmp.ne.s32.totalorder %s61, %s77
    %p79 = scmp.eq.s32.totalorder %s13, 0
    %p80 = por %p78, %p79
    %p81 = scmp.le.s32.totalorder 1, %s7
    %p82 = scmp.lt.s32.totalorder %s7, 5
    %p83 = pnand %p81, %p82
    %p84 = pneg %p83
    // Predicated region
    $region9: #{perceptual_loss.16} parent=5 // pred_check
      _
    $region10: #{perceptual_loss.16} parent=5 // pred_check_branch
      %86 = sbr.rel (%p83) target = $region12
    $region11: #{perceptual_loss.16} parent=5 // pred_region
      %s87 = ssub.s32 %s7, 1
    $region12: #{perceptual_loss.16} parent=5 // pred_fallthru
      _
    %p88 = scmp.lt.s32.totalorder %s7, 4
    // Predicated region
    $region13: #{perceptual_loss.16} parent=5 // pred_check
      %p89 = pneg %p88
    $region14: #{perceptual_loss.16} parent=5 // pred_check_branch
      %91 = sbr.rel (%p89) target = $region16
    $region15: #{perceptual_loss.16} parent=5 // pred_region
      // Predicated region
      $region17: #{perceptual_loss.16} parent=15 // pred_check
        %p92 = pneg %p41
      $region18: #{perceptual_loss.16} parent=15 // pred_check_branch
        %94 = sbr.rel (%p92) target = $region20
      $region19: #{perceptual_loss.16} parent=15 // pred_region
        %s95 = smul.u32 8, %s15
        %p96 = scmp.lt.s32.totalorder %s14, 3
        %s97 = scalar_select %p96, %s14, 3
        %p98 = scmp.lt.s32.totalorder %s95, 7
        %s99 = scalar_select %p98, %s95, 7
        %s100 = smul.addr %s97, 8
        %s101 = sadd.s32 %s99, %s100
        %s102 = smul.addr %s101, 4
        %s103 = scalar_lea.vmem %s0, %s102
        %s104 = smul.u32 8, %s15
      $region20: #{perceptual_loss.16} parent=15 // pred_fallthru
        _
    $region16: #{perceptual_loss.16} parent=5 // pred_fallthru
      _
    %p105 = scmp.le.s32.totalorder 1, %s7
    %p106 = scmp.lt.s32.totalorder %s7, 5
    %p107 = pnand %p105, %p106
    %p108 = pneg %p107
    // Predicated region
    $region21: #{perceptual_loss.16} parent=5 // pred_check
      _
    $region22: #{perceptual_loss.16} parent=5 // pred_check_branch
      %110 = sbr.rel (%p107) target = $region24
    $region23: #{perceptual_loss.16} parent=5 // pred_region
      %s111 = ssub.s32 %s7, 1
      %s112 = smul.u32 8, %s17
      %p113 = scmp.lt.s32.totalorder %s16, 3
      %s114 = scalar_select %p113, %s16, 3
      %p115 = scmp.lt.s32.totalorder %s112, 7
      %s116 = scalar_select %p115, %s112, 7
      %s117 = smul.addr %s114, 8
      %s118 = sadd.s32 %s116, %s117
      %s119 = smul.addr %s118, 4
      %s120 = scalar_lea.vmem %s0, %s119
      %p121 = pneg %p47
      %p122 = pneg %p44
      %p123 = pneg %p73
      %p124 = pneg %p70
      %p125 = scmp.lt.s32.totalorder %s16, 3
      %s126 = scalar_select %p125, %s16, 3
      %s127 = smul.addr %s126, 8
      %s128 = smul.addr %s127, 8
      %s129 = scalar_lea.vmem %s1, %s128
      %s130 = smul.u32 8, %s17
      %p131 = scmp.lt.s32.totalorder %s16, 3
      %s132 = scalar_select %p131, %s16, 3
      %p133 = scmp.lt.s32.totalorder %s130, 7
      %s134 = scalar_select %p133, %s130, 7
      %s135 = smul.addr %s132, 8
      %s136 = sadd.s32 %s134, %s135
      %s137 = smul.addr %s136, 4
      %s138 = scalar_lea.vmem %s0, %s137
      %s139 = smul.u32 8, %s17
      %p140 = scmp.lt.s32.totalorder %s16, 3
      %s141 = scalar_select %p140, %s16, 3
      %s142 = smul.addr %s141, 8
      %s143 = smul.addr %s142, 8
      %s144 = scalar_lea.vmem %s1, %s143
      %p146 = scmp.eq.s32.totalorder %s17, 0
      // Predicated region
      $region25: #{perceptual_loss.16} parent=23 // pred_check
        %p147 = pneg %p146
      $region26: #{perceptual_loss.16} parent=23 // pred_check_branch
        %149 = sbr.rel (%p147) target = $region28
      $region27: #{perceptual_loss.16} parent=23 // pred_region
        %vm150 = vcmask 523264
        %151 = vst.msk [vmem:[#allocation2] sm:$0xff] %vm150, 0.0
        %152 = vst.msk [vmem:[#allocation2 + $0x8] sm:$0xff] %vm150, 0.0
        %153 = vst.msk [vmem:[#allocation2 + $0x10] sm:$0xff] %vm150, 0.0
        %154 = vst.msk [vmem:[#allocation2 + $0x18] sm:$0xff] %vm150, 0.0
        %155 = vst.msk [vmem:[#allocation2 + $0x20] sm:$0xff] %vm150, 0.0
        %156 = vst.msk [vmem:[#allocation2 + $0x28] sm:$0xff] %vm150, 0.0
        %157 = vst.msk [vmem:[#allocation2 + $0x30] sm:$0xff] %vm150, 0.0
        %158 = vst.msk [vmem:[#allocation2 + $0x38] sm:$0xff] %vm150, 0.0
      $region28: #{perceptual_loss.16} parent=23 // pred_fallthru
        _
      %v159 = vld [vmem:[%s138] sm:$0xf]
      %v160 = vld [vmem:[%s138 + $0x4] sm:$0xf]
      %v161 = vld [vmem:[%s138 + $0x8] sm:$0xf]
      %v162 = vld [vmem:[%s138 + $0xc] sm:$0xf]
      %v163 = vld [vmem:[%s138 + $0x10] sm:$0xf]
      %v164 = vld [vmem:[%s138 + $0x14] sm:$0xf]
      %v165 = vld [vmem:[%s138 + $0x18] sm:$0xf]
      %v166 = vld [vmem:[%s138 + $0x1c] sm:$0xf]
      %v167 = vld [vmem:[#allocation2] sm:$0xff]
      %v168 = vld [vmem:[#allocation2 + $0x8] sm:$0xff]
      %v169 = vld [vmem:[#allocation2 + $0x10] sm:$0xff]
      %v170 = vld [vmem:[#allocation2 + $0x18] sm:$0xff]
      %v171 = vld [vmem:[#allocation2 + $0x20] sm:$0xff]
      %v172 = vld [vmem:[#allocation2 + $0x28] sm:$0xff]
      %v173 = vld [vmem:[#allocation2 + $0x30] sm:$0xff]
      %v174 = vld [vmem:[#allocation2 + $0x38] sm:$0xff]
      %v183 = vunpack.c.l.b16 %v159
      %v184 = vunpack.c.l.b16 %v160
      %v185 = vunpack.c.l.b16 %v161
      %v186 = vunpack.c.l.b16 %v162
      %v187 = vunpack.c.l.b16 %v163
      %v188 = vunpack.c.l.b16 %v164
      %v189 = vunpack.c.l.b16 %v165
      %v190 = vunpack.c.l.b16 %v166
      %v191 = vpack.c.b16 %v184, %v183
      %v192 = vpack.c.b16 %v186, %v185
      %v193 = vpack.c.b16 %v188, %v187
      %v194 = vpack.c.b16 %v190, %v189
      %199 = vxpose.xlu0.c.b16.start [1/8] %v191, 128
      %200 = vxpose.xlu0.c.b16.cont [2/8] %v192, 128
      %201 = vxpose.xlu0.c.b16.cont [3/8] %v193, 128
      %202 = vxpose.xlu0.c.b16.cont [4/8] %v194, 128
      %203 = vxpose.xlu0.c.b16.cont [5/8] 0, 128
      %204 = vxpose.xlu0.c.b16.cont [6/8] 0, 128
      %205 = vxpose.xlu0.c.b16.cont [7/8] 0, 128
      %206 = vxpose.xlu0.c.b16.end [8/8] 0, 128
      %v207 = vpop.trf.xlu0
      %v208 = vpop.trf.xlu0
      %v209 = vpop.trf.xlu0
      %v210 = vpop.trf.xlu0
      %v211 = vpop.trf.xlu0
      %v212 = vpop.trf.xlu0
      %v213 = vpop.trf.xlu0
      %v214 = vpop.trf.xlu0
      %vm215 = vcmask 523264
      %v217 = vsel %vm215, %v207, 0
      %v220 = vsel %vm215, %v208, 0
      %v223 = vsel %vm215, %v209, 0
      %v226 = vsel %vm215, %v210, 0
      %228 = vmatprep.subr.bf16.mxu0 0
      %229 = vmatpush1.bf16.msra.mxu0 %v191
      %230 = vmatprep.subr.bf16.mxu0 0
      %231 = vmatpush1.bf16.msra.mxu0 %v192
      %232 = vmatprep.subr.bf16.mxu0 0
      %233 = vmatpush1.bf16.msra.mxu0 %v193
      %234 = vmatprep.subr.bf16.mxu0 0
      %235 = vmatpush1.bf16.msra.mxu0 %v194
      %236 = vmatprep.subr.bf16.mxu0 0
      %237 = vmatpush1.bf16.msra.mxu0 0
      %238 = vmatprep.subr.bf16.mxu0 0
      %239 = vmatpush1.bf16.msra.mxu0 0
      %240 = vmatprep.subr.bf16.mxu0 0
      %241 = vmatpush1.bf16.msra.mxu0 0
      %242 = vmatprep.subr.bf16.mxu0 0
      %243 = vmatpush1.bf16.msra.mxu0 0
      %244 = vmatprep.subr.bf16.mxu0 0
      %245 = vmatpush1.bf16.msra.mxu0 0
      %246 = vmatprep.subr.bf16.mxu0 0
      %247 = vmatpush1.bf16.msra.mxu0 0
      %248 = vmatprep.subr.bf16.mxu0 0
      %249 = vmatpush1.bf16.msra.mxu0 0
      %250 = vmatprep.subr.bf16.mxu0 0
      %251 = vmatpush1.bf16.msra.mxu0 0
      %252 = vmatprep.subr.bf16.mxu0 0
      %253 = vmatpush1.bf16.msra.mxu0 0
      %254 = vmatprep.subr.bf16.mxu0 0
      %255 = vmatpush1.bf16.msra.mxu0 0
      %256 = vmatprep.subr.bf16.mxu0 0
      %257 = vmatpush1.bf16.msra.mxu0 0
      %258 = vmatprep.subr.bf16.mxu0 0
      %259 = vmatpush1.bf16.msra.mxu0 0
      %260 = vmatprep.mubr.bf16.mxu0 0
      %261 = vmatmul.mubr.bf16.gmra.mrb[0].mxu0 %v217
      %v262 = vpop.f32.mrb[0].mxu0
      %v263 = vadd.f32 0.0, %v262
      %v264 = vpop.f32.mrb[0].mxu0
      %v265 = vpop.f32.mrb[0].mxu0
      %v266 = vadd.f32 0.0, %v265
      %v267 = vpop.f32.mrb[0].mxu0
      %268 = vmatprep.mubr.bf16.mxu0 0
      %269 = vmatmul.mubr.bf16.gmra.mrb[0].mxu0 %v220
      %v270 = vpop.f32.mrb[0].mxu0
      %v271 = vadd.f32 0.0, %v270
      %v272 = vpop.f32.mrb[0].mxu0
      %v273 = vpop.f32.mrb[0].mxu0
      %v274 = vadd.f32 0.0, %v273
      %v275 = vpop.f32.mrb[0].mxu0
      %276 = vmatprep.mubr.bf16.mxu0 0
      %277 = vmatmul.mubr.bf16.gmra.mrb[0].mxu0 %v223
      %v278 = vpop.f32.mrb[0].mxu0
      %v279 = vadd.f32 0.0, %v278
      %v280 = vpop.f32.mrb[0].mxu0
      %v281 = vpop.f32.mrb[0].mxu0
      %v282 = vadd.f32 0.0, %v281
      %v283 = vpop.f32.mrb[0].mxu0
      %284 = vmatprep.mubr.bf16.mxu0 0
      %285 = vmatmul.mubr.bf16.gmra.mrb[0].mxu0 %v226
      %v286 = vpop.f32.mrb[0].mxu0
      %v287 = vadd.f32 0.0, %v286
      %v288 = vpop.f32.mrb[0].mxu0
      %v289 = vpop.f32.mrb[0].mxu0
      %v290 = vadd.f32 0.0, %v289
      %v291 = vpop.f32.mrb[0].mxu0
      %292 = vdwg.mxu0
      %v293 = vadd.f32 %v167, %v263
      %v294 = vadd.f32 %v168, %v266
      %v295 = vadd.f32 %v169, %v271
      %v296 = vadd.f32 %v170, %v274
      %v297 = vadd.f32 %v171, %v279
      %v298 = vadd.f32 %v172, %v282
      %v299 = vadd.f32 %v173, %v287
      %v300 = vadd.f32 %v174, %v290
      %301 = vst.msk [vmem:[#allocation2] sm:$0xff] %vm215, %v293
      %302 = vst.msk [vmem:[#allocation2 + $0x8] sm:$0xff] %vm215, %v294
      %303 = vst.msk [vmem:[#allocation2 + $0x10] sm:$0xff] %vm215, %v295
      %304 = vst.msk [vmem:[#allocation2 + $0x18] sm:$0xff] %vm215, %v296
      %305 = vst.msk [vmem:[#allocation2 + $0x20] sm:$0xff] %vm215, %v297
      %306 = vst.msk [vmem:[#allocation2 + $0x28] sm:$0xff] %vm215, %v298
      %307 = vst.msk [vmem:[#allocation2 + $0x30] sm:$0xff] %vm215, %v299
      %308 = vst.msk [vmem:[#allocation2 + $0x38] sm:$0xff] %vm215, %v300
      // Predicated region
      $region29: #{perceptual_loss.16} parent=23 // pred_check
        %p309 = pneg %p146
      $region30: #{perceptual_loss.16} parent=23 // pred_check_branch
        %311 = sbr.rel (%p309) target = $region32
      $region31: #{perceptual_loss.16} parent=23 // pred_region
        %v312 = vld [vmem:[#allocation2] sm:$0xff]
        %v313 = vld [vmem:[#allocation2 + $0x8] sm:$0xff]
        %v314 = vld [vmem:[#allocation2 + $0x10] sm:$0xff]
        %v315 = vld [vmem:[#allocation2 + $0x18] sm:$0xff]
        %v316 = vld [vmem:[#allocation2 + $0x20] sm:$0xff]
        %v317 = vld [vmem:[#allocation2 + $0x28] sm:$0xff]
        %v318 = vld [vmem:[#allocation2 + $0x30] sm:$0xff]
        %v319 = vld [vmem:[#allocation2 + $0x38] sm:$0xff]
        %v320 = vmul.f32 %v312, 0.00024414063
        %v321 = vmul.f32 %v313, 0.00024414063
        %v322 = vmul.f32 %v314, 0.00024414063
        %v323 = vmul.f32 %v315, 0.00024414063
        %v324 = vmul.f32 %v316, 0.00024414063
        %v325 = vmul.f32 %v317, 0.00024414063
        %v326 = vmul.f32 %v318, 0.00024414063
        %v327 = vmul.f32 %v319, 0.00024414063
        %328 = vst.msk [vmem:[%s144] sm:$0xff] %vm215, %v320
        %329 = vst.msk [vmem:[%s144 + $0x8] sm:$0xff] %vm215, %v321
        %330 = vst.msk [vmem:[%s144 + $0x10] sm:$0xff] %vm215, %v322
        %331 = vst.msk [vmem:[%s144 + $0x18] sm:$0xff] %vm215, %v323
        %332 = vst.msk [vmem:[%s144 + $0x20] sm:$0xff] %vm215, %v324
        %333 = vst.msk [vmem:[%s144 + $0x28] sm:$0xff] %vm215, %v325
        %334 = vst.msk [vmem:[%s144 + $0x30] sm:$0xff] %vm215, %v326
        %335 = vst.msk [vmem:[%s144 + $0x38] sm:$0xff] %vm215, %v327
      $region32: #{perceptual_loss.16} parent=23 // pred_fallthru
        _
      %p336 = scmp.lt.s32.totalorder %s16, 3
      %s337 = scalar_select %p336, %s16, 3
      %s338 = smul.addr %s337, 8
      %s339 = smul.addr %s338, 8
      %s340 = scalar_lea.vmem %s1, %s339
      // Predicated region
      $region33: #{perceptual_loss.16} parent=23 // pred_check
        %p341 = pneg %p70
      $region34: #{perceptual_loss.16} parent=23 // pred_check_branch
        %343 = sbr.rel (%p341) target = $region36
      $region35: #{perceptual_loss.16} parent=23 // pred_region
        _
      $region36: #{perceptual_loss.16} parent=23 // pred_fallthru
        _
    $region24: #{perceptual_loss.16} parent=5 // pred_fallthru
      _
    %p344 = scmp.le.s32.totalorder 2, %s7
    // Predicated region
    $region37: #{perceptual_loss.16} parent=5 // pred_check
      %p345 = pneg %p344
    $region38: #{perceptual_loss.16} parent=5 // pred_check_branch
      %347 = sbr.rel (%p345) target = $region40
    $region39: #{perceptual_loss.16} parent=5 // pred_region
      %s348 = ssub.s32 %s7, 2
      // Predicated region
      $region41: #{perceptual_loss.16} parent=39 // pred_check
        %p349 = pneg %p76
      $region42: #{perceptual_loss.16} parent=39 // pred_check_branch
        %351 = sbr.rel (%p349) target = $region44
      $region43: #{perceptual_loss.16} parent=39 // pred_region
        %p352 = scmp.lt.s32.totalorder %s18, 3
        %s353 = scalar_select %p352, %s18, 3
        %s354 = smul.addr %s353, 8
        %s355 = smul.addr %s354, 8
        %s356 = scalar_lea.vmem %s1, %s355
      $region44: #{perceptual_loss.16} parent=39 // pred_fallthru
        _
    $region40: #{perceptual_loss.16} parent=5 // pred_fallthru
      _
  $region6: #{perceptual_loss.16} parent=0 // loop_footer
    %s11 = sadd.s32 1, %s7
  $region7: #{perceptual_loss.16} parent=0 // loop_footer_branch
    %6 = sbr.rel target = $region3
  $region8: #{perceptual_loss.16} parent=0 // loop_exit
    _

// kernel: perceptual_loss.17
$region0: #{perceptual_loss.17}
  #allocation0 [shape = 'u32[]', space=smem, size = 0x4, offset = 0x4, fixed_abs, tag = 'smem constant byte address 0x4 - core index']
  #allocation1 [shape = 'u32[144,128]{1,0:T(1,128)}', space=vmem, size = 0x12000, scoped, tag = 'internal scratch']
  #allocation2 [shape = 'f32[1,64]{1,0:T(1,128)}', space=vmem, size = 0x200, scoped, tag = 'scratch operand']
  %s0 = inlined_call_operand.vmem [shape: f32[2,128,64], index: 0, kind: input, shape index: {}, may-alias: {0,1}]
  %s1 = inlined_call_operand.vmem [shape: f32[2,128,64], index: 1, kind: input, shape index: {}, may-alias: {0,1}]
  %s2 = inlined_call_operand.vmem [shape: f32[1,64], index: 2, kind: output, shape index: {}]
  %s3 = sld [smem:[#allocation0]]
  $region26: #{perceptual_loss.17} parent=0
    _
  %s5 = ssub.s32 1, %s3
  %s6 = scalar_select 0, %s5, %s3
  // Predicated region
  $region2: #{perceptual_loss.17} parent=0 // pred_check
    _
  $region3: #{perceptual_loss.17} parent=0 // pred_check_branch
    %8 = sbr.rel (0) target = $region5
  $region4: #{perceptual_loss.17} parent=0 // pred_region
    _
  $region5: #{perceptual_loss.17} parent=0 // pred_fallthru
    _
  // Predicated region
  $region6: #{perceptual_loss.17} parent=0 // pred_check
    _
  $region7: #{perceptual_loss.17} parent=0 // pred_check_branch
    %10 = sbr.rel (0) target = $region9
  $region8: #{perceptual_loss.17} parent=0 // pred_region
    %s11 = scalar_lea.vmem %s1, 128
  $region9: #{perceptual_loss.17} parent=0 // pred_fallthru
    _
  %s12 = scalar_lea.vmem %s1, 128
  %s13 = scalar_lea.vmem %s1, 128
  %p14 = scmp.eq.s32.totalorder 0, 0
  // Predicated region
  $region10: #{perceptual_loss.17} parent=0 // pred_check
    %p15 = pneg %p14
  $region11: #{perceptual_loss.17} parent=0 // pred_check_branch
    %17 = sbr.rel (%p15) target = $region13
  $region12: #{perceptual_loss.17} parent=0 // pred_region
    %vm18 = vcmask 516096
    %19 = vst.msk [vmem:[#allocation2] sm:$0x1] %vm18, 0.0
  $region13: #{perceptual_loss.17} parent=0 // pred_fallthru
    _
  %v20 = vld [vmem:[%s0] sm:$0xff]
  %v21 = vld [vmem:[%s0 + $0x8] sm:$0xff]
  %v22 = vld [vmem:[%s0 + $0x10] sm:$0xff]
  %v23 = vld [vmem:[%s0 + $0x18] sm:$0xff]
  %v24 = vld [vmem:[%s0 + $0x20] sm:$0xff]
  %v25 = vld [vmem:[%s0 + $0x28] sm:$0xff]
  %v26 = vld [vmem:[%s0 + $0x30] sm:$0xff]
  %v27 = vld [vmem:[%s0 + $0x38] sm:$0xff]
  %v28 = vld [vmem:[%s0 + $0x40] sm:$0xff]
  %v29 = vld [vmem:[%s0 + $0x48] sm:$0xff]
  %v30 = vld [vmem:[%s0 + $0x50] sm:$0xff]
  %v31 = vld [vmem:[%s0 + $0x58] sm:$0xff]
  %v32 = vld [vmem:[%s0 + $0x60] sm:$0xff]
  %v33 = vld [vmem:[%s0 + $0x68] sm:$0xff]
  %v34 = vld [vmem:[%s0 + $0x70] sm:$0xff]
  %v35 = vld [vmem:[%s0 + $0x78] sm:$0xff]
  %v36 = vld [vmem:[%s13] sm:$0xff]
  %v37 = vld [vmem:[%s13 + $0x8] sm:$0xff]
  %v38 = vld [vmem:[%s13 + $0x10] sm:$0xff]
  %v39 = vld [vmem:[%s13 + $0x18] sm:$0xff]
  %v40 = vld [vmem:[%s13 + $0x20] sm:$0xff]
  %v41 = vld [vmem:[%s13 + $0x28] sm:$0xff]
  %v42 = vld [vmem:[%s13 + $0x30] sm:$0xff]
  %v43 = vld [vmem:[%s13 + $0x38] sm:$0xff]
  %v44 = vld [vmem:[%s13 + $0x40] sm:$0xff]
  %v45 = vld [vmem:[%s13 + $0x48] sm:$0xff]
  %v46 = vld [vmem:[%s13 + $0x50] sm:$0xff]
  %v47 = vld [vmem:[%s13 + $0x58] sm:$0xff]
  %v48 = vld [vmem:[%s13 + $0x60] sm:$0xff]
  %v49 = vld [vmem:[%s13 + $0x68] sm:$0xff]
  %v50 = vld [vmem:[%s13 + $0x70] sm:$0xff]
  %v51 = vld [vmem:[%s13 + $0x78] sm:$0xff]
  %v52 = vsub.f32 %v20, %v36
  %v53 = vsub.f32 %v21, %v37
  %v54 = vsub.f32 %v22, %v38
  %v55 = vsub.f32 %v23, %v39
  %v56 = vsub.f32 %v24, %v40
  %v57 = vsub.f32 %v25, %v41
  %v58 = vsub.f32 %v26, %v42
  %v59 = vsub.f32 %v27, %v43
  %v60 = vsub.f32 %v28, %v44
  %v61 = vsub.f32 %v29, %v45
  %v62 = vsub.f32 %v30, %v46
  %v63 = vsub.f32 %v31, %v47
  %v64 = vsub.f32 %v32, %v48
  %v65 = vsub.f32 %v33, %v49
  %v66 = vsub.f32 %v34, %v50
  %v67 = vsub.f32 %v35, %v51
  %v68 = vld [vmem:[#allocation2] sm:$0x1]
  %v69 = vand.u32 2147483647, %v52
  %v70 = vand.u32 2147483647, %v53
  %v71 = vand.u32 2147483647, %v54
  %v72 = vand.u32 2147483647, %v55
  %v73 = vand.u32 2147483647, %v56
  %v74 = vand.u32 2147483647, %v57
  %v75 = vand.u32 2147483647, %v58
  %v76 = vand.u32 2147483647, %v59
  %v77 = vand.u32 2147483647, %v60
  %v78 = vand.u32 2147483647, %v61
  %v79 = vand.u32 2147483647, %v62
  %v80 = vand.u32 2147483647, %v63
  %v81 = vand.u32 2147483647, %v64
  %v82 = vand.u32 2147483647, %v65
  %v83 = vand.u32 2147483647, %v66
  %v84 = vand.u32 2147483647, %v67
  %vm85 = vcmask 523264
  %v86 = vsel %vm85, %v69, 0.0
  %v87 = vsel %vm85, %v70, 0.0
  %v88 = vadd.f32 %v86, %v87
  %v89 = vsel %vm85, %v71, 0.0
  %v90 = vadd.f32 %v88, %v89
  %v91 = vsel %vm85, %v72, 0.0
  %v92 = vadd.f32 %v90, %v91
  %v93 = vsel %vm85, %v73, 0.0
  %v94 = vadd.f32 %v92, %v93
  %v95 = vsel %vm85, %v74, 0.0
  %v96 = vadd.f32 %v94, %v95
  %v97 = vsel %vm85, %v75, 0.0
  %v98 = vadd.f32 %v96, %v97
  %v99 = vsel %vm85, %v76, 0.0
  %v100 = vadd.f32 %v98, %v99
  %v101 = vsel %vm85, %v77, 0.0
  %v102 = vadd.f32 %v100, %v101
  %v103 = vsel %vm85, %v78, 0.0
  %v104 = vadd.f32 %v102, %v103
  %v105 = vsel %vm85, %v79, 0.0
  %v106 = vadd.f32 %v104, %v105
  %v107 = vsel %vm85, %v80, 0.0
  %v108 = vadd.f32 %v106, %v107
  %v109 = vsel %vm85, %v81, 0.0
  %v110 = vadd.f32 %v108, %v109
  %v111 = vsel %vm85, %v82, 0.0
  %v112 = vadd.f32 %v110, %v111
  %v113 = vsel %vm85, %v83, 0.0
  %v114 = vadd.f32 %v112, %v113
  %v115 = vsel %vm85, %v84, 0.0
  %v116 = vadd.f32 %v114, %v115
  %v117 = vrot.slane %v116, 4
  %v118 = vadd.f32 %v116, %v117
  %v119 = vrot.slane %v118, 2
  %v120 = vadd.f32 %v118, %v119
  %v121 = vrot.slane %v120, 1
  %v122 = vadd.f32 %v120, %v121
  %v123 = vadd.f32 %v68, %v122
  %vm124 = vcmask 516096
  %125 = vst.msk [vmem:[#allocation2] sm:$0x1] %vm124, %v123
  // Predicated region
  $region14: #{perceptual_loss.17} parent=0 // pred_check
    %p126 = pneg %p14
  $region15: #{perceptual_loss.17} parent=0 // pred_check_branch
    %128 = sbr.rel (%p126) target = $region17
  $region16: #{perceptual_loss.17} parent=0 // pred_region
    %v129 = vld [vmem:[#allocation2] sm:$0x1]
    %130 = vst.msk [vmem:[%s2] sm:$0x1] %vm124, %v129
  $region17: #{perceptual_loss.17} parent=0 // pred_fallthru
    _
  // Predicated region
  $region18: #{perceptual_loss.17} parent=0 // pred_check
    _
  $region19: #{perceptual_loss.17} parent=0 // pred_check_branch
    %132 = sbr.rel (0) target = $region21
  $region20: #{perceptual_loss.17} parent=0 // pred_region
    _
  $region21: #{perceptual_loss.17} parent=0 // pred_fallthru
    _
  // Predicated region
  $region22: #{perceptual_loss.17} parent=0 // pred_check
    _
  $region23: #{perceptual_loss.17} parent=0 // pred_check_branch
    %134 = sbr.rel (0) target = $region25
  $region24: #{perceptual_loss.17} parent=0 // pred_region
    _
  $region25: #{perceptual_loss.17} parent=0 // pred_fallthru
    _

// kernel: perceptual_loss.15
$region0: #{perceptual_loss.15}
  #allocation0 [shape = 'u32[]', space=smem, size = 0x4, offset = 0x4, fixed_abs, tag = 'smem constant byte address 0x4 - core index']
  #allocation1 [shape = 'u32[144,128]{1,0:T(1,128)}', space=vmem, size = 0x12000, scoped, tag = 'internal scratch']
  #allocation2 [shape = 'f32[1,64]{1,0:T(1,128)}', space=vmem, size = 0x200, scoped, tag = 'scratch operand']
  %s0 = inlined_call_operand.vmem [shape: bf16[2,128,64], index: 0, kind: input, shape index: {}, may-alias: {0,1}]
  %s1 = inlined_call_operand.vmem [shape: bf16[2,128,64], index: 1, kind: input, shape index: {}, may-alias: {0,1}]
  %s2 = inlined_call_operand.vmem [shape: f32[1,64], index: 2, kind: output, shape index: {}]
  %s3 = sld [smem:[#allocation0]]
  $region26: #{perceptual_loss.15} parent=0
    _
  %s5 = ssub.s32 1, %s3
  %s6 = scalar_select 0, %s5, %s3
  // Predicated region
  $region2: #{perceptual_loss.15} parent=0 // pred_check
    _
  $region3: #{perceptual_loss.15} parent=0 // pred_check_branch
    %8 = sbr.rel (0) target = $region5
  $region4: #{perceptual_loss.15} parent=0 // pred_region
    _
  $region5: #{perceptual_loss.15} parent=0 // pred_fallthru
    _
  // Predicated region
  $region6: #{perceptual_loss.15} parent=0 // pred_check
    _
  $region7: #{perceptual_loss.15} parent=0 // pred_check_branch
    %10 = sbr.rel (0) target = $region9
  $region8: #{perceptual_loss.15} parent=0 // pred_region
    %s11 = scalar_lea.vmem %s1, 64
  $region9: #{perceptual_loss.15} parent=0 // pred_fallthru
    _
  %s12 = scalar_lea.vmem %s1, 64
  %s13 = scalar_lea.vmem %s1, 64
  %p14 = scmp.eq.s32.totalorder 0, 0
  // Predicated region
  $region10: #{perceptual_loss.15} parent=0 // pred_check
    %p15 = pneg %p14
  $region11: #{perceptual_loss.15} parent=0 // pred_check_branch
    %17 = sbr.rel (%p15) target = $region13
  $region12: #{perceptual_loss.15} parent=0 // pred_region
    %vm18 = vcmask 516096
    %19 = vst.msk [vmem:[#allocation2] sm:$0x1] %vm18, 0.0
  $region13: #{perceptual_loss.15} parent=0 // pred_fallthru
    _
  %v20 = vld [vmem:[%s0] sm:$0xf]
  %v21 = vld [vmem:[%s0 + $0x4] sm:$0xf]
  %v22 = vld [vmem:[%s0 + $0x8] sm:$0xf]
  %v23 = vld [vmem:[%s0 + $0xc] sm:$0xf]
  %v24 = vld [vmem:[%s0 + $0x10] sm:$0xf]
  %v25 = vld [vmem:[%s0 + $0x14] sm:$0xf]
  %v26 = vld [vmem:[%s0 + $0x18] sm:$0xf]
  %v27 = vld [vmem:[%s0 + $0x1c] sm:$0xf]
  %v28 = vld [vmem:[%s0 + $0x20] sm:$0xf]
  %v29 = vld [vmem:[%s0 + $0x24] sm:$0xf]
  %v30 = vld [vmem:[%s0 + $0x28] sm:$0xf]
  %v31 = vld [vmem:[%s0 + $0x2c] sm:$0xf]
  %v32 = vld [vmem:[%s0 + $0x30] sm:$0xf]
  %v33 = vld [vmem:[%s0 + $0x34] sm:$0xf]
  %v34 = vld [vmem:[%s0 + $0x38] sm:$0xf]
  %v35 = vld [vmem:[%s0 + $0x3c] sm:$0xf]
  %v36 = vunpack.c.l.bf16 %v20
  %v37 = vunpack.c.l.bf16 %v21
  %v38 = vunpack.c.l.bf16 %v22
  %v39 = vunpack.c.l.bf16 %v23
  %v40 = vunpack.c.l.bf16 %v24
  %v41 = vunpack.c.l.bf16 %v25
  %v42 = vunpack.c.l.bf16 %v26
  %v43 = vunpack.c.l.bf16 %v27
  %v44 = vunpack.c.l.bf16 %v28
  %v45 = vunpack.c.l.bf16 %v29
  %v46 = vunpack.c.l.bf16 %v30
  %v47 = vunpack.c.l.bf16 %v31
  %v48 = vunpack.c.l.bf16 %v32
  %v49 = vunpack.c.l.bf16 %v33
  %v50 = vunpack.c.l.bf16 %v34
  %v51 = vunpack.c.l.bf16 %v35
  %v52 = vld [vmem:[%s13] sm:$0xf]
  %v53 = vld [vmem:[%s13 + $0x4] sm:$0xf]
  %v54 = vld [vmem:[%s13 + $0x8] sm:$0xf]
  %v55 = vld [vmem:[%s13 + $0xc] sm:$0xf]
  %v56 = vld [vmem:[%s13 + $0x10] sm:$0xf]
  %v57 = vld [vmem:[%s13 + $0x14] sm:$0xf]
  %v58 = vld [vmem:[%s13 + $0x18] sm:$0xf]
  %v59 = vld [vmem:[%s13 + $0x1c] sm:$0xf]
  %v60 = vld [vmem:[%s13 + $0x20] sm:$0xf]
  %v61 = vld [vmem:[%s13 + $0x24] sm:$0xf]
  %v62 = vld [vmem:[%s13 + $0x28] sm:$0xf]
  %v63 = vld [vmem:[%s13 + $0x2c] sm:$0xf]
  %v64 = vld [vmem:[%s13 + $0x30] sm:$0xf]
  %v65 = vld [vmem:[%s13 + $0x34] sm:$0xf]
  %v66 = vld [vmem:[%s13 + $0x38] sm:$0xf]
  %v67 = vld [vmem:[%s13 + $0x3c] sm:$0xf]
  %v68 = vunpack.c.l.bf16 %v52
  %v69 = vunpack.c.l.bf16 %v53
  %v70 = vunpack.c.l.bf16 %v54
  %v71 = vunpack.c.l.bf16 %v55
  %v72 = vunpack.c.l.bf16 %v56
  %v73 = vunpack.c.l.bf16 %v57
  %v74 = vunpack.c.l.bf16 %v58
  %v75 = vunpack.c.l.bf16 %v59
  %v76 = vunpack.c.l.bf16 %v60
  %v77 = vunpack.c.l.bf16 %v61
  %v78 = vunpack.c.l.bf16 %v62
  %v79 = vunpack.c.l.bf16 %v63
  %v80 = vunpack.c.l.bf16 %v64
  %v81 = vunpack.c.l.bf16 %v65
  %v82 = vunpack.c.l.bf16 %v66
  %v83 = vunpack.c.l.bf16 %v67
  %v84 = vsub.f32 %v36, %v68
  %v85 = vsub.f32 %v37, %v69
  %v86 = vsub.f32 %v38, %v70
  %v87 = vsub.f32 %v39, %v71
  %v88 = vsub.f32 %v40, %v72
  %v89 = vsub.f32 %v41, %v73
  %v90 = vsub.f32 %v42, %v74
  %v91 = vsub.f32 %v43, %v75
  %v92 = vsub.f32 %v44, %v76
  %v93 = vsub.f32 %v45, %v77
  %v94 = vsub.f32 %v46, %v78
  %v95 = vsub.f32 %v47, %v79
  %v96 = vsub.f32 %v48, %v80
  %v97 = vsub.f32 %v49, %v81
  %v98 = vsub.f32 %v50, %v82
  %v99 = vsub.f32 %v51, %v83
  %v100 = vld [vmem:[#allocation2] sm:$0x1]
  %v101 = vand.u32 2147483647, %v84
  %v102 = vand.u32 2147483647, %v85
  %v103 = vand.u32 2147483647, %v86
  %v104 = vand.u32 2147483647, %v87
  %v105 = vand.u32 2147483647, %v88
  %v106 = vand.u32 2147483647, %v89
  %v107 = vand.u32 2147483647, %v90
  %v108 = vand.u32 2147483647, %v91
  %v109 = vand.u32 2147483647, %v92
  %v110 = vand.u32 2147483647, %v93
  %v111 = vand.u32 2147483647, %v94
  %v112 = vand.u32 2147483647, %v95
  %v113 = vand.u32 2147483647, %v96
  %v114 = vand.u32 2147483647, %v97
  %v115 = vand.u32 2147483647, %v98
  %v116 = vand.u32 2147483647, %v99
  %vm117 = vcmask 523264
  %v118 = vsel %vm117, %v101, 0.0
  %v119 = vsel %vm117, %v102, 0.0
  %v120 = vadd.f32 %v118, %v119
  %v121 = vsel %vm117, %v103, 0.0
  %v122 = vadd.f32 %v120, %v121
  %v123 = vsel %vm117, %v104, 0.0
  %v124 = vadd.f32 %v122, %v123
  %v125 = vsel %vm117, %v105, 0.0
  %v126 = vadd.f32 %v124, %v125
  %v127 = vsel %vm117, %v106, 0.0
  %v128 = vadd.f32 %v126, %v127
  %v129 = vsel %vm117, %v107, 0.0
  %v130 = vadd.f32 %v128, %v129
  %v131 = vsel %vm117, %v108, 0.0
  %v132 = vadd.f32 %v130, %v131
  %v133 = vsel %vm117, %v109, 0.0
  %v134 = vadd.f32 %v132, %v133
  %v135 = vsel %vm117, %v110, 0.0
  %v136 = vadd.f32 %v134, %v135
  %v137 = vsel %vm117, %v111, 0.0
  %v138 = vadd.f32 %v136, %v137
  %v139 = vsel %vm117, %v112, 0.0
  %v140 = vadd.f32 %v138, %v139
  %v141 = vsel %vm117, %v113, 0.0
  %v142 = vadd.f32 %v140, %v141
  %v143 = vsel %vm117, %v114, 0.0
  %v144 = vadd.f32 %v142, %v143
  %v145 = vsel %vm117, %v115, 0.0
  %v146 = vadd.f32 %v144, %v145
  %v147 = vsel %vm117, %v116, 0.0
  %v148 = vadd.f32 %v146, %v147
  %v149 = vrot.slane %v148, 4
  %v150 = vadd.f32 %v148, %v149
  %v151 = vrot.slane %v150, 2
  %v152 = vadd.f32 %v150, %v151
  %v153 = vrot.slane %v152, 1
  %v154 = vadd.f32 %v152, %v153
  %v155 = vadd.f32 %v100, %v154
  %vm156 = vcmask 516096
  %157 = vst.msk [vmem:[#allocation2] sm:$0x1] %vm156, %v155
  // Predicated region
  $region14: #{perceptual_loss.15} parent=0 // pred_check
    %p158 = pneg %p14
  $region15: #{perceptual_loss.15} parent=0 // pred_check_branch
    %160 = sbr.rel (%p158) target = $region17
  $region16: #{perceptual_loss.15} parent=0 // pred_region
    %v161 = vld [vmem:[#allocation2] sm:$0x1]
    %162 = vst.msk [vmem:[%s2] sm:$0x1] %vm156, %v161
  $region17: #{perceptual_loss.15} parent=0 // pred_fallthru
    _
  // Predicated region
  $region18: #{perceptual_loss.15} parent=0 // pred_check
    _
  $region19: #{perceptual_loss.15} parent=0 // pred_check_branch
    %164 = sbr.rel (0) target = $region21
  $region20: #{perceptual_loss.15} parent=0 // pred_region
    _
  $region21: #{perceptual_loss.15} parent=0 // pred_fallthru
    _
  // Predicated region
  $region22: #{perceptual_loss.15} parent=0 // pred_check
    _
  $region23: #{perceptual_loss.15} parent=0 // pred_check_branch
    %166 = sbr.rel (0) target = $region25
  $region24: #{perceptual_loss.15} parent=0 // pred_region
    _
  $region25: #{perceptual_loss.15} parent=0 // pred_fallthru
    _

// kernel: perceptual_loss.13
$region0: #{perceptual_loss.13}
  #allocation0 [shape = 'u32[]', space=smem, size = 0x4, offset = 0x4, fixed_abs, tag = 'smem constant byte address 0x4 - core index']
  #allocation1 [shape = 'u32[144,128]{1,0:T(1,128)}', space=vmem, size = 0x12000, scoped, tag = 'internal scratch']
  #allocation2 [shape = 'f32[64,64]{1,0:T(8,128)}', space=vmem, size = 0x8000, scoped, tag = 'scratch operand']
  %s0 = inlined_call_operand.vmem [shape: bf16[4,256,64], index: 0, kind: input, shape index: {}]
  %s1 = inlined_call_operand.vmem [shape: f32[4,64,64], index: 1, kind: output, shape index: {}]
  %s2 = sld [smem:[#allocation0]]
  $region45: #{perceptual_loss.13} parent=0
    _
  %s4 = ssub.s32 1, %s2
  %s5 = scalar_select 0, %s4, %s2
  loop: start=0, step=1, limit=6
  $region2: #{perceptual_loss.13} parent=0 // loop_pre_header
    _
  $region3: #{perceptual_loss.13} parent=0 // loop_header
    %s7 = sphi 0, %s11
    %p8 = scmp.ge.s32.totalorder %s7, 6
    %s14 = sphi 0, %s26
    %s15 = sphi 0, %s22
    %s16 = sphi 0, %s14
    %s17 = sphi 0, %s15
    %s18 = sphi 0, %s16
    %s19 = sphi 0, %s17
    %s31 = sphi 0, %s33
    %s34 = sphi 0, %s31
    %s35 = sphi 0, %s34
    %s51 = sphi 0, %s35
    %s57 = sphi 0, %s59
    %s60 = sphi 0, %s57
    %s61 = sphi 0, %s60
    %s77 = sphi 0, %s61
  $region4: #{perceptual_loss.13} parent=0 // loop_header_branch
    %10 = sbr.rel (%p8) target = $region8
  $region5: #{perceptual_loss.13} parent=0 // loop_body
    %s12 = ssub.s32 %s7, 1
    %s13 = ssub.s32 %s7, 2
    %s20 = sadd.s32 1, %s15
    %p21 = scmp.ge.s32.totalorder %s20, 1
    %s22 = scalar_select %p21, 0, %s20
    %s23 = sadd.s32 1, %s14
    %s24 = scalar_select %p21, %s23, %s14
    %p25 = scmp.ge.s32.totalorder %s24, 4
    %s26 = scalar_select %p25, 0, %s24
    %s27 = ssub.s32 %s14, %s26
    %s28 = ssub.s32 %s15, %s22
    %s29 = sor.u32 %s27, %s28
    %p30 = scmp.eq.s32.totalorder %s29, 0
    %s32 = sadd.s32 %s31, 1
    %s33 = scalar_select %p30, %s31, %s32
    %p36 = pneg %p30
    %p37 = scmp.eq.s32.totalorder %s7, 3
    %p38 = por %p36, %p37
    %p39 = scmp.ne.s32.totalorder %s31, %s34
    %p40 = scmp.eq.s32.totalorder %s7, 0
    %p41 = por %p39, %p40
    %p42 = scmp.ne.s32.totalorder %s31, %s34
    %p43 = scmp.eq.s32.totalorder %s12, 3
    %p44 = por %p42, %p43
    %p45 = scmp.ne.s32.totalorder %s34, %s35
    %p46 = scmp.eq.s32.totalorder %s12, 0
    %p47 = por %p45, %p46
    %p48 = scmp.ne.s32.totalorder %s34, %s35
    %p49 = scmp.eq.s32.totalorder %s13, 3
    %p50 = por %p48, %p49
    %p52 = scmp.ne.s32.totalorder %s35, %s51
    %p53 = scmp.eq.s32.totalorder %s13, 0
    %p54 = por %p52, %p53
    %s55 = ssub.s32 %s14, %s26
    %p56 = scmp.eq.s32.totalorder %s55, 0
    %s58 = sadd.s32 %s57, 1
    %s59 = scalar_select %p56, %s57, %s58
    %p62 = pneg %p56
    %p63 = scmp.eq.s32.totalorder %s7, 3
    %p64 = por %p62, %p63
    %p65 = scmp.ne.s32.totalorder %s57, %s60
    %p66 = scmp.eq.s32.totalorder %s7, 0
    %p67 = por %p65, %p66
    %p68 = scmp.ne.s32.totalorder %s57, %s60
    %p69 = scmp.eq.s32.totalorder %s12, 3
    %p70 = por %p68, %p69
    %p71 = scmp.ne.s32.totalorder %s60, %s61
    %p72 = scmp.eq.s32.totalorder %s12, 0
    %p73 = por %p71, %p72
    %p74 = scmp.ne.s32.totalorder %s60, %s61
    %p75 = scmp.eq.s32.totalorder %s13, 3
    %p76 = por %p74, %p75
    %p78 = scmp.ne.s32.totalorder %s61, %s77
    %p79 = scmp.eq.s32.totalorder %s13, 0
    %p80 = por %p78, %p79
    %p81 = scmp.le.s32.totalorder 1, %s7
    %p82 = scmp.lt.s32.totalorder %s7, 5
    %p83 = pnand %p81, %p82
    %p84 = pneg %p83
    // Predicated region
    $region9: #{perceptual_loss.13} parent=5 // pred_check
      _
    $region10: #{perceptual_loss.13} parent=5 // pred_check_branch
      %86 = sbr.rel (%p83) target = $region12
    $region11: #{perceptual_loss.13} parent=5 // pred_region
      %s87 = ssub.s32 %s7, 1
    $region12: #{perceptual_loss.13} parent=5 // pred_fallthru
      _
    %p88 = scmp.lt.s32.totalorder %s7, 4
    // Predicated region
    $region13: #{perceptual_loss.13} parent=5 // pred_check
      %p89 = pneg %p88
    $region14: #{perceptual_loss.13} parent=5 // pred_check_branch
      %91 = sbr.rel (%p89) target = $region16
    $region15: #{perceptual_loss.13} parent=5 // pred_region
      // Predicated region
      $region17: #{perceptual_loss.13} parent=15 // pred_check
        %p92 = pneg %p41
      $region18: #{perceptual_loss.13} parent=15 // pred_check_branch
        %94 = sbr.rel (%p92) target = $region20
      $region19: #{perceptual_loss.13} parent=15 // pred_region
        %s95 = smul.u32 32, %s15
        %p96 = scmp.lt.s32.totalorder %s14, 3
        %s97 = scalar_select %p96, %s14, 3
        %p98 = scmp.lt.s32.totalorder %s95, 31
        %s99 = scalar_select %p98, %s95, 31
        %s100 = smul.addr %s97, 32
        %s101 = sadd.s32 %s99, %s100
        %s102 = smul.addr %s101, 4
        %s103 = scalar_lea.vmem %s0, %s102
        %s104 = smul.u32 32, %s15
      $region20: #{perceptual_loss.13} parent=15 // pred_fallthru
        _
    $region16: #{perceptual_loss.13} parent=5 // pred_fallthru
      _
    %p105 = scmp.le.s32.totalorder 1, %s7
    %p106 = scmp.lt.s32.totalorder %s7, 5
    %p107 = pnand %p105, %p106
    %p108 = pneg %p107
    // Predicated region
    $region21: #{perceptual_loss.13} parent=5 // pred_check
      _
    $region22: #{perceptual_loss.13} parent=5 // pred_check_branch
      %110 = sbr.rel (%p107) target = $region24
    $region23: #{perceptual_loss.13} parent=5 // pred_region
      %s111 = ssub.s32 %s7, 1
      %s112 = smul.u32 32, %s17
      %p113 = scmp.lt.s32.totalorder %s16, 3
      %s114 = scalar_select %p113, %s16, 3
      %p115 = scmp.lt.s32.totalorder %s112, 31
      %s116 = scalar_select %p115, %s112, 31
      %s117 = smul.addr %s114, 32
      %s118 = sadd.s32 %s116, %s117
      %s119 = smul.addr %s118, 4
      %s120 = scalar_lea.vmem %s0, %s119
      %p121 = pneg %p47
      %p122 = pneg %p44
      %p123 = pneg %p73
      %p124 = pneg %p70
      %p125 = scmp.lt.s32.totalorder %s16, 3
      %s126 = scalar_select %p125, %s16, 3
      %s127 = smul.addr %s126, 8
      %s128 = smul.addr %s127, 8
      %s129 = scalar_lea.vmem %s1, %s128
      %s130 = smul.u32 32, %s17
      %p131 = scmp.lt.s32.totalorder %s16, 3
      %s132 = scalar_select %p131, %s16, 3
      %p133 = scmp.lt.s32.totalorder %s130, 31
      %s134 = scalar_select %p133, %s130, 31
      %s135 = smul.addr %s132, 32
      %s136 = sadd.s32 %s134, %s135
      %s137 = smul.addr %s136, 4
      %s138 = scalar_lea.vmem %s0, %s137
      %s139 = smul.u32 32, %s17
      %p140 = scmp.lt.s32.totalorder %s16, 3
      %s141 = scalar_select %p140, %s16, 3
      %s142 = smul.addr %s141, 8
      %s143 = smul.addr %s142, 8
      %s144 = scalar_lea.vmem %s1, %s143
      %p146 = scmp.eq.s32.totalorder %s17, 0
      // Predicated region
      $region25: #{perceptual_loss.13} parent=23 // pred_check
        %p147 = pneg %p146
      $region26: #{perceptual_loss.13} parent=23 // pred_check_branch
        %149 = sbr.rel (%p147) target = $region28
      $region27: #{perceptual_loss.13} parent=23 // pred_region
        %vm150 = vcmask 523264
        %151 = vst.msk [vmem:[#allocation2] sm:$0xff] %vm150, 0.0
        %152 = vst.msk [vmem:[#allocation2 + $0x8] sm:$0xff] %vm150, 0.0
        %153 = vst.msk [vmem:[#allocation2 + $0x10] sm:$0xff] %vm150, 0.0
        %154 = vst.msk [vmem:[#allocation2 + $0x18] sm:$0xff] %vm150, 0.0
        %155 = vst.msk [vmem:[#allocation2 + $0x20] sm:$0xff] %vm150, 0.0
        %156 = vst.msk [vmem:[#allocation2 + $0x28] sm:$0xff] %vm150, 0.0
        %157 = vst.msk [vmem:[#allocation2 + $0x30] sm:$0xff] %vm150, 0.0
        %158 = vst.msk [vmem:[#allocation2 + $0x38] sm:$0xff] %vm150, 0.0
      $region28: #{perceptual_loss.13} parent=23 // pred_fallthru
        _
      %v159 = vld [vmem:[%s138] sm:$0xf]
      %v160 = vld [vmem:[%s138 + $0x4] sm:$0xf]
      %v161 = vld [vmem:[%s138 + $0x8] sm:$0xf]
      %v162 = vld [vmem:[%s138 + $0xc] sm:$0xf]
      %v163 = vld [vmem:[%s138 + $0x10] sm:$0xf]
      %v164 = vld [vmem:[%s138 + $0x14] sm:$0xf]
      %v165 = vld [vmem:[%s138 + $0x18] sm:$0xf]
      %v166 = vld [vmem:[%s138 + $0x1c] sm:$0xf]
      %v167 = vld [vmem:[%s138 + $0x20] sm:$0xf]
      %v168 = vld [vmem:[%s138 + $0x24] sm:$0xf]
      %v169 = vld [vmem:[%s138 + $0x28] sm:$0xf]
      %v170 = vld [vmem:[%s138 + $0x2c] sm:$0xf]
      %v171 = vld [vmem:[%s138 + $0x30] sm:$0xf]
      %v172 = vld [vmem:[%s138 + $0x34] sm:$0xf]
      %v173 = vld [vmem:[%s138 + $0x38] sm:$0xf]
      %v174 = vld [vmem:[%s138 + $0x3c] sm:$0xf]
      %v175 = vld [vmem:[%s138 + $0x40] sm:$0xf]
      %v176 = vld [vmem:[%s138 + $0x44] sm:$0xf]
      %v177 = vld [vmem:[%s138 + $0x48] sm:$0xf]
      %v178 = vld [vmem:[%s138 + $0x4c] sm:$0xf]
      %v179 = vld [vmem:[%s138 + $0x50] sm:$0xf]
      %v180 = vld [vmem:[%s138 + $0x54] sm:$0xf]
      %v181 = vld [vmem:[%s138 + $0x58] sm:$0xf]
      %v182 = vld [vmem:[%s138 + $0x5c] sm:$0xf]
      %v183 = vld [vmem:[%s138 + $0x60] sm:$0xf]
      %v184 = vld [vmem:[%s138 + $0x64] sm:$0xf]
      %v185 = vld [vmem:[%s138 + $0x68] sm:$0xf]
      %v186 = vld [vmem:[%s138 + $0x6c] sm:$0xf]
      %v187 = vld [vmem:[%s138 + $0x70] sm:$0xf]
      %v188 = vld [vmem:[%s138 + $0x74] sm:$0xf]
      %v189 = vld [vmem:[%s138 + $0x78] sm:$0xf]
      %v190 = vld [vmem:[%s138 + $0x7c] sm:$0xf]
      %v191 = vld [vmem:[#allocation2] sm:$0xff]
      %v192 = vld [vmem:[#allocation2 + $0x8] sm:$0xff]
      %v193 = vld [vmem:[#allocation2 + $0x10] sm:$0xff]
      %v194 = vld [vmem:[#allocation2 + $0x18] sm:$0xff]
      %v195 = vld [vmem:[#allocation2 + $0x20] sm:$0xff]
      %v196 = vld [vmem:[#allocation2 + $0x28] sm:$0xff]
      %v197 = vld [vmem:[#allocation2 + $0x30] sm:$0xff]
      %v198 = vld [vmem:[#allocation2 + $0x38] sm:$0xff]
      %v231 = vunpack.c.l.b16 %v159
      %v232 = vunpack.c.l.b16 %v160
      %v233 = vunpack.c.l.b16 %v161
      %v234 = vunpack.c.l.b16 %v162
      %v235 = vunpack.c.l.b16 %v163
      %v236 = vunpack.c.l.b16 %v164
      %v237 = vunpack.c.l.b16 %v165
      %v238 = vunpack.c.l.b16 %v166
      %v239 = vunpack.c.l.b16 %v167
      %v240 = vunpack.c.l.b16 %v168
      %v241 = vunpack.c.l.b16 %v169
      %v242 = vunpack.c.l.b16 %v170
      %v243 = vunpack.c.l.b16 %v171
      %v244 = vunpack.c.l.b16 %v172
      %v245 = vunpack.c.l.b16 %v173
      %v246 = vunpack.c.l.b16 %v174
      %v247 = vunpack.c.l.b16 %v175
      %v248 = vunpack.c.l.b16 %v176
      %v249 = vunpack.c.l.b16 %v177
      %v250 = vunpack.c.l.b16 %v178
      %v251 = vunpack.c.l.b16 %v179
      %v252 = vunpack.c.l.b16 %v180
      %v253 = vunpack.c.l.b16 %v181
      %v254 = vunpack.c.l.b16 %v182
      %v255 = vunpack.c.l.b16 %v183
      %v256 = vunpack.c.l.b16 %v184
      %v257 = vunpack.c.l.b16 %v185
      %v258 = vunpack.c.l.b16 %v186
      %v259 = vunpack.c.l.b16 %v187
      %v260 = vunpack.c.l.b16 %v188
      %v261 = vunpack.c.l.b16 %v189
      %v262 = vunpack.c.l.b16 %v190
      %v263 = vpack.c.b16 %v232, %v231
      %v264 = vpack.c.b16 %v234, %v233
      %v265 = vpack.c.b16 %v236, %v235
      %v266 = vpack.c.b16 %v238, %v237
      %v267 = vpack.c.b16 %v240, %v239
      %v268 = vpack.c.b16 %v242, %v241
      %v269 = vpack.c.b16 %v244, %v243
      %v270 = vpack.c.b16 %v246, %v245
      %v271 = vpack.c.b16 %v248, %v247
      %v272 = vpack.c.b16 %v250, %v249
      %v273 = vpack.c.b16 %v252, %v251
      %v274 = vpack.c.b16 %v254, %v253
      %v275 = vpack.c.b16 %v256, %v255
      %v276 = vpack.c.b16 %v258, %v257
      %v277 = vpack.c.b16 %v260, %v259
      %v278 = vpack.c.b16 %v262, %v261
      %295 = vxpose.xlu0.c.b16.start [1/8] %v263, 128
      %296 = vxpose.xlu0.c.b16.cont [2/8] %v264, 128
      %297 = vxpose.xlu0.c.b16.cont [3/8] %v265, 128
      %298 = vxpose.xlu0.c.b16.cont [4/8] %v266, 128
      %299 = vxpose.xlu0.c.b16.cont [5/8] %v267, 128
      %300 = vxpose.xlu0.c.b16.cont [6/8] %v268, 128
      %301 = vxpose.xlu0.c.b16.cont [7/8] %v269, 128
      %302 = vxpose.xlu0.c.b16.end [8/8] %v270, 128
      %v303 = vpop.trf.xlu0
      %v304 = vpop.trf.xlu0
      %v305 = vpop.trf.xlu0
      %v306 = vpop.trf.xlu0
      %v307 = vpop.trf.xlu0
      %v308 = vpop.trf.xlu0
      %v309 = vpop.trf.xlu0
      %v310 = vpop.trf.xlu0
      %311 = vxpose.xlu0.c.b16.start [1/8] %v271, 128
      %312 = vxpose.xlu0.c.b16.cont [2/8] %v272, 128
      %313 = vxpose.xlu0.c.b16.cont [3/8] %v273, 128
      %314 = vxpose.xlu0.c.b16.cont [4/8] %v274, 128
      %315 = vxpose.xlu0.c.b16.cont [5/8] %v275, 128
      %316 = vxpose.xlu0.c.b16.cont [6/8] %v276, 128
      %317 = vxpose.xlu0.c.b16.cont [7/8] %v277, 128
      %318 = vxpose.xlu0.c.b16.end [8/8] %v278, 128
      %v319 = vpop.trf.xlu0
      %v320 = vpop.trf.xlu0
      %v321 = vpop.trf.xlu0
      %v322 = vpop.trf.xlu0
      %v323 = vpop.trf.xlu0
      %v324 = vpop.trf.xlu0
      %v325 = vpop.trf.xlu0
      %v326 = vpop.trf.xlu0
      %327 = vmatprep.subr.bf16.mxu0 0
      %328 = vmatpush1.bf16.msra.mxu0 %v263
      %329 = vmatprep.subr.bf16.mxu0 0
      %330 = vmatpush1.bf16.msra.mxu0 %v264
      %331 = vmatprep.subr.bf16.mxu0 0
      %332 = vmatpush1.bf16.msra.mxu0 %v265
      %333 = vmatprep.subr.bf16.mxu0 0
      %334 = vmatpush1.bf16.msra.mxu0 %v266
      %335 = vmatprep.subr.bf16.mxu0 0
      %336 = vmatpush1.bf16.msra.mxu0 %v267
      %337 = vmatprep.subr.bf16.mxu0 0
      %338 = vmatpush1.bf16.msra.mxu0 %v268
      %339 = vmatprep.subr.bf16.mxu0 0
      %340 = vmatpush1.bf16.msra.mxu0 %v269
      %341 = vmatprep.subr.bf16.mxu0 0
      %342 = vmatpush1.bf16.msra.mxu0 %v270
      %343 = vmatprep.subr.bf16.mxu0 0
      %344 = vmatpush1.bf16.msra.mxu0 %v271
      %345 = vmatprep.subr.bf16.mxu0 0
      %346 = vmatpush1.bf16.msra.mxu0 %v272
      %347 = vmatprep.subr.bf16.mxu0 0
      %348 = vmatpush1.bf16.msra.mxu0 %v273
      %349 = vmatprep.subr.bf16.mxu0 0
      %350 = vmatpush1.bf16.msra.mxu0 %v274
      %351 = vmatprep.subr.bf16.mxu0 0
      %352 = vmatpush1.bf16.msra.mxu0 %v275
      %353 = vmatprep.subr.bf16.mxu0 0
      %354 = vmatpush1.bf16.msra.mxu0 %v276
      %355 = vmatprep.subr.bf16.mxu0 0
      %356 = vmatpush1.bf16.msra.mxu0 %v277
      %357 = vmatprep.subr.bf16.mxu0 0
      %358 = vmatpush1.bf16.msra.mxu0 %v278
      %359 = vmatprep.mubr.bf16.mxu0 %v319
      %360 = vmatmul.mubr.bf16.gmra.mrb[0].mxu0 %v303
      %v361 = vpop.f32.mrb[0].mxu0
      %v362 = vadd.f32 0.0, %v361
      %v363 = vpop.f32.mrb[0].mxu0
      %v364 = vpop.f32.mrb[0].mxu0
      %v365 = vadd.f32 0.0, %v364
      %v366 = vpop.f32.mrb[0].mxu0
      %367 = vmatprep.mubr.bf16.mxu0 %v320
      %368 = vmatmul.mubr.bf16.gmra.mrb[0].mxu0 %v304
      %v369 = vpop.f32.mrb[0].mxu0
      %v370 = vadd.f32 0.0, %v369
      %v371 = vpop.f32.mrb[0].mxu0
      %v372 = vpop.f32.mrb[0].mxu0
      %v373 = vadd.f32 0.0, %v372
      %v374 = vpop.f32.mrb[0].mxu0
      %375 = vmatprep.mubr.bf16.mxu0 %v321
      %376 = vmatmul.mubr.bf16.gmra.mrb[0].mxu0 %v305
      %v377 = vpop.f32.mrb[0].mxu0
      %v378 = vadd.f32 0.0, %v377
      %v379 = vpop.f32.mrb[0].mxu0
      %v380 = vpop.f32.mrb[0].mxu0
      %v381 = vadd.f32 0.0, %v380
      %v382 = vpop.f32.mrb[0].mxu0
      %383 = vmatprep.mubr.bf16.mxu0 %v322
      %384 = vmatmul.mubr.bf16.gmra.mrb[0].mxu0 %v306
      %v385 = vpop.f32.mrb[0].mxu0
      %v386 = vadd.f32 0.0, %v385
      %v387 = vpop.f32.mrb[0].mxu0
      %v388 = vpop.f32.mrb[0].mxu0
      %v389 = vadd.f32 0.0, %v388
      %v390 = vpop.f32.mrb[0].mxu0
      %391 = vdwg.mxu0
      %v392 = vadd.f32 %v191, %v362
      %v393 = vadd.f32 %v192, %v365
      %v394 = vadd.f32 %v193, %v370
      %v395 = vadd.f32 %v194, %v373
      %v396 = vadd.f32 %v195, %v378
      %v397 = vadd.f32 %v196, %v381
      %v398 = vadd.f32 %v197, %v386
      %v399 = vadd.f32 %v198, %v389
      %vm400 = vcmask 523264
      %401 = vst.msk [vmem:[#allocation2] sm:$0xff] %vm400, %v392
      %402 = vst.msk [vmem:[#allocation2 + $0x8] sm:$0xff] %vm400, %v393
      %403 = vst.msk [vmem:[#allocation2 + $0x10] sm:$0xff] %vm400, %v394
      %404 = vst.msk [vmem:[#allocation2 + $0x18] sm:$0xff] %vm400, %v395
      %405 = vst.msk [vmem:[#allocation2 + $0x20] sm:$0xff] %vm400, %v396
      %406 = vst.msk [vmem:[#allocation2 + $0x28] sm:$0xff] %vm400, %v397
      %407 = vst.msk [vmem:[#allocation2 + $0x30] sm:$0xff] %vm400, %v398
      %408 = vst.msk [vmem:[#allocation2 + $0x38] sm:$0xff] %vm400, %v399
      // Predicated region
      $region29: #{perceptual_loss.13} parent=23 // pred_check
        %p409 = pneg %p146
      $region30: #{perceptual_loss.13} parent=23 // pred_check_branch
        %411 = sbr.rel (%p409) target = $region32
      $region31: #{perceptual_loss.13} parent=23 // pred_region
        %v412 = vld [vmem:[#allocation2] sm:$0xff]
        %v413 = vld [vmem:[#allocation2 + $0x8] sm:$0xff]
        %v414 = vld [vmem:[#allocation2 + $0x10] sm:$0xff]
        %v415 = vld [vmem:[#allocation2 + $0x18] sm:$0xff]
        %v416 = vld [vmem:[#allocation2 + $0x20] sm:$0xff]
        %v417 = vld [vmem:[#allocation2 + $0x28] sm:$0xff]
        %v418 = vld [vmem:[#allocation2 + $0x30] sm:$0xff]
        %v419 = vld [vmem:[#allocation2 + $0x38] sm:$0xff]
        %v420 = vmul.f32 %v412, 6.1035156e-05
        %v421 = vmul.f32 %v413, 6.1035156e-05
        %v422 = vmul.f32 %v414, 6.1035156e-05
        %v423 = vmul.f32 %v415, 6.1035156e-05
        %v424 = vmul.f32 %v416, 6.1035156e-05
        %v425 = vmul.f32 %v417, 6.1035156e-05
        %v426 = vmul.f32 %v418, 6.1035156e-05
        %v427 = vmul.f32 %v419, 6.1035156e-05
        %428 = vst.msk [vmem:[%s144] sm:$0xff] %vm400, %v420
        %429 = vst.msk [vmem:[%s144 + $0x8] sm:$0xff] %vm400, %v421
        %430 = vst.msk [vmem:[%s144 + $0x10] sm:$0xff] %vm400, %v422
        %431 = vst.msk [vmem:[%s144 + $0x18] sm:$0xff] %vm400, %v423
        %432 = vst.msk [vmem:[%s144 + $0x20] sm:$0xff] %vm400, %v424
        %433 = vst.msk [vmem:[%s144 + $0x28] sm:$0xff] %vm400, %v425
        %434 = vst.msk [vmem:[%s144 + $0x30] sm:$0xff] %vm400, %v426
        %435 = vst.msk [vmem:[%s144 + $0x38] sm:$0xff] %vm400, %v427
      $region32: #{perceptual_loss.13} parent=23 // pred_fallthru
        _
      %p436 = scmp.lt.s32.totalorder %s16, 3
      %s437 = scalar_select %p436, %s16, 3
      %s438 = smul.addr %s437, 8
      %s439 = smul.addr %s438, 8
      %s440 = scalar_lea.vmem %s1, %s439
      // Predicated region
      $region33: #{perceptual_loss.13} parent=23 // pred_check
        %p441 = pneg %p70
      $region34: #{perceptual_loss.13} parent=23 // pred_check_branch
        %443 = sbr.rel (%p441) target = $region36
      $region35: #{perceptual_loss.13} parent=23 // pred_region
        _
      $region36: #{perceptual_loss.13} parent=23 // pred_fallthru
        _
    $region24: #{perceptual_loss.13} parent=5 // pred_fallthru
      _
    %p444 = scmp.le.s32.totalorder 2, %s7
    // Predicated region
    $region37: #{perceptual_loss.13} parent=5 // pred_check
      %p445 = pneg %p444
    $region38: #{perceptual_loss.13} parent=5 // pred_check_branch
      %447 = sbr.rel (%p445) target = $region40
    $region39: #{perceptual_loss.13} parent=5 // pred_region
      %s448 = ssub.s32 %s7, 2
      // Predicated region
      $region41: #{perceptual_loss.13} parent=39 // pred_check
        %p449 = pneg %p76
      $region42: #{perceptual_loss.13} parent=39 // pred_check_branch
        %451 = sbr.rel (%p449) target = $region44
      $region43: #{perceptual_loss.13} parent=39 // pred_region
        %p452 = scmp.lt.s32.totalorder %s18, 3
        %s453 = scalar_select %p452, %s18, 3
        %s454 = smul.addr %s453, 8
        %s455 = smul.addr %s454, 8
        %s456 = scalar_lea.vmem %s1, %s455
      $region44: #{perceptual_loss.13} parent=39 // pred_fallthru
        _
    $region40: #{perceptual_loss.13} parent=5 // pred_fallthru
      _
  $region6: #{perceptual_loss.13} parent=0 // loop_footer
    %s11 = sadd.s32 1, %s7
  $region7: #{perceptual_loss.13} parent=0 // loop_footer_branch
    %6 = sbr.rel target = $region3
  $region8: #{perceptual_loss.13} parent=0 // loop_exit
    _

// kernel: perceptual_loss.12
$region0: #{perceptual_loss.12}
  #allocation0 [shape = 'u32[]', space=smem, size = 0x4, offset = 0x4, fixed_abs, tag = 'smem constant byte address 0x4 - core index']
  #allocation1 [shape = 'u32[144,128]{1,0:T(1,128)}', space=vmem, size = 0x12000, scoped, tag = 'internal scratch']
  #allocation2 [shape = 'f32[1,64]{1,0:T(1,128)}', space=vmem, size = 0x200, scoped, tag = 'scratch operand']
  %s0 = inlined_call_operand.vmem [shape: bf16[2,512,64], index: 0, kind: input, shape index: {}, may-alias: {0,1}]
  %s1 = inlined_call_operand.vmem [shape: bf16[2,512,64], index: 1, kind: input, shape index: {}, may-alias: {0,1}]
  %s2 = inlined_call_operand.vmem [shape: f32[1,64], index: 2, kind: output, shape index: {}]
  %s3 = sld [smem:[#allocation0]]
  $region26: #{perceptual_loss.12} parent=0
    _
  %s5 = ssub.s32 1, %s3
  %s6 = scalar_select 0, %s5, %s3
  // Predicated region
  $region2: #{perceptual_loss.12} parent=0 // pred_check
    _
  $region3: #{perceptual_loss.12} parent=0 // pred_check_branch
    %8 = sbr.rel (0) target = $region5
  $region4: #{perceptual_loss.12} parent=0 // pred_region
    _
  $region5: #{perceptual_loss.12} parent=0 // pred_fallthru
    _
  // Predicated region
  $region6: #{perceptual_loss.12} parent=0 // pred_check
    _
  $region7: #{perceptual_loss.12} parent=0 // pred_check_branch
    %10 = sbr.rel (0) target = $region9
  $region8: #{perceptual_loss.12} parent=0 // pred_region
    %s11 = scalar_lea.vmem %s1, 256
  $region9: #{perceptual_loss.12} parent=0 // pred_fallthru
    _
  %s12 = scalar_lea.vmem %s1, 256
  %s13 = scalar_lea.vmem %s1, 256
  %p14 = scmp.eq.s32.totalorder 0, 0
  // Predicated region
  $region10: #{perceptual_loss.12} parent=0 // pred_check
    %p15 = pneg %p14
  $region11: #{perceptual_loss.12} parent=0 // pred_check_branch
    %17 = sbr.rel (%p15) target = $region13
  $region12: #{perceptual_loss.12} parent=0 // pred_region
    %vm18 = vcmask 516096
    %19 = vst.msk [vmem:[#allocation2] sm:$0x1] %vm18, 0.0
  $region13: #{perceptual_loss.12} parent=0 // pred_fallthru
    _
  %v20 = vld [vmem:[%s0] sm:$0xf]
  %v21 = vld [vmem:[%s0 + $0x4] sm:$0xf]
  %v22 = vld [vmem:[%s0 + $0x8] sm:$0xf]
  %v23 = vld [vmem:[%s0 + $0xc] sm:$0xf]
  %v24 = vld [vmem:[%s0 + $0x10] sm:$0xf]
  %v25 = vld [vmem:[%s0 + $0x14] sm:$0xf]
  %v26 = vld [vmem:[%s0 + $0x18] sm:$0xf]
  %v27 = vld [vmem:[%s0 + $0x1c] sm:$0xf]
  %v28 = vld [vmem:[%s0 + $0x20] sm:$0xf]
  %v29 = vld [vmem:[%s0 + $0x24] sm:$0xf]
  %v30 = vld [vmem:[%s0 + $0x28] sm:$0xf]
  %v31 = vld [vmem:[%s0 + $0x2c] sm:$0xf]
  %v32 = vld [vmem:[%s0 + $0x30] sm:$0xf]
  %v33 = vld [vmem:[%s0 + $0x34] sm:$0xf]
  %v34 = vld [vmem:[%s0 + $0x38] sm:$0xf]
  %v35 = vld [vmem:[%s0 + $0x3c] sm:$0xf]
  %v36 = vld [vmem:[%s0 + $0x40] sm:$0xf]
  %v37 = vld [vmem:[%s0 + $0x44] sm:$0xf]
  %v38 = vld [vmem:[%s0 + $0x48] sm:$0xf]
  %v39 = vld [vmem:[%s0 + $0x4c] sm:$0xf]
  %v40 = vld [vmem:[%s0 + $0x50] sm:$0xf]
  %v41 = vld [vmem:[%s0 + $0x54] sm:$0xf]
  %v42 = vld [vmem:[%s0 + $0x58] sm:$0xf]
  %v43 = vld [vmem:[%s0 + $0x5c] sm:$0xf]
  %v44 = vld [vmem:[%s0 + $0x60] sm:$0xf]
  %v45 = vld [vmem:[%s0 + $0x64] sm:$0xf]
  %v46 = vld [vmem:[%s0 + $0x68] sm:$0xf]
  %v47 = vld [vmem:[%s0 + $0x6c] sm:$0xf]
  %v48 = vld [vmem:[%s0 + $0x70] sm:$0xf]
  %v49 = vld [vmem:[%s0 + $0x74] sm:$0xf]
  %v50 = vld [vmem:[%s0 + $0x78] sm:$0xf]
  %v51 = vld [vmem:[%s0 + $0x7c] sm:$0xf]
  %v52 = vld [vmem:[%s0 + $0x80] sm:$0xf]
  %v53 = vld [vmem:[%s0 + $0x84] sm:$0xf]
  %v54 = vld [vmem:[%s0 + $0x88] sm:$0xf]
  %v55 = vld [vmem:[%s0 + $0x8c] sm:$0xf]
  %v56 = vld [vmem:[%s0 + $0x90] sm:$0xf]
  %v57 = vld [vmem:[%s0 + $0x94] sm:$0xf]
  %v58 = vld [vmem:[%s0 + $0x98] sm:$0xf]
  %v59 = vld [vmem:[%s0 + $0x9c] sm:$0xf]
  %v60 = vld [vmem:[%s0 + $0xa0] sm:$0xf]
  %v61 = vld [vmem:[%s0 + $0xa4] sm:$0xf]
  %v62 = vld [vmem:[%s0 + $0xa8] sm:$0xf]
  %v63 = vld [vmem:[%s0 + $0xac] sm:$0xf]
  %v64 = vld [vmem:[%s0 + $0xb0] sm:$0xf]
  %v65 = vld [vmem:[%s0 + $0xb4] sm:$0xf]
  %v66 = vld [vmem:[%s0 + $0xb8] sm:$0xf]
  %v67 = vld [vmem:[%s0 + $0xbc] sm:$0xf]
  %v68 = vld [vmem:[%s0 + $0xc0] sm:$0xf]
  %v69 = vld [vmem:[%s0 + $0xc4] sm:$0xf]
  %v70 = vld [vmem:[%s0 + $0xc8] sm:$0xf]
  %v71 = vld [vmem:[%s0 + $0xcc] sm:$0xf]
  %v72 = vld [vmem:[%s0 + $0xd0] sm:$0xf]
  %v73 = vld [vmem:[%s0 + $0xd4] sm:$0xf]
  %v74 = vld [vmem:[%s0 + $0xd8] sm:$0xf]
  %v75 = vld [vmem:[%s0 + $0xdc] sm:$0xf]
  %v76 = vld [vmem:[%s0 + $0xe0] sm:$0xf]
  %v77 = vld [vmem:[%s0 + $0xe4] sm:$0xf]
  %v78 = vld [vmem:[%s0 + $0xe8] sm:$0xf]
  %v79 = vld [vmem:[%s0 + $0xec] sm:$0xf]
  %v80 = vld [vmem:[%s0 + $0xf0] sm:$0xf]
  %v81 = vld [vmem:[%s0 + $0xf4] sm:$0xf]
  %v82 = vld [vmem:[%s0 + $0xf8] sm:$0xf]
  %v83 = vld [vmem:[%s0 + $0xfc] sm:$0xf]
  %v84 = vunpack.c.l.bf16 %v20
  %v85 = vunpack.c.l.bf16 %v21
  %v86 = vunpack.c.l.bf16 %v22
  %v87 = vunpack.c.l.bf16 %v23
  %v88 = vunpack.c.l.bf16 %v24
  %v89 = vunpack.c.l.bf16 %v25
  %v90 = vunpack.c.l.bf16 %v26
  %v91 = vunpack.c.l.bf16 %v27
  %v92 = vunpack.c.l.bf16 %v28
  %v93 = vunpack.c.l.bf16 %v29
  %v94 = vunpack.c.l.bf16 %v30
  %v95 = vunpack.c.l.bf16 %v31
  %v96 = vunpack.c.l.bf16 %v32
  %v97 = vunpack.c.l.bf16 %v33
  %v98 = vunpack.c.l.bf16 %v34
  %v99 = vunpack.c.l.bf16 %v35
  %v100 = vunpack.c.l.bf16 %v36
  %v101 = vunpack.c.l.bf16 %v37
  %v102 = vunpack.c.l.bf16 %v38
  %v103 = vunpack.c.l.bf16 %v39
  %v104 = vunpack.c.l.bf16 %v40
  %v105 = vunpack.c.l.bf16 %v41
  %v106 = vunpack.c.l.bf16 %v42
  %v107 = vunpack.c.l.bf16 %v43
  %v108 = vunpack.c.l.bf16 %v44
  %v109 = vunpack.c.l.bf16 %v45
  %v110 = vunpack.c.l.bf16 %v46
  %v111 = vunpack.c.l.bf16 %v47
  %v112 = vunpack.c.l.bf16 %v48
  %v113 = vunpack.c.l.bf16 %v49
  %v114 = vunpack.c.l.bf16 %v50
  %v115 = vunpack.c.l.bf16 %v51
  %v116 = vunpack.c.l.bf16 %v52
  %v117 = vunpack.c.l.bf16 %v53
  %v118 = vunpack.c.l.bf16 %v54
  %v119 = vunpack.c.l.bf16 %v55
  %v120 = vunpack.c.l.bf16 %v56
  %v121 = vunpack.c.l.bf16 %v57
  %v122 = vunpack.c.l.bf16 %v58
  %v123 = vunpack.c.l.bf16 %v59
  %v124 = vunpack.c.l.bf16 %v60
  %v125 = vunpack.c.l.bf16 %v61
  %v126 = vunpack.c.l.bf16 %v62
  %v127 = vunpack.c.l.bf16 %v63
  %v128 = vunpack.c.l.bf16 %v64
  %v129 = vunpack.c.l.bf16 %v65
  %v130 = vunpack.c.l.bf16 %v66
  %v131 = vunpack.c.l.bf16 %v67
  %v132 = vunpack.c.l.bf16 %v68
  %v133 = vunpack.c.l.bf16 %v69
  %v134 = vunpack.c.l.bf16 %v70
  %v135 = vunpack.c.l.bf16 %v71
  %v136 = vunpack.c.l.bf16 %v72
  %v137 = vunpack.c.l.bf16 %v73
  %v138 = vunpack.c.l.bf16 %v74
  %v139 = vunpack.c.l.bf16 %v75
  %v140 = vunpack.c.l.bf16 %v76
  %v141 = vunpack.c.l.bf16 %v77
  %v142 = vunpack.c.l.bf16 %v78
  %v143 = vunpack.c.l.bf16 %v79
  %v144 = vunpack.c.l.bf16 %v80
  %v145 = vunpack.c.l.bf16 %v81
  %v146 = vunpack.c.l.bf16 %v82
  %v147 = vunpack.c.l.bf16 %v83
  %v148 = vld [vmem:[%s13] sm:$0xf]
  %v149 = vld [vmem:[%s13 + $0x4] sm:$0xf]
  %v150 = vld [vmem:[%s13 + $0x8] sm:$0xf]
  %v151 = vld [vmem:[%s13 + $0xc] sm:$0xf]
  %v152 = vld [vmem:[%s13 + $0x10] sm:$0xf]
  %v153 = vld [vmem:[%s13 + $0x14] sm:$0xf]
  %v154 = vld [vmem:[%s13 + $0x18] sm:$0xf]
  %v155 = vld [vmem:[%s13 + $0x1c] sm:$0xf]
  %v156 = vld [vmem:[%s13 + $0x20] sm:$0xf]
  %v157 = vld [vmem:[%s13 + $0x24] sm:$0xf]
  %v158 = vld [vmem:[%s13 + $0x28] sm:$0xf]
  %v159 = vld [vmem:[%s13 + $0x2c] sm:$0xf]
  %v160 = vld [vmem:[%s13 + $0x30] sm:$0xf]
  %v161 = vld [vmem:[%s13 + $0x34] sm:$0xf]
  %v162 = vld [vmem:[%s13 + $0x38] sm:$0xf]
  %v163 = vld [vmem:[%s13 + $0x3c] sm:$0xf]
  %v164 = vld [vmem:[%s13 + $0x40] sm:$0xf]
  %v165 = vld [vmem:[%s13 + $0x44] sm:$0xf]
  %v166 = vld [vmem:[%s13 + $0x48] sm:$0xf]
  %v167 = vld [vmem:[%s13 + $0x4c] sm:$0xf]
  %v168 = vld [vmem:[%s13 + $0x50] sm:$0xf]
  %v169 = vld [vmem:[%s13 + $0x54] sm:$0xf]
  %v170 = vld [vmem:[%s13 + $0x58] sm:$0xf]
  %v171 = vld [vmem:[%s13 + $0x5c] sm:$0xf]
  %v172 = vld [vmem:[%s13 + $0x60] sm:$0xf]
  %v173 = vld [vmem:[%s13 + $0x64] sm:$0xf]
  %v174 = vld [vmem:[%s13 + $0x68] sm:$0xf]
  %v175 = vld [vmem:[%s13 + $0x6c] sm:$0xf]
  %v176 = vld [vmem:[%s13 + $0x70] sm:$0xf]
  %v177 = vld [vmem:[%s13 + $0x74] sm:$0xf]
  %v178 = vld [vmem:[%s13 + $0x78] sm:$0xf]
  %v179 = vld [vmem:[%s13 + $0x7c] sm:$0xf]
  %v180 = vld [vmem:[%s13 + $0x80] sm:$0xf]
  %v181 = vld [vmem:[%s13 + $0x84] sm:$0xf]
  %v182 = vld [vmem:[%s13 + $0x88] sm:$0xf]
  %v183 = vld [vmem:[%s13 + $0x8c] sm:$0xf]
  %v184 = vld [vmem:[%s13 + $0x90] sm:$0xf]
  %v185 = vld [vmem:[%s13 + $0x94] sm:$0xf]
  %v186 = vld [vmem:[%s13 + $0x98] sm:$0xf]
  %v187 = vld [vmem:[%s13 + $0x9c] sm:$0xf]
  %v188 = vld [vmem:[%s13 + $0xa0] sm:$0xf]
  %v189 = vld [vmem:[%s13 + $0xa4] sm:$0xf]
  %v190 = vld [vmem:[%s13 + $0xa8] sm:$0xf]
  %v191 = vld [vmem:[%s13 + $0xac] sm:$0xf]
  %v192 = vld [vmem:[%s13 + $0xb0] sm:$0xf]
  %v193 = vld [vmem:[%s13 + $0xb4] sm:$0xf]
  %v194 = vld [vmem:[%s13 + $0xb8] sm:$0xf]
  %v195 = vld [vmem:[%s13 + $0xbc] sm:$0xf]
  %v196 = vld [vmem:[%s13 + $0xc0] sm:$0xf]
  %v197 = vld [vmem:[%s13 + $0xc4] sm:$0xf]
  %v198 = vld [vmem:[%s13 + $0xc8] sm:$0xf]
  %v199 = vld [vmem:[%s13 + $0xcc] sm:$0xf]
  %v200 = vld [vmem:[%s13 + $0xd0] sm:$0xf]
  %v201 = vld [vmem:[%s13 + $0xd4] sm:$0xf]
  %v202 = vld [vmem:[%s13 + $0xd8] sm:$0xf]
  %v203 = vld [vmem:[%s13 + $0xdc] sm:$0xf]
  %v204 = vld [vmem:[%s13 + $0xe0] sm:$0xf]
  %v205 = vld [vmem:[%s13 + $0xe4] sm:$0xf]
  %v206 = vld [vmem:[%s13 + $0xe8] sm:$0xf]
  %v207 = vld [vmem:[%s13 + $0xec] sm:$0xf]
  %v208 = vld [vmem:[%s13 + $0xf0] sm:$0xf]
  %v209 = vld [vmem:[%s13 + $0xf4] sm:$0xf]
  %v210 = vld [vmem:[%s13 + $0xf8] sm:$0xf]
  %v211 = vld [vmem:[%s13 + $0xfc] sm:$0xf]
  %v212 = vunpack.c.l.bf16 %v148
  %v213 = vunpack.c.l.bf16 %v149
  %v214 = vunpack.c.l.bf16 %v150
  %v215 = vunpack.c.l.bf16 %v151
  %v216 = vunpack.c.l.bf16 %v152
  %v217 = vunpack.c.l.bf16 %v153
  %v218 = vunpack.c.l.bf16 %v154
  %v219 = vunpack.c.l.bf16 %v155
  %v220 = vunpack.c.l.bf16 %v156
  %v221 = vunpack.c.l.bf16 %v157
  %v222 = vunpack.c.l.bf16 %v158
  %v223 = vunpack.c.l.bf16 %v159
  %v224 = vunpack.c.l.bf16 %v160
  %v225 = vunpack.c.l.bf16 %v161
  %v226 = vunpack.c.l.bf16 %v162
  %v227 = vunpack.c.l.bf16 %v163
  %v228 = vunpack.c.l.bf16 %v164
  %v229 = vunpack.c.l.bf16 %v165
  %v230 = vunpack.c.l.bf16 %v166
  %v231 = vunpack.c.l.bf16 %v167
  %v232 = vunpack.c.l.bf16 %v168
  %v233 = vunpack.c.l.bf16 %v169
  %v234 = vunpack.c.l.bf16 %v170
  %v235 = vunpack.c.l.bf16 %v171
  %v236 = vunpack.c.l.bf16 %v172
  %v237 = vunpack.c.l.bf16 %v173
  %v238 = vunpack.c.l.bf16 %v174
  %v239 = vunpack.c.l.bf16 %v175
  %v240 = vunpack.c.l.bf16 %v176
  %v241 = vunpack.c.l.bf16 %v177
  %v242 = vunpack.c.l.bf16 %v178
  %v243 = vunpack.c.l.bf16 %v179
  %v244 = vunpack.c.l.bf16 %v180
  %v245 = vunpack.c.l.bf16 %v181
  %v246 = vunpack.c.l.bf16 %v182
  %v247 = vunpack.c.l.bf16 %v183
  %v248 = vunpack.c.l.bf16 %v184
  %v249 = vunpack.c.l.bf16 %v185
  %v250 = vunpack.c.l.bf16 %v186
  %v251 = vunpack.c.l.bf16 %v187
  %v252 = vunpack.c.l.bf16 %v188
  %v253 = vunpack.c.l.bf16 %v189
  %v254 = vunpack.c.l.bf16 %v190
  %v255 = vunpack.c.l.bf16 %v191
  %v256 = vunpack.c.l.bf16 %v192
  %v257 = vunpack.c.l.bf16 %v193
  %v258 = vunpack.c.l.bf16 %v194
  %v259 = vunpack.c.l.bf16 %v195
  %v260 = vunpack.c.l.bf16 %v196
  %v261 = vunpack.c.l.bf16 %v197
  %v262 = vunpack.c.l.bf16 %v198
  %v263 = vunpack.c.l.bf16 %v199
  %v264 = vunpack.c.l.bf16 %v200
  %v265 = vunpack.c.l.bf16 %v201
  %v266 = vunpack.c.l.bf16 %v202
  %v267 = vunpack.c.l.bf16 %v203
  %v268 = vunpack.c.l.bf16 %v204
  %v269 = vunpack.c.l.bf16 %v205
  %v270 = vunpack.c.l.bf16 %v206
  %v271 = vunpack.c.l.bf16 %v207
  %v272 = vunpack.c.l.bf16 %v208
  %v273 = vunpack.c.l.bf16 %v209
  %v274 = vunpack.c.l.bf16 %v210
  %v275 = vunpack.c.l.bf16 %v211
  %v276 = vsub.f32 %v84, %v212
  %v277 = vsub.f32 %v85, %v213
  %v278 = vsub.f32 %v86, %v214
  %v279 = vsub.f32 %v87, %v215
  %v280 = vsub.f32 %v88, %v216
  %v281 = vsub.f32 %v89, %v217
  %v282 = vsub.f32 %v90, %v218
  %v283 = vsub.f32 %v91, %v219
  %v284 = vsub.f32 %v92, %v220
  %v285 = vsub.f32 %v93, %v221
  %v286 = vsub.f32 %v94, %v222
  %v287 = vsub.f32 %v95, %v223
  %v288 = vsub.f32 %v96, %v224
  %v289 = vsub.f32 %v97, %v225
  %v290 = vsub.f32 %v98, %v226
  %v291 = vsub.f32 %v99, %v227
  %v292 = vsub.f32 %v100, %v228
  %v293 = vsub.f32 %v101, %v229
  %v294 = vsub.f32 %v102, %v230
  %v295 = vsub.f32 %v103, %v231
  %v296 = vsub.f32 %v104, %v232
  %v297 = vsub.f32 %v105, %v233
  %v298 = vsub.f32 %v106, %v234
  %v299 = vsub.f32 %v107, %v235
  %v300 = vsub.f32 %v108, %v236
  %v301 = vsub.f32 %v109, %v237
  %v302 = vsub.f32 %v110, %v238
  %v303 = vsub.f32 %v111, %v239
  %v304 = vsub.f32 %v112, %v240
  %v305 = vsub.f32 %v113, %v241
  %v306 = vsub.f32 %v114, %v242
  %v307 = vsub.f32 %v115, %v243
  %v308 = vsub.f32 %v116, %v244
  %v309 = vsub.f32 %v117, %v245
  %v310 = vsub.f32 %v118, %v246
  %v311 = vsub.f32 %v119, %v247
  %v312 = vsub.f32 %v120, %v248
  %v313 = vsub.f32 %v121, %v249
  %v314 = vsub.f32 %v122, %v250
  %v315 = vsub.f32 %v123, %v251
  %v316 = vsub.f32 %v124, %v252
  %v317 = vsub.f32 %v125, %v253
  %v318 = vsub.f32 %v126, %v254
  %v319 = vsub.f32 %v127, %v255
  %v320 = vsub.f32 %v128, %v256
  %v321 = vsub.f32 %v129, %v257
  %v322 = vsub.f32 %v130, %v258
  %v323 = vsub.f32 %v131, %v259
  %v324 = vsub.f32 %v132, %v260
  %v325 = vsub.f32 %v133, %v261
  %v326 = vsub.f32 %v134, %v262
  %v327 = vsub.f32 %v135, %v263
  %v328 = vsub.f32 %v136, %v264
  %v329 = vsub.f32 %v137, %v265
  %v330 = vsub.f32 %v138, %v266
  %v331 = vsub.f32 %v139, %v267
  %v332 = vsub.f32 %v140, %v268
  %v333 = vsub.f32 %v141, %v269
  %v334 = vsub.f32 %v142, %v270
  %v335 = vsub.f32 %v143, %v271
  %v336 = vsub.f32 %v144, %v272
  %v337 = vsub.f32 %v145, %v273
  %v338 = vsub.f32 %v146, %v274
  %v339 = vsub.f32 %v147, %v275
  %v340 = vld [vmem:[#allocation2] sm:$0x1]
  %v341 = vand.u32 2147483647, %v276
  %v342 = vand.u32 2147483647, %v277
  %v343 = vand.u32 2147483647, %v278
  %v344 = vand.u32 2147483647, %v279
  %v345 = vand.u32 2147483647, %v280
  %v346 = vand.u32 2147483647, %v281
  %v347 = vand.u32 2147483647, %v282
  %v348 = vand.u32 2147483647, %v283
  %v349 = vand.u32 2147483647, %v284
  %v350 = vand.u32 2147483647, %v285
  %v351 = vand.u32 2147483647, %v286
  %v352 = vand.u32 2147483647, %v287
  %v353 = vand.u32 2147483647, %v288
  %v354 = vand.u32 2147483647, %v289
  %v355 = vand.u32 2147483647, %v290
  %v356 = vand.u32 2147483647, %v291
  %v357 = vand.u32 2147483647, %v292
  %v358 = vand.u32 2147483647, %v293
  %v359 = vand.u32 2147483647, %v294
  %v360 = vand.u32 2147483647, %v295
  %v361 = vand.u32 2147483647, %v296
  %v362 = vand.u32 2147483647, %v297
  %v363 = vand.u32 2147483647, %v298
  %v364 = vand.u32 2147483647, %v299
  %v365 = vand.u32 2147483647, %v300
  %v366 = vand.u32 2147483647, %v301
  %v367 = vand.u32 2147483647, %v302
  %v368 = vand.u32 2147483647, %v303
  %v369 = vand.u32 2147483647, %v304
  %v370 = vand.u32 2147483647, %v305
  %v371 = vand.u32 2147483647, %v306
  %v372 = vand.u32 2147483647, %v307
  %v373 = vand.u32 2147483647, %v308
  %v374 = vand.u32 2147483647, %v309
  %v375 = vand.u32 2147483647, %v310
  %v376 = vand.u32 2147483647, %v311
  %v377 = vand.u32 2147483647, %v312
  %v378 = vand.u32 2147483647, %v313
  %v379 = vand.u32 2147483647, %v314
  %v380 = vand.u32 2147483647, %v315
  %v381 = vand.u32 2147483647, %v316
  %v382 = vand.u32 2147483647, %v317
  %v383 = vand.u32 2147483647, %v318
  %v384 = vand.u32 2147483647, %v319
  %v385 = vand.u32 2147483647, %v320
  %v386 = vand.u32 2147483647, %v321
  %v387 = vand.u32 2147483647, %v322
  %v388 = vand.u32 2147483647, %v323
  %v389 = vand.u32 2147483647, %v324
  %v390 = vand.u32 2147483647, %v325
  %v391 = vand.u32 2147483647, %v326
  %v392 = vand.u32 2147483647, %v327
  %v393 = vand.u32 2147483647, %v328
  %v394 = vand.u32 2147483647, %v329
  %v395 = vand.u32 2147483647, %v330
  %v396 = vand.u32 2147483647, %v331
  %v397 = vand.u32 2147483647, %v332
  %v398 = vand.u32 2147483647, %v333
  %v399 = vand.u32 2147483647, %v334
  %v400 = vand.u32 2147483647, %v335
  %v401 = vand.u32 2147483647, %v336
  %v402 = vand.u32 2147483647, %v337
  %v403 = vand.u32 2147483647, %v338
  %v404 = vand.u32 2147483647, %v339
  %vm405 = vcmask 523264
  %v406 = vsel %vm405, %v341, 0.0
  %v407 = vsel %vm405, %v342, 0.0
  %v408 = vadd.f32 %v406, %v407
  %v409 = vsel %vm405, %v343, 0.0
  %v410 = vadd.f32 %v408, %v409
  %v411 = vsel %vm405, %v344, 0.0
  %v412 = vadd.f32 %v410, %v411
  %v413 = vsel %vm405, %v345, 0.0
  %v414 = vadd.f32 %v412, %v413
  %v415 = vsel %vm405, %v346, 0.0
  %v416 = vadd.f32 %v414, %v415
  %v417 = vsel %vm405, %v347, 0.0
  %v418 = vadd.f32 %v416, %v417
  %v419 = vsel %vm405, %v348, 0.0
  %v420 = vadd.f32 %v418, %v419
  %v421 = vsel %vm405, %v349, 0.0
  %v422 = vadd.f32 %v420, %v421
  %v423 = vsel %vm405, %v350, 0.0
  %v424 = vadd.f32 %v422, %v423
  %v425 = vsel %vm405, %v351, 0.0
  %v426 = vadd.f32 %v424, %v425
  %v427 = vsel %vm405, %v352, 0.0
  %v428 = vadd.f32 %v426, %v427
  %v429 = vsel %vm405, %v353, 0.0
  %v430 = vadd.f32 %v428, %v429
  %v431 = vsel %vm405, %v354, 0.0
  %v432 = vadd.f32 %v430, %v431
  %v433 = vsel %vm405, %v355, 0.0
  %v434 = vadd.f32 %v432, %v433
  %v435 = vsel %vm405, %v356, 0.0
  %v436 = vadd.f32 %v434, %v435
  %v437 = vsel %vm405, %v357, 0.0
  %v438 = vadd.f32 %v436, %v437
  %v439 = vsel %vm405, %v358, 0.0
  %v440 = vadd.f32 %v438, %v439
  %v441 = vsel %vm405, %v359, 0.0
  %v442 = vadd.f32 %v440, %v441
  %v443 = vsel %vm405, %v360, 0.0
  %v444 = vadd.f32 %v442, %v443
  %v445 = vsel %vm405, %v361, 0.0
  %v446 = vadd.f32 %v444, %v445
  %v447 = vsel %vm405, %v362, 0.0
  %v448 = vadd.f32 %v446, %v447
  %v449 = vsel %vm405, %v363, 0.0
  %v450 = vadd.f32 %v448, %v449
  %v451 = vsel %vm405, %v364, 0.0
  %v452 = vadd.f32 %v450, %v451
  %v453 = vsel %vm405, %v365, 0.0
  %v454 = vadd.f32 %v452, %v453
  %v455 = vsel %vm405, %v366, 0.0
  %v456 = vadd.f32 %v454, %v455
  %v457 = vsel %vm405, %v367, 0.0
  %v458 = vadd.f32 %v456, %v457
  %v459 = vsel %vm405, %v368, 0.0
  %v460 = vadd.f32 %v458, %v459
  %v461 = vsel %vm405, %v369, 0.0
  %v462 = vadd.f32 %v460, %v461
  %v463 = vsel %vm405, %v370, 0.0
  %v464 = vadd.f32 %v462, %v463
  %v465 = vsel %vm405, %v371, 0.0
  %v466 = vadd.f32 %v464, %v465
  %v467 = vsel %vm405, %v372, 0.0
  %v468 = vadd.f32 %v466, %v467
  %v469 = vsel %vm405, %v373, 0.0
  %v470 = vadd.f32 %v468, %v469
  %v471 = vsel %vm405, %v374, 0.0
  %v472 = vadd.f32 %v470, %v471
  %v473 = vsel %vm405, %v375, 0.0
  %v474 = vadd.f32 %v472, %v473
  %v475 = vsel %vm405, %v376, 0.0
  %v476 = vadd.f32 %v474, %v475
  %v477 = vsel %vm405, %v377, 0.0
  %v478 = vadd.f32 %v476, %v477
  %v479 = vsel %vm405, %v378, 0.0
  %v480 = vadd.f32 %v478, %v479
  %v481 = vsel %vm405, %v379, 0.0
  %v482 = vadd.f32 %v480, %v481
  %v483 = vsel %vm405, %v380, 0.0
  %v484 = vadd.f32 %v482, %v483
  %v485 = vsel %vm405, %v381, 0.0
  %v486 = vadd.f32 %v484, %v485
  %v487 = vsel %vm405, %v382, 0.0
  %v488 = vadd.f32 %v486, %v487
  %v489 = vsel %vm405, %v383, 0.0
  %v490 = vadd.f32 %v488, %v489
  %v491 = vsel %vm405, %v384, 0.0
  %v492 = vadd.f32 %v490, %v491
  %v493 = vsel %vm405, %v385, 0.0
  %v494 = vadd.f32 %v492, %v493
  %v495 = vsel %vm405, %v386, 0.0
  %v496 = vadd.f32 %v494, %v495
  %v497 = vsel %vm405, %v387, 0.0
  %v498 = vadd.f32 %v496, %v497
  %v499 = vsel %vm405, %v388, 0.0
  %v500 = vadd.f32 %v498, %v499
  %v501 = vsel %vm405, %v389, 0.0
  %v502 = vadd.f32 %v500, %v501
  %v503 = vsel %vm405, %v390, 0.0
  %v504 = vadd.f32 %v502, %v503
  %v505 = vsel %vm405, %v391, 0.0
  %v506 = vadd.f32 %v504, %v505
  %v507 = vsel %vm405, %v392, 0.0
  %v508 = vadd.f32 %v506, %v507
  %v509 = vsel %vm405, %v393, 0.0
  %v510 = vadd.f32 %v508, %v509
  %v511 = vsel %vm405, %v394, 0.0
  %v512 = vadd.f32 %v510, %v511
  %v513 = vsel %vm405, %v395, 0.0
  %v514 = vadd.f32 %v512, %v513
  %v515 = vsel %vm405, %v396, 0.0
  %v516 = vadd.f32 %v514, %v515
  %v517 = vsel %vm405, %v397, 0.0
  %v518 = vadd.f32 %v516, %v517
  %v519 = vsel %vm405, %v398, 0.0
  %v520 = vadd.f32 %v518, %v519
  %v521 = vsel %vm405, %v399, 0.0
  %v522 = vadd.f32 %v520, %v521
  %v523 = vsel %vm405, %v400, 0.0
  %v524 = vadd.f32 %v522, %v523
  %v525 = vsel %vm405, %v401, 0.0
  %v526 = vadd.f32 %v524, %v525
  %v527 = vsel %vm405, %v402, 0.0
  %v528 = vadd.f32 %v526, %v527
  %v529 = vsel %vm405, %v403, 0.0
  %v530 = vadd.f32 %v528, %v529
  %v531 = vsel %vm405, %v404, 0.0
  %v532 = vadd.f32 %v530, %v531
  %v533 = vrot.slane %v532, 4
  %v534 = vadd.f32 %v532, %v533
  %v535 = vrot.slane %v534, 2
  %v536 = vadd.f32 %v534, %v535
  %v537 = vrot.slane %v536, 1
  %v538 = vadd.f32 %v536, %v537
  %v539 = vadd.f32 %v340, %v538
  %vm540 = vcmask 516096
  %541 = vst.msk [vmem:[#allocation2] sm:$0x1] %vm540, %v539
  // Predicated region
  $region14: #{perceptual_loss.12} parent=0 // pred_check
    %p542 = pneg %p14
  $region15: #{perceptual_loss.12} parent=0 // pred_check_branch
    %544 = sbr.rel (%p542) target = $region17
  $region16: #{perceptual_loss.12} parent=0 // pred_region
    %v545 = vld [vmem:[#allocation2] sm:$0x1]
    %546 = vst.msk [vmem:[%s2] sm:$0x1] %vm540, %v545
  $region17: #{perceptual_loss.12} parent=0 // pred_fallthru
    _
  // Predicated region
  $region18: #{perceptual_loss.12} parent=0 // pred_check
    _
  $region19: #{perceptual_loss.12} parent=0 // pred_check_branch
    %548 = sbr.rel (0) target = $region21
  $region20: #{perceptual_loss.12} parent=0 // pred_region
    _
  $region21: #{perceptual_loss.12} parent=0 // pred_fallthru
    _
  // Predicated region
  $region22: #{perceptual_loss.12} parent=0 // pred_check
    _
  $region23: #{perceptual_loss.12} parent=0 // pred_check_branch
    %550 = sbr.rel (0) target = $region25
  $region24: #{perceptual_loss.12} parent=0 // pred_region
    _
  $region25: #{perceptual_loss.12} parent=0 // pred_fallthru
    _

</llo_original>
